<compile_context>
chip_gen: v6e
topology: v6e:2x2x1
jax: 0.10.0
libtpu: 0.0.40
codegen_flags: <defaults>
</compile_context>

<pallas_src>
import math
import functools

import jax
import jax.numpy as jnp
from jax.experimental import pallas as pl
from jax.experimental.pallas import tpu as pltpu

GROUP = 4            # rotation group size (reflection=False)
WIDTH = 8
MODES = 4
IN_CHANNELS = 1
INITIAL_STEP = 3
Q_OUT = 50
EPS = 1e-5           # InstanceNorm3d default eps
SQRT_HALF = 1.0 / math.sqrt(2.0)
DEFAULT_TILE = 4096  # lane-tile for the pointwise kernels (sweep 2048-8192)


# ----------------------------------------------------------------------------
# Pallas kernels (channel-major: activations are (C, lanes))
# ----------------------------------------------------------------------------
def _gelu(x):
    # exact (erf-based) GELU == torch.nn.functional.gelu default
    return 0.5 * x * (1.0 + jax.lax.erf(x * SQRT_HALF))


def _conv_cm_kernel(x_ref, w_ref, b_ref, o_ref, *, act):
    # 1x1 group conv, channel-major: o = w @ x + b
    h = jnp.dot(w_ref[...], x_ref[...], preferred_element_type=jnp.float32)
    h = h + b_ref[...]
    if act:
        h = _gelu(h)
    o_ref[...] = h


def _gmlp_cm_kernel(x_ref, w1_ref, b1_ref, w2_ref, b2_ref, o_ref):
    # fused GMLP2d: conv1x1 -> gelu -> conv1x1 (channel-major)
    a = jnp.dot(w1_ref[...], x_ref[...], preferred_element_type=jnp.float32)
    a = _gelu(a + b1_ref[...])
    o_ref[...] = jnp.dot(w2_ref[...], a, preferred_element_type=jnp.float32) + b2_ref[...]


def _block_tail_cm_kernel(h_ref, n2_ref, w1_ref, b1_ref, w2_ref, b2_ref,
                          ww_ref, wb_ref, o_ref, *, act):
    # fused Fourier-block tail:
    #   x1 = mlp(n2)   (GMLP2d: conv1x1 -> gelu -> conv1x1)
    #   x2 = w(h)      (residual 1x1 group conv)
    #   o  = gelu(x1 + x2)   (no gelu on the last block)
    a = jnp.dot(w1_ref[...], n2_ref[...], preferred_element_type=jnp.float32)
    a = _gelu(a + b1_ref[...])
    x1 = jnp.dot(w2_ref[...], a, preferred_element_type=jnp.float32) + b2_ref[...]
    x2 = jnp.dot(ww_ref[...], h_ref[...], preferred_element_type=jnp.float32) + wb_ref[...]
    o = x1 + x2
    if act:
        o = _gelu(o)
    o_ref[...] = o


def _gnorm_cm_kernel(x_ref, pool_ref, o_ref):
    # per-(batch, width-channel) InstanceNorm3d over (group, H, W), no affine.
    # x: (Cg, H*W) block = one batch; pool: (Cg, Cg) group-averaging matrix.
    x = x_ref[...]
    pool = pool_ref[...]
    mu = jnp.mean(jnp.dot(pool, x, preferred_element_type=jnp.float32),
                  axis=-1, keepdims=True)                      # (Cg, 1)
    xc = x - mu
    var = jnp.mean(jnp.dot(pool, xc * xc, preferred_element_type=jnp.float32),
                   axis=-1, keepdims=True)                     # biased variance
    o_ref[...] = xc * jax.lax.rsqrt(var + EPS)


def _spectral_cm_kernel(xp_ref, wp_ref, op_ref):
    # All Fourier modes in ONE grid step.  Per mode f a single packed real
    # matmul: [xr | xi] @ [[wr, wi], [-wi, wr]] = [out_r | out_i].
    for f in range(xp_ref.shape[0]):                           # static unroll
        op_ref[f] = jnp.dot(xp_ref[f], wp_ref[f],
                            preferred_element_type=jnp.float32)


# ----------------------------------------------------------------------------
# Pallas wrappers
# ----------------------------------------------------------------------------
def pallas_conv_cm(x, w, b, *, act=False, tile_n=DEFAULT_TILE):
    Cin, N = x.shape
    Cout = w.shape[0]
    tn = min(tile_n, N)
    return pl.pallas_call(
        functools.partial(_conv_cm_kernel, act=act),
        grid=(pl.cdiv(N, tn),),
        in_specs=[
            pl.BlockSpec((Cin, tn), lambda i: (0, i)),
            pl.BlockSpec((Cout, Cin), lambda i: (0, 0)),
            pl.BlockSpec((Cout, 1), lambda i: (0, 0)),
        ],
        out_specs=pl.BlockSpec((Cout, tn), lambda i: (0, i)),
        out_shape=jax.ShapeDtypeStruct((Cout, N), jnp.float32),
        compiler_params=pltpu.CompilerParams(dimension_semantics=("parallel",)),
    )(x, w, b.reshape(Cout, 1))


def pallas_gmlp_cm(x, w1, b1, w2, b2, *, tile_n=DEFAULT_TILE):
    Cin, N = x.shape
    Cmid, Cout = w1.shape[0], w2.shape[0]
    tn = min(tile_n, N)
    return pl.pallas_call(
        _gmlp_cm_kernel,
        grid=(pl.cdiv(N, tn),),
        in_specs=[
            pl.BlockSpec((Cin, tn), lambda i: (0, i)),
            pl.BlockSpec((Cmid, Cin), lambda i: (0, 0)),
            pl.BlockSpec((Cmid, 1), lambda i: (0, 0)),
            pl.BlockSpec((Cout, Cmid), lambda i: (0, 0)),
            pl.BlockSpec((Cout, 1), lambda i: (0, 0)),
        ],
        out_specs=pl.BlockSpec((Cout, tn), lambda i: (0, i)),
        out_shape=jax.ShapeDtypeStruct((Cout, N), jnp.float32),
        compiler_params=pltpu.CompilerParams(dimension_semantics=("parallel",)),
    )(x, w1, b1.reshape(Cmid, 1), w2, b2.reshape(Cout, 1))


def pallas_block_tail_cm(h, n2, w1, b1, w2, b2, ww, wb, *, act, tile_n=DEFAULT_TILE):
    Cg, N = h.shape
    Cmid = w1.shape[0]
    tn = min(tile_n, N)
    return pl.pallas_call(
        functools.partial(_block_tail_cm_kernel, act=act),
        grid=(pl.cdiv(N, tn),),
        in_specs=[
            pl.BlockSpec((Cg, tn), lambda i: (0, i)),
            pl.BlockSpec((Cg, tn), lambda i: (0, i)),
            pl.BlockSpec((Cmid, Cg), lambda i: (0, 0)),
            pl.BlockSpec((Cmid, 1), lambda i: (0, 0)),
            pl.BlockSpec((Cg, Cmid), lambda i: (0, 0)),
            pl.BlockSpec((Cg, 1), lambda i: (0, 0)),
            pl.BlockSpec((Cg, Cg), lambda i: (0, 0)),
            pl.BlockSpec((Cg, 1), lambda i: (0, 0)),
        ],
        out_specs=pl.BlockSpec((Cg, tn), lambda i: (0, i)),
        out_shape=jax.ShapeDtypeStruct((Cg, N), jnp.float32),
        compiler_params=pltpu.CompilerParams(dimension_semantics=("parallel",)),
    )(h, n2, w1, b1.reshape(Cmid, 1), w2, b2.reshape(Cg, 1), ww, wb.reshape(Cg, 1))


def pallas_gnorm_cm(x_cm, B, HW):
    # GNorm: view (B, width, G, H, W) -> InstanceNorm3d(width) -> view back,
    # done directly on the channel-major (Cg, B*H*W) activation.
    Cg, N = x_cm.shape
    assert N == B * HW
    assert (HW % 128 == 0) or (B == 1), "H*W must be a multiple of 128"
    pool = jnp.kron(jnp.eye(WIDTH, dtype=jnp.float32),
                    jnp.full((GROUP, GROUP), 1.0 / GROUP, jnp.float32))
    return pl.pallas_call(
        _gnorm_cm_kernel,
        grid=(B,),
        in_specs=[
            pl.BlockSpec((Cg, HW), lambda b: (0, b)),
            pl.BlockSpec((Cg, Cg), lambda b: (0, 0)),
        ],
        out_specs=pl.BlockSpec((Cg, HW), lambda b: (0, b)),
        out_shape=jax.ShapeDtypeStruct((Cg, N), jnp.float32),
        compiler_params=pltpu.CompilerParams(dimension_semantics=("parallel",)),
    )(x_cm, pool)


def pallas_spectral_cm(Xp, Wp):
    # single grid step over all modes; data fits VMEM hundreds of times over.
    F, B2, C2 = Xp.shape
    return pl.pallas_call(
        _spectral_cm_kernel,
        grid=(1,),
        in_specs=[
            pl.BlockSpec((F, B2, C2), lambda i: (0, 0, 0)),
            pl.BlockSpec((F, C2, C2), lambda i: (0, 0, 0)),
        ],
        out_specs=pl.BlockSpec((F, B2, C2), lambda i: (0, 0, 0)),
        out_shape=jax.ShapeDtypeStruct((F, B2, C2), jnp.float32),
        compiler_params=pltpu.CompilerParams(dimension_semantics=("arbitrary",)),
    )(Xp, Wp)


def gspectral_conv_cm(x_cm, Wp, B, H, W):
    # GSpectralConv2d forward on the channel-major layout.
    # TODO(synk): rfft2/irfft2/fftshift have no Pallas equivalent; kept in XLA.
    Cg, N = x_cm.shape
    m = MODES
    K = 2 * m - 1
    F = K * m
    freq0 = H // 2  # zero-freq index after fftshift (H even, as in G-FNO)

    x4 = x_cm.reshape(Cg, B, H, W)                                  # free view
    x_ft = jnp.fft.fftshift(jnp.fft.rfft2(x4), axes=-2)             # (Cg,B,H,W//2+1)
    x_ft = x_ft[..., freq0 - m + 1:freq0 + m, :m]                   # (Cg,B,K,m)
    xf = jnp.transpose(x_ft, (2, 3, 1, 0)).reshape(F, B, Cg)        # tiny transpose
    Xp = jnp.concatenate([jnp.real(xf), jnp.imag(xf)], axis=-1).astype(jnp.float32)

    Op = pallas_spectral_cm(Xp, Wp)                                 # (F,B,2Cg)
    of = (Op[..., :Cg] + 1j * Op[..., Cg:]).astype(jnp.complex64)   # (F,B,Cg)
    of = jnp.transpose(of.reshape(K, m, B, Cg), (3, 2, 0, 1))       # (Cg,B,K,m)

    out_ft = jnp.zeros((Cg, B, H, W // 2 + 1), dtype=jnp.complex64)
    out_ft = out_ft.at[..., freq0 - m + 1:freq0 + m, :m].set(of)
    out = jnp.fft.irfft2(jnp.fft.ifftshift(out_ft, axes=-2), s=(H, W))
    return out.reshape(Cg, N).astype(jnp.float32)


# ----------------------------------------------------------------------------
# Group-equivariant weight expansion (GConv2d.get_weight), channel-major form
# ----------------------------------------------------------------------------
def expand_first_layer(W, b):
    # W:(Cout,Cin) b:(Cout,) -> weight (Cout*G, Cin), bias (Cout*G,)
    return jnp.repeat(W, GROUP, axis=0), jnp.repeat(b, GROUP)


def expand_middle_1x1(W, b):
    # W:(Cout,Cin,G) -> weight[o*G+k, i*G+g] = W[o,i,(g-k)%G]
    Cout, Cin, _ = W.shape
    rolled = jnp.stack([jnp.roll(W, k, axis=-1) for k in range(GROUP)], axis=1)
    return rolled.reshape(Cout * GROUP, Cin * GROUP), jnp.repeat(b, GROUP)


def expand_last_layer(W, b):
    # W:(Cout,Cin) -> weight (Cout, Cin*G): group pooling
    return jnp.repeat(W, GROUP, axis=1), b


def expand_spectral_packed(y0, w00, ypos, modes):
    # Hermitian assembly + group expansion of GConv2d(spectral=True, Hermitian=True),
    # then packed into the real 2Cg x 2Cg matrix [[wr, wi], [-wi, wr]] per mode.
    m = modes
    K = 2 * m - 1
    col0 = jnp.concatenate(
        [y0, w00.astype(jnp.complex64), jnp.conj(jnp.flip(y0, axis=-2))], axis=-2)
    wf = jnp.concatenate([col0, ypos], axis=-1)                     # (Co,Ci,G,K,m)
    left = jnp.flip(jnp.flip(jnp.conj(wf[..., 1:]), axis=-1), axis=-2)
    wf = jnp.concatenate([left, wf], axis=-1)                       # (Co,Ci,G,K,K)

    slices = [wf]
    cur = wf
    for _ in range(1, GROUP):
        cur = jnp.roll(jnp.rot90(cur, k=1, axes=(3, 4)), shift=1, axis=2)
        slices.append(cur)
    Wexp = jnp.stack(slices, axis=1)                                # (Co,Gk,Ci,Gg,K,K)
    Co, Ci = Wexp.shape[0], Wexp.shape[2]
    Wfull = Wexp.reshape(Co * GROUP, Ci * GROUP, K, K)[..., -m:]    # (Co*G,Ci*G,K,m)
    Wt = jnp.transpose(Wfull, (1, 0, 2, 3))                         # (Ci*G,Co*G,K,m)
    Wk = jnp.transpose(Wt, (2, 3, 0, 1)).reshape(K * m, Ci * GROUP, Co * GROUP)
    wr = jnp.real(Wk).astype(jnp.float32)
    wi = jnp.imag(Wk).astype(jnp.float32)
    top = jnp.concatenate([wr, wi], axis=-1)
    bot = jnp.concatenate([-wi, wr], axis=-1)
    return jnp.concatenate([top, bot], axis=-2)                     # (F, 2Cg, 2Cg)


# ----------------------------------------------------------------------------
# Parameter construction (deterministic, kaiming-uniform-like bounds)
# ----------------------------------------------------------------------------
class KeyGen:
    def __init__(self, seed):
        self.key = jax.random.PRNGKey(seed)

    def __call__(self):
        self.key, sub = jax.random.split(self.key)
        return sub


def _uinit(kg, shape, fan_in):
    bound = 1.0 / math.sqrt(fan_in)
    return jax.random.uniform(kg(), shape, jnp.float32, -bound, bound)


def _cinit(kg, shape, fan_in):
    return (_uinit(kg, shape, fan_in) + 1j * _uinit(kg, shape, fan_in)).astype(jnp.complex64)


def make_params(seed=0):
    kg = KeyGen(seed)
    cin = IN_CHANNELS * INITIAL_STEP  # grid_type="None" -> grid_dim=0
    params = {}
    # p : first-layer GConv2d(cin -> width, k=1)
    params["p"] = expand_first_layer(_uinit(kg, (WIDTH, cin), cin),
                                     _uinit(kg, (WIDTH,), cin))
    for l in range(4):
        fin = WIDTH * GROUP
        y0 = _cinit(kg, (WIDTH, WIDTH, GROUP, MODES - 1, 1), fin)
        ypos = _cinit(kg, (WIDTH, WIDTH, GROUP, 2 * MODES - 1, MODES - 1), fin)
        w00 = _uinit(kg, (WIDTH, WIDTH, GROUP, 1, 1), fin)
        params[f"sp{l}"] = expand_spectral_packed(y0, w00, ypos, MODES)
        # GMLP2d(width -> width, mid=width): two middle 1x1 group convs
        m1 = expand_middle_1x1(_uinit(kg, (WIDTH, WIDTH, GROUP), fin), _uinit(kg, (WIDTH,), fin))
        m2 = expand_middle_1x1(_uinit(kg, (WIDTH, WIDTH, GROUP), fin), _uinit(kg, (WIDTH,), fin))
        params[f"mlp{l}"] = (m1[0], m1[1], m2[0], m2[1])
        # w_l : middle 1x1 group conv
        params[f"w{l}"] = expand_middle_1x1(_uinit(kg, (WIDTH, WIDTH, GROUP), fin),
                                            _uinit(kg, (WIDTH,), fin))
    # q : GMLP2d(width -> 50, mid=4*width, last_layer=True)
    mid = WIDTH * 4
    q1 = expand_middle_1x1(_uinit(kg, (mid, WIDTH, GROUP), WIDTH * GROUP),
                           _uinit(kg, (mid,), WIDTH * GROUP))
    q2 = expand_last_layer(_uinit(kg, (Q_OUT, mid), mid * GROUP),
                           _uinit(kg, (Q_OUT,), mid * GROUP))
    params["q"] = (q1[0], q1[1], q2[0], q2[1])
    return params


# ----------------------------------------------------------------------------
# GFNO2d forward
# ----------------------------------------------------------------------------
def gfno2d_forward(x_bhwc, params):
    B, H, W, _ = x_bhwc.shape
    N = B * H * W
    HW = H * W
    Cg = WIDTH * GROUP

    # x.view(B,X,Y,-1); grid = identity -> channel-major (Cin, B*H*W)
    x_cm = x_bhwc.reshape(N, -1).T
    h = pallas_conv_cm(x_cm, params["p"][0], params["p"][1])            # (Cg, N)

    for l in range(4):
        n1 = pallas_gnorm_cm(h, B, HW)                                  # norm(x)
        s = gspectral_conv_cm(n1, params[f"sp{l}"], B, H, W)            # conv_l(.)
        n2 = pallas_gnorm_cm(s, B, HW)                                  # norm(.)
        w1, b1, w2, b2 = params[f"mlp{l}"]
        ww, wb = params[f"w{l}"]
        # x = gelu(mlp_l(n2) + w_l(x))   (no gelu after the 4th block)  -- fused
        h = pallas_block_tail_cm(h, n2, w1, b1, w2, b2, ww, wb, act=(l < 3))

    qw1, qb1, qw2, qb2 = params["q"]
    out_cm = pallas_gmlp_cm(h, qw1, qb1, qw2, qb2)                      # (50, N)
    out = out_cm.T.reshape(B, H, W, Q_OUT)
    return out[:, :, :, None, :]                                        # (B,H,W,1,50)


if __name__ == "__main__":
    B, H, W = 2, 16, 16
    cin = IN_CHANNELS * INITIAL_STEP
    key = jax.random.PRNGKey(0)
    x = jax.random.normal(key, (B, H, W, cin), dtype=jnp.float32)

    params = make_params(seed=0)
    fwd = jax.jit(gfno2d_forward)
    out = fwd(x, params)
    out = jax.block_until_ready(out)
    assert out.shape == (B, H, W, 1, Q_OUT), out.shape
    assert bool(jnp.all(jnp.isfinite(out)))
    print("KERNEL_OK")
</pallas_src>

<mosaic_0001>
module attributes {stable_mosaic.version = 11 : i64} {
  func.func @_conv_cm_kernel(%arg0: i32, %arg1: memref<3x512xf32, #tpu.memory_space<vmem>>, %arg2: memref<32x3xf32, #tpu.memory_space<vmem>>, %arg3: memref<32x1xf32, #tpu.memory_space<vmem>>, %arg4: memref<32x512xf32, #tpu.memory_space<vmem>>) attributes {dimension_semantics = [#tpu.dimension_semantics<parallel>], iteration_bounds = array<i64: 1>, scalar_prefetch = 0 : i64, scratch_operands = 0 : i64, tpu.core_type = #tpu.core_type<tc>, window_params = [{transform_indices = @transform_0, window_bounds = array<i64: 3, 512>}, {pipeline_mode = #tpu.pipeline_mode<synchronous>, transform_indices = @transform_1, window_bounds = array<i64: 32, 3>}, {pipeline_mode = #tpu.pipeline_mode<synchronous>, transform_indices = @transform_2, window_bounds = array<i64: 32, 1>}, {transform_indices = @transform_3, window_bounds = array<i64: 32, 512>}]} {
    %c0 = arith.constant 0 : index
    %c0_0 = arith.constant 0 : index
    %0 = vector.load %arg2[%c0, %c0_0] : memref<32x3xf32, #tpu.memory_space<vmem>>, vector<32x3xf32>
    %c0_1 = arith.constant 0 : index
    %c0_2 = arith.constant 0 : index
    %1 = vector.load %arg1[%c0_1, %c0_2] : memref<3x512xf32, #tpu.memory_space<vmem>>, vector<3x512xf32>
    %cst = arith.constant dense<0.000000e+00> : vector<32x512xf32>
    %2 = tpu.matmul %0, %1, %cst {dimension_numbers = #tpu.dot_dimension_numbers<[1], [0], [0], [1], [0, 0, 1, 1], [], []>} : vector<32x3xf32>, vector<3x512xf32>, vector<32x512xf32> -> vector<32x512xf32>
    %c0_3 = arith.constant 0 : index
    %c0_4 = arith.constant 0 : index
    %3 = vector.load %arg3[%c0_3, %c0_4] : memref<32x1xf32, #tpu.memory_space<vmem>>, vector<32x1xf32>
    %4 = vector.broadcast %3 : vector<32x1xf32> to vector<32x512xf32>
    %5 = arith.addf %2, %4 : vector<32x512xf32>
    %c0_5 = arith.constant 0 : index
    %c0_6 = arith.constant 0 : index
    %6 = vector.load %arg4[%c0_5, %c0_6] : memref<32x512xf32, #tpu.memory_space<vmem>>, vector<32x512xf32>
    tpu.vector_store %arg4[%c0_5, %c0_6], %5 {strides = array<i32>} : memref<32x512xf32, #tpu.memory_space<vmem>>, vector<32x512xf32>,
    return
  }
  func.func @transform_0(%arg0: i32) -> (i32, i32) {
    %c0_i32 = arith.constant 0 : i32
    %c0_i32_0 = arith.constant 0 : i32
    return %c0_i32, %arg0 : i32, i32
  }
  func.func @transform_1(%arg0: i32) -> (i32, i32) {
    %c0_i32 = arith.constant 0 : i32
    %c0_i32_0 = arith.constant 0 : i32
    %c0_i32_1 = arith.constant 0 : i32
    return %c0_i32, %c0_i32_0 : i32, i32
  }
  func.func @transform_2(%arg0: i32) -> (i32, i32) {
    %c0_i32 = arith.constant 0 : i32
    %c0_i32_0 = arith.constant 0 : i32
    %c0_i32_1 = arith.constant 0 : i32
    return %c0_i32, %c0_i32_0 : i32, i32
  }
  func.func @transform_3(%arg0: i32) -> (i32, i32) {
    %c0_i32 = arith.constant 0 : i32
    %c0_i32_0 = arith.constant 0 : i32
    return %c0_i32, %arg0 : i32, i32
  }
}

module attributes {stable_mosaic.version = 11 : i64} {
  func.func @_gnorm_cm_kernel(%arg0: i32, %arg1: memref<32x256xf32, #tpu.memory_space<vmem>>, %arg2: memref<32x32xf32, #tpu.memory_space<vmem>>, %arg3: memref<32x256xf32, #tpu.memory_space<vmem>>) attributes {dimension_semantics = [#tpu.dimension_semantics<parallel>], iteration_bounds = array<i64: 2>, scalar_prefetch = 0 : i64, scratch_operands = 0 : i64, tpu.core_type = #tpu.core_type<tc>, window_params = [{transform_indices = @transform_0, window_bounds = array<i64: 32, 256>}, {pipeline_mode = #tpu.pipeline_mode<synchronous>, transform_indices = @transform_1, window_bounds = array<i64: 32, 32>}, {transform_indices = @transform_2, window_bounds = array<i64: 32, 256>}]} {
    %c0 = arith.constant 0 : index
    %c0_0 = arith.constant 0 : index
    %0 = vector.load %arg1[%c0, %c0_0] : memref<32x256xf32, #tpu.memory_space<vmem>>, vector<32x256xf32>
    %c0_1 = arith.constant 0 : index
    %c0_2 = arith.constant 0 : index
    %1 = vector.load %arg2[%c0_1, %c0_2] : memref<32x32xf32, #tpu.memory_space<vmem>>, vector<32x32xf32>
    %cst = arith.constant dense<0.000000e+00> : vector<32x256xf32>
    %2 = tpu.matmul %1, %0, %cst {dimension_numbers = #tpu.dot_dimension_numbers<[1], [0], [0], [1], [0, 0, 1, 1], [], []>} : vector<32x32xf32>, vector<32x256xf32>, vector<32x256xf32> -> vector<32x256xf32>
    %cst_3 = arith.constant dense<0.000000e+00> : vector<32xf32>
    %3 = vector.multi_reduction <add>, %2, %cst_3 [1] : vector<32x256xf32> to vector<32xf32>
    %4 = vector.shape_cast %3 : vector<32xf32> to vector<32x1xf32>
    %cst_4 = arith.constant 2.560000e+02 : f32
    %5 = vector.broadcast %cst_4 : f32 to vector<32x1xf32>
    %6 = arith.divf %4, %5 : vector<32x1xf32>
    %7 = vector.broadcast %6 : vector<32x1xf32> to vector<32x256xf32>
    %8 = arith.subf %0, %7 : vector<32x256xf32>
    %9 = arith.mulf %8, %8 : vector<32x256xf32>
    %cst_5 = arith.constant dense<0.000000e+00> : vector<32x256xf32>
    %10 = tpu.matmul %1, %9, %cst_5 {dimension_numbers = #tpu.dot_dimension_numbers<[1], [0], [0], [1], [0, 0, 1, 1], [], []>} : vector<32x32xf32>, vector<32x256xf32>, vector<32x256xf32> -> vector<32x256xf32>
    %cst_6 = arith.constant dense<0.000000e+00> : vector<32xf32>
    %11 = vector.multi_reduction <add>, %10, %cst_6 [1] : vector<32x256xf32> to vector<32xf32>
    %12 = vector.shape_cast %11 : vector<32xf32> to vector<32x1xf32>
    %cst_7 = arith.constant 2.560000e+02 : f32
    %13 = vector.broadcast %cst_7 : f32 to vector<32x1xf32>
    %14 = arith.divf %12, %13 : vector<32x1xf32>
    %cst_8 = arith.constant 9.99999974E-6 : f32
    %15 = vector.broadcast %cst_8 : f32 to vector<32x1xf32>
    %16 = arith.addf %14, %15 : vector<32x1xf32>
    %17 = math.rsqrt %16 : vector<32x1xf32>
    %18 = vector.broadcast %17 : vector<32x1xf32> to vector<32x256xf32>
    %19 = arith.mulf %8, %18 : vector<32x256xf32>
    %c0_9 = arith.constant 0 : index
    %c0_10 = arith.constant 0 : index
    %20 = vector.load %arg3[%c0_9, %c0_10] : memref<32x256xf32, #tpu.memory_space<vmem>>, vector<32x256xf32>
    tpu.vector_store %arg3[%c0_9, %c0_10], %19 {strides = array<i32>} : memref<32x256xf32, #tpu.memory_space<vmem>>, vector<32x256xf32>,
    return
  }
  func.func @transform_0(%arg0: i32) -> (i32, i32) {
    %c0_i32 = arith.constant 0 : i32
    %c0_i32_0 = arith.constant 0 : i32
    return %c0_i32, %arg0 : i32, i32
  }
  func.func @transform_1(%arg0: i32) -> (i32, i32) {
    %c0_i32 = arith.constant 0 : i32
    %c0_i32_0 = arith.constant 0 : i32
    %c0_i32_1 = arith.constant 0 : i32
    return %c0_i32, %c0_i32_0 : i32, i32
  }
  func.func @transform_2(%arg0: i32) -> (i32, i32) {
    %c0_i32 = arith.constant 0 : i32
    %c0_i32_0 = arith.constant 0 : i32
    return %c0_i32, %arg0 : i32, i32
  }
}

module attributes {stable_mosaic.version = 11 : i64} {
  func.func @_spectral_cm_kernel(%arg0: i32, %arg1: memref<28x2x64xf32, #tpu.memory_space<vmem>>, %arg2: memref<28x64x64xf32, #tpu.memory_space<vmem>>, %arg3: memref<28x2x64xf32, #tpu.memory_space<vmem>>) attributes {dimension_semantics = [#tpu.dimension_semantics<arbitrary>], iteration_bounds = array<i64: 1>, scalar_prefetch = 0 : i64, scratch_operands = 0 : i64, tpu.core_type = #tpu.core_type<tc>, window_params = [{pipeline_mode = #tpu.pipeline_mode<synchronous>, transform_indices = @transform_0, window_bounds = array<i64: 28, 2, 64>}, {pipeline_mode = #tpu.pipeline_mode<synchronous>, transform_indices = @transform_1, window_bounds = array<i64: 28, 64, 64>}, {pipeline_mode = #tpu.pipeline_mode<synchronous>, transform_indices = @transform_2, window_bounds = array<i64: 28, 2, 64>}]} {
    %c0 = arith.constant 0 : index
    %c0_0 = arith.constant 0 : index
    %c0_1 = arith.constant 0 : index
    %0 = vector.load %arg1[%c0, %c0_0, %c0_1] : memref<28x2x64xf32, #tpu.memory_space<vmem>>, vector<1x2x64xf32>
    %1 = vector.shape_cast %0 : vector<1x2x64xf32> to vector<2x64xf32>
    %c0_2 = arith.constant 0 : index
    %c0_3 = arith.constant 0 : index
    %c0_4 = arith.constant 0 : index
    %2 = vector.load %arg2[%c0_2, %c0_3, %c0_4] : memref<28x64x64xf32, #tpu.memory_space<vmem>>, vector<1x64x64xf32>
    %3 = vector.shape_cast %2 : vector<1x64x64xf32> to vector<64x64xf32>
    %cst = arith.constant dense<0.000000e+00> : vector<2x64xf32>
    %4 = tpu.matmul %1, %3, %cst {dimension_numbers = #tpu.dot_dimension_numbers<[1], [0], [0], [1], [0, 0, 1, 1], [], []>} : vector<2x64xf32>, vector<64x64xf32>, vector<2x64xf32> -> vector<2x64xf32>
    %c0_5 = arith.constant 0 : index
    %c0_6 = arith.constant 0 : index
    %c0_7 = arith.constant 0 : index
    %5 = vector.load %arg3[%c0_5, %c0_6, %c0_7] : memref<28x2x64xf32, #tpu.memory_space<vmem>>, vector<1x2x64xf32>
    %6 = vector.shape_cast %5 : vector<1x2x64xf32> to vector<2x64xf32>
    %7 = vector.shape_cast %4 : vector<2x64xf32> to vector<1x2x64xf32>
    tpu.vector_store %arg3[%c0_5, %c0_6, %c0_7], %7 {strides = array<i32>} : memref<28x2x64xf32, #tpu.memory_space<vmem>>, vector<1x2x64xf32>,
    %c1 = arith.constant 1 : index
    %c0_8 = arith.constant 0 : index
    %c0_9 = arith.constant 0 : index
    %8 = vector.load %arg1[%c1, %c0_8, %c0_9] : memref<28x2x64xf32, #tpu.memory_space<vmem>>, vector<1x2x64xf32>
    %9 = vector.shape_cast %8 : vector<1x2x64xf32> to vector<2x64xf32>
    %c1_10 = arith.constant 1 : index
    %c0_11 = arith.constant 0 : index
    %c0_12 = arith.constant 0 : index
    %10 = vector.load %arg2[%c1_10, %c0_11, %c0_12] : memref<28x64x64xf32, #tpu.memory_space<vmem>>, vector<1x64x64xf32>
    %11 = vector.shape_cast %10 : vector<1x64x64xf32> to vector<64x64xf32>
    %cst_13 = arith.constant dense<0.000000e+00> : vector<2x64xf32>
    %12 = tpu.matmul %9, %11, %cst_13 {dimension_numbers = #tpu.dot_dimension_numbers<[1], [0], [0], [1], [0, 0, 1, 1], [], []>} : vector<2x64xf32>, vector<64x64xf32>, vector<2x64xf32> -> vector<2x64xf32>
    %c1_14 = arith.constant 1 : index
    %c0_15 = arith.constant 0 : index
    %c0_16 = arith.constant 0 : index
    %13 = vector.load %arg3[%c1_14, %c0_15, %c0_16] : memref<28x2x64xf32, #tpu.memory_space<vmem>>, vector<1x2x64xf32>
    %14 = vector.shape_cast %13 : vector<1x2x64xf32> to vector<2x64xf32>
    %15 = vector.shape_cast %12 : vector<2x64xf32> to vector<1x2x64xf32>
    tpu.vector_store %arg3[%c1_14, %c0_15, %c0_16], %15 {strides = array<i32>} : memref<28x2x64xf32, #tpu.memory_space<vmem>>, vector<1x2x64xf32>,
    %c2 = arith.constant 2 : index
    %c0_17 = arith.constant 0 : index
    %c0_18 = arith.constant 0 : index
    %16 = vector.load %arg1[%c2, %c0_17, %c0_18] : memref<28x2x64xf32, #tpu.memory_space<vmem>>, vector<1x2x64xf32>
    %17 = vector.shape_cast %16 : vector<1x2x64xf32> to vector<2x64xf32>
    %c2_19 = arith.constant 2 : index
    %c0_20 = arith.constant 0 : index
    %c0_21 = arith.constant 0 : index
    %18 = vector.load %arg2[%c2_19, %c0_20, %c0_21] : memref<28x64x64xf32, #tpu.memory_space<vmem>>, vector<1x64x64xf32>
    %19 = vector.shape_cast %18 : vector<1x64x64xf32> to vector<64x64xf32>
    %cst_22 = arith.constant dense<0.000000e+00> : vector<2x64xf32>
    %20 = tpu.matmul %17, %19, %cst_22 {dimension_numbers = #tpu.dot_dimension_numbers<[1], [0], [0], [1], [0, 0, 1, 1], [], []>} : vector<2x64xf32>, vector<64x64xf32>, vector<2x64xf32> -> vector<2x64xf32>
    %c2_23 = arith.constant 2 : index
    %c0_24 = arith.constant 0 : index
    %c0_25 = arith.constant 0 : index
    %21 = vector.load %arg3[%c2_23, %c0_24, %c0_25] : memref<28x2x64xf32, #tpu.memory_space<vmem>>, vector<1x2x64xf32>
    %22 = vector.shape_cast %21 : vector<1x2x64xf32> to vector<2x64xf32>
    %23 = vector.shape_cast %20 : vector<2x64xf32> to vector<1x2x64xf32>
    tpu.vector_store %arg3[%c2_23, %c0_24, %c0_25], %23 {strides = array<i32>} : memref<28x2x64xf32, #tpu.memory_space<vmem>>, vector<1x2x64xf32>,
    %c3 = arith.constant 3 : index
    %c0_26 = arith.constant 0 : index
    %c0_27 = arith.constant 0 : index
    %24 = vector.load %arg1[%c3, %c0_26, %c0_27] : memref<28x2x64xf32, #tpu.memory_space<vmem>>, vector<1x2x64xf32>
    %25 = vector.shape_cast %24 : vector<1x2x64xf32> to vector<2x64xf32>
    %c3_28 = arith.constant 3 : index
    %c0_29 = arith.constant 0 : index
    %c0_30 = arith.constant 0 : index
    %26 = vector.load %arg2[%c3_28, %c0_29, %c0_30] : memref<28x64x64xf32, #tpu.memory_space<vmem>>, vector<1x64x64xf32>
    %27 = vector.shape_cast %26 : vector<1x64x64xf32> to vector<64x64xf32>
    %cst_31 = arith.constant dense<0.000000e+00> : vector<2x64xf32>
    %28 = tpu.matmul %25, %27, %cst_31 {dimension_numbers = #tpu.dot_dimension_numbers<[1], [0], [0], [1], [0, 0, 1, 1], [], []>} : vector<2x64xf32>, vector<64x64xf32>, vector<2x64xf32> -> vector<2x64xf32>
    %c3_32 = arith.constant 3 : index
    %c0_33 = arith.constant 0 : index
    %c0_34 = arith.constant 0 : index
    %29 = vector.load %arg3[%c3_32, %c0_33, %c0_34] : memref<28x2x64xf32, #tpu.memory_space<vmem>>, vector<1x2x64xf32>
    %30 = vector.shape_cast %29 : vector<1x2x64xf32> to vector<2x64xf32>
    %31 = vector.shape_cast %28 : vector<2x64xf32> to vector<1x2x64xf32>
    tpu.vector_store %arg3[%c3_32, %c0_33, %c0_34], %31 {strides = array<i32>} : memref<28x2x64xf32, #tpu.memory_space<vmem>>, vector<1x2x64xf32>,
    %c4 = arith.constant 4 : index
    %c0_35 = arith.constant 0 : index
    %c0_36 = arith.constant 0 : index
    %32 = vector.load %arg1[%c4, %c0_35, %c0_36] : memref<28x2x64xf32, #tpu.memory_space<vmem>>, vector<1x2x64xf32>
    %33 = vector.shape_cast %32 : vector<1x2x64xf32> to vector<2x64xf32>
    %c4_37 = arith.constant 4 : index
    %c0_38 = arith.constant 0 : index
    %c0_39 = arith.constant 0 : index
    %34 = vector.load %arg2[%c4_37, %c0_38, %c0_39] : memref<28x64x64xf32, #tpu.memory_space<vmem>>, vector<1x64x64xf32>
    %35 = vector.shape_cast %34 : vector<1x64x64xf32> to vector<64x64xf32>
    %cst_40 = arith.constant dense<0.000000e+00> : vector<2x64xf32>
    %36 = tpu.matmul %33, %35, %cst_40 {dimension_numbers = #tpu.dot_dimension_numbers<[1], [0], [0], [1], [0, 0, 1, 1], [], []>} : vector<2x64xf32>, vector<64x64xf32>, vector<2x64xf32> -> vector<2x64xf32>
    %c4_41 = arith.constant 4 : index
    %c0_42 = arith.constant 0 : index
    %c0_43 = arith.constant 0 : index
    %37 = vector.load %arg3[%c4_41, %c0_42, %c0_43] : memref<28x2x64xf32, #tpu.memory_space<vmem>>, vector<1x2x64xf32>
    %38 = vector.shape_cast %37 : vector<1x2x64xf32> to vector<2x64xf32>
    %39 = vector.shape_cast %36 : vector<2x64xf32> to vector<1x2x64xf32>
    tpu.vector_store %arg3[%c4_41, %c0_42, %c0_43], %39 {strides = array<i32>} : memref<28x2x64xf32, #tpu.memory_space<vmem>>, vector<1x2x64xf32>,
    %c5 = arith.constant 5 : index
    %c0_44 = arith.constant 0 : index
    %c0_45 = arith.constant 0 : index
    %40 = vector.load %arg1[%c5, %c0_44, %c0_45] : memref<28x2x64xf32, #tpu.memory_space<vmem>>, vector<1x2x64xf32>
    %41 = vector.shape_cast %40 : vector<1x2x64xf32> to vector<2x64xf32>
    %c5_46 = arith.constant 5 : index
    %c0_47 = arith.constant 0 : index
    %c0_48 = arith.constant 0 : index
    %42 = vector.load %arg2[%c5_46, %c0_47, %c0_48] : memref<28x64x64xf32, #tpu.memory_space<vmem>>, vector<1x64x64xf32>
    %43 = vector.shape_cast %42 : vector<1x64x64xf32> to vector<64x64xf32>
    %cst_49 = arith.constant dense<0.000000e+00> : vector<2x64xf32>
    %44 = tpu.matmul %41, %43, %cst_49 {dimension_numbers = #tpu.dot_dimension_numbers<[1], [0], [0], [1], [0, 0, 1, 1], [], []>} : vector<2x64xf32>, vector<64x64xf32>, vector<2x64xf32> -> vector<2x64xf32>
    %c5_50 = arith.constant 5 : index
    %c0_51 = arith.constant 0 : index
    %c0_52 = arith.constant 0 : index
    %45 = vector.load %arg3[%c5_50, %c0_51, %c0_52] : memref<28x2x64xf32, #tpu.memory_space<vmem>>, vector<1x2x64xf32>
    %46 = vector.shape_cast %45 : vector<1x2x64xf32> to vector<2x64xf32>
    %47 = vector.shape_cast %44 : vector<2x64xf32> to vector<1x2x64xf32>
    tpu.vector_store %arg3[%c5_50, %c0_51, %c0_52], %47 {strides = array<i32>} : memref<28x2x64xf32, #tpu.memory_space<vmem>>, vector<1x2x64xf32>,
    %c6 = arith.constant 6 : index
    %c0_53 = arith.constant 0 : index
    %c0_54 = arith.constant 0 : index
    %48 = vector.load %arg1[%c6, %c0_53, %c0_54] : memref<28x2x64xf32, #tpu.memory_space<vmem>>, vector<1x2x64xf32>
    %49 = vector.shape_cast %48 : vector<1x2x64xf32> to vector<2x64xf32>
    %c6_55 = arith.constant 6 : index
    %c0_56 = arith.constant 0 : index
    %c0_57 = arith.constant 0 : index
    %50 = vector.load %arg2[%c6_55, %c0_56, %c0_57] : memref<28x64x64xf32, #tpu.memory_space<vmem>>, vector<1x64x64xf32>
    %51 = vector.shape_cast %50 : vector<1x64x64xf32> to vector<64x64xf32>
    %cst_58 = arith.constant dense<0.000000e+00> : vector<2x64xf32>
    %52 = tpu.matmul %49, %51, %cst_58 {dimension_numbers = #tpu.dot_dimension_numbers<[1], [0], [0], [1], [0, 0, 1, 1], [], []>} : vector<2x64xf32>, vector<64x64xf32>, vector<2x64xf32> -> vector<2x64xf32>
    %c6_59 = arith.constant 6 : index
    %c0_60 = arith.constant 0 : index
    %c0_61 = arith.constant 0 : index
    %53 = vector.load %arg3[%c6_59, %c0_60, %c0_61] : memref<28x2x64xf32, #tpu.memory_space<vmem>>, vector<1x2x64xf32>
    %54 = vector.shape_cast %53 : vector<1x2x64xf32> to vector<2x64xf32>
    %55 = vector.shape_cast %52 : vector<2x64xf32> to vector<1x2x64xf32>
    tpu.vector_store %arg3[%c6_59, %c0_60, %c0_61], %55 {strides = array<i32>} : memref<28x2x64xf32, #tpu.memory_space<vmem>>, vector<1x2x64xf32>,
    %c7 = arith.constant 7 : index
    %c0_62 = arith.constant 0 : index
    %c0_63 = arith.constant 0 : index
    %56 = vector.load %arg1[%c7, %c0_62, %c0_63] : memref<28x2x64xf32, #tpu.memory_space<vmem>>, vector<1x2x64xf32>
    %57 = vector.shape_cast %56 : vector<1x2x64xf32> to vector<2x64xf32>
    %c7_64 = arith.constant 7 : index
    %c0_65 = arith.constant 0 : index
    %c0_66 = arith.constant 0 : index
    %58 = vector.load %arg2[%c7_64, %c0_65, %c0_66] : memref<28x64x64xf32, #tpu.memory_space<vmem>>, vector<1x64x64xf32>
    %59 = vector.shape_cast %58 : vector<1x64x64xf32> to vector<64x64xf32>
    %cst_67 = arith.constant dense<0.000000e+00> : vector<2x64xf32>
    %60 = tpu.matmul %57, %59, %cst_67 {dimension_numbers = #tpu.dot_dimension_numbers<[1], [0], [0], [1], [0, 0, 1, 1], [], []>} : vector<2x64xf32>, vector<64x64xf32>, vector<2x64xf32> -> vector<2x64xf32>
    %c7_68 = arith.constant 7 : index
    %c0_69 = arith.constant 0 : index
    %c0_70 = arith.constant 0 : index
    %61 = vector.load %arg3[%c7_68, %c0_69, %c0_70] : memref<28x2x64xf32, #tpu.memory_space<vmem>>, vector<1x2x64xf32>
    %62 = vector.shape_cast %61 : vector<1x2x64xf32> to vector<2x64xf32>
    %63 = vector.shape_cast %60 : vector<2x64xf32> to vector<1x2x64xf32>
    tpu.vector_store %arg3[%c7_68, %c0_69, %c0_70], %63 {strides = array<i32>} : memref<28x2x64xf32, #tpu.memory_space<vmem>>, vector<1x2x64xf32>,
    %c8 = arith.constant 8 : index
    %c0_71 = arith.constant 0 : index
    %c0_72 = arith.constant 0 : index
    %64 = vector.load %arg1[%c8, %c0_71, %c0_72] : memref<28x2x64xf32, #tpu.memory_space<vmem>>, vector<1x2x64xf32>
    %65 = vector.shape_cast %64 : vector<1x2x64xf32> to vector<2x64xf32>
    %c8_73 = arith.constant 8 : index
    %c0_74 = arith.constant 0 : index
    %c0_75 = arith.constant 0 : index
    %66 = vector.load %arg2[%c8_73, %c0_74, %c0_75] : memref<28x64x64xf32, #tpu.memory_space<vmem>>, vector<1x64x64xf32>
    %67 = vector.shape_cast %66 : vector<1x64x64xf32> to vector<64x64xf32>
    %cst_76 = arith.constant dense<0.000000e+00> : vector<2x64xf32>
    %68 = tpu.matmul %65, %67, %cst_76 {dimension_numbers = #tpu.dot_dimension_numbers<[1], [0], [0], [1], [0, 0, 1, 1], [], []>} : vector<2x64xf32>, vector<64x64xf32>, vector<2x64xf32> -> vector<2x64xf32>
    %c8_77 = arith.constant 8 : index
    %c0_78 = arith.constant 0 : index
    %c0_79 = arith.constant 0 : index
    %69 = vector.load %arg3[%c8_77, %c0_78, %c0_79] : memref<28x2x64xf32, #tpu.memory_space<vmem>>, vector<1x2x64xf32>
    %70 = vector.shape_cast %69 : vector<1x2x64xf32> to vector<2x64xf32>
    %71 = vector.shape_cast %68 : vector<2x64xf32> to vector<1x2x64xf32>
    tpu.vector_store %arg3[%c8_77, %c0_78, %c0_79], %71 {strides = array<i32>} : memref<28x2x64xf32, #tpu.memory_space<vmem>>, vector<1x2x64xf32>,
    %c9 = arith.constant 9 : index
    %c0_80 = arith.constant 0 : index
    %c0_81 = arith.constant 0 : index
    %72 = vector.load %arg1[%c9, %c0_80, %c0_81] : memref<28x2x64xf32, #tpu.memory_space<vmem>>, vector<1x2x64xf32>
    %73 = vector.shape_cast %72 : vector<1x2x64xf32> to vector<2x64xf32>
    %c9_82 = arith.constant 9 : index
    %c0_83 = arith.constant 0 : index
    %c0_84 = arith.constant 0 : index
    %74 = vector.load %arg2[%c9_82, %c0_83, %c0_84] : memref<28x64x64xf32, #tpu.memory_space<vmem>>, vector<1x64x64xf32>
    %75 = vector.shape_cast %74 : vector<1x64x64xf32> to vector<64x64xf32>
    %cst_85 = arith.constant dense<0.000000e+00> : vector<2x64xf32>
    %76 = tpu.matmul %73, %75, %cst_85 {dimension_numbers = #tpu.dot_dimension_numbers<[1], [0], [0], [1], [0, 0, 1, 1], [], []>} : vector<2x64xf32>, vector<64x64xf32>, vector<2x64xf32> -> vector<2x64xf32>
    %c9_86 = arith.constant 9 : index
    %c0_87 = arith.constant 0 : index
    %c0_88 = arith.constant 0 : index
    %77 = vector.load %arg3[%c9_86, %c0_87, %c0_88] : memref<28x2x64xf32, #tpu.memory_space<vmem>>, vector<1x2x64xf32>
    %78 = vector.shape_cast %77 : vector<1x2x64xf32> to vector<2x64xf32>
    %79 = vector.shape_cast %76 : vector<2x64xf32> to vector<1x2x64xf32>
    tpu.vector_store %arg3[%c9_86, %c0_87, %c0_88], %79 {strides = array<i32>} : memref<28x2x64xf32, #tpu.memory_space<vmem>>, vector<1x2x64xf32>,
    %c10 = arith.constant 10 : index
    %c0_89 = arith.constant 0 : index
    %c0_90 = arith.constant 0 : index
    %80 = vector.load %arg1[%c10, %c0_89, %c0_90] : memref<28x2x64xf32, #tpu.memory_space<vmem>>, vector<1x2x64xf32>
    %81 = vector.shape_cast %80 : vector<1x2x64xf32> to vector<2x64xf32>
    %c10_91 = arith.constant 10 : index
    %c0_92 = arith.constant 0 : index
    %c0_93 = arith.constant 0 : index
    %82 = vector.load %arg2[%c10_91, %c0_92, %c0_93] : memref<28x64x64xf32, #tpu.memory_space<vmem>>, vector<1x64x64xf32>
    %83 = vector.shape_cast %82 : vector<1x64x64xf32> to vector<64x64xf32>
    %cst_94 = arith.constant dense<0.000000e+00> : vector<2x64xf32>
    %84 = tpu.matmul %81, %83, %cst_94 {dimension_numbers = #tpu.dot_dimension_numbers<[1], [0], [0], [1], [0, 0, 1, 1], [], []>} : vector<2x64xf32>, vector<64x64xf32>, vector<2x64xf32> -> vector<2x64xf32>
    %c10_95 = arith.constant 10 : index
    %c0_96 = arith.constant 0 : index
    %c0_97 = arith.constant 0 : index
    %85 = vector.load %arg3[%c10_95, %c0_96, %c0_97] : memref<28x2x64xf32, #tpu.memory_space<vmem>>, vector<1x2x64xf32>
    %86 = vector.shape_cast %85 : vector<1x2x64xf32> to vector<2x64xf32>
    %87 = vector.shape_cast %84 : vector<2x64xf32> to vector<1x2x64xf32>
    tpu.vector_store %arg3[%c10_95, %c0_96, %c0_97], %87 {strides = array<i32>} : memref<28x2x64xf32, #tpu.memory_space<vmem>>, vector<1x2x64xf32>,
    %c11 = arith.constant 11 : index
    %c0_98 = arith.constant 0 : index
    %c0_99 = arith.constant 0 : index
    %88 = vector.load %arg1[%c11, %c0_98, %c0_99] : memref<28x2x64xf32, #tpu.memory_space<vmem>>, vector<1x2x64xf32>
    %89 = vector.shape_cast %88 : vector<1x2x64xf32> to vector<2x64xf32>
    %c11_100 = arith.constant 11 : index
    %c0_101 = arith.constant 0 : index
    %c0_102 = arith.constant 0 : index
    %90 = vector.load %arg2[%c11_100, %c0_101, %c0_102] : memref<28x64x64xf32, #tpu.memory_space<vmem>>, vector<1x64x64xf32>
    %91 = vector.shape_cast %90 : vector<1x64x64xf32> to vector<64x64xf32>
    %cst_103 = arith.constant dense<0.000000e+00> : vector<2x64xf32>
    %92 = tpu.matmul %89, %91, %cst_103 {dimension_numbers = #tpu.dot_dimension_numbers<[1], [0], [0], [1], [0, 0, 1, 1], [], []>} : vector<2x64xf32>, vector<64x64xf32>, vector<2x64xf32> -> vector<2x64xf32>
    %c11_104 = arith.constant 11 : index
    %c0_105 = arith.constant 0 : index
    %c0_106 = arith.constant 0 : index
    %93 = vector.load %arg3[%c11_104, %c0_105, %c0_106] : memref<28x2x64xf32, #tpu.memory_space<vmem>>, vector<1x2x64xf32>
    %94 = vector.shape_cast %93 : vector<1x2x64xf32> to vector<2x64xf32>
    %95 = vector.shape_cast %92 : vector<2x64xf32> to vector<1x2x64xf32>
    tpu.vector_store %arg3[%c11_104, %c0_105, %c0_106], %95 {strides = array<i32>} : memref<28x2x64xf32, #tpu.memory_space<vmem>>, vector<1x2x64xf32>,
    %c12 = arith.constant 12 : index
    %c0_107 = arith.constant 0 : index
    %c0_108 = arith.constant 0 : index
    %96 = vector.load %arg1[%c12, %c0_107, %c0_108] : memref<28x2x64xf32, #tpu.memory_space<vmem>>, vector<1x2x64xf32>
    %97 = vector.shape_cast %96 : vector<1x2x64xf32> to vector<2x64xf32>
    %c12_109 = arith.constant 12 : index
    %c0_110 = arith.constant 0 : index
    %c0_111 = arith.constant 0 : index
    %98 = vector.load %arg2[%c12_109, %c0_110, %c0_111] : memref<28x64x64xf32, #tpu.memory_space<vmem>>, vector<1x64x64xf32>
    %99 = vector.shape_cast %98 : vector<1x64x64xf32> to vector<64x64xf32>
    %cst_112 = arith.constant dense<0.000000e+00> : vector<2x64xf32>
    %100 = tpu.matmul %97, %99, %cst_112 {dimension_numbers = #tpu.dot_dimension_numbers<[1], [0], [0], [1], [0, 0, 1, 1], [], []>} : vector<2x64xf32>, vector<64x64xf32>, vector<2x64xf32> -> vector<2x64xf32>
    %c12_113 = arith.constant 12 : index
    %c0_114 = arith.constant 0 : index
    %c0_115 = arith.constant 0 : index
    %101 = vector.load %arg3[%c12_113, %c0_114, %c0_115] : memref<28x2x64xf32, #tpu.memory_space<vmem>>, vector<1x2x64xf32>
    %102 = vector.shape_cast %101 : vector<1x2x64xf32> to vector<2x64xf32>
    %103 = vector.shape_cast %100 : vector<2x64xf32> to vector<1x2x64xf32>
    tpu.vector_store %arg3[%c12_113, %c0_114, %c0_115], %103 {strides = array<i32>} : memref<28x2x64xf32, #tpu.memory_space<vmem>>, vector<1x2x64xf32>,
    %c13 = arith.constant 13 : index
    %c0_116 = arith.constant 0 : index
    %c0_117 = arith.constant 0 : index
    %104 = vector.load %arg1[%c13, %c0_116, %c0_117] : memref<28x2x64xf32, #tpu.memory_space<vmem>>, vector<1x2x64xf32>
    %105 = vector.shape_cast %104 : vector<1x2x64xf32> to vector<2x64xf32>
    %c13_118 = arith.constant 13 : index
    %c0_119 = arith.constant 0 : index
    %c0_120 = arith.constant 0 : index
    %106 = vector.load %arg2[%c13_118, %c0_119, %c0_120] : memref<28x64x64xf32, #tpu.memory_space<vmem>>, vector<1x64x64xf32>
    %107 = vector.shape_cast %106 : vector<1x64x64xf32> to vector<64x64xf32>
    %cst_121 = arith.constant dense<0.000000e+00> : vector<2x64xf32>
    %108 = tpu.matmul %105, %107, %cst_121 {dimension_numbers = #tpu.dot_dimension_numbers<[1], [0], [0], [1], [0, 0, 1, 1], [], []>} : vector<2x64xf32>, vector<64x64xf32>, vector<2x64xf32> -> vector<2x64xf32>
    %c13_122 = arith.constant 13 : index
    %c0_123 = arith.constant 0 : index
    %c0_124 = arith.constant 0 : index
    %109 = vector.load %arg3[%c13_122, %c0_123, %c0_124] : memref<28x2x64xf32, #tpu.memory_space<vmem>>, vector<1x2x64xf32>
    %110 = vector.shape_cast %109 : vector<1x2x64xf32> to vector<2x64xf32>
    %111 = vector.shape_cast %108 : vector<2x64xf32> to vector<1x2x64xf32>
    tpu.vector_store %arg3[%c13_122, %c0_123, %c0_124], %111 {strides = array<i32>} : memref<28x2x64xf32, #tpu.memory_space<vmem>>, vector<1x2x64xf32>,
    %c14 = arith.constant 14 : index
    %c0_125 = arith.constant 0 : index
    %c0_126 = arith.constant 0 : index
    %112 = vector.load %arg1[%c14, %c0_125, %c0_126] : memref<28x2x64xf32, #tpu.memory_space<vmem>>, vector<1x2x64xf32>
    %113 = vector.shape_cast %112 : vector<1x2x64xf32> to vector<2x64xf32>
    %c14_127 = arith.constant 14 : index
    %c0_128 = arith.constant 0 : index
    %c0_129 = arith.constant 0 : index
    %114 = vector.load %arg2[%c14_127, %c0_128, %c0_129] : memref<28x64x64xf32, #tpu.memory_space<vmem>>, vector<1x64x64xf32>
    %115 = vector.shape_cast %114 : vector<1x64x64xf32> to vector<64x64xf32>
    %cst_130 = arith.constant dense<0.000000e+00> : vector<2x64xf32>
    %116 = tpu.matmul %113, %115, %cst_130 {dimension_numbers = #tpu.dot_dimension_numbers<[1], [0], [0], [1], [0, 0, 1, 1], [], []>} : vector<2x64xf32>, vector<64x64xf32>, vector<2x64xf32> -> vector<2x64xf32>
    %c14_131 = arith.constant 14 : index
    %c0_132 = arith.constant 0 : index
    %c0_133 = arith.constant 0 : index
    %117 = vector.load %arg3[%c14_131, %c0_132, %c0_133] : memref<28x2x64xf32, #tpu.memory_space<vmem>>, vector<1x2x64xf32>
    %118 = vector.shape_cast %117 : vector<1x2x64xf32> to vector<2x64xf32>
    %119 = vector.shape_cast %116 : vector<2x64xf32> to vector<1x2x64xf32>
    tpu.vector_store %arg3[%c14_131, %c0_132, %c0_133], %119 {strides = array<i32>} : memref<28x2x64xf32, #tpu.memory_space<vmem>>, vector<1x2x64xf32>,
    %c15 = arith.constant 15 : index
    %c0_134 = arith.constant 0 : index
    %c0_135 = arith.constant 0 : index
    %120 = vector.load %arg1[%c15, %c0_134, %c0_135] : memref<28x2x64xf32, #tpu.memory_space<vmem>>, vector<1x2x64xf32>
    %121 = vector.shape_cast %120 : vector<1x2x64xf32> to vector<2x64xf32>
    %c15_136 = arith.constant 15 : index
    %c0_137 = arith.constant 0 : index
    %c0_138 = arith.constant 0 : index
    %122 = vector.load %arg2[%c15_136, %c0_137, %c0_138] : memref<28x64x64xf32, #tpu.memory_space<vmem>>, vector<1x64x64xf32>
    %123 = vector.shape_cast %122 : vector<1x64x64xf32> to vector<64x64xf32>
    %cst_139 = arith.constant dense<0.000000e+00> : vector<2x64xf32>
    %124 = tpu.matmul %121, %123, %cst_139 {dimension_numbers = #tpu.dot_dimension_numbers<[1], [0], [0], [1], [0, 0, 1, 1], [], []>} : vector<2x64xf32>, vector<64x64xf32>, vector<2x64xf32> -> vector<2x64xf32>
    %c15_140 = arith.constant 15 : index
    %c0_141 = arith.constant 0 : index
    %c0_142 = arith.constant 0 : index
    %125 = vector.load %arg3[%c15_140, %c0_141, %c0_142] : memref<28x2x64xf32, #tpu.memory_space<vmem>>, vector<1x2x64xf32>
    %126 = vector.shape_cast %125 : vector<1x2x64xf32> to vector<2x64xf32>
    %127 = vector.shape_cast %124 : vector<2x64xf32> to vector<1x2x64xf32>
    tpu.vector_store %arg3[%c15_140, %c0_141, %c0_142], %127 {strides = array<i32>} : memref<28x2x64xf32, #tpu.memory_space<vmem>>, vector<1x2x64xf32>,
    %c16 = arith.constant 16 : index
    %c0_143 = arith.constant 0 : index
    %c0_144 = arith.constant 0 : index
    %128 = vector.load %arg1[%c16, %c0_143, %c0_144] : memref<28x2x64xf32, #tpu.memory_space<vmem>>, vector<1x2x64xf32>
    %129 = vector.shape_cast %128 : vector<1x2x64xf32> to vector<2x64xf32>
    %c16_145 = arith.constant 16 : index
    %c0_146 = arith.constant 0 : index
    %c0_147 = arith.constant 0 : index
    %130 = vector.load %arg2[%c16_145, %c0_146, %c0_147] : memref<28x64x64xf32, #tpu.memory_space<vmem>>, vector<1x64x64xf32>
    %131 = vector.shape_cast %130 : vector<1x64x64xf32> to vector<64x64xf32>
    %cst_148 = arith.constant dense<0.000000e+00> : vector<2x64xf32>
    %132 = tpu.matmul %129, %131, %cst_148 {dimension_numbers = #tpu.dot_dimension_numbers<[1], [0], [0], [1], [0, 0, 1, 1], [], []>} : vector<2x64xf32>, vector<64x64xf32>, vector<2x64xf32> -> vector<2x64xf32>
    %c16_149 = arith.constant 16 : index
    %c0_150 = arith.constant 0 : index
    %c0_151 = arith.constant 0 : index
    %133 = vector.load %arg3[%c16_149, %c0_150, %c0_151] : memref<28x2x64xf32, #tpu.memory_space<vmem>>, vector<1x2x64xf32>
    %134 = vector.shape_cast %133 : vector<1x2x64xf32> to vector<2x64xf32>
    %135 = vector.shape_cast %132 : vector<2x64xf32> to vector<1x2x64xf32>
    tpu.vector_store %arg3[%c16_149, %c0_150, %c0_151], %135 {strides = array<i32>} : memref<28x2x64xf32, #tpu.memory_space<vmem>>, vector<1x2x64xf32>,
    %c17 = arith.constant 17 : index
    %c0_152 = arith.constant 0 : index
    %c0_153 = arith.constant 0 : index
    %136 = vector.load %arg1[%c17, %c0_152, %c0_153] : memref<28x2x64xf32, #tpu.memory_space<vmem>>, vector<1x2x64xf32>
    %137 = vector.shape_cast %136 : vector<1x2x64xf32> to vector<2x64xf32>
    %c17_154 = arith.constant 17 : index
    %c0_155 = arith.constant 0 : index
    %c0_156 = arith.constant 0 : index
    %138 = vector.load %arg2[%c17_154, %c0_155, %c0_156] : memref<28x64x64xf32, #tpu.memory_space<vmem>>, vector<1x64x64xf32>
    %139 = vector.shape_cast %138 : vector<1x64x64xf32> to vector<64x64xf32>
    %cst_157 = arith.constant dense<0.000000e+00> : vector<2x64xf32>
    %140 = tpu.matmul %137, %139, %cst_157 {dimension_numbers = #tpu.dot_dimension_numbers<[1], [0], [0], [1], [0, 0, 1, 1], [], []>} : vector<2x64xf32>, vector<64x64xf32>, vector<2x64xf32> -> vector<2x64xf32>
    %c17_158 = arith.constant 17 : index
    %c0_159 = arith.constant 0 : index
    %c0_160 = arith.constant 0 : index
    %141 = vector.load %arg3[%c17_158, %c0_159, %c0_160] : memref<28x2x64xf32, #tpu.memory_space<vmem>>, vector<1x2x64xf32>
    %142 = vector.shape_cast %141 : vector<1x2x64xf32> to vector<2x64xf32>
    %143 = vector.shape_cast %140 : vector<2x64xf32> to vector<1x2x64xf32>
    tpu.vector_store %arg3[%c17_158, %c0_159, %c0_160], %143 {strides = array<i32>} : memref<28x2x64xf32, #tpu.memory_space<vmem>>, vector<1x2x64xf32>,
    %c18 = arith.constant 18 : index
    %c0_161 = arith.constant 0 : index
    %c0_162 = arith.constant 0 : index
    %144 = vector.load %arg1[%c18, %c0_161, %c0_162] : memref<28x2x64xf32, #tpu.memory_space<vmem>>, vector<1x2x64xf32>
    %145 = vector.shape_cast %144 : vector<1x2x64xf32> to vector<2x64xf32>
    %c18_163 = arith.constant 18 : index
    %c0_164 = arith.constant 0 : index
    %c0_165 = arith.constant 0 : index
    %146 = vector.load %arg2[%c18_163, %c0_164, %c0_165] : memref<28x64x64xf32, #tpu.memory_space<vmem>>, vector<1x64x64xf32>
    %147 = vector.shape_cast %146 : vector<1x64x64xf32> to vector<64x64xf32>
    %cst_166 = arith.constant dense<0.000000e+00> : vector<2x64xf32>
    %148 = tpu.matmul %145, %147, %cst_166 {dimension_numbers = #tpu.dot_dimension_numbers<[1], [0], [0], [1], [0, 0, 1, 1], [], []>} : vector<2x64xf32>, vector<64x64xf32>, vector<2x64xf32> -> vector<2x64xf32>
    %c18_167 = arith.constant 18 : index
    %c0_168 = arith.constant 0 : index
    %c0_169 = arith.constant 0 : index
    %149 = vector.load %arg3[%c18_167, %c0_168, %c0_169] : memref<28x2x64xf32, #tpu.memory_space<vmem>>, vector<1x2x64xf32>
    %150 = vector.shape_cast %149 : vector<1x2x64xf32> to vector<2x64xf32>
    %151 = vector.shape_cast %148 : vector<2x64xf32> to vector<1x2x64xf32>
    tpu.vector_store %arg3[%c18_167, %c0_168, %c0_169], %151 {strides = array<i32>} : memref<28x2x64xf32, #tpu.memory_space<vmem>>, vector<1x2x64xf32>,
    %c19 = arith.constant 19 : index
    %c0_170 = arith.constant 0 : index
    %c0_171 = arith.constant 0 : index
    %152 = vector.load %arg1[%c19, %c0_170, %c0_171] : memref<28x2x64xf32, #tpu.memory_space<vmem>>, vector<1x2x64xf32>
    %153 = vector.shape_cast %152 : vector<1x2x64xf32> to vector<2x64xf32>
    %c19_172 = arith.constant 19 : index
    %c0_173 = arith.constant 0 : index
    %c0_174 = arith.constant 0 : index
    %154 = vector.load %arg2[%c19_172, %c0_173, %c0_174] : memref<28x64x64xf32, #tpu.memory_space<vmem>>, vector<1x64x64xf32>
    %155 = vector.shape_cast %154 : vector<1x64x64xf32> to vector<64x64xf32>
    %cst_175 = arith.constant dense<0.000000e+00> : vector<2x64xf32>
    %156 = tpu.matmul %153, %155, %cst_175 {dimension_numbers = #tpu.dot_dimension_numbers<[1], [0], [0], [1], [0, 0, 1, 1], [], []>} : vector<2x64xf32>, vector<64x64xf32>, vector<2x64xf32> -> vector<2x64xf32>
    %c19_176 = arith.constant 19 : index
    %c0_177 = arith.constant 0 : index
    %c0_178 = arith.constant 0 : index
    %157 = vector.load %arg3[%c19_176, %c0_177, %c0_178] : memref<28x2x64xf32, #tpu.memory_space<vmem>>, vector<1x2x64xf32>
    %158 = vector.shape_cast %157 : vector<1x2x64xf32> to vector<2x64xf32>
    %159 = vector.shape_cast %156 : vector<2x64xf32> to vector<1x2x64xf32>
    tpu.vector_store %arg3[%c19_176, %c0_177, %c0_178], %159 {strides = array<i32>} : memref<28x2x64xf32, #tpu.memory_space<vmem>>, vector<1x2x64xf32>,
    %c20 = arith.constant 20 : index
    %c0_179 = arith.constant 0 : index
    %c0_180 = arith.constant 0 : index
    %160 = vector.load %arg1[%c20, %c0_179, %c0_180] : memref<28x2x64xf32, #tpu.memory_space<vmem>>, vector<1x2x64xf32>
    %161 = vector.shape_cast %160 : vector<1x2x64xf32> to vector<2x64xf32>
    %c20_181 = arith.constant 20 : index
    %c0_182 = arith.constant 0 : index
    %c0_183 = arith.constant 0 : index
    %162 = vector.load %arg2[%c20_181, %c0_182, %c0_183] : memref<28x64x64xf32, #tpu.memory_space<vmem>>, vector<1x64x64xf32>
    %163 = vector.shape_cast %162 : vector<1x64x64xf32> to vector<64x64xf32>
    %cst_184 = arith.constant dense<0.000000e+00> : vector<2x64xf32>
    %164 = tpu.matmul %161, %163, %cst_184 {dimension_numbers = #tpu.dot_dimension_numbers<[1], [0], [0], [1], [0, 0, 1, 1], [], []>} : vector<2x64xf32>, vector<64x64xf32>, vector<2x64xf32> -> vector<2x64xf32>
    %c20_185 = arith.constant 20 : index
    %c0_186 = arith.constant 0 : index
    %c0_187 = arith.constant 0 : index
    %165 = vector.load %arg3[%c20_185, %c0_186, %c0_187] : memref<28x2x64xf32, #tpu.memory_space<vmem>>, vector<1x2x64xf32>
    %166 = vector.shape_cast %165 : vector<1x2x64xf32> to vector<2x64xf32>
    %167 = vector.shape_cast %164 : vector<2x64xf32> to vector<1x2x64xf32>
    tpu.vector_store %arg3[%c20_185, %c0_186, %c0_187], %167 {strides = array<i32>} : memref<28x2x64xf32, #tpu.memory_space<vmem>>, vector<1x2x64xf32>,
    %c21 = arith.constant 21 : index
    %c0_188 = arith.constant 0 : index
    %c0_189 = arith.constant 0 : index
    %168 = vector.load %arg1[%c21, %c0_188, %c0_189] : memref<28x2x64xf32, #tpu.memory_space<vmem>>, vector<1x2x64xf32>
    %169 = vector.shape_cast %168 : vector<1x2x64xf32> to vector<2x64xf32>
    %c21_190 = arith.constant 21 : index
    %c0_191 = arith.constant 0 : index
    %c0_192 = arith.constant 0 : index
    %170 = vector.load %arg2[%c21_190, %c0_191, %c0_192] : memref<28x64x64xf32, #tpu.memory_space<vmem>>, vector<1x64x64xf32>
    %171 = vector.shape_cast %170 : vector<1x64x64xf32> to vector<64x64xf32>
    %cst_193 = arith.constant dense<0.000000e+00> : vector<2x64xf32>
    %172 = tpu.matmul %169, %171, %cst_193 {dimension_numbers = #tpu.dot_dimension_numbers<[1], [0], [0], [1], [0, 0, 1, 1], [], []>} : vector<2x64xf32>, vector<64x64xf32>, vector<2x64xf32> -> vector<2x64xf32>
    %c21_194 = arith.constant 21 : index
    %c0_195 = arith.constant 0 : index
    %c0_196 = arith.constant 0 : index
    %173 = vector.load %arg3[%c21_194, %c0_195, %c0_196] : memref<28x2x64xf32, #tpu.memory_space<vmem>>, vector<1x2x64xf32>
    %174 = vector.shape_cast %173 : vector<1x2x64xf32> to vector<2x64xf32>
    %175 = vector.shape_cast %172 : vector<2x64xf32> to vector<1x2x64xf32>
    tpu.vector_store %arg3[%c21_194, %c0_195, %c0_196], %175 {strides = array<i32>} : memref<28x2x64xf32, #tpu.memory_space<vmem>>, vector<1x2x64xf32>,
    %c22 = arith.constant 22 : index
    %c0_197 = arith.constant 0 : index
    %c0_198 = arith.constant 0 : index
    %176 = vector.load %arg1[%c22, %c0_197, %c0_198] : memref<28x2x64xf32, #tpu.memory_space<vmem>>, vector<1x2x64xf32>
    %177 = vector.shape_cast %176 : vector<1x2x64xf32> to vector<2x64xf32>
    %c22_199 = arith.constant 22 : index
    %c0_200 = arith.constant 0 : index
    %c0_201 = arith.constant 0 : index
    %178 = vector.load %arg2[%c22_199, %c0_200, %c0_201] : memref<28x64x64xf32, #tpu.memory_space<vmem>>, vector<1x64x64xf32>
    %179 = vector.shape_cast %178 : vector<1x64x64xf32> to vector<64x64xf32>
    %cst_202 = arith.constant dense<0.000000e+00> : vector<2x64xf32>
    %180 = tpu.matmul %177, %179, %cst_202 {dimension_numbers = #tpu.dot_dimension_numbers<[1], [0], [0], [1], [0, 0, 1, 1], [], []>} : vector<2x64xf32>, vector<64x64xf32>, vector<2x64xf32> -> vector<2x64xf32>
    %c22_203 = arith.constant 22 : index
    %c0_204 = arith.constant 0 : index
    %c0_205 = arith.constant 0 : index
    %181 = vector.load %arg3[%c22_203, %c0_204, %c0_205] : memref<28x2x64xf32, #tpu.memory_space<vmem>>, vector<1x2x64xf32>
    %182 = vector.shape_cast %181 : vector<1x2x64xf32> to vector<2x64xf32>
    %183 = vector.shape_cast %180 : vector<2x64xf32> to vector<1x2x64xf32>
    tpu.vector_store %arg3[%c22_203, %c0_204, %c0_205], %183 {strides = array<i32>} : memref<28x2x64xf32, #tpu.memory_space<vmem>>, vector<1x2x64xf32>,
    %c23 = arith.constant 23 : index
    %c0_206 = arith.constant 0 : index
    %c0_207 = arith.constant 0 : index
    %184 = vector.load %arg1[%c23, %c0_206, %c0_207] : memref<28x2x64xf32, #tpu.memory_space<vmem>>, vector<1x2x64xf32>
    %185 = vector.shape_cast %184 : vector<1x2x64xf32> to vector<2x64xf32>
    %c23_208 = arith.constant 23 : index
    %c0_209 = arith.constant 0 : index
    %c0_210 = arith.constant 0 : index
    %186 = vector.load %arg2[%c23_208, %c0_209, %c0_210] : memref<28x64x64xf32, #tpu.memory_space<vmem>>, vector<1x64x64xf32>
    %187 = vector.shape_cast %186 : vector<1x64x64xf32> to vector<64x64xf32>
    %cst_211 = arith.constant dense<0.000000e+00> : vector<2x64xf32>
    %188 = tpu.matmul %185, %187, %cst_211 {dimension_numbers = #tpu.dot_dimension_numbers<[1], [0], [0], [1], [0, 0, 1, 1], [], []>} : vector<2x64xf32>, vector<64x64xf32>, vector<2x64xf32> -> vector<2x64xf32>
    %c23_212 = arith.constant 23 : index
    %c0_213 = arith.constant 0 : index
    %c0_214 = arith.constant 0 : index
    %189 = vector.load %arg3[%c23_212, %c0_213, %c0_214] : memref<28x2x64xf32, #tpu.memory_space<vmem>>, vector<1x2x64xf32>
    %190 = vector.shape_cast %189 : vector<1x2x64xf32> to vector<2x64xf32>
    %191 = vector.shape_cast %188 : vector<2x64xf32> to vector<1x2x64xf32>
    tpu.vector_store %arg3[%c23_212, %c0_213, %c0_214], %191 {strides = array<i32>} : memref<28x2x64xf32, #tpu.memory_space<vmem>>, vector<1x2x64xf32>,
    %c24 = arith.constant 24 : index
    %c0_215 = arith.constant 0 : index
    %c0_216 = arith.constant 0 : index
    %192 = vector.load %arg1[%c24, %c0_215, %c0_216] : memref<28x2x64xf32, #tpu.memory_space<vmem>>, vector<1x2x64xf32>
    %193 = vector.shape_cast %192 : vector<1x2x64xf32> to vector<2x64xf32>
    %c24_217 = arith.constant 24 : index
    %c0_218 = arith.constant 0 : index
    %c0_219 = arith.constant 0 : index
    %194 = vector.load %arg2[%c24_217, %c0_218, %c0_219] : memref<28x64x64xf32, #tpu.memory_space<vmem>>, vector<1x64x64xf32>
    %195 = vector.shape_cast %194 : vector<1x64x64xf32> to vector<64x64xf32>
    %cst_220 = arith.constant dense<0.000000e+00> : vector<2x64xf32>
    %196 = tpu.matmul %193, %195, %cst_220 {dimension_numbers = #tpu.dot_dimension_numbers<[1], [0], [0], [1], [0, 0, 1, 1], [], []>} : vector<2x64xf32>, vector<64x64xf32>, vector<2x64xf32> -> vector<2x64xf32>
    %c24_221 = arith.constant 24 : index
    %c0_222 = arith.constant 0 : index
    %c0_223 = arith.constant 0 : index
    %197 = vector.load %arg3[%c24_221, %c0_222, %c0_223] : memref<28x2x64xf32, #tpu.memory_space<vmem>>, vector<1x2x64xf32>
    %198 = vector.shape_cast %197 : vector<1x2x64xf32> to vector<2x64xf32>
    %199 = vector.shape_cast %196 : vector<2x64xf32> to vector<1x2x64xf32>
    tpu.vector_store %arg3[%c24_221, %c0_222, %c0_223], %199 {strides = array<i32>} : memref<28x2x64xf32, #tpu.memory_space<vmem>>, vector<1x2x64xf32>,
    %c25 = arith.constant 25 : index
    %c0_224 = arith.constant 0 : index
    %c0_225 = arith.constant 0 : index
    %200 = vector.load %arg1[%c25, %c0_224, %c0_225] : memref<28x2x64xf32, #tpu.memory_space<vmem>>, vector<1x2x64xf32>
    %201 = vector.shape_cast %200 : vector<1x2x64xf32> to vector<2x64xf32>
    %c25_226 = arith.constant 25 : index
    %c0_227 = arith.constant 0 : index
    %c0_228 = arith.constant 0 : index
    %202 = vector.load %arg2[%c25_226, %c0_227, %c0_228] : memref<28x64x64xf32, #tpu.memory_space<vmem>>, vector<1x64x64xf32>
    %203 = vector.shape_cast %202 : vector<1x64x64xf32> to vector<64x64xf32>
    %cst_229 = arith.constant dense<0.000000e+00> : vector<2x64xf32>
    %204 = tpu.matmul %201, %203, %cst_229 {dimension_numbers = #tpu.dot_dimension_numbers<[1], [0], [0], [1], [0, 0, 1, 1], [], []>} : vector<2x64xf32>, vector<64x64xf32>, vector<2x64xf32> -> vector<2x64xf32>
    %c25_230 = arith.constant 25 : index
    %c0_231 = arith.constant 0 : index
    %c0_232 = arith.constant 0 : index
    %205 = vector.load %arg3[%c25_230, %c0_231, %c0_232] : memref<28x2x64xf32, #tpu.memory_space<vmem>>, vector<1x2x64xf32>
    %206 = vector.shape_cast %205 : vector<1x2x64xf32> to vector<2x64xf32>
    %207 = vector.shape_cast %204 : vector<2x64xf32> to vector<1x2x64xf32>
    tpu.vector_store %arg3[%c25_230, %c0_231, %c0_232], %207 {strides = array<i32>} : memref<28x2x64xf32, #tpu.memory_space<vmem>>, vector<1x2x64xf32>,
    %c26 = arith.constant 26 : index
    %c0_233 = arith.constant 0 : index
    %c0_234 = arith.constant 0 : index
    %208 = vector.load %arg1[%c26, %c0_233, %c0_234] : memref<28x2x64xf32, #tpu.memory_space<vmem>>, vector<1x2x64xf32>
    %209 = vector.shape_cast %208 : vector<1x2x64xf32> to vector<2x64xf32>
    %c26_235 = arith.constant 26 : index
    %c0_236 = arith.constant 0 : index
    %c0_237 = arith.constant 0 : index
    %210 = vector.load %arg2[%c26_235, %c0_236, %c0_237] : memref<28x64x64xf32, #tpu.memory_space<vmem>>, vector<1x64x64xf32>
    %211 = vector.shape_cast %210 : vector<1x64x64xf32> to vector<64x64xf32>
    %cst_238 = arith.constant dense<0.000000e+00> : vector<2x64xf32>
    %212 = tpu.matmul %209, %211, %cst_238 {dimension_numbers = #tpu.dot_dimension_numbers<[1], [0], [0], [1], [0, 0, 1, 1], [], []>} : vector<2x64xf32>, vector<64x64xf32>, vector<2x64xf32> -> vector<2x64xf32>
    %c26_239 = arith.constant 26 : index
    %c0_240 = arith.constant 0 : index
    %c0_241 = arith.constant 0 : index
    %213 = vector.load %arg3[%c26_239, %c0_240, %c0_241] : memref<28x2x64xf32, #tpu.memory_space<vmem>>, vector<1x2x64xf32>
    %214 = vector.shape_cast %213 : vector<1x2x64xf32> to vector<2x64xf32>
    %215 = vector.shape_cast %212 : vector<2x64xf32> to vector<1x2x64xf32>
    tpu.vector_store %arg3[%c26_239, %c0_240, %c0_241], %215 {strides = array<i32>} : memref<28x2x64xf32, #tpu.memory_space<vmem>>, vector<1x2x64xf32>,
    %c27 = arith.constant 27 : index
    %c0_242 = arith.constant 0 : index
    %c0_243 = arith.constant 0 : index
    %216 = vector.load %arg1[%c27, %c0_242, %c0_243] : memref<28x2x64xf32, #tpu.memory_space<vmem>>, vector<1x2x64xf32>
    %217 = vector.shape_cast %216 : vector<1x2x64xf32> to vector<2x64xf32>
    %c27_244 = arith.constant 27 : index
    %c0_245 = arith.constant 0 : index
    %c0_246 = arith.constant 0 : index
    %218 = vector.load %arg2[%c27_244, %c0_245, %c0_246] : memref<28x64x64xf32, #tpu.memory_space<vmem>>, vector<1x64x64xf32>
    %219 = vector.shape_cast %218 : vector<1x64x64xf32> to vector<64x64xf32>
    %cst_247 = arith.constant dense<0.000000e+00> : vector<2x64xf32>
    %220 = tpu.matmul %217, %219, %cst_247 {dimension_numbers = #tpu.dot_dimension_numbers<[1], [0], [0], [1], [0, 0, 1, 1], [], []>} : vector<2x64xf32>, vector<64x64xf32>, vector<2x64xf32> -> vector<2x64xf32>
    %c27_248 = arith.constant 27 : index
    %c0_249 = arith.constant 0 : index
    %c0_250 = arith.constant 0 : index
    %221 = vector.load %arg3[%c27_248, %c0_249, %c0_250] : memref<28x2x64xf32, #tpu.memory_space<vmem>>, vector<1x2x64xf32>
    %222 = vector.shape_cast %221 : vector<1x2x64xf32> to vector<2x64xf32>
    %223 = vector.shape_cast %220 : vector<2x64xf32> to vector<1x2x64xf32>
    tpu.vector_store %arg3[%c27_248, %c0_249, %c0_250], %223 {strides = array<i32>} : memref<28x2x64xf32, #tpu.memory_space<vmem>>, vector<1x2x64xf32>,
    return
  }
  func.func @transform_0(%arg0: i32) -> (i32, i32, i32) {
    %c0_i32 = arith.constant 0 : i32
    %c0_i32_0 = arith.constant 0 : i32
    %c0_i32_1 = arith.constant 0 : i32
    %c0_i32_2 = arith.constant 0 : i32
    return %c0_i32, %c0_i32_0, %c0_i32_1 : i32, i32, i32
  }
  func.func @transform_1(%arg0: i32) -> (i32, i32, i32) {
    %c0_i32 = arith.constant 0 : i32
    %c0_i32_0 = arith.constant 0 : i32
    %c0_i32_1 = arith.constant 0 : i32
    %c0_i32_2 = arith.constant 0 : i32
    return %c0_i32, %c0_i32_0, %c0_i32_1 : i32, i32, i32
  }
  func.func @transform_2(%arg0: i32) -> (i32, i32, i32) {
    %c0_i32 = arith.constant 0 : i32
    %c0_i32_0 = arith.constant 0 : i32
    %c0_i32_1 = arith.constant 0 : i32
    %c0_i32_2 = arith.constant 0 : i32
    return %c0_i32, %c0_i32_0, %c0_i32_1 : i32, i32, i32
  }
}

module attributes {stable_mosaic.version = 11 : i64} {
  func.func @_block_tail_cm_kernel(%arg0: i32, %arg1: memref<32x512xf32, #tpu.memory_space<vmem>>, %arg2: memref<32x512xf32, #tpu.memory_space<vmem>>, %arg3: memref<32x32xf32, #tpu.memory_space<vmem>>, %arg4: memref<32x1xf32, #tpu.memory_space<vmem>>, %arg5: memref<32x32xf32, #tpu.memory_space<vmem>>, %arg6: memref<32x1xf32, #tpu.memory_space<vmem>>, %arg7: memref<32x32xf32, #tpu.memory_space<vmem>>, %arg8: memref<32x1xf32, #tpu.memory_space<vmem>>, %arg9: memref<32x512xf32, #tpu.memory_space<vmem>>) attributes {dimension_semantics = [#tpu.dimension_semantics<parallel>], iteration_bounds = array<i64: 1>, scalar_prefetch = 0 : i64, scratch_operands = 0 : i64, tpu.core_type = #tpu.core_type<tc>, window_params = [{transform_indices = @transform_0, window_bounds = array<i64: 32, 512>}, {transform_indices = @transform_1, window_bounds = array<i64: 32, 512>}, {pipeline_mode = #tpu.pipeline_mode<synchronous>, transform_indices = @transform_2, window_bounds = array<i64: 32, 32>}, {pipeline_mode = #tpu.pipeline_mode<synchronous>, transform_indices = @transform_3, window_bounds = array<i64: 32, 1>}, {pipeline_mode = #tpu.pipeline_mode<synchronous>, transform_indices = @transform_4, window_bounds = array<i64: 32, 32>}, {pipeline_mode = #tpu.pipeline_mode<synchronous>, transform_indices = @transform_5, window_bounds = array<i64: 32, 1>}, {pipeline_mode = #tpu.pipeline_mode<synchronous>, transform_indices = @transform_6, window_bounds = array<i64: 32, 32>}, {pipeline_mode = #tpu.pipeline_mode<synchronous>, transform_indices = @transform_7, window_bounds = array<i64: 32, 1>}, {transform_indices = @transform_8, window_bounds = array<i64: 32, 512>}]} {
    %c0 = arith.constant 0 : index
    %c0_0 = arith.constant 0 : index
    %0 = vector.load %arg3[%c0, %c0_0] : memref<32x32xf32, #tpu.memory_space<vmem>>, vector<32x32xf32>
    %c0_1 = arith.constant 0 : index
    %c0_2 = arith.constant 0 : index
    %1 = vector.load %arg2[%c0_1, %c0_2] : memref<32x512xf32, #tpu.memory_space<vmem>>, vector<32x512xf32>
    %cst = arith.constant dense<0.000000e+00> : vector<32x512xf32>
    %2 = tpu.matmul %0, %1, %cst {dimension_numbers = #tpu.dot_dimension_numbers<[1], [0], [0], [1], [0, 0, 1, 1], [], []>} : vector<32x32xf32>, vector<32x512xf32>, vector<32x512xf32> -> vector<32x512xf32>
    %c0_3 = arith.constant 0 : index
    %c0_4 = arith.constant 0 : index
    %3 = vector.load %arg4[%c0_3, %c0_4] : memref<32x1xf32, #tpu.memory_space<vmem>>, vector<32x1xf32>
    %4 = vector.broadcast %3 : vector<32x1xf32> to vector<32x512xf32>
    %5 = arith.addf %2, %4 : vector<32x512xf32>
    %cst_5 = arith.constant 5.000000e-01 : f32
    %6 = vector.broadcast %cst_5 : f32 to vector<32x512xf32>
    %7 = arith.mulf %6, %5 : vector<32x512xf32>
    %cst_6 = arith.constant 0.707106769 : f32
    %8 = vector.broadcast %cst_6 : f32 to vector<32x512xf32>
    %9 = arith.mulf %5, %8 : vector<32x512xf32>
    %10 = math.erf %9 : vector<32x512xf32>
    %cst_7 = arith.constant 1.000000e+00 : f32
    %11 = vector.broadcast %cst_7 : f32 to vector<32x512xf32>
    %12 = arith.addf %11, %10 : vector<32x512xf32>
    %13 = arith.mulf %7, %12 : vector<32x512xf32>
    %c0_8 = arith.constant 0 : index
    %c0_9 = arith.constant 0 : index
    %14 = vector.load %arg5[%c0_8, %c0_9] : memref<32x32xf32, #tpu.memory_space<vmem>>, vector<32x32xf32>
    %cst_10 = arith.constant dense<0.000000e+00> : vector<32x512xf32>
    %15 = tpu.matmul %14, %13, %cst_10 {dimension_numbers = #tpu.dot_dimension_numbers<[1], [0], [0], [1], [0, 0, 1, 1], [], []>} : vector<32x32xf32>, vector<32x512xf32>, vector<32x512xf32> -> vector<32x512xf32>
    %c0_11 = arith.constant 0 : index
    %c0_12 = arith.constant 0 : index
    %16 = vector.load %arg6[%c0_11, %c0_12] : memref<32x1xf32, #tpu.memory_space<vmem>>, vector<32x1xf32>
    %17 = vector.broadcast %16 : vector<32x1xf32> to vector<32x512xf32>
    %18 = arith.addf %15, %17 : vector<32x512xf32>
    %c0_13 = arith.constant 0 : index
    %c0_14 = arith.constant 0 : index
    %19 = vector.load %arg7[%c0_13, %c0_14] : memref<32x32xf32, #tpu.memory_space<vmem>>, vector<32x32xf32>
    %c0_15 = arith.constant 0 : index
    %c0_16 = arith.constant 0 : index
    %20 = vector.load %arg1[%c0_15, %c0_16] : memref<32x512xf32, #tpu.memory_space<vmem>>, vector<32x512xf32>
    %cst_17 = arith.constant dense<0.000000e+00> : vector<32x512xf32>
    %21 = tpu.matmul %19, %20, %cst_17 {dimension_numbers = #tpu.dot_dimension_numbers<[1], [0], [0], [1], [0, 0, 1, 1], [], []>} : vector<32x32xf32>, vector<32x512xf32>, vector<32x512xf32> -> vector<32x512xf32>
    %c0_18 = arith.constant 0 : index
    %c0_19 = arith.constant 0 : index
    %22 = vector.load %arg8[%c0_18, %c0_19] : memref<32x1xf32, #tpu.memory_space<vmem>>, vector<32x1xf32>
    %23 = vector.broadcast %22 : vector<32x1xf32> to vector<32x512xf32>
    %24 = arith.addf %21, %23 : vector<32x512xf32>
    %25 = arith.addf %18, %24 : vector<32x512xf32>
    %cst_20 = arith.constant 5.000000e-01 : f32
    %26 = vector.broadcast %cst_20 : f32 to vector<32x512xf32>
    %27 = arith.mulf %26, %25 : vector<32x512xf32>
    %cst_21 = arith.constant 0.707106769 : f32
    %28 = vector.broadcast %cst_21 : f32 to vector<32x512xf32>
    %29 = arith.mulf %25, %28 : vector<32x512xf32>
    %30 = math.erf %29 : vector<32x512xf32>
    %cst_22 = arith.constant 1.000000e+00 : f32
    %31 = vector.broadcast %cst_22 : f32 to vector<32x512xf32>
    %32 = arith.addf %31, %30 : vector<32x512xf32>
    %33 = arith.mulf %27, %32 : vector<32x512xf32>
    %c0_23 = arith.constant 0 : index
    %c0_24 = arith.constant 0 : index
    %34 = vector.load %arg9[%c0_23, %c0_24] : memref<32x512xf32, #tpu.memory_space<vmem>>, vector<32x512xf32>
    tpu.vector_store %arg9[%c0_23, %c0_24], %33 {strides = array<i32>} : memref<32x512xf32, #tpu.memory_space<vmem>>, vector<32x512xf32>,
    return
  }
  func.func @transform_0(%arg0: i32) -> (i32, i32) {
    %c0_i32 = arith.constant 0 : i32
    %c0_i32_0 = arith.constant 0 : i32
    return %c0_i32, %arg0 : i32, i32
  }
  func.func @transform_1(%arg0: i32) -> (i32, i32) {
    %c0_i32 = arith.constant 0 : i32
    %c0_i32_0 = arith.constant 0 : i32
    return %c0_i32, %arg0 : i32, i32
  }
  func.func @transform_2(%arg0: i32) -> (i32, i32) {
    %c0_i32 = arith.constant 0 : i32
    %c0_i32_0 = arith.constant 0 : i32
    %c0_i32_1 = arith.constant 0 : i32
    return %c0_i32, %c0_i32_0 : i32, i32
  }
  func.func @transform_3(%arg0: i32) -> (i32, i32) {
    %c0_i32 = arith.constant 0 : i32
    %c0_i32_0 = arith.constant 0 : i32
    %c0_i32_1 = arith.constant 0 : i32
    return %c0_i32, %c0_i32_0 : i32, i32
  }
  func.func @transform_4(%arg0: i32) -> (i32, i32) {
    %c0_i32 = arith.constant 0 : i32
    %c0_i32_0 = arith.constant 0 : i32
    %c0_i32_1 = arith.constant 0 : i32
    return %c0_i32, %c0_i32_0 : i32, i32
  }
  func.func @transform_5(%arg0: i32) -> (i32, i32) {
    %c0_i32 = arith.constant 0 : i32
    %c0_i32_0 = arith.constant 0 : i32
    %c0_i32_1 = arith.constant 0 : i32
    return %c0_i32, %c0_i32_0 : i32, i32
  }
  func.func @transform_6(%arg0: i32) -> (i32, i32) {
    %c0_i32 = arith.constant 0 : i32
    %c0_i32_0 = arith.constant 0 : i32
    %c0_i32_1 = arith.constant 0 : i32
    return %c0_i32, %c0_i32_0 : i32, i32
  }
  func.func @transform_7(%arg0: i32) -> (i32, i32) {
    %c0_i32 = arith.constant 0 : i32
    %c0_i32_0 = arith.constant 0 : i32
    %c0_i32_1 = arith.constant 0 : i32
    return %c0_i32, %c0_i32_0 : i32, i32
  }
  func.func @transform_8(%arg0: i32) -> (i32, i32) {
    %c0_i32 = arith.constant 0 : i32
    %c0_i32_0 = arith.constant 0 : i32
    return %c0_i32, %arg0 : i32, i32
  }
}

module attributes {stable_mosaic.version = 11 : i64} {
  func.func @_block_tail_cm_kernel(%arg0: i32, %arg1: memref<32x512xf32, #tpu.memory_space<vmem>>, %arg2: memref<32x512xf32, #tpu.memory_space<vmem>>, %arg3: memref<32x32xf32, #tpu.memory_space<vmem>>, %arg4: memref<32x1xf32, #tpu.memory_space<vmem>>, %arg5: memref<32x32xf32, #tpu.memory_space<vmem>>, %arg6: memref<32x1xf32, #tpu.memory_space<vmem>>, %arg7: memref<32x32xf32, #tpu.memory_space<vmem>>, %arg8: memref<32x1xf32, #tpu.memory_space<vmem>>, %arg9: memref<32x512xf32, #tpu.memory_space<vmem>>) attributes {dimension_semantics = [#tpu.dimension_semantics<parallel>], iteration_bounds = array<i64: 1>, scalar_prefetch = 0 : i64, scratch_operands = 0 : i64, tpu.core_type = #tpu.core_type<tc>, window_params = [{transform_indices = @transform_0, window_bounds = array<i64: 32, 512>}, {transform_indices = @transform_1, window_bounds = array<i64: 32, 512>}, {pipeline_mode = #tpu.pipeline_mode<synchronous>, transform_indices = @transform_2, window_bounds = array<i64: 32, 32>}, {pipeline_mode = #tpu.pipeline_mode<synchronous>, transform_indices = @transform_3, window_bounds = array<i64: 32, 1>}, {pipeline_mode = #tpu.pipeline_mode<synchronous>, transform_indices = @transform_4, window_bounds = array<i64: 32, 32>}, {pipeline_mode = #tpu.pipeline_mode<synchronous>, transform_indices = @transform_5, window_bounds = array<i64: 32, 1>}, {pipeline_mode = #tpu.pipeline_mode<synchronous>, transform_indices = @transform_6, window_bounds = array<i64: 32, 32>}, {pipeline_mode = #tpu.pipeline_mode<synchronous>, transform_indices = @transform_7, window_bounds = array<i64: 32, 1>}, {transform_indices = @transform_8, window_bounds = array<i64: 32, 512>}]} {
    %c0 = arith.constant 0 : index
    %c0_0 = arith.constant 0 : index
    %0 = vector.load %arg3[%c0, %c0_0] : memref<32x32xf32, #tpu.memory_space<vmem>>, vector<32x32xf32>
    %c0_1 = arith.constant 0 : index
    %c0_2 = arith.constant 0 : index
    %1 = vector.load %arg2[%c0_1, %c0_2] : memref<32x512xf32, #tpu.memory_space<vmem>>, vector<32x512xf32>
    %cst = arith.constant dense<0.000000e+00> : vector<32x512xf32>
    %2 = tpu.matmul %0, %1, %cst {dimension_numbers = #tpu.dot_dimension_numbers<[1], [0], [0], [1], [0, 0, 1, 1], [], []>} : vector<32x32xf32>, vector<32x512xf32>, vector<32x512xf32> -> vector<32x512xf32>
    %c0_3 = arith.constant 0 : index
    %c0_4 = arith.constant 0 : index
    %3 = vector.load %arg4[%c0_3, %c0_4] : memref<32x1xf32, #tpu.memory_space<vmem>>, vector<32x1xf32>
    %4 = vector.broadcast %3 : vector<32x1xf32> to vector<32x512xf32>
    %5 = arith.addf %2, %4 : vector<32x512xf32>
    %cst_5 = arith.constant 5.000000e-01 : f32
    %6 = vector.broadcast %cst_5 : f32 to vector<32x512xf32>
    %7 = arith.mulf %6, %5 : vector<32x512xf32>
    %cst_6 = arith.constant 0.707106769 : f32
    %8 = vector.broadcast %cst_6 : f32 to vector<32x512xf32>
    %9 = arith.mulf %5, %8 : vector<32x512xf32>
    %10 = math.erf %9 : vector<32x512xf32>
    %cst_7 = arith.constant 1.000000e+00 : f32
    %11 = vector.broadcast %cst_7 : f32 to vector<32x512xf32>
    %12 = arith.addf %11, %10 : vector<32x512xf32>
    %13 = arith.mulf %7, %12 : vector<32x512xf32>
    %c0_8 = arith.constant 0 : index
    %c0_9 = arith.constant 0 : index
    %14 = vector.load %arg5[%c0_8, %c0_9] : memref<32x32xf32, #tpu.memory_space<vmem>>, vector<32x32xf32>
    %cst_10 = arith.constant dense<0.000000e+00> : vector<32x512xf32>
    %15 = tpu.matmul %14, %13, %cst_10 {dimension_numbers = #tpu.dot_dimension_numbers<[1], [0], [0], [1], [0, 0, 1, 1], [], []>} : vector<32x32xf32>, vector<32x512xf32>, vector<32x512xf32> -> vector<32x512xf32>
    %c0_11 = arith.constant 0 : index
    %c0_12 = arith.constant 0 : index
    %16 = vector.load %arg6[%c0_11, %c0_12] : memref<32x1xf32, #tpu.memory_space<vmem>>, vector<32x1xf32>
    %17 = vector.broadcast %16 : vector<32x1xf32> to vector<32x512xf32>
    %18 = arith.addf %15, %17 : vector<32x512xf32>
    %c0_13 = arith.constant 0 : index
    %c0_14 = arith.constant 0 : index
    %19 = vector.load %arg7[%c0_13, %c0_14] : memref<32x32xf32, #tpu.memory_space<vmem>>, vector<32x32xf32>
    %c0_15 = arith.constant 0 : index
    %c0_16 = arith.constant 0 : index
    %20 = vector.load %arg1[%c0_15, %c0_16] : memref<32x512xf32, #tpu.memory_space<vmem>>, vector<32x512xf32>
    %cst_17 = arith.constant dense<0.000000e+00> : vector<32x512xf32>
    %21 = tpu.matmul %19, %20, %cst_17 {dimension_numbers = #tpu.dot_dimension_numbers<[1], [0], [0], [1], [0, 0, 1, 1], [], []>} : vector<32x32xf32>, vector<32x512xf32>, vector<32x512xf32> -> vector<32x512xf32>
    %c0_18 = arith.constant 0 : index
    %c0_19 = arith.constant 0 : index
    %22 = vector.load %arg8[%c0_18, %c0_19] : memref<32x1xf32, #tpu.memory_space<vmem>>, vector<32x1xf32>
    %23 = vector.broadcast %22 : vector<32x1xf32> to vector<32x512xf32>
    %24 = arith.addf %21, %23 : vector<32x512xf32>
    %25 = arith.addf %18, %24 : vector<32x512xf32>
    %c0_20 = arith.constant 0 : index
    %c0_21 = arith.constant 0 : index
    %26 = vector.load %arg9[%c0_20, %c0_21] : memref<32x512xf32, #tpu.memory_space<vmem>>, vector<32x512xf32>
    tpu.vector_store %arg9[%c0_20, %c0_21], %25 {strides = array<i32>} : memref<32x512xf32, #tpu.memory_space<vmem>>, vector<32x512xf32>,
    return
  }
  func.func @transform_0(%arg0: i32) -> (i32, i32) {
    %c0_i32 = arith.constant 0 : i32
    %c0_i32_0 = arith.constant 0 : i32
    return %c0_i32, %arg0 : i32, i32
  }
  func.func @transform_1(%arg0: i32) -> (i32, i32) {
    %c0_i32 = arith.constant 0 : i32
    %c0_i32_0 = arith.constant 0 : i32
    return %c0_i32, %arg0 : i32, i32
  }
  func.func @transform_2(%arg0: i32) -> (i32, i32) {
    %c0_i32 = arith.constant 0 : i32
    %c0_i32_0 = arith.constant 0 : i32
    %c0_i32_1 = arith.constant 0 : i32
    return %c0_i32, %c0_i32_0 : i32, i32
  }
  func.func @transform_3(%arg0: i32) -> (i32, i32) {
    %c0_i32 = arith.constant 0 : i32
    %c0_i32_0 = arith.constant 0 : i32
    %c0_i32_1 = arith.constant 0 : i32
    return %c0_i32, %c0_i32_0 : i32, i32
  }
  func.func @transform_4(%arg0: i32) -> (i32, i32) {
    %c0_i32 = arith.constant 0 : i32
    %c0_i32_0 = arith.constant 0 : i32
    %c0_i32_1 = arith.constant 0 : i32
    return %c0_i32, %c0_i32_0 : i32, i32
  }
  func.func @transform_5(%arg0: i32) -> (i32, i32) {
    %c0_i32 = arith.constant 0 : i32
    %c0_i32_0 = arith.constant 0 : i32
    %c0_i32_1 = arith.constant 0 : i32
    return %c0_i32, %c0_i32_0 : i32, i32
  }
  func.func @transform_6(%arg0: i32) -> (i32, i32) {
    %c0_i32 = arith.constant 0 : i32
    %c0_i32_0 = arith.constant 0 : i32
    %c0_i32_1 = arith.constant 0 : i32
    return %c0_i32, %c0_i32_0 : i32, i32
  }
  func.func @transform_7(%arg0: i32) -> (i32, i32) {
    %c0_i32 = arith.constant 0 : i32
    %c0_i32_0 = arith.constant 0 : i32
    %c0_i32_1 = arith.constant 0 : i32
    return %c0_i32, %c0_i32_0 : i32, i32
  }
  func.func @transform_8(%arg0: i32) -> (i32, i32) {
    %c0_i32 = arith.constant 0 : i32
    %c0_i32_0 = arith.constant 0 : i32
    return %c0_i32, %arg0 : i32, i32
  }
}

module attributes {stable_mosaic.version = 11 : i64} {
  func.func @_gmlp_cm_kernel(%arg0: i32, %arg1: memref<32x512xf32, #tpu.memory_space<vmem>>, %arg2: memref<128x32xf32, #tpu.memory_space<vmem>>, %arg3: memref<128x1xf32, #tpu.memory_space<vmem>>, %arg4: memref<50x128xf32, #tpu.memory_space<vmem>>, %arg5: memref<50x1xf32, #tpu.memory_space<vmem>>, %arg6: memref<50x512xf32, #tpu.memory_space<vmem>>) attributes {dimension_semantics = [#tpu.dimension_semantics<parallel>], iteration_bounds = array<i64: 1>, scalar_prefetch = 0 : i64, scratch_operands = 0 : i64, tpu.core_type = #tpu.core_type<tc>, window_params = [{transform_indices = @transform_0, window_bounds = array<i64: 32, 512>}, {pipeline_mode = #tpu.pipeline_mode<synchronous>, transform_indices = @transform_1, window_bounds = array<i64: 128, 32>}, {pipeline_mode = #tpu.pipeline_mode<synchronous>, transform_indices = @transform_2, window_bounds = array<i64: 128, 1>}, {pipeline_mode = #tpu.pipeline_mode<synchronous>, transform_indices = @transform_3, window_bounds = array<i64: 50, 128>}, {pipeline_mode = #tpu.pipeline_mode<synchronous>, transform_indices = @transform_4, window_bounds = array<i64: 50, 1>}, {transform_indices = @transform_5, window_bounds = array<i64: 50, 512>}]} {
    %c0 = arith.constant 0 : index
    %c0_0 = arith.constant 0 : index
    %0 = vector.load %arg2[%c0, %c0_0] : memref<128x32xf32, #tpu.memory_space<vmem>>, vector<128x32xf32>
    %c0_1 = arith.constant 0 : index
    %c0_2 = arith.constant 0 : index
    %1 = vector.load %arg1[%c0_1, %c0_2] : memref<32x512xf32, #tpu.memory_space<vmem>>, vector<32x512xf32>
    %cst = arith.constant dense<0.000000e+00> : vector<128x512xf32>
    %2 = tpu.matmul %0, %1, %cst {dimension_numbers = #tpu.dot_dimension_numbers<[1], [0], [0], [1], [0, 0, 1, 1], [], []>} : vector<128x32xf32>, vector<32x512xf32>, vector<128x512xf32> -> vector<128x512xf32>
    %c0_3 = arith.constant 0 : index
    %c0_4 = arith.constant 0 : index
    %3 = vector.load %arg3[%c0_3, %c0_4] : memref<128x1xf32, #tpu.memory_space<vmem>>, vector<128x1xf32>
    %4 = vector.broadcast %3 : vector<128x1xf32> to vector<128x512xf32>
    %5 = arith.addf %2, %4 : vector<128x512xf32>
    %cst_5 = arith.constant 5.000000e-01 : f32
    %6 = vector.broadcast %cst_5 : f32 to vector<128x512xf32>
    %7 = arith.mulf %6, %5 : vector<128x512xf32>
    %cst_6 = arith.constant 0.707106769 : f32
    %8 = vector.broadcast %cst_6 : f32 to vector<128x512xf32>
    %9 = arith.mulf %5, %8 : vector<128x512xf32>
    %10 = math.erf %9 : vector<128x512xf32>
    %cst_7 = arith.constant 1.000000e+00 : f32
    %11 = vector.broadcast %cst_7 : f32 to vector<128x512xf32>
    %12 = arith.addf %11, %10 : vector<128x512xf32>
    %13 = arith.mulf %7, %12 : vector<128x512xf32>
    %c0_8 = arith.constant 0 : index
    %c0_9 = arith.constant 0 : index
    %14 = vector.load %arg4[%c0_8, %c0_9] : memref<50x128xf32, #tpu.memory_space<vmem>>, vector<50x128xf32>
    %cst_10 = arith.constant dense<0.000000e+00> : vector<50x512xf32>
    %15 = tpu.matmul %14, %13, %cst_10 {dimension_numbers = #tpu.dot_dimension_numbers<[1], [0], [0], [1], [0, 0, 1, 1], [], []>} : vector<50x128xf32>, vector<128x512xf32>, vector<50x512xf32> -> vector<50x512xf32>
    %c0_11 = arith.constant 0 : index
    %c0_12 = arith.constant 0 : index
    %16 = vector.load %arg5[%c0_11, %c0_12] : memref<50x1xf32, #tpu.memory_space<vmem>>, vector<50x1xf32>
    %17 = vector.broadcast %16 : vector<50x1xf32> to vector<50x512xf32>
    %18 = arith.addf %15, %17 : vector<50x512xf32>
    %c0_13 = arith.constant 0 : index
    %c0_14 = arith.constant 0 : index
    %19 = vector.load %arg6[%c0_13, %c0_14] : memref<50x512xf32, #tpu.memory_space<vmem>>, vector<50x512xf32>
    tpu.vector_store %arg6[%c0_13, %c0_14], %18 {strides = array<i32>} : memref<50x512xf32, #tpu.memory_space<vmem>>, vector<50x512xf32>,
    return
  }
  func.func @transform_0(%arg0: i32) -> (i32, i32) {
    %c0_i32 = arith.constant 0 : i32
    %c0_i32_0 = arith.constant 0 : i32
    return %c0_i32, %arg0 : i32, i32
  }
  func.func @transform_1(%arg0: i32) -> (i32, i32) {
    %c0_i32 = arith.constant 0 : i32
    %c0_i32_0 = arith.constant 0 : i32
    %c0_i32_1 = arith.constant 0 : i32
    return %c0_i32, %c0_i32_0 : i32, i32
  }
  func.func @transform_2(%arg0: i32) -> (i32, i32) {
    %c0_i32 = arith.constant 0 : i32
    %c0_i32_0 = arith.constant 0 : i32
    %c0_i32_1 = arith.constant 0 : i32
    return %c0_i32, %c0_i32_0 : i32, i32
  }
  func.func @transform_3(%arg0: i32) -> (i32, i32) {
    %c0_i32 = arith.constant 0 : i32
    %c0_i32_0 = arith.constant 0 : i32
    %c0_i32_1 = arith.constant 0 : i32
    return %c0_i32, %c0_i32_0 : i32, i32
  }
  func.func @transform_4(%arg0: i32) -> (i32, i32) {
    %c0_i32 = arith.constant 0 : i32
    %c0_i32_0 = arith.constant 0 : i32
    %c0_i32_1 = arith.constant 0 : i32
    return %c0_i32, %c0_i32_0 : i32, i32
  }
  func.func @transform_5(%arg0: i32) -> (i32, i32) {
    %c0_i32 = arith.constant 0 : i32
    %c0_i32_0 = arith.constant 0 : i32
    return %c0_i32, %arg0 : i32, i32
  }
}

</mosaic_0001>

<llo_original>
// kernel: gfno2d_forward.19
$region0: #{gfno2d_forward.19}
  #allocation0 [shape = 'u32[]', space=smem, size = 0x4, offset = 0x4, fixed_abs, tag = 'smem constant byte address 0x4 - core index']
  #allocation1 [shape = 'u32[144,128]{1,0:T(1,128)}', space=vmem, size = 0x12000, scoped, tag = 'internal scratch']
  %s0 = inlined_call_operand.vmem [shape: f32[32,512], index: 0, kind: input, shape index: {}]
  %s1 = inlined_call_operand.vmem [shape: f32[32,32], index: 1, kind: input, shape index: {}]
  %s2 = inlined_call_operand.vmem [shape: f32[32,512], index: 2, kind: output, shape index: {}]
  %s3 = sld [smem:[#allocation0]]
  $region83: #{gfno2d_forward.19} parent=0
    _
  %s5 = ssub.s32 1, %s3
  %s6 = scalar_select 0, %s5, %s3
  $region1: #{gfno2d_forward.19} parent=0
    #allocation2 [shape = 'u8[65536]{0}', space=vmem, size = 0x10000, scoped, tag = 'input window, operand 0']
    #allocation3 [shape = 'u8[65536]{0}', space=vmem, size = 0x10000, scoped, tag = 'output window, operand 0']
    loop: start=0, step=1, limit=4
    $region2: #{gfno2d_forward.19} parent=1 // loop_pre_header
      _
    $region3: #{gfno2d_forward.19} parent=1 // loop_header
      %s8 = sphi 0, %s12
      %p9 = scmp.ge.s32.totalorder %s8, 4
      %s18 = sphi 0, %s20
      %s21 = sphi 0, %s18
      %s22 = sphi 0, %s21
      %s38 = sphi 0, %s22
      %s42 = sphi 0, %s42
      %s44 = sphi 0, %s42
      %s45 = sphi 0, %s44
      %s59 = sphi 0, %s45
      %s65 = sphi 0, %s67
      %s68 = sphi 0, %s65
      %s69 = sphi 0, %s68
      %s85 = sphi 0, %s69
    $region4: #{gfno2d_forward.19} parent=1 // loop_header_branch
      %11 = sbr.rel (%p9) target = $region8
    $region5: #{gfno2d_forward.19} parent=1 // loop_body
      %s13 = ssub.s32 %s8, 1
      %s14 = ssub.s32 %s8, 2
      %s15 = sadd.s32 %s8, 1
      %s16 = ssub.s32 %s8, %s15
      %p17 = scmp.eq.s32.totalorder %s16, 0
      %s19 = sadd.s32 %s18, 1
      %s20 = scalar_select %p17, %s18, %s19
      %p23 = pneg %p17
      %p24 = scmp.eq.s32.totalorder %s8, 1
      %p25 = por %p23, %p24
      %p26 = scmp.ne.s32.totalorder %s18, %s21
      %p27 = scmp.eq.s32.totalorder %s8, 0
      %p28 = por %p26, %p27
      %p29 = scmp.ne.s32.totalorder %s18, %s21
      %p30 = scmp.eq.s32.totalorder %s13, 1
      %p31 = por %p29, %p30
      %p32 = scmp.ne.s32.totalorder %s21, %s22
      %p33 = scmp.eq.s32.totalorder %s13, 0
      %p34 = por %p32, %p33
      %p35 = scmp.ne.s32.totalorder %s21, %s22
      %p36 = scmp.eq.s32.totalorder %s14, 1
      %p37 = por %p35, %p36
      %p39 = scmp.ne.s32.totalorder %s22, %s38
      %p40 = scmp.eq.s32.totalorder %s14, 0
      %p41 = por %p39, %p40
      %s43 = sadd.s32 %s42, 1
      %p46 = scmp.eq.s32.totalorder %s8, 1
      %p47 = scmp.ne.s32.totalorder %s42, %s44
      %p48 = scmp.eq.s32.totalorder %s8, 0
      %p49 = por %p47, %p48
      %p50 = scmp.ne.s32.totalorder %s42, %s44
      %p51 = scmp.eq.s32.totalorder %s13, 1
      %p52 = por %p50, %p51
      %p53 = scmp.ne.s32.totalorder %s44, %s45
      %p54 = scmp.eq.s32.totalorder %s13, 0
      %p55 = por %p53, %p54
      %p56 = scmp.ne.s32.totalorder %s44, %s45
      %p57 = scmp.eq.s32.totalorder %s14, 1
      %p58 = por %p56, %p57
      %p60 = scmp.ne.s32.totalorder %s45, %s59
      %p61 = scmp.eq.s32.totalorder %s14, 0
      %p62 = por %p60, %p61
      %s63 = ssub.s32 %s8, %s15
      %p64 = scmp.eq.s32.totalorder %s63, 0
      %s66 = sadd.s32 %s65, 1
      %s67 = scalar_select %p64, %s65, %s66
      %p70 = pneg %p64
      %p71 = scmp.eq.s32.totalorder %s8, 1
      %p72 = por %p70, %p71
      %p73 = scmp.ne.s32.totalorder %s65, %s68
      %p74 = scmp.eq.s32.totalorder %s8, 0
      %p75 = por %p73, %p74
      %p76 = scmp.ne.s32.totalorder %s65, %s68
      %p77 = scmp.eq.s32.totalorder %s13, 1
      %p78 = por %p76, %p77
      %p79 = scmp.ne.s32.totalorder %s68, %s69
      %p80 = scmp.eq.s32.totalorder %s13, 0
      %p81 = por %p79, %p80
      %p82 = scmp.ne.s32.totalorder %s68, %s69
      %p83 = scmp.eq.s32.totalorder %s14, 1
      %p84 = por %p82, %p83
      %p86 = scmp.ne.s32.totalorder %s69, %s85
      %p87 = scmp.eq.s32.totalorder %s14, 0
      %p88 = por %p86, %p87
      %p89 = scmp.le.s32.totalorder 1, %s8
      %p90 = scmp.lt.s32.totalorder %s8, 3
      %p91 = pnand %p89, %p90
      %p92 = pneg %p91
      // Predicated region
      $region9: #{gfno2d_forward.19} parent=5 // pred_check
        _
      $region10: #{gfno2d_forward.19} parent=5 // pred_check_branch
        %94 = sbr.rel (%p91) target = $region12
      $region11: #{gfno2d_forward.19} parent=5 // pred_region
        %s95 = ssub.s32 %s8, 1
        // Predicated region
        $region13: #{gfno2d_forward.19} parent=11 // pred_check
          %p96 = pneg %p55
        $region14: #{gfno2d_forward.19} parent=11 // pred_check_branch
          %98 = sbr.rel (%p96) target = $region16
        $region15: #{gfno2d_forward.19} parent=11 // pred_region
          _
        $region16: #{gfno2d_forward.19} parent=11 // pred_fallthru
          _
      $region12: #{gfno2d_forward.19} parent=5 // pred_fallthru
        _
      %p99 = scmp.lt.s32.totalorder %s8, 2
      // Predicated region
      $region17: #{gfno2d_forward.19} parent=5 // pred_check
        %p100 = pneg %p99
      $region18: #{gfno2d_forward.19} parent=5 // pred_check_branch
        %102 = sbr.rel (%p100) target = $region20
      $region19: #{gfno2d_forward.19} parent=5 // pred_region
        // Predicated region
        $region21: #{gfno2d_forward.19} parent=19 // pred_check
          %p103 = pneg %p28
        $region22: #{gfno2d_forward.19} parent=19 // pred_check_branch
          %105 = sbr.rel (%p103) target = $region24
        $region23: #{gfno2d_forward.19} parent=19 // pred_region
          %s106 = sand.u32 %s18, 1
          %s107 = sand.u32 %s18, 1
          %s108 = smul.addr %s107, 64
          %s109 = scalar_lea.vmem [#allocation2], %s108
          %s110 = smul.u32 2, %s8
          %s111 = smul.addr %s110, 8
          %s112 = scalar_lea.vmem %s0, %s111
          // Predicated region
          $region25: #{gfno2d_forward.19} parent=23 // pred_check
            _
          $region26: #{gfno2d_forward.19} parent=23 // pred_check_branch
            %114 = sbr.rel (0) target = $region28
          $region27: #{gfno2d_forward.19} parent=23 // pred_region
            // Predicated region
            $region29: #{gfno2d_forward.19} parent=27 // pred_check
              _
            $region30: #{gfno2d_forward.19} parent=27 // pred_check_branch
              %116 = sbr.rel (0) target = $region32
            $region31: #{gfno2d_forward.19} parent=27 // pred_region
              loop: start=0, step=1, limit=1
              $region33: #{gfno2d_forward.19} parent=31 // loop_pre_header
                _
              $region34: #{gfno2d_forward.19} parent=31 // loop_header
                %s118 = sphi 0, %s122
                %p119 = scmp.ge.s32.totalorder %s118, 1
                %s123 = sphi %s112, %s112
                %s124 = sphi %s109, %s109
              $region35: #{gfno2d_forward.19} parent=31 // loop_header_branch
                %121 = sbr.rel (%p119) target = $region39
              $region36: #{gfno2d_forward.19} parent=31 // loop_body
                %v125 = vld [vmem:[%s123] sm:$0xff]
                %126 = vst [vmem:[%s124] sm:$0xff] %v125
                %v127 = vld [vmem:[%s123 + $0x8] sm:$0xff]
                %128 = vst [vmem:[%s124 + $0x8] sm:$0xff] %v127
                %v129 = vld [vmem:[%s123 + $0x20] sm:$0xff]
                %130 = vst [vmem:[%s124 + $0x10] sm:$0xff] %v129
                %v131 = vld [vmem:[%s123 + $0x28] sm:$0xff]
                %132 = vst [vmem:[%s124 + $0x18] sm:$0xff] %v131
                %v133 = vld [vmem:[%s123 + $0x40] sm:$0xff]
                %134 = vst [vmem:[%s124 + $0x20] sm:$0xff] %v133
                %v135 = vld [vmem:[%s123 + $0x48] sm:$0xff]
                %136 = vst [vmem:[%s124 + $0x28] sm:$0xff] %v135
                %v137 = vld [vmem:[%s123 + $0x60] sm:$0xff]
                %138 = vst [vmem:[%s124 + $0x30] sm:$0xff] %v137
                %v139 = vld [vmem:[%s123 + $0x68] sm:$0xff]
                %140 = vst [vmem:[%s124 + $0x38] sm:$0xff] %v139
              $region37: #{gfno2d_forward.19} parent=31 // loop_footer
                %s122 = sadd.s32 1, %s118
              $region38: #{gfno2d_forward.19} parent=31 // loop_footer_branch
                %117 = sbr.rel target = $region34
              $region39: #{gfno2d_forward.19} parent=31 // loop_exit
                _
            $region32: #{gfno2d_forward.19} parent=27 // pred_fallthru
              _
            // Predicated region
            $region40: #{gfno2d_forward.19} parent=27 // pred_check
              _
            $region41: #{gfno2d_forward.19} parent=27 // pred_check_branch
              %142 = sbr.rel target = $region43
            $region42: #{gfno2d_forward.19} parent=27 // pred_region
              _
            $region43: #{gfno2d_forward.19} parent=27 // pred_fallthru
              _
          $region28: #{gfno2d_forward.19} parent=23 // pred_fallthru
            _
          %143 = vnop
        $region24: #{gfno2d_forward.19} parent=19 // pred_fallthru
          _
      $region20: #{gfno2d_forward.19} parent=5 // pred_fallthru
        _
      %p144 = scmp.le.s32.totalorder 1, %s8
      %p145 = scmp.lt.s32.totalorder %s8, 3
      %p146 = pnand %p144, %p145
      %p147 = pneg %p146
      // Predicated region
      $region44: #{gfno2d_forward.19} parent=5 // pred_check
        _
      $region45: #{gfno2d_forward.19} parent=5 // pred_check_branch
        %149 = sbr.rel (%p146) target = $region47
      $region46: #{gfno2d_forward.19} parent=5 // pred_region
        %s150 = ssub.s32 %s8, 1
        %s151 = sand.u32 %s21, 1
        %s152 = sand.u32 %s21, 1
        %s153 = smul.addr %s152, 64
        %s154 = scalar_lea.vmem [#allocation2], %s153
        // Predicated region
        $region48: #{gfno2d_forward.19} parent=46 // pred_check
          %p155 = pneg %p34
        $region49: #{gfno2d_forward.19} parent=46 // pred_check_branch
          %157 = sbr.rel (%p155) target = $region51
        $region50: #{gfno2d_forward.19} parent=46 // pred_region
          _
        $region51: #{gfno2d_forward.19} parent=46 // pred_fallthru
          _
        %s158 = sand.u32 %s21, 1
        %s159 = sand.u32 %s21, 1
        %s160 = smul.addr %s159, 64
        %s161 = scalar_lea.vmem [#allocation2], %s160
        %p162 = pneg %p34
        %p163 = pneg %p31
        %p164 = pneg %p55
        %p165 = pneg %p52
        %p166 = pneg %p81
        %p167 = pneg %p78
        %s168 = sand.u32 %s68, 1
        %s169 = sand.u32 %s68, 1
        %s170 = smul.addr %s169, 64
        %s171 = scalar_lea.vmem [#allocation3], %s170
        %s172 = smul.u32 2, %s13
        %s173 = smul.u32 2, %s13
        %v174 = vld [vmem:[%s154] sm:$0xff]
        %v175 = vld [vmem:[%s154 + $0x8] sm:$0xff]
        %v176 = vld [vmem:[%s154 + $0x10] sm:$0xff]
        %v177 = vld [vmem:[%s154 + $0x18] sm:$0xff]
        %v178 = vld [vmem:[%s154 + $0x20] sm:$0xff]
        %v179 = vld [vmem:[%s154 + $0x28] sm:$0xff]
        %v180 = vld [vmem:[%s154 + $0x30] sm:$0xff]
        %v181 = vld [vmem:[%s154 + $0x38] sm:$0xff]
        %v182 = vld [vmem:[%s1] sm:$0xff]
        %v183 = vld [vmem:[%s1 + $0x8] sm:$0xff]
        %v184 = vld [vmem:[%s1 + $0x10] sm:$0xff]
        %v185 = vld [vmem:[%s1 + $0x18] sm:$0xff]
        %vm186 = vcmask 261120
        %v188 = vsel %vm186, %v182, 0
        %v191 = vsel %vm186, %v183, 0
        %v194 = vsel %vm186, %v184, 0
        %v197 = vsel %vm186, %v185, 0
        %199 = vmatprep.subr.mxu0 0.0
        %200 = vmatpush1.msra.mxu0 0.0
        %201 = vmatprep.subr.mxu0 0.0
        %202 = vmatpush1.msra.mxu0 0.0
        %203 = vmatprep.subr.mxu0 0.0
        %204 = vmatpush1.msra.mxu0 0.0
        %205 = vmatprep.subr.mxu0 0.0
        %206 = vmatpush1.msra.mxu0 0.0
        %207 = vmatprep.subr.mxu0 0.0
        %208 = vmatpush1.msra.mxu0 0.0
        %209 = vmatprep.subr.mxu0 0.0
        %210 = vmatpush1.msra.mxu0 0.0
        %211 = vmatprep.subr.mxu0 0.0
        %212 = vmatpush1.msra.mxu0 0.0
        %213 = vmatprep.subr.mxu0 0.0
        %214 = vmatpush1.msra.mxu0 0.0
        %215 = vmatprep.subr.mxu0 0.0
        %216 = vmatpush1.msra.mxu0 0.0
        %217 = vmatprep.subr.mxu0 0.0
        %218 = vmatpush1.msra.mxu0 0.0
        %219 = vmatprep.subr.mxu0 0.0
        %220 = vmatpush1.msra.mxu0 0.0
        %221 = vmatprep.subr.mxu0 0.0
        %222 = vmatpush1.msra.mxu0 0.0
        %223 = vmatprep.subr.mxu0 %v181
        %224 = vmatpush1.msra.mxu0 %v180
        %225 = vmatprep.subr.mxu0 %v179
        %226 = vmatpush1.msra.mxu0 %v178
        %227 = vmatprep.subr.mxu0 %v177
        %228 = vmatpush1.msra.mxu0 %v176
        %229 = vmatprep.subr.mxu0 %v175
        %230 = vmatpush1.msra.mxu0 %v174
        %231 = vmatprep.subr.mxu0 0.0
        %232 = vmatpush2.msra.mxu0 0.0
        %233 = vmatprep.subr.mxu0 0.0
        %234 = vmatpush2.msra.mxu0 0.0
        %235 = vmatprep.subr.mxu0 0.0
        %236 = vmatpush2.msra.mxu0 0.0
        %237 = vmatprep.subr.mxu0 0.0
        %238 = vmatpush2.msra.mxu0 0.0
        %239 = vmatprep.subr.mxu0 0.0
        %240 = vmatpush2.msra.mxu0 0.0
        %241 = vmatprep.subr.mxu0 0.0
        %242 = vmatpush2.msra.mxu0 0.0
        %243 = vmatprep.subr.mxu0 0.0
        %244 = vmatpush2.msra.mxu0 0.0
        %245 = vmatprep.subr.mxu0 0.0
        %246 = vmatpush2.msra.mxu0 0.0
        %247 = vmatprep.subr.mxu0 0.0
        %248 = vmatpush2.msra.mxu0 0.0
        %249 = vmatprep.subr.mxu0 0.0
        %250 = vmatpush2.msra.mxu0 0.0
        %251 = vmatprep.subr.mxu0 0.0
        %252 = vmatpush2.msra.mxu0 0.0
        %253 = vmatprep.subr.mxu0 0.0
        %254 = vmatpush2.msra.mxu0 0.0
        %255 = vmatprep.subr.mxu0 0.0
        %256 = vmatpush2.msra.mxu0 0.0
        %257 = vmatprep.subr.mxu0 0.0
        %258 = vmatpush2.msra.mxu0 0.0
        %259 = vmatprep.subr.mxu0 0.0
        %260 = vmatpush2.msra.mxu0 0.0
        %261 = vmatprep.subr.mxu0 0.0
        %262 = vmatpush2.msra.mxu0 0.0
        %263 = vmatprep.mubr.f32.mxu0 0.0
        %264 = vmatmul.mubr.f32.gmra.mxu0 %v188
        %v265 = vpop.f32.mrf.mxu0
        %v266 = vadd.f32 0.0, %v265
        %v267 = vpop.f32.mrf.mxu0
        %v268 = vadd.f32 0.0, %v267
        %269 = vmatprep.mubr.f32.mxu0 0.0
        %270 = vmatmul.mubr.f32.gmra.mxu0 %v191
        %v271 = vpop.f32.mrf.mxu0
        %v272 = vadd.f32 0.0, %v271
        %v273 = vpop.f32.mrf.mxu0
        %v274 = vadd.f32 0.0, %v273
        %275 = vmatprep.mubr.f32.mxu0 0.0
        %276 = vmatmul.mubr.f32.gmra.mxu0 %v194
        %v277 = vpop.f32.mrf.mxu0
        %v278 = vadd.f32 0.0, %v277
        %v279 = vpop.f32.mrf.mxu0
        %v280 = vadd.f32 0.0, %v279
        %281 = vmatprep.mubr.f32.mxu0 0.0
        %282 = vmatmul.mubr.f32.gmra.mxu0 %v197
        %v283 = vpop.f32.mrf.mxu0
        %v284 = vadd.f32 0.0, %v283
        %v285 = vpop.f32.mrf.mxu0
        %v286 = vadd.f32 0.0, %v285
        %287 = vdwg.mxu0
        %v288 = vadd.f32 %v266, %v268
        %289 = vadd.xlane.f32.xlu0 %v288
        %v290 = vpop.xlane.xlu0 %289
        %v291 = vadd.f32 %v272, %v274
        %292 = vadd.xlane.f32.xlu0 %v291
        %v293 = vpop.xlane.xlu0 %292
        %v294 = vadd.f32 %v278, %v280
        %295 = vadd.xlane.f32.xlu0 %v294
        %v296 = vpop.xlane.xlu0 %295
        %v297 = vadd.f32 %v284, %v286
        %298 = vadd.xlane.f32.xlu0 %v297
        %v299 = vpop.xlane.xlu0 %298
        %v300 = vrcp.pop 256.0
        %v301 = vmul.f32 %v290, %v300
        %v302 = vmul.f32 %v293, %v300
        %v303 = vmul.f32 %v296, %v300
        %v304 = vmul.f32 %v299, %v300
        %v305 = vsub.f32 %v174, %v301
        %v306 = vsub.f32 %v175, %v301
        %v307 = vsub.f32 %v176, %v302
        %v308 = vsub.f32 %v177, %v302
        %v309 = vsub.f32 %v178, %v303
        %v310 = vsub.f32 %v179, %v303
        %v311 = vsub.f32 %v180, %v304
        %v312 = vsub.f32 %v181, %v304
        %v313 = vmul.f32 %v305, %v305
        %v314 = vmul.f32 %v306, %v306
        %v315 = vmul.f32 %v307, %v307
        %v316 = vmul.f32 %v308, %v308
        %v317 = vmul.f32 %v309, %v309
        %v318 = vmul.f32 %v310, %v310
        %v319 = vmul.f32 %v311, %v311
        %v320 = vmul.f32 %v312, %v312
        %321 = vmatprep.subr.mxu0 0.0
        %322 = vmatpush1.msra.mxu0 0.0
        %323 = vmatprep.subr.mxu0 0.0
        %324 = vmatpush1.msra.mxu0 0.0
        %325 = vmatprep.subr.mxu0 0.0
        %326 = vmatpush1.msra.mxu0 0.0
        %327 = vmatprep.subr.mxu0 0.0
        %328 = vmatpush1.msra.mxu0 0.0
        %329 = vmatprep.subr.mxu0 0.0
        %330 = vmatpush1.msra.mxu0 0.0
        %331 = vmatprep.subr.mxu0 0.0
        %332 = vmatpush1.msra.mxu0 0.0
        %333 = vmatprep.subr.mxu0 0.0
        %334 = vmatpush1.msra.mxu0 0.0
        %335 = vmatprep.subr.mxu0 0.0
        %336 = vmatpush1.msra.mxu0 0.0
        %337 = vmatprep.subr.mxu0 0.0
        %338 = vmatpush1.msra.mxu0 0.0
        %339 = vmatprep.subr.mxu0 0.0
        %340 = vmatpush1.msra.mxu0 0.0
        %341 = vmatprep.subr.mxu0 0.0
        %342 = vmatpush1.msra.mxu0 0.0
        %343 = vmatprep.subr.mxu0 0.0
        %344 = vmatpush1.msra.mxu0 0.0
        %345 = vmatprep.subr.mxu0 %v320
        %346 = vmatpush1.msra.mxu0 %v319
        %347 = vmatprep.subr.mxu0 %v318
        %348 = vmatpush1.msra.mxu0 %v317
        %349 = vmatprep.subr.mxu0 %v316
        %350 = vmatpush1.msra.mxu0 %v315
        %351 = vmatprep.subr.mxu0 %v314
        %352 = vmatpush1.msra.mxu0 %v313
        %353 = vmatprep.subr.mxu0 0.0
        %354 = vmatpush2.msra.mxu0 0.0
        %355 = vmatprep.subr.mxu0 0.0
        %356 = vmatpush2.msra.mxu0 0.0
        %357 = vmatprep.subr.mxu0 0.0
        %358 = vmatpush2.msra.mxu0 0.0
        %359 = vmatprep.subr.mxu0 0.0
        %360 = vmatpush2.msra.mxu0 0.0
        %361 = vmatprep.subr.mxu0 0.0
        %362 = vmatpush2.msra.mxu0 0.0
        %363 = vmatprep.subr.mxu0 0.0
        %364 = vmatpush2.msra.mxu0 0.0
        %365 = vmatprep.subr.mxu0 0.0
        %366 = vmatpush2.msra.mxu0 0.0
        %367 = vmatprep.subr.mxu0 0.0
        %368 = vmatpush2.msra.mxu0 0.0
        %369 = vmatprep.subr.mxu0 0.0
        %370 = vmatpush2.msra.mxu0 0.0
        %371 = vmatprep.subr.mxu0 0.0
        %372 = vmatpush2.msra.mxu0 0.0
        %373 = vmatprep.subr.mxu0 0.0
        %374 = vmatpush2.msra.mxu0 0.0
        %375 = vmatprep.subr.mxu0 0.0
        %376 = vmatpush2.msra.mxu0 0.0
        %377 = vmatprep.subr.mxu0 0.0
        %378 = vmatpush2.msra.mxu0 0.0
        %379 = vmatprep.subr.mxu0 0.0
        %380 = vmatpush2.msra.mxu0 0.0
        %381 = vmatprep.subr.mxu0 0.0
        %382 = vmatpush2.msra.mxu0 0.0
        %383 = vmatprep.subr.mxu0 0.0
        %384 = vmatpush2.msra.mxu0 0.0
        %385 = vmatprep.mubr.f32.mxu0 0.0
        %386 = vmatmul.mubr.f32.gmra.mxu0 %v188
        %v387 = vpop.f32.mrf.mxu0
        %v388 = vadd.f32 0.0, %v387
        %v389 = vpop.f32.mrf.mxu0
        %v390 = vadd.f32 0.0, %v389
        %391 = vmatprep.mubr.f32.mxu0 0.0
        %392 = vmatmul.mubr.f32.gmra.mxu0 %v191
        %v393 = vpop.f32.mrf.mxu0
        %v394 = vadd.f32 0.0, %v393
        %v395 = vpop.f32.mrf.mxu0
        %v396 = vadd.f32 0.0, %v395
        %397 = vmatprep.mubr.f32.mxu0 0.0
        %398 = vmatmul.mubr.f32.gmra.mxu0 %v194
        %v399 = vpop.f32.mrf.mxu0
        %v400 = vadd.f32 0.0, %v399
        %v401 = vpop.f32.mrf.mxu0
        %v402 = vadd.f32 0.0, %v401
        %403 = vmatprep.mubr.f32.mxu0 0.0
        %404 = vmatmul.mubr.f32.gmra.mxu0 %v197
        %v405 = vpop.f32.mrf.mxu0
        %v406 = vadd.f32 0.0, %v405
        %v407 = vpop.f32.mrf.mxu0
        %v408 = vadd.f32 0.0, %v407
        %409 = vdwg.mxu0
        %v410 = vadd.f32 %v388, %v390
        %411 = vadd.xlane.f32.xlu0 %v410
        %v412 = vpop.xlane.xlu0 %411
        %v413 = vadd.f32 %v394, %v396
        %414 = vadd.xlane.f32.xlu0 %v413
        %v415 = vpop.xlane.xlu0 %414
        %v416 = vadd.f32 %v400, %v402
        %417 = vadd.xlane.f32.xlu0 %v416
        %v418 = vpop.xlane.xlu0 %417
        %v419 = vadd.f32 %v406, %v408
        %420 = vadd.xlane.f32.xlu0 %v419
        %v421 = vpop.xlane.xlu0 %420
        %v422 = vmul.f32 %v412, %v300
        %v423 = vmul.f32 %v415, %v300
        %v424 = vmul.f32 %v418, %v300
        %v425 = vmul.f32 %v421, %v300
        %v426 = vadd.f32 %v422, 1e-05
        %v427 = vadd.f32 %v423, 1e-05
        %v428 = vadd.f32 %v424, 1e-05
        %v429 = vadd.f32 %v425, 1e-05
        %v430 = vrsqrt.pop %v426
        %v431 = vrsqrt.pop %v427
        %v432 = vrsqrt.pop %v428
        %v433 = vrsqrt.pop %v429
        %v434 = vmul.f32 %v305, %v430
        %v435 = vmul.f32 %v306, %v430
        %v436 = vmul.f32 %v307, %v431
        %v437 = vmul.f32 %v308, %v431
        %v438 = vmul.f32 %v309, %v432
        %v439 = vmul.f32 %v310, %v432
        %v440 = vmul.f32 %v311, %v433
        %v441 = vmul.f32 %v312, %v433
        %442 = vst [vmem:[%s171] sm:$0xff] %v434
        %443 = vst [vmem:[%s171 + $0x8] sm:$0xff] %v435
        %444 = vst [vmem:[%s171 + $0x10] sm:$0xff] %v436
        %445 = vst [vmem:[%s171 + $0x18] sm:$0xff] %v437
        %446 = vst [vmem:[%s171 + $0x20] sm:$0xff] %v438
        %447 = vst [vmem:[%s171 + $0x28] sm:$0xff] %v439
        %448 = vst [vmem:[%s171 + $0x30] sm:$0xff] %v440
        %449 = vst [vmem:[%s171 + $0x38] sm:$0xff] %v441
        %s450 = sand.u32 %s68, 1
        %s451 = sand.u32 %s68, 1
        %s452 = smul.addr %s451, 64
        %s453 = scalar_lea.vmem [#allocation3], %s452
        // Predicated region
        $region52: #{gfno2d_forward.19} parent=46 // pred_check
          %p454 = pneg %p78
        $region53: #{gfno2d_forward.19} parent=46 // pred_check_branch
          %456 = sbr.rel (%p454) target = $region55
        $region54: #{gfno2d_forward.19} parent=46 // pred_region
          %s457 = smul.u32 2, %s13
          %s458 = smul.addr %s457, 8
          %s459 = scalar_lea.vmem %s2, %s458
          // Predicated region
          $region56: #{gfno2d_forward.19} parent=54 // pred_check
            _
          $region57: #{gfno2d_forward.19} parent=54 // pred_check_branch
            %461 = sbr.rel (0) target = $region59
          $region58: #{gfno2d_forward.19} parent=54 // pred_region
            // Predicated region
            $region60: #{gfno2d_forward.19} parent=58 // pred_check
              _
            $region61: #{gfno2d_forward.19} parent=58 // pred_check_branch
              %463 = sbr.rel (0) target = $region63
            $region62: #{gfno2d_forward.19} parent=58 // pred_region
              loop: start=0, step=1, limit=1
              $region64: #{gfno2d_forward.19} parent=62 // loop_pre_header
                _
              $region65: #{gfno2d_forward.19} parent=62 // loop_header
                %s465 = sphi 0, %s469
                %p466 = scmp.ge.s32.totalorder %s465, 1
                %s470 = sphi %s453, %s453
                %s471 = sphi %s459, %s459
              $region66: #{gfno2d_forward.19} parent=62 // loop_header_branch
                %468 = sbr.rel (%p466) target = $region70
              $region67: #{gfno2d_forward.19} parent=62 // loop_body
                %v472 = vld [vmem:[%s470] sm:$0xff]
                %473 = vst [vmem:[%s471] sm:$0xff] %v472
                %v474 = vld [vmem:[%s470 + $0x8] sm:$0xff]
                %475 = vst [vmem:[%s471 + $0x8] sm:$0xff] %v474
                %v476 = vld [vmem:[%s470 + $0x10] sm:$0xff]
                %477 = vst [vmem:[%s471 + $0x20] sm:$0xff] %v476
                %v478 = vld [vmem:[%s470 + $0x18] sm:$0xff]
                %479 = vst [vmem:[%s471 + $0x28] sm:$0xff] %v478
                %v480 = vld [vmem:[%s470 + $0x20] sm:$0xff]
                %481 = vst [vmem:[%s471 + $0x40] sm:$0xff] %v480
                %v482 = vld [vmem:[%s470 + $0x28] sm:$0xff]
                %483 = vst [vmem:[%s471 + $0x48] sm:$0xff] %v482
                %v484 = vld [vmem:[%s470 + $0x30] sm:$0xff]
                %485 = vst [vmem:[%s471 + $0x60] sm:$0xff] %v484
                %v486 = vld [vmem:[%s470 + $0x38] sm:$0xff]
                %487 = vst [vmem:[%s471 + $0x68] sm:$0xff] %v486
              $region68: #{gfno2d_forward.19} parent=62 // loop_footer
                %s469 = sadd.s32 1, %s465
              $region69: #{gfno2d_forward.19} parent=62 // loop_footer_branch
                %464 = sbr.rel target = $region65
              $region70: #{gfno2d_forward.19} parent=62 // loop_exit
                _
            $region63: #{gfno2d_forward.19} parent=58 // pred_fallthru
              _
            // Predicated region
            $region71: #{gfno2d_forward.19} parent=58 // pred_check
              _
            $region72: #{gfno2d_forward.19} parent=58 // pred_check_branch
              %489 = sbr.rel target = $region74
            $region73: #{gfno2d_forward.19} parent=58 // pred_region
              _
            $region74: #{gfno2d_forward.19} parent=58 // pred_fallthru
              _
          $region59: #{gfno2d_forward.19} parent=54 // pred_fallthru
            _
          %490 = vnop
        $region55: #{gfno2d_forward.19} parent=46 // pred_fallthru
          _
      $region47: #{gfno2d_forward.19} parent=5 // pred_fallthru
        _
      %p491 = scmp.le.s32.totalorder 2, %s8
      // Predicated region
      $region75: #{gfno2d_forward.19} parent=5 // pred_check
        %p492 = pneg %p491
      $region76: #{gfno2d_forward.19} parent=5 // pred_check_branch
        %494 = sbr.rel (%p492) target = $region78
      $region77: #{gfno2d_forward.19} parent=5 // pred_region
        %s495 = ssub.s32 %s8, 2
        // Predicated region
        $region79: #{gfno2d_forward.19} parent=77 // pred_check
          %p496 = pneg %p84
        $region80: #{gfno2d_forward.19} parent=77 // pred_check_branch
          %498 = sbr.rel (%p496) target = $region82
        $region81: #{gfno2d_forward.19} parent=77 // pred_region
          %s499 = sand.u32 %s69, 1
          %s500 = sand.u32 %s69, 1
          %s501 = smul.addr %s500, 64
          %s502 = scalar_lea.vmem [#allocation3], %s501
        $region82: #{gfno2d_forward.19} parent=77 // pred_fallthru
          _
      $region78: #{gfno2d_forward.19} parent=5 // pred_fallthru
        _
    $region6: #{gfno2d_forward.19} parent=1 // loop_footer
      %s12 = sadd.s32 1, %s8
    $region7: #{gfno2d_forward.19} parent=1 // loop_footer_branch
      %7 = sbr.rel target = $region3
    $region8: #{gfno2d_forward.19} parent=1 // loop_exit
      _

// kernel: gfno2d_forward.18
$region0: #{gfno2d_forward.18}
  #allocation0 [shape = 'u32[]', space=smem, size = 0x4, offset = 0x4, fixed_abs, tag = 'smem constant byte address 0x4 - core index']
  #allocation1 [shape = 'u32[144,128]{1,0:T(1,128)}', space=vmem, size = 0x12000, scoped, tag = 'internal scratch']
  %s0 = inlined_call_operand.vmem [shape: f32[3,512], index: 0, kind: input, shape index: {}]
  %s1 = inlined_call_operand.vmem [shape: f32[32,3], index: 1, kind: input, shape index: {}]
  %s2 = inlined_call_operand.vmem [shape: f32[32,1], index: 2, kind: input, shape index: {}]
  %s3 = inlined_call_operand.vmem [shape: f32[32,512], index: 3, kind: output, shape index: {}]
  %s4 = sld [smem:[#allocation0]]
  $region22: #{gfno2d_forward.18} parent=0
    _
  %s6 = ssub.s32 1, %s4
  %s7 = scalar_select 0, %s6, %s4
  // Predicated region
  $region2: #{gfno2d_forward.18} parent=0 // pred_check
    _
  $region3: #{gfno2d_forward.18} parent=0 // pred_check_branch
    %9 = sbr.rel (0) target = $region5
  $region4: #{gfno2d_forward.18} parent=0 // pred_region
    _
  $region5: #{gfno2d_forward.18} parent=0 // pred_fallthru
    _
  // Predicated region
  $region6: #{gfno2d_forward.18} parent=0 // pred_check
    _
  $region7: #{gfno2d_forward.18} parent=0 // pred_check_branch
    %11 = sbr.rel (0) target = $region9
  $region8: #{gfno2d_forward.18} parent=0 // pred_region
    _
  $region9: #{gfno2d_forward.18} parent=0 // pred_fallthru
    _
  // Predicated region
  $region10: #{gfno2d_forward.18} parent=0 // pred_check
    _
  $region11: #{gfno2d_forward.18} parent=0 // pred_check_branch
    %13 = sbr.rel (0) target = $region13
  $region12: #{gfno2d_forward.18} parent=0 // pred_region
    _
  $region13: #{gfno2d_forward.18} parent=0 // pred_fallthru
    _
  %v14 = vld [vmem:[%s1] sm:$0xff]
  %v15 = vld [vmem:[%s1 + $0x8] sm:$0xff]
  %v16 = vld [vmem:[%s1 + $0x10] sm:$0xff]
  %v17 = vld [vmem:[%s1 + $0x18] sm:$0xff]
  %v18 = vld [vmem:[%s0] sm:$0x77]
  %v19 = vld [vmem:[%s0 + $0x8] sm:$0x77]
  %v20 = vld [vmem:[%s2] sm:$0xff]
  %v21 = vld [vmem:[%s2 + $0x8] sm:$0xff]
  %v22 = vld [vmem:[%s2 + $0x10] sm:$0xff]
  %v23 = vld [vmem:[%s2 + $0x18] sm:$0xff]
  %25 = vset.pattern.permute.xlu0 0
  %26 = vperm.xlu0 %25, %v20
  %v27 = vpop.permute.xlu0 %26
  %30 = vset.pattern.permute.xlu0 0
  %31 = vperm.xlu0 %30, %v21
  %v32 = vpop.permute.xlu0 %31
  %35 = vset.pattern.permute.xlu0 0
  %36 = vperm.xlu0 %35, %v22
  %v37 = vpop.permute.xlu0 %36
  %40 = vset.pattern.permute.xlu0 0
  %41 = vperm.xlu0 %40, %v23
  %v42 = vpop.permute.xlu0 %41
  %v46 = vcombine.high %v18, %v18
  %v47 = vcombine.high %v19, %v19
  %vm48 = vcmask 23552
  %v50 = vsel %vm48, %v14, 0
  %v53 = vsel %vm48, %v15, 0
  %v56 = vsel %vm48, %v16, 0
  %v59 = vsel %vm48, %v17, 0
  %vm61 = vcmask 1042432
  %v62 = vsel %vm61, %v18, 0
  %v64 = vsel %vm61, %v46, 0
  %v66 = vsel %vm61, %v19, 0
  %v68 = vsel %vm61, %v47, 0
  %70 = vmatprep.subr.mxu0 0.0
  %71 = vmatpush1.msra.mxu0 0.0
  %72 = vmatprep.subr.mxu0 0.0
  %73 = vmatpush1.msra.mxu0 0.0
  %74 = vmatprep.subr.mxu0 0.0
  %75 = vmatpush1.msra.mxu0 0.0
  %76 = vmatprep.subr.mxu0 0.0
  %77 = vmatpush1.msra.mxu0 0.0
  %78 = vmatprep.subr.mxu0 0.0
  %79 = vmatpush1.msra.mxu0 0.0
  %80 = vmatprep.subr.mxu0 0.0
  %81 = vmatpush1.msra.mxu0 0.0
  %82 = vmatprep.subr.mxu0 0.0
  %83 = vmatpush1.msra.mxu0 0.0
  %84 = vmatprep.subr.mxu0 0.0
  %85 = vmatpush1.msra.mxu0 0.0
  %86 = vmatprep.subr.mxu0 0.0
  %87 = vmatpush1.msra.mxu0 0.0
  %88 = vmatprep.subr.mxu0 0.0
  %89 = vmatpush1.msra.mxu0 0.0
  %90 = vmatprep.subr.mxu0 0.0
  %91 = vmatpush1.msra.mxu0 0.0
  %92 = vmatprep.subr.mxu0 0.0
  %93 = vmatpush1.msra.mxu0 0.0
  %94 = vmatprep.subr.mxu0 0.0
  %95 = vmatpush1.msra.mxu0 0.0
  %96 = vmatprep.subr.mxu0 0.0
  %97 = vmatpush1.msra.mxu0 0.0
  %98 = vmatprep.subr.mxu0 0.0
  %99 = vmatpush1.msra.mxu0 0.0
  %100 = vmatprep.subr.mxu0 %v64
  %101 = vmatpush1.msra.mxu0 %v62
  %102 = vmatprep.subr.mxu0 0.0
  %103 = vmatpush2.msra.mxu0 0.0
  %104 = vmatprep.subr.mxu0 0.0
  %105 = vmatpush2.msra.mxu0 0.0
  %106 = vmatprep.subr.mxu0 0.0
  %107 = vmatpush2.msra.mxu0 0.0
  %108 = vmatprep.subr.mxu0 0.0
  %109 = vmatpush2.msra.mxu0 0.0
  %110 = vmatprep.subr.mxu0 0.0
  %111 = vmatpush2.msra.mxu0 0.0
  %112 = vmatprep.subr.mxu0 0.0
  %113 = vmatpush2.msra.mxu0 0.0
  %114 = vmatprep.subr.mxu0 0.0
  %115 = vmatpush2.msra.mxu0 0.0
  %116 = vmatprep.subr.mxu0 0.0
  %117 = vmatpush2.msra.mxu0 0.0
  %118 = vmatprep.subr.mxu0 0.0
  %119 = vmatpush2.msra.mxu0 0.0
  %120 = vmatprep.subr.mxu0 0.0
  %121 = vmatpush2.msra.mxu0 0.0
  %122 = vmatprep.subr.mxu0 0.0
  %123 = vmatpush2.msra.mxu0 0.0
  %124 = vmatprep.subr.mxu0 0.0
  %125 = vmatpush2.msra.mxu0 0.0
  %126 = vmatprep.subr.mxu0 0.0
  %127 = vmatpush2.msra.mxu0 0.0
  %128 = vmatprep.subr.mxu0 0.0
  %129 = vmatpush2.msra.mxu0 0.0
  %130 = vmatprep.subr.mxu0 0.0
  %131 = vmatpush2.msra.mxu0 0.0
  %132 = vmatprep.subr.mxu0 0.0
  %133 = vmatpush2.msra.mxu0 0.0
  %134 = vmatprep.mubr.f32.mxu0 0.0
  %135 = vmatmul.mubr.f32.gmra.mxu0 %v50
  %v136 = vpop.f32.mrf.mxu0
  %v137 = vadd.f32 %v27, %v136
  %v138 = vpop.f32.mrf.mxu0
  %v139 = vadd.f32 %v27, %v138
  %140 = vmatprep.mubr.f32.mxu0 0.0
  %141 = vmatmul.mubr.f32.gmra.mxu0 %v53
  %v142 = vpop.f32.mrf.mxu0
  %v143 = vadd.f32 %v32, %v142
  %v144 = vpop.f32.mrf.mxu0
  %v145 = vadd.f32 %v32, %v144
  %146 = vmatprep.mubr.f32.mxu0 0.0
  %147 = vmatmul.mubr.f32.gmra.mxu0 %v56
  %v148 = vpop.f32.mrf.mxu0
  %v149 = vadd.f32 %v37, %v148
  %v150 = vpop.f32.mrf.mxu0
  %v151 = vadd.f32 %v37, %v150
  %152 = vmatprep.mubr.f32.mxu0 0.0
  %153 = vmatmul.mubr.f32.gmra.mxu0 %v59
  %v154 = vpop.f32.mrf.mxu0
  %v155 = vadd.f32 %v42, %v154
  %v156 = vpop.f32.mrf.mxu0
  %v157 = vadd.f32 %v42, %v156
  %158 = vdwg.mxu0
  %159 = vmatprep.subr.mxu0 0.0
  %160 = vmatpush1.msra.mxu0 0.0
  %161 = vmatprep.subr.mxu0 0.0
  %162 = vmatpush1.msra.mxu0 0.0
  %163 = vmatprep.subr.mxu0 0.0
  %164 = vmatpush1.msra.mxu0 0.0
  %165 = vmatprep.subr.mxu0 0.0
  %166 = vmatpush1.msra.mxu0 0.0
  %167 = vmatprep.subr.mxu0 0.0
  %168 = vmatpush1.msra.mxu0 0.0
  %169 = vmatprep.subr.mxu0 0.0
  %170 = vmatpush1.msra.mxu0 0.0
  %171 = vmatprep.subr.mxu0 0.0
  %172 = vmatpush1.msra.mxu0 0.0
  %173 = vmatprep.subr.mxu0 0.0
  %174 = vmatpush1.msra.mxu0 0.0
  %175 = vmatprep.subr.mxu0 0.0
  %176 = vmatpush1.msra.mxu0 0.0
  %177 = vmatprep.subr.mxu0 0.0
  %178 = vmatpush1.msra.mxu0 0.0
  %179 = vmatprep.subr.mxu0 0.0
  %180 = vmatpush1.msra.mxu0 0.0
  %181 = vmatprep.subr.mxu0 0.0
  %182 = vmatpush1.msra.mxu0 0.0
  %183 = vmatprep.subr.mxu0 0.0
  %184 = vmatpush1.msra.mxu0 0.0
  %185 = vmatprep.subr.mxu0 0.0
  %186 = vmatpush1.msra.mxu0 0.0
  %187 = vmatprep.subr.mxu0 0.0
  %188 = vmatpush1.msra.mxu0 0.0
  %189 = vmatprep.subr.mxu0 %v68
  %190 = vmatpush1.msra.mxu0 %v66
  %191 = vmatprep.subr.mxu0 0.0
  %192 = vmatpush2.msra.mxu0 0.0
  %193 = vmatprep.subr.mxu0 0.0
  %194 = vmatpush2.msra.mxu0 0.0
  %195 = vmatprep.subr.mxu0 0.0
  %196 = vmatpush2.msra.mxu0 0.0
  %197 = vmatprep.subr.mxu0 0.0
  %198 = vmatpush2.msra.mxu0 0.0
  %199 = vmatprep.subr.mxu0 0.0
  %200 = vmatpush2.msra.mxu0 0.0
  %201 = vmatprep.subr.mxu0 0.0
  %202 = vmatpush2.msra.mxu0 0.0
  %203 = vmatprep.subr.mxu0 0.0
  %204 = vmatpush2.msra.mxu0 0.0
  %205 = vmatprep.subr.mxu0 0.0
  %206 = vmatpush2.msra.mxu0 0.0
  %207 = vmatprep.subr.mxu0 0.0
  %208 = vmatpush2.msra.mxu0 0.0
  %209 = vmatprep.subr.mxu0 0.0
  %210 = vmatpush2.msra.mxu0 0.0
  %211 = vmatprep.subr.mxu0 0.0
  %212 = vmatpush2.msra.mxu0 0.0
  %213 = vmatprep.subr.mxu0 0.0
  %214 = vmatpush2.msra.mxu0 0.0
  %215 = vmatprep.subr.mxu0 0.0
  %216 = vmatpush2.msra.mxu0 0.0
  %217 = vmatprep.subr.mxu0 0.0
  %218 = vmatpush2.msra.mxu0 0.0
  %219 = vmatprep.subr.mxu0 0.0
  %220 = vmatpush2.msra.mxu0 0.0
  %221 = vmatprep.subr.mxu0 0.0
  %222 = vmatpush2.msra.mxu0 0.0
  %223 = vmatprep.mubr.f32.mxu0 0.0
  %224 = vmatmul.mubr.f32.gmra.mxu0 %v50
  %v225 = vpop.f32.mrf.mxu0
  %v226 = vadd.f32 %v27, %v225
  %v227 = vpop.f32.mrf.mxu0
  %v228 = vadd.f32 %v27, %v227
  %229 = vmatprep.mubr.f32.mxu0 0.0
  %230 = vmatmul.mubr.f32.gmra.mxu0 %v53
  %v231 = vpop.f32.mrf.mxu0
  %v232 = vadd.f32 %v32, %v231
  %v233 = vpop.f32.mrf.mxu0
  %v234 = vadd.f32 %v32, %v233
  %235 = vmatprep.mubr.f32.mxu0 0.0
  %236 = vmatmul.mubr.f32.gmra.mxu0 %v56
  %v237 = vpop.f32.mrf.mxu0
  %v238 = vadd.f32 %v37, %v237
  %v239 = vpop.f32.mrf.mxu0
  %v240 = vadd.f32 %v37, %v239
  %241 = vmatprep.mubr.f32.mxu0 0.0
  %242 = vmatmul.mubr.f32.gmra.mxu0 %v59
  %v243 = vpop.f32.mrf.mxu0
  %v244 = vadd.f32 %v42, %v243
  %v245 = vpop.f32.mrf.mxu0
  %v246 = vadd.f32 %v42, %v245
  %247 = vdwg.mxu0
  %248 = vst [vmem:[%s3] sm:$0xff] %v137
  %249 = vst [vmem:[%s3 + $0x8] sm:$0xff] %v139
  %250 = vst [vmem:[%s3 + $0x10] sm:$0xff] %v226
  %251 = vst [vmem:[%s3 + $0x18] sm:$0xff] %v228
  %252 = vst [vmem:[%s3 + $0x20] sm:$0xff] %v143
  %253 = vst [vmem:[%s3 + $0x28] sm:$0xff] %v145
  %254 = vst [vmem:[%s3 + $0x30] sm:$0xff] %v232
  %255 = vst [vmem:[%s3 + $0x38] sm:$0xff] %v234
  %256 = vst [vmem:[%s3 + $0x40] sm:$0xff] %v149
  %257 = vst [vmem:[%s3 + $0x48] sm:$0xff] %v151
  %258 = vst [vmem:[%s3 + $0x50] sm:$0xff] %v238
  %259 = vst [vmem:[%s3 + $0x58] sm:$0xff] %v240
  %260 = vst [vmem:[%s3 + $0x60] sm:$0xff] %v155
  %261 = vst [vmem:[%s3 + $0x68] sm:$0xff] %v157
  %262 = vst [vmem:[%s3 + $0x70] sm:$0xff] %v244
  %263 = vst [vmem:[%s3 + $0x78] sm:$0xff] %v246
  // Predicated region
  $region14: #{gfno2d_forward.18} parent=0 // pred_check
    _
  $region15: #{gfno2d_forward.18} parent=0 // pred_check_branch
    %265 = sbr.rel (0) target = $region17
  $region16: #{gfno2d_forward.18} parent=0 // pred_region
    _
  $region17: #{gfno2d_forward.18} parent=0 // pred_fallthru
    _
  // Predicated region
  $region18: #{gfno2d_forward.18} parent=0 // pred_check
    _
  $region19: #{gfno2d_forward.18} parent=0 // pred_check_branch
    %267 = sbr.rel (0) target = $region21
  $region20: #{gfno2d_forward.18} parent=0 // pred_region
    _
  $region21: #{gfno2d_forward.18} parent=0 // pred_fallthru
    _

// kernel: reverse.8
$region0: #{reverse.8}
  #allocation0 [shape = 's32[1]{0}', space=sflag, size = 0x4, scoped, tag = 'scoped memory for reverse.8']
  %s0 = inlined_call_operand.vmem [shape: f32[32,2,16,7], index: 0, kind: input, shape index: {}]
  %s1 = inlined_call_operand.vmem [shape: f32[32,2,16,7], index: 1, kind: output, shape index: {}]
  %s2 = scalar_lea.vmem %s0, 96
  %v3 = vld [vmem:[%s2] sm:$0xff]
  %4 = vst [vmem:[%s1] sm:$0xff] %v3
  %s5 = scalar_lea.vmem %s0, 208
  %v6 = vld [vmem:[%s5] sm:$0xff]
  %s7 = scalar_lea.vmem %s1, 112
  %8 = vst [vmem:[%s7] sm:$0xff] %v6
  %s9 = scalar_lea.vmem %s0, 80
  %v10 = vld [vmem:[%s9] sm:$0xff]
  %s11 = scalar_lea.vmem %s1, 16
  %12 = vst [vmem:[%s11] sm:$0xff] %v10
  %s13 = scalar_lea.vmem %s0, 192
  %v14 = vld [vmem:[%s13] sm:$0xff]
  %s15 = scalar_lea.vmem %s1, 128
  %16 = vst [vmem:[%s15] sm:$0xff] %v14
  %s17 = scalar_lea.vmem %s0, 64
  %v18 = vld [vmem:[%s17] sm:$0xff]
  %s19 = scalar_lea.vmem %s1, 32
  %20 = vst [vmem:[%s19] sm:$0xff] %v18
  %s21 = scalar_lea.vmem %s0, 176
  %v22 = vld [vmem:[%s21] sm:$0xff]
  %s23 = scalar_lea.vmem %s1, 144
  %24 = vst [vmem:[%s23] sm:$0xff] %v22
  %s25 = scalar_lea.vmem %s0, 48
  %v26 = vld [vmem:[%s25] sm:$0xff]
  %s27 = scalar_lea.vmem %s1, 48
  %28 = vst [vmem:[%s27] sm:$0xff] %v26
  %s29 = scalar_lea.vmem %s0, 160
  %v30 = vld [vmem:[%s29] sm:$0xff]
  %s31 = scalar_lea.vmem %s1, 160
  %32 = vst [vmem:[%s31] sm:$0xff] %v30
  %s33 = scalar_lea.vmem %s0, 32
  %v34 = vld [vmem:[%s33] sm:$0xff]
  %s35 = scalar_lea.vmem %s1, 64
  %36 = vst [vmem:[%s35] sm:$0xff] %v34
  %s37 = scalar_lea.vmem %s0, 144
  %v38 = vld [vmem:[%s37] sm:$0xff]
  %s39 = scalar_lea.vmem %s1, 176
  %40 = vst [vmem:[%s39] sm:$0xff] %v38
  %s41 = scalar_lea.vmem %s0, 16
  %v42 = vld [vmem:[%s41] sm:$0xff]
  %s43 = scalar_lea.vmem %s1, 80
  %44 = vst [vmem:[%s43] sm:$0xff] %v42
  %s45 = scalar_lea.vmem %s0, 128
  %v46 = vld [vmem:[%s45] sm:$0xff]
  %s47 = scalar_lea.vmem %s1, 192
  %48 = vst [vmem:[%s47] sm:$0xff] %v46
  %v49 = vld [vmem:[%s0] sm:$0xff]
  %s50 = scalar_lea.vmem %s1, 96
  %51 = vst [vmem:[%s50] sm:$0xff] %v49
  %s52 = scalar_lea.vmem %s0, 112
  %v53 = vld [vmem:[%s52] sm:$0xff]
  %s54 = scalar_lea.vmem %s1, 208
  %55 = vst [vmem:[%s54] sm:$0xff] %v53
  %s56 = scalar_lea.vmem %s0, 104
  %v57 = vld [vmem:[%s56] sm:$0xff]
  %s58 = scalar_lea.vmem %s1, 8
  %59 = vst [vmem:[%s58] sm:$0xff] %v57
  %s60 = scalar_lea.vmem %s0, 216
  %v61 = vld [vmem:[%s60] sm:$0xff]
  %s62 = scalar_lea.vmem %s1, 120
  %63 = vst [vmem:[%s62] sm:$0xff] %v61
  %s64 = scalar_lea.vmem %s0, 88
  %v65 = vld [vmem:[%s64] sm:$0xff]
  %s66 = scalar_lea.vmem %s1, 24
  %67 = vst [vmem:[%s66] sm:$0xff] %v65
  %s68 = scalar_lea.vmem %s0, 200
  %v69 = vld [vmem:[%s68] sm:$0xff]
  %s70 = scalar_lea.vmem %s1, 136
  %71 = vst [vmem:[%s70] sm:$0xff] %v69
  %s72 = scalar_lea.vmem %s0, 72
  %v73 = vld [vmem:[%s72] sm:$0xff]
  %s74 = scalar_lea.vmem %s1, 40
  %75 = vst [vmem:[%s74] sm:$0xff] %v73
  %s76 = scalar_lea.vmem %s0, 184
  %v77 = vld [vmem:[%s76] sm:$0xff]
  %s78 = scalar_lea.vmem %s1, 152
  %79 = vst [vmem:[%s78] sm:$0xff] %v77
  %s80 = scalar_lea.vmem %s0, 56
  %v81 = vld [vmem:[%s80] sm:$0xff]
  %s82 = scalar_lea.vmem %s1, 56
  %83 = vst [vmem:[%s82] sm:$0xff] %v81
  %s84 = scalar_lea.vmem %s0, 168
  %v85 = vld [vmem:[%s84] sm:$0xff]
  %s86 = scalar_lea.vmem %s1, 168
  %87 = vst [vmem:[%s86] sm:$0xff] %v85
  %s88 = scalar_lea.vmem %s0, 40
  %v89 = vld [vmem:[%s88] sm:$0xff]
  %s90 = scalar_lea.vmem %s1, 72
  %91 = vst [vmem:[%s90] sm:$0xff] %v89
  %s92 = scalar_lea.vmem %s0, 152
  %v93 = vld [vmem:[%s92] sm:$0xff]
  %s94 = scalar_lea.vmem %s1, 184
  %95 = vst [vmem:[%s94] sm:$0xff] %v93
  %s96 = scalar_lea.vmem %s0, 24
  %v97 = vld [vmem:[%s96] sm:$0xff]
  %s98 = scalar_lea.vmem %s1, 88
  %99 = vst [vmem:[%s98] sm:$0xff] %v97
  %s100 = scalar_lea.vmem %s0, 136
  %v101 = vld [vmem:[%s100] sm:$0xff]
  %s102 = scalar_lea.vmem %s1, 200
  %103 = vst [vmem:[%s102] sm:$0xff] %v101
  %s104 = scalar_lea.vmem %s0, 8
  %v105 = vld [vmem:[%s104] sm:$0xff]
  %s106 = scalar_lea.vmem %s1, 104
  %107 = vst [vmem:[%s106] sm:$0xff] %v105
  %s108 = scalar_lea.vmem %s0, 120
  %v109 = vld [vmem:[%s108] sm:$0xff]
  %s110 = scalar_lea.vmem %s1, 216
  %111 = vst [vmem:[%s110] sm:$0xff] %v109

// kernel: gfno2d_forward.20
$region0: #{gfno2d_forward.20}
  #allocation0 [shape = 'u32[]', space=smem, size = 0x4, offset = 0x4, fixed_abs, tag = 'smem constant byte address 0x4 - core index']
  #allocation1 [shape = 'u32[144,128]{1,0:T(1,128)}', space=vmem, size = 0x12000, scoped, tag = 'internal scratch']
  %s0 = inlined_call_operand.vmem [shape: f32[28,2,64], index: 0, kind: input, shape index: {}]
  %s1 = inlined_call_operand.vmem [shape: f32[28,64,64], index: 1, kind: input, shape index: {}]
  %s2 = inlined_call_operand.vmem [shape: f32[28,2,64], index: 2, kind: output, shape index: {}]
  %s3 = sld [smem:[#allocation0]]
  $region18: #{gfno2d_forward.20} parent=0
    _
  %s5 = ssub.s32 1, %s3
  %s6 = scalar_select 0, %s5, %s3
  // Predicated region
  $region2: #{gfno2d_forward.20} parent=0 // pred_check
    _
  $region3: #{gfno2d_forward.20} parent=0 // pred_check_branch
    %8 = sbr.rel (0) target = $region5
  $region4: #{gfno2d_forward.20} parent=0 // pred_region
    _
  $region5: #{gfno2d_forward.20} parent=0 // pred_fallthru
    _
  // Predicated region
  $region6: #{gfno2d_forward.20} parent=0 // pred_check
    _
  $region7: #{gfno2d_forward.20} parent=0 // pred_check_branch
    %10 = sbr.rel (0) target = $region9
  $region8: #{gfno2d_forward.20} parent=0 // pred_region
    _
  $region9: #{gfno2d_forward.20} parent=0 // pred_fallthru
    _
  %v11 = vld [vmem:[%s0] sm:$0x3]
  %v12 = vld [vmem:[%s1] sm:$0xff]
  %v13 = vld [vmem:[%s1 + $0x8] sm:$0xff]
  %v14 = vld [vmem:[%s1 + $0x10] sm:$0xff]
  %v15 = vld [vmem:[%s1 + $0x18] sm:$0xff]
  %v16 = vld [vmem:[%s1 + $0x20] sm:$0xff]
  %v17 = vld [vmem:[%s1 + $0x28] sm:$0xff]
  %v18 = vld [vmem:[%s1 + $0x30] sm:$0xff]
  %v19 = vld [vmem:[%s1 + $0x38] sm:$0xff]
  %vm20 = vcmask 523264
  %v22 = vsel %vm20, %v11, 0
  %24 = vmatprep.subr.mxu0 0.0
  %25 = vmatpush1.msra.mxu0 0.0
  %26 = vmatprep.subr.mxu0 0.0
  %27 = vmatpush1.msra.mxu0 0.0
  %28 = vmatprep.subr.mxu0 0.0
  %29 = vmatpush1.msra.mxu0 0.0
  %30 = vmatprep.subr.mxu0 0.0
  %31 = vmatpush1.msra.mxu0 0.0
  %32 = vmatprep.subr.mxu0 0.0
  %33 = vmatpush1.msra.mxu0 0.0
  %34 = vmatprep.subr.mxu0 0.0
  %35 = vmatpush1.msra.mxu0 0.0
  %36 = vmatprep.subr.mxu0 0.0
  %37 = vmatpush1.msra.mxu0 0.0
  %38 = vmatprep.subr.mxu0 0.0
  %39 = vmatpush1.msra.mxu0 0.0
  %40 = vmatprep.subr.mxu0 0.0
  %41 = vmatpush1.msra.mxu0 %v19
  %42 = vmatprep.subr.mxu0 0.0
  %43 = vmatpush1.msra.mxu0 %v18
  %44 = vmatprep.subr.mxu0 0.0
  %45 = vmatpush1.msra.mxu0 %v17
  %46 = vmatprep.subr.mxu0 0.0
  %47 = vmatpush1.msra.mxu0 %v16
  %48 = vmatprep.subr.mxu0 0.0
  %49 = vmatpush1.msra.mxu0 %v15
  %50 = vmatprep.subr.mxu0 0.0
  %51 = vmatpush1.msra.mxu0 %v14
  %52 = vmatprep.subr.mxu0 0.0
  %53 = vmatpush1.msra.mxu0 %v13
  %54 = vmatprep.subr.mxu0 0.0
  %55 = vmatpush1.msra.mxu0 %v12
  %56 = vmatprep.subr.mxu0 0.0
  %57 = vmatpush2.msra.mxu0 0.0
  %58 = vmatprep.subr.mxu0 0.0
  %59 = vmatpush2.msra.mxu0 0.0
  %60 = vmatprep.subr.mxu0 0.0
  %61 = vmatpush2.msra.mxu0 0.0
  %62 = vmatprep.subr.mxu0 0.0
  %63 = vmatpush2.msra.mxu0 0.0
  %64 = vmatprep.subr.mxu0 0.0
  %65 = vmatpush2.msra.mxu0 0.0
  %66 = vmatprep.subr.mxu0 0.0
  %67 = vmatpush2.msra.mxu0 0.0
  %68 = vmatprep.subr.mxu0 0.0
  %69 = vmatpush2.msra.mxu0 0.0
  %70 = vmatprep.subr.mxu0 0.0
  %71 = vmatpush2.msra.mxu0 0.0
  %72 = vmatprep.subr.mxu0 0.0
  %73 = vmatpush2.msra.mxu0 0.0
  %74 = vmatprep.subr.mxu0 0.0
  %75 = vmatpush2.msra.mxu0 0.0
  %76 = vmatprep.subr.mxu0 0.0
  %77 = vmatpush2.msra.mxu0 0.0
  %78 = vmatprep.subr.mxu0 0.0
  %79 = vmatpush2.msra.mxu0 0.0
  %80 = vmatprep.subr.mxu0 0.0
  %81 = vmatpush2.msra.mxu0 0.0
  %82 = vmatprep.subr.mxu0 0.0
  %83 = vmatpush2.msra.mxu0 0.0
  %84 = vmatprep.subr.mxu0 0.0
  %85 = vmatpush2.msra.mxu0 0.0
  %86 = vmatprep.subr.mxu0 0.0
  %87 = vmatpush2.msra.mxu0 0.0
  %88 = vmatprep.mubr.f32.mxu0 0.0
  %89 = vmatmul.mubr.f32.gmra.mxu0 %v22
  %v90 = vpop.f32.mrf.mxu0
  %v91 = vadd.f32 0.0, %v90
  %v92 = vpop.f32.mrf.mxu0
  %93 = vdwg.mxu0
  %vm94 = vcmask 517120
  %95 = vst.msk [vmem:[%s2] sm:$0x3] %vm94, %v91
  %s96 = scalar_lea.vmem %s0, 2
  %v97 = vld [vmem:[%s96] sm:$0x3]
  %s98 = scalar_lea.vmem %s1, 64
  %v99 = vld [vmem:[%s98] sm:$0xff]
  %v100 = vld [vmem:[%s98 + $0x8] sm:$0xff]
  %v101 = vld [vmem:[%s98 + $0x10] sm:$0xff]
  %v102 = vld [vmem:[%s98 + $0x18] sm:$0xff]
  %v103 = vld [vmem:[%s98 + $0x20] sm:$0xff]
  %v104 = vld [vmem:[%s98 + $0x28] sm:$0xff]
  %v105 = vld [vmem:[%s98 + $0x30] sm:$0xff]
  %v106 = vld [vmem:[%s98 + $0x38] sm:$0xff]
  %v108 = vsel %vm20, %v97, 0
  %110 = vmatprep.subr.mxu0 0.0
  %111 = vmatpush1.msra.mxu0 0.0
  %112 = vmatprep.subr.mxu0 0.0
  %113 = vmatpush1.msra.mxu0 0.0
  %114 = vmatprep.subr.mxu0 0.0
  %115 = vmatpush1.msra.mxu0 0.0
  %116 = vmatprep.subr.mxu0 0.0
  %117 = vmatpush1.msra.mxu0 0.0
  %118 = vmatprep.subr.mxu0 0.0
  %119 = vmatpush1.msra.mxu0 0.0
  %120 = vmatprep.subr.mxu0 0.0
  %121 = vmatpush1.msra.mxu0 0.0
  %122 = vmatprep.subr.mxu0 0.0
  %123 = vmatpush1.msra.mxu0 0.0
  %124 = vmatprep.subr.mxu0 0.0
  %125 = vmatpush1.msra.mxu0 0.0
  %126 = vmatprep.subr.mxu0 0.0
  %127 = vmatpush1.msra.mxu0 %v106
  %128 = vmatprep.subr.mxu0 0.0
  %129 = vmatpush1.msra.mxu0 %v105
  %130 = vmatprep.subr.mxu0 0.0
  %131 = vmatpush1.msra.mxu0 %v104
  %132 = vmatprep.subr.mxu0 0.0
  %133 = vmatpush1.msra.mxu0 %v103
  %134 = vmatprep.subr.mxu0 0.0
  %135 = vmatpush1.msra.mxu0 %v102
  %136 = vmatprep.subr.mxu0 0.0
  %137 = vmatpush1.msra.mxu0 %v101
  %138 = vmatprep.subr.mxu0 0.0
  %139 = vmatpush1.msra.mxu0 %v100
  %140 = vmatprep.subr.mxu0 0.0
  %141 = vmatpush1.msra.mxu0 %v99
  %142 = vmatprep.subr.mxu0 0.0
  %143 = vmatpush2.msra.mxu0 0.0
  %144 = vmatprep.subr.mxu0 0.0
  %145 = vmatpush2.msra.mxu0 0.0
  %146 = vmatprep.subr.mxu0 0.0
  %147 = vmatpush2.msra.mxu0 0.0
  %148 = vmatprep.subr.mxu0 0.0
  %149 = vmatpush2.msra.mxu0 0.0
  %150 = vmatprep.subr.mxu0 0.0
  %151 = vmatpush2.msra.mxu0 0.0
  %152 = vmatprep.subr.mxu0 0.0
  %153 = vmatpush2.msra.mxu0 0.0
  %154 = vmatprep.subr.mxu0 0.0
  %155 = vmatpush2.msra.mxu0 0.0
  %156 = vmatprep.subr.mxu0 0.0
  %157 = vmatpush2.msra.mxu0 0.0
  %158 = vmatprep.subr.mxu0 0.0
  %159 = vmatpush2.msra.mxu0 0.0
  %160 = vmatprep.subr.mxu0 0.0
  %161 = vmatpush2.msra.mxu0 0.0
  %162 = vmatprep.subr.mxu0 0.0
  %163 = vmatpush2.msra.mxu0 0.0
  %164 = vmatprep.subr.mxu0 0.0
  %165 = vmatpush2.msra.mxu0 0.0
  %166 = vmatprep.subr.mxu0 0.0
  %167 = vmatpush2.msra.mxu0 0.0
  %168 = vmatprep.subr.mxu0 0.0
  %169 = vmatpush2.msra.mxu0 0.0
  %170 = vmatprep.subr.mxu0 0.0
  %171 = vmatpush2.msra.mxu0 0.0
  %172 = vmatprep.subr.mxu0 0.0
  %173 = vmatpush2.msra.mxu0 0.0
  %174 = vmatprep.mubr.f32.mxu0 0.0
  %175 = vmatmul.mubr.f32.gmra.mxu0 %v108
  %v176 = vpop.f32.mrf.mxu0
  %v177 = vadd.f32 0.0, %v176
  %v178 = vpop.f32.mrf.mxu0
  %179 = vdwg.mxu0
  %s180 = scalar_lea.vmem %s2, 2
  %181 = vst.msk [vmem:[%s180] sm:$0x3] %vm94, %v177
  %s182 = scalar_lea.vmem %s0, 4
  %v183 = vld [vmem:[%s182] sm:$0x3]
  %s184 = scalar_lea.vmem %s1, 128
  %v185 = vld [vmem:[%s184] sm:$0xff]
  %v186 = vld [vmem:[%s184 + $0x8] sm:$0xff]
  %v187 = vld [vmem:[%s184 + $0x10] sm:$0xff]
  %v188 = vld [vmem:[%s184 + $0x18] sm:$0xff]
  %v189 = vld [vmem:[%s184 + $0x20] sm:$0xff]
  %v190 = vld [vmem:[%s184 + $0x28] sm:$0xff]
  %v191 = vld [vmem:[%s184 + $0x30] sm:$0xff]
  %v192 = vld [vmem:[%s184 + $0x38] sm:$0xff]
  %v194 = vsel %vm20, %v183, 0
  %196 = vmatprep.subr.mxu0 0.0
  %197 = vmatpush1.msra.mxu0 0.0
  %198 = vmatprep.subr.mxu0 0.0
  %199 = vmatpush1.msra.mxu0 0.0
  %200 = vmatprep.subr.mxu0 0.0
  %201 = vmatpush1.msra.mxu0 0.0
  %202 = vmatprep.subr.mxu0 0.0
  %203 = vmatpush1.msra.mxu0 0.0
  %204 = vmatprep.subr.mxu0 0.0
  %205 = vmatpush1.msra.mxu0 0.0
  %206 = vmatprep.subr.mxu0 0.0
  %207 = vmatpush1.msra.mxu0 0.0
  %208 = vmatprep.subr.mxu0 0.0
  %209 = vmatpush1.msra.mxu0 0.0
  %210 = vmatprep.subr.mxu0 0.0
  %211 = vmatpush1.msra.mxu0 0.0
  %212 = vmatprep.subr.mxu0 0.0
  %213 = vmatpush1.msra.mxu0 %v192
  %214 = vmatprep.subr.mxu0 0.0
  %215 = vmatpush1.msra.mxu0 %v191
  %216 = vmatprep.subr.mxu0 0.0
  %217 = vmatpush1.msra.mxu0 %v190
  %218 = vmatprep.subr.mxu0 0.0
  %219 = vmatpush1.msra.mxu0 %v189
  %220 = vmatprep.subr.mxu0 0.0
  %221 = vmatpush1.msra.mxu0 %v188
  %222 = vmatprep.subr.mxu0 0.0
  %223 = vmatpush1.msra.mxu0 %v187
  %224 = vmatprep.subr.mxu0 0.0
  %225 = vmatpush1.msra.mxu0 %v186
  %226 = vmatprep.subr.mxu0 0.0
  %227 = vmatpush1.msra.mxu0 %v185
  %228 = vmatprep.subr.mxu0 0.0
  %229 = vmatpush2.msra.mxu0 0.0
  %230 = vmatprep.subr.mxu0 0.0
  %231 = vmatpush2.msra.mxu0 0.0
  %232 = vmatprep.subr.mxu0 0.0
  %233 = vmatpush2.msra.mxu0 0.0
  %234 = vmatprep.subr.mxu0 0.0
  %235 = vmatpush2.msra.mxu0 0.0
  %236 = vmatprep.subr.mxu0 0.0
  %237 = vmatpush2.msra.mxu0 0.0
  %238 = vmatprep.subr.mxu0 0.0
  %239 = vmatpush2.msra.mxu0 0.0
  %240 = vmatprep.subr.mxu0 0.0
  %241 = vmatpush2.msra.mxu0 0.0
  %242 = vmatprep.subr.mxu0 0.0
  %243 = vmatpush2.msra.mxu0 0.0
  %244 = vmatprep.subr.mxu0 0.0
  %245 = vmatpush2.msra.mxu0 0.0
  %246 = vmatprep.subr.mxu0 0.0
  %247 = vmatpush2.msra.mxu0 0.0
  %248 = vmatprep.subr.mxu0 0.0
  %249 = vmatpush2.msra.mxu0 0.0
  %250 = vmatprep.subr.mxu0 0.0
  %251 = vmatpush2.msra.mxu0 0.0
  %252 = vmatprep.subr.mxu0 0.0
  %253 = vmatpush2.msra.mxu0 0.0
  %254 = vmatprep.subr.mxu0 0.0
  %255 = vmatpush2.msra.mxu0 0.0
  %256 = vmatprep.subr.mxu0 0.0
  %257 = vmatpush2.msra.mxu0 0.0
  %258 = vmatprep.subr.mxu0 0.0
  %259 = vmatpush2.msra.mxu0 0.0
  %260 = vmatprep.mubr.f32.mxu0 0.0
  %261 = vmatmul.mubr.f32.gmra.mxu0 %v194
  %v262 = vpop.f32.mrf.mxu0
  %v263 = vadd.f32 0.0, %v262
  %v264 = vpop.f32.mrf.mxu0
  %265 = vdwg.mxu0
  %s266 = scalar_lea.vmem %s2, 4
  %267 = vst.msk [vmem:[%s266] sm:$0x3] %vm94, %v263
  %s268 = scalar_lea.vmem %s0, 6
  %v269 = vld [vmem:[%s268] sm:$0x3]
  %s270 = scalar_lea.vmem %s1, 192
  %v271 = vld [vmem:[%s270] sm:$0xff]
  %v272 = vld [vmem:[%s270 + $0x8] sm:$0xff]
  %v273 = vld [vmem:[%s270 + $0x10] sm:$0xff]
  %v274 = vld [vmem:[%s270 + $0x18] sm:$0xff]
  %v275 = vld [vmem:[%s270 + $0x20] sm:$0xff]
  %v276 = vld [vmem:[%s270 + $0x28] sm:$0xff]
  %v277 = vld [vmem:[%s270 + $0x30] sm:$0xff]
  %v278 = vld [vmem:[%s270 + $0x38] sm:$0xff]
  %v280 = vsel %vm20, %v269, 0
  %282 = vmatprep.subr.mxu0 0.0
  %283 = vmatpush1.msra.mxu0 0.0
  %284 = vmatprep.subr.mxu0 0.0
  %285 = vmatpush1.msra.mxu0 0.0
  %286 = vmatprep.subr.mxu0 0.0
  %287 = vmatpush1.msra.mxu0 0.0
  %288 = vmatprep.subr.mxu0 0.0
  %289 = vmatpush1.msra.mxu0 0.0
  %290 = vmatprep.subr.mxu0 0.0
  %291 = vmatpush1.msra.mxu0 0.0
  %292 = vmatprep.subr.mxu0 0.0
  %293 = vmatpush1.msra.mxu0 0.0
  %294 = vmatprep.subr.mxu0 0.0
  %295 = vmatpush1.msra.mxu0 0.0
  %296 = vmatprep.subr.mxu0 0.0
  %297 = vmatpush1.msra.mxu0 0.0
  %298 = vmatprep.subr.mxu0 0.0
  %299 = vmatpush1.msra.mxu0 %v278
  %300 = vmatprep.subr.mxu0 0.0
  %301 = vmatpush1.msra.mxu0 %v277
  %302 = vmatprep.subr.mxu0 0.0
  %303 = vmatpush1.msra.mxu0 %v276
  %304 = vmatprep.subr.mxu0 0.0
  %305 = vmatpush1.msra.mxu0 %v275
  %306 = vmatprep.subr.mxu0 0.0
  %307 = vmatpush1.msra.mxu0 %v274
  %308 = vmatprep.subr.mxu0 0.0
  %309 = vmatpush1.msra.mxu0 %v273
  %310 = vmatprep.subr.mxu0 0.0
  %311 = vmatpush1.msra.mxu0 %v272
  %312 = vmatprep.subr.mxu0 0.0
  %313 = vmatpush1.msra.mxu0 %v271
  %314 = vmatprep.subr.mxu0 0.0
  %315 = vmatpush2.msra.mxu0 0.0
  %316 = vmatprep.subr.mxu0 0.0
  %317 = vmatpush2.msra.mxu0 0.0
  %318 = vmatprep.subr.mxu0 0.0
  %319 = vmatpush2.msra.mxu0 0.0
  %320 = vmatprep.subr.mxu0 0.0
  %321 = vmatpush2.msra.mxu0 0.0
  %322 = vmatprep.subr.mxu0 0.0
  %323 = vmatpush2.msra.mxu0 0.0
  %324 = vmatprep.subr.mxu0 0.0
  %325 = vmatpush2.msra.mxu0 0.0
  %326 = vmatprep.subr.mxu0 0.0
  %327 = vmatpush2.msra.mxu0 0.0
  %328 = vmatprep.subr.mxu0 0.0
  %329 = vmatpush2.msra.mxu0 0.0
  %330 = vmatprep.subr.mxu0 0.0
  %331 = vmatpush2.msra.mxu0 0.0
  %332 = vmatprep.subr.mxu0 0.0
  %333 = vmatpush2.msra.mxu0 0.0
  %334 = vmatprep.subr.mxu0 0.0
  %335 = vmatpush2.msra.mxu0 0.0
  %336 = vmatprep.subr.mxu0 0.0
  %337 = vmatpush2.msra.mxu0 0.0
  %338 = vmatprep.subr.mxu0 0.0
  %339 = vmatpush2.msra.mxu0 0.0
  %340 = vmatprep.subr.mxu0 0.0
  %341 = vmatpush2.msra.mxu0 0.0
  %342 = vmatprep.subr.mxu0 0.0
  %343 = vmatpush2.msra.mxu0 0.0
  %344 = vmatprep.subr.mxu0 0.0
  %345 = vmatpush2.msra.mxu0 0.0
  %346 = vmatprep.mubr.f32.mxu0 0.0
  %347 = vmatmul.mubr.f32.gmra.mxu0 %v280
  %v348 = vpop.f32.mrf.mxu0
  %v349 = vadd.f32 0.0, %v348
  %v350 = vpop.f32.mrf.mxu0
  %351 = vdwg.mxu0
  %s352 = scalar_lea.vmem %s2, 6
  %353 = vst.msk [vmem:[%s352] sm:$0x3] %vm94, %v349
  %s354 = scalar_lea.vmem %s0, 8
  %v355 = vld [vmem:[%s354] sm:$0x3]
  %s356 = scalar_lea.vmem %s1, 256
  %v357 = vld [vmem:[%s356] sm:$0xff]
  %v358 = vld [vmem:[%s356 + $0x8] sm:$0xff]
  %v359 = vld [vmem:[%s356 + $0x10] sm:$0xff]
  %v360 = vld [vmem:[%s356 + $0x18] sm:$0xff]
  %v361 = vld [vmem:[%s356 + $0x20] sm:$0xff]
  %v362 = vld [vmem:[%s356 + $0x28] sm:$0xff]
  %v363 = vld [vmem:[%s356 + $0x30] sm:$0xff]
  %v364 = vld [vmem:[%s356 + $0x38] sm:$0xff]
  %v366 = vsel %vm20, %v355, 0
  %368 = vmatprep.subr.mxu0 0.0
  %369 = vmatpush1.msra.mxu0 0.0
  %370 = vmatprep.subr.mxu0 0.0
  %371 = vmatpush1.msra.mxu0 0.0
  %372 = vmatprep.subr.mxu0 0.0
  %373 = vmatpush1.msra.mxu0 0.0
  %374 = vmatprep.subr.mxu0 0.0
  %375 = vmatpush1.msra.mxu0 0.0
  %376 = vmatprep.subr.mxu0 0.0
  %377 = vmatpush1.msra.mxu0 0.0
  %378 = vmatprep.subr.mxu0 0.0
  %379 = vmatpush1.msra.mxu0 0.0
  %380 = vmatprep.subr.mxu0 0.0
  %381 = vmatpush1.msra.mxu0 0.0
  %382 = vmatprep.subr.mxu0 0.0
  %383 = vmatpush1.msra.mxu0 0.0
  %384 = vmatprep.subr.mxu0 0.0
  %385 = vmatpush1.msra.mxu0 %v364
  %386 = vmatprep.subr.mxu0 0.0
  %387 = vmatpush1.msra.mxu0 %v363
  %388 = vmatprep.subr.mxu0 0.0
  %389 = vmatpush1.msra.mxu0 %v362
  %390 = vmatprep.subr.mxu0 0.0
  %391 = vmatpush1.msra.mxu0 %v361
  %392 = vmatprep.subr.mxu0 0.0
  %393 = vmatpush1.msra.mxu0 %v360
  %394 = vmatprep.subr.mxu0 0.0
  %395 = vmatpush1.msra.mxu0 %v359
  %396 = vmatprep.subr.mxu0 0.0
  %397 = vmatpush1.msra.mxu0 %v358
  %398 = vmatprep.subr.mxu0 0.0
  %399 = vmatpush1.msra.mxu0 %v357
  %400 = vmatprep.subr.mxu0 0.0
  %401 = vmatpush2.msra.mxu0 0.0
  %402 = vmatprep.subr.mxu0 0.0
  %403 = vmatpush2.msra.mxu0 0.0
  %404 = vmatprep.subr.mxu0 0.0
  %405 = vmatpush2.msra.mxu0 0.0
  %406 = vmatprep.subr.mxu0 0.0
  %407 = vmatpush2.msra.mxu0 0.0
  %408 = vmatprep.subr.mxu0 0.0
  %409 = vmatpush2.msra.mxu0 0.0
  %410 = vmatprep.subr.mxu0 0.0
  %411 = vmatpush2.msra.mxu0 0.0
  %412 = vmatprep.subr.mxu0 0.0
  %413 = vmatpush2.msra.mxu0 0.0
  %414 = vmatprep.subr.mxu0 0.0
  %415 = vmatpush2.msra.mxu0 0.0
  %416 = vmatprep.subr.mxu0 0.0
  %417 = vmatpush2.msra.mxu0 0.0
  %418 = vmatprep.subr.mxu0 0.0
  %419 = vmatpush2.msra.mxu0 0.0
  %420 = vmatprep.subr.mxu0 0.0
  %421 = vmatpush2.msra.mxu0 0.0
  %422 = vmatprep.subr.mxu0 0.0
  %423 = vmatpush2.msra.mxu0 0.0
  %424 = vmatprep.subr.mxu0 0.0
  %425 = vmatpush2.msra.mxu0 0.0
  %426 = vmatprep.subr.mxu0 0.0
  %427 = vmatpush2.msra.mxu0 0.0
  %428 = vmatprep.subr.mxu0 0.0
  %429 = vmatpush2.msra.mxu0 0.0
  %430 = vmatprep.subr.mxu0 0.0
  %431 = vmatpush2.msra.mxu0 0.0
  %432 = vmatprep.mubr.f32.mxu0 0.0
  %433 = vmatmul.mubr.f32.gmra.mxu0 %v366
  %v434 = vpop.f32.mrf.mxu0
  %v435 = vadd.f32 0.0, %v434
  %v436 = vpop.f32.mrf.mxu0
  %437 = vdwg.mxu0
  %s438 = scalar_lea.vmem %s2, 8
  %439 = vst.msk [vmem:[%s438] sm:$0x3] %vm94, %v435
  %s440 = scalar_lea.vmem %s0, 10
  %v441 = vld [vmem:[%s440] sm:$0x3]
  %s442 = scalar_lea.vmem %s1, 320
  %v443 = vld [vmem:[%s442] sm:$0xff]
  %v444 = vld [vmem:[%s442 + $0x8] sm:$0xff]
  %v445 = vld [vmem:[%s442 + $0x10] sm:$0xff]
  %v446 = vld [vmem:[%s442 + $0x18] sm:$0xff]
  %v447 = vld [vmem:[%s442 + $0x20] sm:$0xff]
  %v448 = vld [vmem:[%s442 + $0x28] sm:$0xff]
  %v449 = vld [vmem:[%s442 + $0x30] sm:$0xff]
  %v450 = vld [vmem:[%s442 + $0x38] sm:$0xff]
  %v452 = vsel %vm20, %v441, 0
  %454 = vmatprep.subr.mxu0 0.0
  %455 = vmatpush1.msra.mxu0 0.0
  %456 = vmatprep.subr.mxu0 0.0
  %457 = vmatpush1.msra.mxu0 0.0
  %458 = vmatprep.subr.mxu0 0.0
  %459 = vmatpush1.msra.mxu0 0.0
  %460 = vmatprep.subr.mxu0 0.0
  %461 = vmatpush1.msra.mxu0 0.0
  %462 = vmatprep.subr.mxu0 0.0
  %463 = vmatpush1.msra.mxu0 0.0
  %464 = vmatprep.subr.mxu0 0.0
  %465 = vmatpush1.msra.mxu0 0.0
  %466 = vmatprep.subr.mxu0 0.0
  %467 = vmatpush1.msra.mxu0 0.0
  %468 = vmatprep.subr.mxu0 0.0
  %469 = vmatpush1.msra.mxu0 0.0
  %470 = vmatprep.subr.mxu0 0.0
  %471 = vmatpush1.msra.mxu0 %v450
  %472 = vmatprep.subr.mxu0 0.0
  %473 = vmatpush1.msra.mxu0 %v449
  %474 = vmatprep.subr.mxu0 0.0
  %475 = vmatpush1.msra.mxu0 %v448
  %476 = vmatprep.subr.mxu0 0.0
  %477 = vmatpush1.msra.mxu0 %v447
  %478 = vmatprep.subr.mxu0 0.0
  %479 = vmatpush1.msra.mxu0 %v446
  %480 = vmatprep.subr.mxu0 0.0
  %481 = vmatpush1.msra.mxu0 %v445
  %482 = vmatprep.subr.mxu0 0.0
  %483 = vmatpush1.msra.mxu0 %v444
  %484 = vmatprep.subr.mxu0 0.0
  %485 = vmatpush1.msra.mxu0 %v443
  %486 = vmatprep.subr.mxu0 0.0
  %487 = vmatpush2.msra.mxu0 0.0
  %488 = vmatprep.subr.mxu0 0.0
  %489 = vmatpush2.msra.mxu0 0.0
  %490 = vmatprep.subr.mxu0 0.0
  %491 = vmatpush2.msra.mxu0 0.0
  %492 = vmatprep.subr.mxu0 0.0
  %493 = vmatpush2.msra.mxu0 0.0
  %494 = vmatprep.subr.mxu0 0.0
  %495 = vmatpush2.msra.mxu0 0.0
  %496 = vmatprep.subr.mxu0 0.0
  %497 = vmatpush2.msra.mxu0 0.0
  %498 = vmatprep.subr.mxu0 0.0
  %499 = vmatpush2.msra.mxu0 0.0
  %500 = vmatprep.subr.mxu0 0.0
  %501 = vmatpush2.msra.mxu0 0.0
  %502 = vmatprep.subr.mxu0 0.0
  %503 = vmatpush2.msra.mxu0 0.0
  %504 = vmatprep.subr.mxu0 0.0
  %505 = vmatpush2.msra.mxu0 0.0
  %506 = vmatprep.subr.mxu0 0.0
  %507 = vmatpush2.msra.mxu0 0.0
  %508 = vmatprep.subr.mxu0 0.0
  %509 = vmatpush2.msra.mxu0 0.0
  %510 = vmatprep.subr.mxu0 0.0
  %511 = vmatpush2.msra.mxu0 0.0
  %512 = vmatprep.subr.mxu0 0.0
  %513 = vmatpush2.msra.mxu0 0.0
  %514 = vmatprep.subr.mxu0 0.0
  %515 = vmatpush2.msra.mxu0 0.0
  %516 = vmatprep.subr.mxu0 0.0
  %517 = vmatpush2.msra.mxu0 0.0
  %518 = vmatprep.mubr.f32.mxu0 0.0
  %519 = vmatmul.mubr.f32.gmra.mxu0 %v452
  %v520 = vpop.f32.mrf.mxu0
  %v521 = vadd.f32 0.0, %v520
  %v522 = vpop.f32.mrf.mxu0
  %523 = vdwg.mxu0
  %s524 = scalar_lea.vmem %s2, 10
  %525 = vst.msk [vmem:[%s524] sm:$0x3] %vm94, %v521
  %s526 = scalar_lea.vmem %s0, 12
  %v527 = vld [vmem:[%s526] sm:$0x3]
  %s528 = scalar_lea.vmem %s1, 384
  %v529 = vld [vmem:[%s528] sm:$0xff]
  %v530 = vld [vmem:[%s528 + $0x8] sm:$0xff]
  %v531 = vld [vmem:[%s528 + $0x10] sm:$0xff]
  %v532 = vld [vmem:[%s528 + $0x18] sm:$0xff]
  %v533 = vld [vmem:[%s528 + $0x20] sm:$0xff]
  %v534 = vld [vmem:[%s528 + $0x28] sm:$0xff]
  %v535 = vld [vmem:[%s528 + $0x30] sm:$0xff]
  %v536 = vld [vmem:[%s528 + $0x38] sm:$0xff]
  %v538 = vsel %vm20, %v527, 0
  %540 = vmatprep.subr.mxu0 0.0
  %541 = vmatpush1.msra.mxu0 0.0
  %542 = vmatprep.subr.mxu0 0.0
  %543 = vmatpush1.msra.mxu0 0.0
  %544 = vmatprep.subr.mxu0 0.0
  %545 = vmatpush1.msra.mxu0 0.0
  %546 = vmatprep.subr.mxu0 0.0
  %547 = vmatpush1.msra.mxu0 0.0
  %548 = vmatprep.subr.mxu0 0.0
  %549 = vmatpush1.msra.mxu0 0.0
  %550 = vmatprep.subr.mxu0 0.0
  %551 = vmatpush1.msra.mxu0 0.0
  %552 = vmatprep.subr.mxu0 0.0
  %553 = vmatpush1.msra.mxu0 0.0
  %554 = vmatprep.subr.mxu0 0.0
  %555 = vmatpush1.msra.mxu0 0.0
  %556 = vmatprep.subr.mxu0 0.0
  %557 = vmatpush1.msra.mxu0 %v536
  %558 = vmatprep.subr.mxu0 0.0
  %559 = vmatpush1.msra.mxu0 %v535
  %560 = vmatprep.subr.mxu0 0.0
  %561 = vmatpush1.msra.mxu0 %v534
  %562 = vmatprep.subr.mxu0 0.0
  %563 = vmatpush1.msra.mxu0 %v533
  %564 = vmatprep.subr.mxu0 0.0
  %565 = vmatpush1.msra.mxu0 %v532
  %566 = vmatprep.subr.mxu0 0.0
  %567 = vmatpush1.msra.mxu0 %v531
  %568 = vmatprep.subr.mxu0 0.0
  %569 = vmatpush1.msra.mxu0 %v530
  %570 = vmatprep.subr.mxu0 0.0
  %571 = vmatpush1.msra.mxu0 %v529
  %572 = vmatprep.subr.mxu0 0.0
  %573 = vmatpush2.msra.mxu0 0.0
  %574 = vmatprep.subr.mxu0 0.0
  %575 = vmatpush2.msra.mxu0 0.0
  %576 = vmatprep.subr.mxu0 0.0
  %577 = vmatpush2.msra.mxu0 0.0
  %578 = vmatprep.subr.mxu0 0.0
  %579 = vmatpush2.msra.mxu0 0.0
  %580 = vmatprep.subr.mxu0 0.0
  %581 = vmatpush2.msra.mxu0 0.0
  %582 = vmatprep.subr.mxu0 0.0
  %583 = vmatpush2.msra.mxu0 0.0
  %584 = vmatprep.subr.mxu0 0.0
  %585 = vmatpush2.msra.mxu0 0.0
  %586 = vmatprep.subr.mxu0 0.0
  %587 = vmatpush2.msra.mxu0 0.0
  %588 = vmatprep.subr.mxu0 0.0
  %589 = vmatpush2.msra.mxu0 0.0
  %590 = vmatprep.subr.mxu0 0.0
  %591 = vmatpush2.msra.mxu0 0.0
  %592 = vmatprep.subr.mxu0 0.0
  %593 = vmatpush2.msra.mxu0 0.0
  %594 = vmatprep.subr.mxu0 0.0
  %595 = vmatpush2.msra.mxu0 0.0
  %596 = vmatprep.subr.mxu0 0.0
  %597 = vmatpush2.msra.mxu0 0.0
  %598 = vmatprep.subr.mxu0 0.0
  %599 = vmatpush2.msra.mxu0 0.0
  %600 = vmatprep.subr.mxu0 0.0
  %601 = vmatpush2.msra.mxu0 0.0
  %602 = vmatprep.subr.mxu0 0.0
  %603 = vmatpush2.msra.mxu0 0.0
  %604 = vmatprep.mubr.f32.mxu0 0.0
  %605 = vmatmul.mubr.f32.gmra.mxu0 %v538
  %v606 = vpop.f32.mrf.mxu0
  %v607 = vadd.f32 0.0, %v606
  %v608 = vpop.f32.mrf.mxu0
  %609 = vdwg.mxu0
  %s610 = scalar_lea.vmem %s2, 12
  %611 = vst.msk [vmem:[%s610] sm:$0x3] %vm94, %v607
  %s612 = scalar_lea.vmem %s0, 14
  %v613 = vld [vmem:[%s612] sm:$0x3]
  %s614 = scalar_lea.vmem %s1, 448
  %v615 = vld [vmem:[%s614] sm:$0xff]
  %v616 = vld [vmem:[%s614 + $0x8] sm:$0xff]
  %v617 = vld [vmem:[%s614 + $0x10] sm:$0xff]
  %v618 = vld [vmem:[%s614 + $0x18] sm:$0xff]
  %v619 = vld [vmem:[%s614 + $0x20] sm:$0xff]
  %v620 = vld [vmem:[%s614 + $0x28] sm:$0xff]
  %v621 = vld [vmem:[%s614 + $0x30] sm:$0xff]
  %v622 = vld [vmem:[%s614 + $0x38] sm:$0xff]
  %v624 = vsel %vm20, %v613, 0
  %626 = vmatprep.subr.mxu0 0.0
  %627 = vmatpush1.msra.mxu0 0.0
  %628 = vmatprep.subr.mxu0 0.0
  %629 = vmatpush1.msra.mxu0 0.0
  %630 = vmatprep.subr.mxu0 0.0
  %631 = vmatpush1.msra.mxu0 0.0
  %632 = vmatprep.subr.mxu0 0.0
  %633 = vmatpush1.msra.mxu0 0.0
  %634 = vmatprep.subr.mxu0 0.0
  %635 = vmatpush1.msra.mxu0 0.0
  %636 = vmatprep.subr.mxu0 0.0
  %637 = vmatpush1.msra.mxu0 0.0
  %638 = vmatprep.subr.mxu0 0.0
  %639 = vmatpush1.msra.mxu0 0.0
  %640 = vmatprep.subr.mxu0 0.0
  %641 = vmatpush1.msra.mxu0 0.0
  %642 = vmatprep.subr.mxu0 0.0
  %643 = vmatpush1.msra.mxu0 %v622
  %644 = vmatprep.subr.mxu0 0.0
  %645 = vmatpush1.msra.mxu0 %v621
  %646 = vmatprep.subr.mxu0 0.0
  %647 = vmatpush1.msra.mxu0 %v620
  %648 = vmatprep.subr.mxu0 0.0
  %649 = vmatpush1.msra.mxu0 %v619
  %650 = vmatprep.subr.mxu0 0.0
  %651 = vmatpush1.msra.mxu0 %v618
  %652 = vmatprep.subr.mxu0 0.0
  %653 = vmatpush1.msra.mxu0 %v617
  %654 = vmatprep.subr.mxu0 0.0
  %655 = vmatpush1.msra.mxu0 %v616
  %656 = vmatprep.subr.mxu0 0.0
  %657 = vmatpush1.msra.mxu0 %v615
  %658 = vmatprep.subr.mxu0 0.0
  %659 = vmatpush2.msra.mxu0 0.0
  %660 = vmatprep.subr.mxu0 0.0
  %661 = vmatpush2.msra.mxu0 0.0
  %662 = vmatprep.subr.mxu0 0.0
  %663 = vmatpush2.msra.mxu0 0.0
  %664 = vmatprep.subr.mxu0 0.0
  %665 = vmatpush2.msra.mxu0 0.0
  %666 = vmatprep.subr.mxu0 0.0
  %667 = vmatpush2.msra.mxu0 0.0
  %668 = vmatprep.subr.mxu0 0.0
  %669 = vmatpush2.msra.mxu0 0.0
  %670 = vmatprep.subr.mxu0 0.0
  %671 = vmatpush2.msra.mxu0 0.0
  %672 = vmatprep.subr.mxu0 0.0
  %673 = vmatpush2.msra.mxu0 0.0
  %674 = vmatprep.subr.mxu0 0.0
  %675 = vmatpush2.msra.mxu0 0.0
  %676 = vmatprep.subr.mxu0 0.0
  %677 = vmatpush2.msra.mxu0 0.0
  %678 = vmatprep.subr.mxu0 0.0
  %679 = vmatpush2.msra.mxu0 0.0
  %680 = vmatprep.subr.mxu0 0.0
  %681 = vmatpush2.msra.mxu0 0.0
  %682 = vmatprep.subr.mxu0 0.0
  %683 = vmatpush2.msra.mxu0 0.0
  %684 = vmatprep.subr.mxu0 0.0
  %685 = vmatpush2.msra.mxu0 0.0
  %686 = vmatprep.subr.mxu0 0.0
  %687 = vmatpush2.msra.mxu0 0.0
  %688 = vmatprep.subr.mxu0 0.0
  %689 = vmatpush2.msra.mxu0 0.0
  %690 = vmatprep.mubr.f32.mxu0 0.0
  %691 = vmatmul.mubr.f32.gmra.mxu0 %v624
  %v692 = vpop.f32.mrf.mxu0
  %v693 = vadd.f32 0.0, %v692
  %v694 = vpop.f32.mrf.mxu0
  %695 = vdwg.mxu0
  %s696 = scalar_lea.vmem %s2, 14
  %697 = vst.msk [vmem:[%s696] sm:$0x3] %vm94, %v693
  %s698 = scalar_lea.vmem %s0, 16
  %v699 = vld [vmem:[%s698] sm:$0x3]
  %s700 = scalar_lea.vmem %s1, 512
  %v701 = vld [vmem:[%s700] sm:$0xff]
  %v702 = vld [vmem:[%s700 + $0x8] sm:$0xff]
  %v703 = vld [vmem:[%s700 + $0x10] sm:$0xff]
  %v704 = vld [vmem:[%s700 + $0x18] sm:$0xff]
  %v705 = vld [vmem:[%s700 + $0x20] sm:$0xff]
  %v706 = vld [vmem:[%s700 + $0x28] sm:$0xff]
  %v707 = vld [vmem:[%s700 + $0x30] sm:$0xff]
  %v708 = vld [vmem:[%s700 + $0x38] sm:$0xff]
  %v710 = vsel %vm20, %v699, 0
  %712 = vmatprep.subr.mxu0 0.0
  %713 = vmatpush1.msra.mxu0 0.0
  %714 = vmatprep.subr.mxu0 0.0
  %715 = vmatpush1.msra.mxu0 0.0
  %716 = vmatprep.subr.mxu0 0.0
  %717 = vmatpush1.msra.mxu0 0.0
  %718 = vmatprep.subr.mxu0 0.0
  %719 = vmatpush1.msra.mxu0 0.0
  %720 = vmatprep.subr.mxu0 0.0
  %721 = vmatpush1.msra.mxu0 0.0
  %722 = vmatprep.subr.mxu0 0.0
  %723 = vmatpush1.msra.mxu0 0.0
  %724 = vmatprep.subr.mxu0 0.0
  %725 = vmatpush1.msra.mxu0 0.0
  %726 = vmatprep.subr.mxu0 0.0
  %727 = vmatpush1.msra.mxu0 0.0
  %728 = vmatprep.subr.mxu0 0.0
  %729 = vmatpush1.msra.mxu0 %v708
  %730 = vmatprep.subr.mxu0 0.0
  %731 = vmatpush1.msra.mxu0 %v707
  %732 = vmatprep.subr.mxu0 0.0
  %733 = vmatpush1.msra.mxu0 %v706
  %734 = vmatprep.subr.mxu0 0.0
  %735 = vmatpush1.msra.mxu0 %v705
  %736 = vmatprep.subr.mxu0 0.0
  %737 = vmatpush1.msra.mxu0 %v704
  %738 = vmatprep.subr.mxu0 0.0
  %739 = vmatpush1.msra.mxu0 %v703
  %740 = vmatprep.subr.mxu0 0.0
  %741 = vmatpush1.msra.mxu0 %v702
  %742 = vmatprep.subr.mxu0 0.0
  %743 = vmatpush1.msra.mxu0 %v701
  %744 = vmatprep.subr.mxu0 0.0
  %745 = vmatpush2.msra.mxu0 0.0
  %746 = vmatprep.subr.mxu0 0.0
  %747 = vmatpush2.msra.mxu0 0.0
  %748 = vmatprep.subr.mxu0 0.0
  %749 = vmatpush2.msra.mxu0 0.0
  %750 = vmatprep.subr.mxu0 0.0
  %751 = vmatpush2.msra.mxu0 0.0
  %752 = vmatprep.subr.mxu0 0.0
  %753 = vmatpush2.msra.mxu0 0.0
  %754 = vmatprep.subr.mxu0 0.0
  %755 = vmatpush2.msra.mxu0 0.0
  %756 = vmatprep.subr.mxu0 0.0
  %757 = vmatpush2.msra.mxu0 0.0
  %758 = vmatprep.subr.mxu0 0.0
  %759 = vmatpush2.msra.mxu0 0.0
  %760 = vmatprep.subr.mxu0 0.0
  %761 = vmatpush2.msra.mxu0 0.0
  %762 = vmatprep.subr.mxu0 0.0
  %763 = vmatpush2.msra.mxu0 0.0
  %764 = vmatprep.subr.mxu0 0.0
  %765 = vmatpush2.msra.mxu0 0.0
  %766 = vmatprep.subr.mxu0 0.0
  %767 = vmatpush2.msra.mxu0 0.0
  %768 = vmatprep.subr.mxu0 0.0
  %769 = vmatpush2.msra.mxu0 0.0
  %770 = vmatprep.subr.mxu0 0.0
  %771 = vmatpush2.msra.mxu0 0.0
  %772 = vmatprep.subr.mxu0 0.0
  %773 = vmatpush2.msra.mxu0 0.0
  %774 = vmatprep.subr.mxu0 0.0
  %775 = vmatpush2.msra.mxu0 0.0
  %776 = vmatprep.mubr.f32.mxu0 0.0
  %777 = vmatmul.mubr.f32.gmra.mxu0 %v710
  %v778 = vpop.f32.mrf.mxu0
  %v779 = vadd.f32 0.0, %v778
  %v780 = vpop.f32.mrf.mxu0
  %781 = vdwg.mxu0
  %s782 = scalar_lea.vmem %s2, 16
  %783 = vst.msk [vmem:[%s782] sm:$0x3] %vm94, %v779
  %s784 = scalar_lea.vmem %s0, 18
  %v785 = vld [vmem:[%s784] sm:$0x3]
  %s786 = scalar_lea.vmem %s1, 576
  %v787 = vld [vmem:[%s786] sm:$0xff]
  %v788 = vld [vmem:[%s786 + $0x8] sm:$0xff]
  %v789 = vld [vmem:[%s786 + $0x10] sm:$0xff]
  %v790 = vld [vmem:[%s786 + $0x18] sm:$0xff]
  %v791 = vld [vmem:[%s786 + $0x20] sm:$0xff]
  %v792 = vld [vmem:[%s786 + $0x28] sm:$0xff]
  %v793 = vld [vmem:[%s786 + $0x30] sm:$0xff]
  %v794 = vld [vmem:[%s786 + $0x38] sm:$0xff]
  %v796 = vsel %vm20, %v785, 0
  %798 = vmatprep.subr.mxu0 0.0
  %799 = vmatpush1.msra.mxu0 0.0
  %800 = vmatprep.subr.mxu0 0.0
  %801 = vmatpush1.msra.mxu0 0.0
  %802 = vmatprep.subr.mxu0 0.0
  %803 = vmatpush1.msra.mxu0 0.0
  %804 = vmatprep.subr.mxu0 0.0
  %805 = vmatpush1.msra.mxu0 0.0
  %806 = vmatprep.subr.mxu0 0.0
  %807 = vmatpush1.msra.mxu0 0.0
  %808 = vmatprep.subr.mxu0 0.0
  %809 = vmatpush1.msra.mxu0 0.0
  %810 = vmatprep.subr.mxu0 0.0
  %811 = vmatpush1.msra.mxu0 0.0
  %812 = vmatprep.subr.mxu0 0.0
  %813 = vmatpush1.msra.mxu0 0.0
  %814 = vmatprep.subr.mxu0 0.0
  %815 = vmatpush1.msra.mxu0 %v794
  %816 = vmatprep.subr.mxu0 0.0
  %817 = vmatpush1.msra.mxu0 %v793
  %818 = vmatprep.subr.mxu0 0.0
  %819 = vmatpush1.msra.mxu0 %v792
  %820 = vmatprep.subr.mxu0 0.0
  %821 = vmatpush1.msra.mxu0 %v791
  %822 = vmatprep.subr.mxu0 0.0
  %823 = vmatpush1.msra.mxu0 %v790
  %824 = vmatprep.subr.mxu0 0.0
  %825 = vmatpush1.msra.mxu0 %v789
  %826 = vmatprep.subr.mxu0 0.0
  %827 = vmatpush1.msra.mxu0 %v788
  %828 = vmatprep.subr.mxu0 0.0
  %829 = vmatpush1.msra.mxu0 %v787
  %830 = vmatprep.subr.mxu0 0.0
  %831 = vmatpush2.msra.mxu0 0.0
  %832 = vmatprep.subr.mxu0 0.0
  %833 = vmatpush2.msra.mxu0 0.0
  %834 = vmatprep.subr.mxu0 0.0
  %835 = vmatpush2.msra.mxu0 0.0
  %836 = vmatprep.subr.mxu0 0.0
  %837 = vmatpush2.msra.mxu0 0.0
  %838 = vmatprep.subr.mxu0 0.0
  %839 = vmatpush2.msra.mxu0 0.0
  %840 = vmatprep.subr.mxu0 0.0
  %841 = vmatpush2.msra.mxu0 0.0
  %842 = vmatprep.subr.mxu0 0.0
  %843 = vmatpush2.msra.mxu0 0.0
  %844 = vmatprep.subr.mxu0 0.0
  %845 = vmatpush2.msra.mxu0 0.0
  %846 = vmatprep.subr.mxu0 0.0
  %847 = vmatpush2.msra.mxu0 0.0
  %848 = vmatprep.subr.mxu0 0.0
  %849 = vmatpush2.msra.mxu0 0.0
  %850 = vmatprep.subr.mxu0 0.0
  %851 = vmatpush2.msra.mxu0 0.0
  %852 = vmatprep.subr.mxu0 0.0
  %853 = vmatpush2.msra.mxu0 0.0
  %854 = vmatprep.subr.mxu0 0.0
  %855 = vmatpush2.msra.mxu0 0.0
  %856 = vmatprep.subr.mxu0 0.0
  %857 = vmatpush2.msra.mxu0 0.0
  %858 = vmatprep.subr.mxu0 0.0
  %859 = vmatpush2.msra.mxu0 0.0
  %860 = vmatprep.subr.mxu0 0.0
  %861 = vmatpush2.msra.mxu0 0.0
  %862 = vmatprep.mubr.f32.mxu0 0.0
  %863 = vmatmul.mubr.f32.gmra.mxu0 %v796
  %v864 = vpop.f32.mrf.mxu0
  %v865 = vadd.f32 0.0, %v864
  %v866 = vpop.f32.mrf.mxu0
  %867 = vdwg.mxu0
  %s868 = scalar_lea.vmem %s2, 18
  %869 = vst.msk [vmem:[%s868] sm:$0x3] %vm94, %v865
  %s870 = scalar_lea.vmem %s0, 20
  %v871 = vld [vmem:[%s870] sm:$0x3]
  %s872 = scalar_lea.vmem %s1, 640
  %v873 = vld [vmem:[%s872] sm:$0xff]
  %v874 = vld [vmem:[%s872 + $0x8] sm:$0xff]
  %v875 = vld [vmem:[%s872 + $0x10] sm:$0xff]
  %v876 = vld [vmem:[%s872 + $0x18] sm:$0xff]
  %v877 = vld [vmem:[%s872 + $0x20] sm:$0xff]
  %v878 = vld [vmem:[%s872 + $0x28] sm:$0xff]
  %v879 = vld [vmem:[%s872 + $0x30] sm:$0xff]
  %v880 = vld [vmem:[%s872 + $0x38] sm:$0xff]
  %v882 = vsel %vm20, %v871, 0
  %884 = vmatprep.subr.mxu0 0.0
  %885 = vmatpush1.msra.mxu0 0.0
  %886 = vmatprep.subr.mxu0 0.0
  %887 = vmatpush1.msra.mxu0 0.0
  %888 = vmatprep.subr.mxu0 0.0
  %889 = vmatpush1.msra.mxu0 0.0
  %890 = vmatprep.subr.mxu0 0.0
  %891 = vmatpush1.msra.mxu0 0.0
  %892 = vmatprep.subr.mxu0 0.0
  %893 = vmatpush1.msra.mxu0 0.0
  %894 = vmatprep.subr.mxu0 0.0
  %895 = vmatpush1.msra.mxu0 0.0
  %896 = vmatprep.subr.mxu0 0.0
  %897 = vmatpush1.msra.mxu0 0.0
  %898 = vmatprep.subr.mxu0 0.0
  %899 = vmatpush1.msra.mxu0 0.0
  %900 = vmatprep.subr.mxu0 0.0
  %901 = vmatpush1.msra.mxu0 %v880
  %902 = vmatprep.subr.mxu0 0.0
  %903 = vmatpush1.msra.mxu0 %v879
  %904 = vmatprep.subr.mxu0 0.0
  %905 = vmatpush1.msra.mxu0 %v878
  %906 = vmatprep.subr.mxu0 0.0
  %907 = vmatpush1.msra.mxu0 %v877
  %908 = vmatprep.subr.mxu0 0.0
  %909 = vmatpush1.msra.mxu0 %v876
  %910 = vmatprep.subr.mxu0 0.0
  %911 = vmatpush1.msra.mxu0 %v875
  %912 = vmatprep.subr.mxu0 0.0
  %913 = vmatpush1.msra.mxu0 %v874
  %914 = vmatprep.subr.mxu0 0.0
  %915 = vmatpush1.msra.mxu0 %v873
  %916 = vmatprep.subr.mxu0 0.0
  %917 = vmatpush2.msra.mxu0 0.0
  %918 = vmatprep.subr.mxu0 0.0
  %919 = vmatpush2.msra.mxu0 0.0
  %920 = vmatprep.subr.mxu0 0.0
  %921 = vmatpush2.msra.mxu0 0.0
  %922 = vmatprep.subr.mxu0 0.0
  %923 = vmatpush2.msra.mxu0 0.0
  %924 = vmatprep.subr.mxu0 0.0
  %925 = vmatpush2.msra.mxu0 0.0
  %926 = vmatprep.subr.mxu0 0.0
  %927 = vmatpush2.msra.mxu0 0.0
  %928 = vmatprep.subr.mxu0 0.0
  %929 = vmatpush2.msra.mxu0 0.0
  %930 = vmatprep.subr.mxu0 0.0
  %931 = vmatpush2.msra.mxu0 0.0
  %932 = vmatprep.subr.mxu0 0.0
  %933 = vmatpush2.msra.mxu0 0.0
  %934 = vmatprep.subr.mxu0 0.0
  %935 = vmatpush2.msra.mxu0 0.0
  %936 = vmatprep.subr.mxu0 0.0
  %937 = vmatpush2.msra.mxu0 0.0
  %938 = vmatprep.subr.mxu0 0.0
  %939 = vmatpush2.msra.mxu0 0.0
  %940 = vmatprep.subr.mxu0 0.0
  %941 = vmatpush2.msra.mxu0 0.0
  %942 = vmatprep.subr.mxu0 0.0
  %943 = vmatpush2.msra.mxu0 0.0
  %944 = vmatprep.subr.mxu0 0.0
  %945 = vmatpush2.msra.mxu0 0.0
  %946 = vmatprep.subr.mxu0 0.0
  %947 = vmatpush2.msra.mxu0 0.0
  %948 = vmatprep.mubr.f32.mxu0 0.0
  %949 = vmatmul.mubr.f32.gmra.mxu0 %v882
  %v950 = vpop.f32.mrf.mxu0
  %v951 = vadd.f32 0.0, %v950
  %v952 = vpop.f32.mrf.mxu0
  %953 = vdwg.mxu0
  %s954 = scalar_lea.vmem %s2, 20
  %955 = vst.msk [vmem:[%s954] sm:$0x3] %vm94, %v951
  %s956 = scalar_lea.vmem %s0, 22
  %v957 = vld [vmem:[%s956] sm:$0x3]
  %s958 = scalar_lea.vmem %s1, 704
  %v959 = vld [vmem:[%s958] sm:$0xff]
  %v960 = vld [vmem:[%s958 + $0x8] sm:$0xff]
  %v961 = vld [vmem:[%s958 + $0x10] sm:$0xff]
  %v962 = vld [vmem:[%s958 + $0x18] sm:$0xff]
  %v963 = vld [vmem:[%s958 + $0x20] sm:$0xff]
  %v964 = vld [vmem:[%s958 + $0x28] sm:$0xff]
  %v965 = vld [vmem:[%s958 + $0x30] sm:$0xff]
  %v966 = vld [vmem:[%s958 + $0x38] sm:$0xff]
  %v968 = vsel %vm20, %v957, 0
  %970 = vmatprep.subr.mxu0 0.0
  %971 = vmatpush1.msra.mxu0 0.0
  %972 = vmatprep.subr.mxu0 0.0
  %973 = vmatpush1.msra.mxu0 0.0
  %974 = vmatprep.subr.mxu0 0.0
  %975 = vmatpush1.msra.mxu0 0.0
  %976 = vmatprep.subr.mxu0 0.0
  %977 = vmatpush1.msra.mxu0 0.0
  %978 = vmatprep.subr.mxu0 0.0
  %979 = vmatpush1.msra.mxu0 0.0
  %980 = vmatprep.subr.mxu0 0.0
  %981 = vmatpush1.msra.mxu0 0.0
  %982 = vmatprep.subr.mxu0 0.0
  %983 = vmatpush1.msra.mxu0 0.0
  %984 = vmatprep.subr.mxu0 0.0
  %985 = vmatpush1.msra.mxu0 0.0
  %986 = vmatprep.subr.mxu0 0.0
  %987 = vmatpush1.msra.mxu0 %v966
  %988 = vmatprep.subr.mxu0 0.0
  %989 = vmatpush1.msra.mxu0 %v965
  %990 = vmatprep.subr.mxu0 0.0
  %991 = vmatpush1.msra.mxu0 %v964
  %992 = vmatprep.subr.mxu0 0.0
  %993 = vmatpush1.msra.mxu0 %v963
  %994 = vmatprep.subr.mxu0 0.0
  %995 = vmatpush1.msra.mxu0 %v962
  %996 = vmatprep.subr.mxu0 0.0
  %997 = vmatpush1.msra.mxu0 %v961
  %998 = vmatprep.subr.mxu0 0.0
  %999 = vmatpush1.msra.mxu0 %v960
  %1000 = vmatprep.subr.mxu0 0.0
  %1001 = vmatpush1.msra.mxu0 %v959
  %1002 = vmatprep.subr.mxu0 0.0
  %1003 = vmatpush2.msra.mxu0 0.0
  %1004 = vmatprep.subr.mxu0 0.0
  %1005 = vmatpush2.msra.mxu0 0.0
  %1006 = vmatprep.subr.mxu0 0.0
  %1007 = vmatpush2.msra.mxu0 0.0
  %1008 = vmatprep.subr.mxu0 0.0
  %1009 = vmatpush2.msra.mxu0 0.0
  %1010 = vmatprep.subr.mxu0 0.0
  %1011 = vmatpush2.msra.mxu0 0.0
  %1012 = vmatprep.subr.mxu0 0.0
  %1013 = vmatpush2.msra.mxu0 0.0
  %1014 = vmatprep.subr.mxu0 0.0
  %1015 = vmatpush2.msra.mxu0 0.0
  %1016 = vmatprep.subr.mxu0 0.0
  %1017 = vmatpush2.msra.mxu0 0.0
  %1018 = vmatprep.subr.mxu0 0.0
  %1019 = vmatpush2.msra.mxu0 0.0
  %1020 = vmatprep.subr.mxu0 0.0
  %1021 = vmatpush2.msra.mxu0 0.0
  %1022 = vmatprep.subr.mxu0 0.0
  %1023 = vmatpush2.msra.mxu0 0.0
  %1024 = vmatprep.subr.mxu0 0.0
  %1025 = vmatpush2.msra.mxu0 0.0
  %1026 = vmatprep.subr.mxu0 0.0
  %1027 = vmatpush2.msra.mxu0 0.0
  %1028 = vmatprep.subr.mxu0 0.0
  %1029 = vmatpush2.msra.mxu0 0.0
  %1030 = vmatprep.subr.mxu0 0.0
  %1031 = vmatpush2.msra.mxu0 0.0
  %1032 = vmatprep.subr.mxu0 0.0
  %1033 = vmatpush2.msra.mxu0 0.0
  %1034 = vmatprep.mubr.f32.mxu0 0.0
  %1035 = vmatmul.mubr.f32.gmra.mxu0 %v968
  %v1036 = vpop.f32.mrf.mxu0
  %v1037 = vadd.f32 0.0, %v1036
  %v1038 = vpop.f32.mrf.mxu0
  %1039 = vdwg.mxu0
  %s1040 = scalar_lea.vmem %s2, 22
  %1041 = vst.msk [vmem:[%s1040] sm:$0x3] %vm94, %v1037
  %s1042 = scalar_lea.vmem %s0, 24
  %v1043 = vld [vmem:[%s1042] sm:$0x3]
  %s1044 = scalar_lea.vmem %s1, 768
  %v1045 = vld [vmem:[%s1044] sm:$0xff]
  %v1046 = vld [vmem:[%s1044 + $0x8] sm:$0xff]
  %v1047 = vld [vmem:[%s1044 + $0x10] sm:$0xff]
  %v1048 = vld [vmem:[%s1044 + $0x18] sm:$0xff]
  %v1049 = vld [vmem:[%s1044 + $0x20] sm:$0xff]
  %v1050 = vld [vmem:[%s1044 + $0x28] sm:$0xff]
  %v1051 = vld [vmem:[%s1044 + $0x30] sm:$0xff]
  %v1052 = vld [vmem:[%s1044 + $0x38] sm:$0xff]
  %v1054 = vsel %vm20, %v1043, 0
  %1056 = vmatprep.subr.mxu0 0.0
  %1057 = vmatpush1.msra.mxu0 0.0
  %1058 = vmatprep.subr.mxu0 0.0
  %1059 = vmatpush1.msra.mxu0 0.0
  %1060 = vmatprep.subr.mxu0 0.0
  %1061 = vmatpush1.msra.mxu0 0.0
  %1062 = vmatprep.subr.mxu0 0.0
  %1063 = vmatpush1.msra.mxu0 0.0
  %1064 = vmatprep.subr.mxu0 0.0
  %1065 = vmatpush1.msra.mxu0 0.0
  %1066 = vmatprep.subr.mxu0 0.0
  %1067 = vmatpush1.msra.mxu0 0.0
  %1068 = vmatprep.subr.mxu0 0.0
  %1069 = vmatpush1.msra.mxu0 0.0
  %1070 = vmatprep.subr.mxu0 0.0
  %1071 = vmatpush1.msra.mxu0 0.0
  %1072 = vmatprep.subr.mxu0 0.0
  %1073 = vmatpush1.msra.mxu0 %v1052
  %1074 = vmatprep.subr.mxu0 0.0
  %1075 = vmatpush1.msra.mxu0 %v1051
  %1076 = vmatprep.subr.mxu0 0.0
  %1077 = vmatpush1.msra.mxu0 %v1050
  %1078 = vmatprep.subr.mxu0 0.0
  %1079 = vmatpush1.msra.mxu0 %v1049
  %1080 = vmatprep.subr.mxu0 0.0
  %1081 = vmatpush1.msra.mxu0 %v1048
  %1082 = vmatprep.subr.mxu0 0.0
  %1083 = vmatpush1.msra.mxu0 %v1047
  %1084 = vmatprep.subr.mxu0 0.0
  %1085 = vmatpush1.msra.mxu0 %v1046
  %1086 = vmatprep.subr.mxu0 0.0
  %1087 = vmatpush1.msra.mxu0 %v1045
  %1088 = vmatprep.subr.mxu0 0.0
  %1089 = vmatpush2.msra.mxu0 0.0
  %1090 = vmatprep.subr.mxu0 0.0
  %1091 = vmatpush2.msra.mxu0 0.0
  %1092 = vmatprep.subr.mxu0 0.0
  %1093 = vmatpush2.msra.mxu0 0.0
  %1094 = vmatprep.subr.mxu0 0.0
  %1095 = vmatpush2.msra.mxu0 0.0
  %1096 = vmatprep.subr.mxu0 0.0
  %1097 = vmatpush2.msra.mxu0 0.0
  %1098 = vmatprep.subr.mxu0 0.0
  %1099 = vmatpush2.msra.mxu0 0.0
  %1100 = vmatprep.subr.mxu0 0.0
  %1101 = vmatpush2.msra.mxu0 0.0
  %1102 = vmatprep.subr.mxu0 0.0
  %1103 = vmatpush2.msra.mxu0 0.0
  %1104 = vmatprep.subr.mxu0 0.0
  %1105 = vmatpush2.msra.mxu0 0.0
  %1106 = vmatprep.subr.mxu0 0.0
  %1107 = vmatpush2.msra.mxu0 0.0
  %1108 = vmatprep.subr.mxu0 0.0
  %1109 = vmatpush2.msra.mxu0 0.0
  %1110 = vmatprep.subr.mxu0 0.0
  %1111 = vmatpush2.msra.mxu0 0.0
  %1112 = vmatprep.subr.mxu0 0.0
  %1113 = vmatpush2.msra.mxu0 0.0
  %1114 = vmatprep.subr.mxu0 0.0
  %1115 = vmatpush2.msra.mxu0 0.0
  %1116 = vmatprep.subr.mxu0 0.0
  %1117 = vmatpush2.msra.mxu0 0.0
  %1118 = vmatprep.subr.mxu0 0.0
  %1119 = vmatpush2.msra.mxu0 0.0
  %1120 = vmatprep.mubr.f32.mxu0 0.0
  %1121 = vmatmul.mubr.f32.gmra.mxu0 %v1054
  %v1122 = vpop.f32.mrf.mxu0
  %v1123 = vadd.f32 0.0, %v1122
  %v1124 = vpop.f32.mrf.mxu0
  %1125 = vdwg.mxu0
  %s1126 = scalar_lea.vmem %s2, 24
  %1127 = vst.msk [vmem:[%s1126] sm:$0x3] %vm94, %v1123
  %s1128 = scalar_lea.vmem %s0, 26
  %v1129 = vld [vmem:[%s1128] sm:$0x3]
  %s1130 = scalar_lea.vmem %s1, 832
  %v1131 = vld [vmem:[%s1130] sm:$0xff]
  %v1132 = vld [vmem:[%s1130 + $0x8] sm:$0xff]
  %v1133 = vld [vmem:[%s1130 + $0x10] sm:$0xff]
  %v1134 = vld [vmem:[%s1130 + $0x18] sm:$0xff]
  %v1135 = vld [vmem:[%s1130 + $0x20] sm:$0xff]
  %v1136 = vld [vmem:[%s1130 + $0x28] sm:$0xff]
  %v1137 = vld [vmem:[%s1130 + $0x30] sm:$0xff]
  %v1138 = vld [vmem:[%s1130 + $0x38] sm:$0xff]
  %v1140 = vsel %vm20, %v1129, 0
  %1142 = vmatprep.subr.mxu0 0.0
  %1143 = vmatpush1.msra.mxu0 0.0
  %1144 = vmatprep.subr.mxu0 0.0
  %1145 = vmatpush1.msra.mxu0 0.0
  %1146 = vmatprep.subr.mxu0 0.0
  %1147 = vmatpush1.msra.mxu0 0.0
  %1148 = vmatprep.subr.mxu0 0.0
  %1149 = vmatpush1.msra.mxu0 0.0
  %1150 = vmatprep.subr.mxu0 0.0
  %1151 = vmatpush1.msra.mxu0 0.0
  %1152 = vmatprep.subr.mxu0 0.0
  %1153 = vmatpush1.msra.mxu0 0.0
  %1154 = vmatprep.subr.mxu0 0.0
  %1155 = vmatpush1.msra.mxu0 0.0
  %1156 = vmatprep.subr.mxu0 0.0
  %1157 = vmatpush1.msra.mxu0 0.0
  %1158 = vmatprep.subr.mxu0 0.0
  %1159 = vmatpush1.msra.mxu0 %v1138
  %1160 = vmatprep.subr.mxu0 0.0
  %1161 = vmatpush1.msra.mxu0 %v1137
  %1162 = vmatprep.subr.mxu0 0.0
  %1163 = vmatpush1.msra.mxu0 %v1136
  %1164 = vmatprep.subr.mxu0 0.0
  %1165 = vmatpush1.msra.mxu0 %v1135
  %1166 = vmatprep.subr.mxu0 0.0
  %1167 = vmatpush1.msra.mxu0 %v1134
  %1168 = vmatprep.subr.mxu0 0.0
  %1169 = vmatpush1.msra.mxu0 %v1133
  %1170 = vmatprep.subr.mxu0 0.0
  %1171 = vmatpush1.msra.mxu0 %v1132
  %1172 = vmatprep.subr.mxu0 0.0
  %1173 = vmatpush1.msra.mxu0 %v1131
  %1174 = vmatprep.subr.mxu0 0.0
  %1175 = vmatpush2.msra.mxu0 0.0
  %1176 = vmatprep.subr.mxu0 0.0
  %1177 = vmatpush2.msra.mxu0 0.0
  %1178 = vmatprep.subr.mxu0 0.0
  %1179 = vmatpush2.msra.mxu0 0.0
  %1180 = vmatprep.subr.mxu0 0.0
  %1181 = vmatpush2.msra.mxu0 0.0
  %1182 = vmatprep.subr.mxu0 0.0
  %1183 = vmatpush2.msra.mxu0 0.0
  %1184 = vmatprep.subr.mxu0 0.0
  %1185 = vmatpush2.msra.mxu0 0.0
  %1186 = vmatprep.subr.mxu0 0.0
  %1187 = vmatpush2.msra.mxu0 0.0
  %1188 = vmatprep.subr.mxu0 0.0
  %1189 = vmatpush2.msra.mxu0 0.0
  %1190 = vmatprep.subr.mxu0 0.0
  %1191 = vmatpush2.msra.mxu0 0.0
  %1192 = vmatprep.subr.mxu0 0.0
  %1193 = vmatpush2.msra.mxu0 0.0
  %1194 = vmatprep.subr.mxu0 0.0
  %1195 = vmatpush2.msra.mxu0 0.0
  %1196 = vmatprep.subr.mxu0 0.0
  %1197 = vmatpush2.msra.mxu0 0.0
  %1198 = vmatprep.subr.mxu0 0.0
  %1199 = vmatpush2.msra.mxu0 0.0
  %1200 = vmatprep.subr.mxu0 0.0
  %1201 = vmatpush2.msra.mxu0 0.0
  %1202 = vmatprep.subr.mxu0 0.0
  %1203 = vmatpush2.msra.mxu0 0.0
  %1204 = vmatprep.subr.mxu0 0.0
  %1205 = vmatpush2.msra.mxu0 0.0
  %1206 = vmatprep.mubr.f32.mxu0 0.0
  %1207 = vmatmul.mubr.f32.gmra.mxu0 %v1140
  %v1208 = vpop.f32.mrf.mxu0
  %v1209 = vadd.f32 0.0, %v1208
  %v1210 = vpop.f32.mrf.mxu0
  %1211 = vdwg.mxu0
  %s1212 = scalar_lea.vmem %s2, 26
  %1213 = vst.msk [vmem:[%s1212] sm:$0x3] %vm94, %v1209
  %s1214 = scalar_lea.vmem %s0, 28
  %v1215 = vld [vmem:[%s1214] sm:$0x3]
  %s1216 = scalar_lea.vmem %s1, 896
  %v1217 = vld [vmem:[%s1216] sm:$0xff]
  %v1218 = vld [vmem:[%s1216 + $0x8] sm:$0xff]
  %v1219 = vld [vmem:[%s1216 + $0x10] sm:$0xff]
  %v1220 = vld [vmem:[%s1216 + $0x18] sm:$0xff]
  %v1221 = vld [vmem:[%s1216 + $0x20] sm:$0xff]
  %v1222 = vld [vmem:[%s1216 + $0x28] sm:$0xff]
  %v1223 = vld [vmem:[%s1216 + $0x30] sm:$0xff]
  %v1224 = vld [vmem:[%s1216 + $0x38] sm:$0xff]
  %v1226 = vsel %vm20, %v1215, 0
  %1228 = vmatprep.subr.mxu0 0.0
  %1229 = vmatpush1.msra.mxu0 0.0
  %1230 = vmatprep.subr.mxu0 0.0
  %1231 = vmatpush1.msra.mxu0 0.0
  %1232 = vmatprep.subr.mxu0 0.0
  %1233 = vmatpush1.msra.mxu0 0.0
  %1234 = vmatprep.subr.mxu0 0.0
  %1235 = vmatpush1.msra.mxu0 0.0
  %1236 = vmatprep.subr.mxu0 0.0
  %1237 = vmatpush1.msra.mxu0 0.0
  %1238 = vmatprep.subr.mxu0 0.0
  %1239 = vmatpush1.msra.mxu0 0.0
  %1240 = vmatprep.subr.mxu0 0.0
  %1241 = vmatpush1.msra.mxu0 0.0
  %1242 = vmatprep.subr.mxu0 0.0
  %1243 = vmatpush1.msra.mxu0 0.0
  %1244 = vmatprep.subr.mxu0 0.0
  %1245 = vmatpush1.msra.mxu0 %v1224
  %1246 = vmatprep.subr.mxu0 0.0
  %1247 = vmatpush1.msra.mxu0 %v1223
  %1248 = vmatprep.subr.mxu0 0.0
  %1249 = vmatpush1.msra.mxu0 %v1222
  %1250 = vmatprep.subr.mxu0 0.0
  %1251 = vmatpush1.msra.mxu0 %v1221
  %1252 = vmatprep.subr.mxu0 0.0
  %1253 = vmatpush1.msra.mxu0 %v1220
  %1254 = vmatprep.subr.mxu0 0.0
  %1255 = vmatpush1.msra.mxu0 %v1219
  %1256 = vmatprep.subr.mxu0 0.0
  %1257 = vmatpush1.msra.mxu0 %v1218
  %1258 = vmatprep.subr.mxu0 0.0
  %1259 = vmatpush1.msra.mxu0 %v1217
  %1260 = vmatprep.subr.mxu0 0.0
  %1261 = vmatpush2.msra.mxu0 0.0
  %1262 = vmatprep.subr.mxu0 0.0
  %1263 = vmatpush2.msra.mxu0 0.0
  %1264 = vmatprep.subr.mxu0 0.0
  %1265 = vmatpush2.msra.mxu0 0.0
  %1266 = vmatprep.subr.mxu0 0.0
  %1267 = vmatpush2.msra.mxu0 0.0
  %1268 = vmatprep.subr.mxu0 0.0
  %1269 = vmatpush2.msra.mxu0 0.0
  %1270 = vmatprep.subr.mxu0 0.0
  %1271 = vmatpush2.msra.mxu0 0.0
  %1272 = vmatprep.subr.mxu0 0.0
  %1273 = vmatpush2.msra.mxu0 0.0
  %1274 = vmatprep.subr.mxu0 0.0
  %1275 = vmatpush2.msra.mxu0 0.0
  %1276 = vmatprep.subr.mxu0 0.0
  %1277 = vmatpush2.msra.mxu0 0.0
  %1278 = vmatprep.subr.mxu0 0.0
  %1279 = vmatpush2.msra.mxu0 0.0
  %1280 = vmatprep.subr.mxu0 0.0
  %1281 = vmatpush2.msra.mxu0 0.0
  %1282 = vmatprep.subr.mxu0 0.0
  %1283 = vmatpush2.msra.mxu0 0.0
  %1284 = vmatprep.subr.mxu0 0.0
  %1285 = vmatpush2.msra.mxu0 0.0
  %1286 = vmatprep.subr.mxu0 0.0
  %1287 = vmatpush2.msra.mxu0 0.0
  %1288 = vmatprep.subr.mxu0 0.0
  %1289 = vmatpush2.msra.mxu0 0.0
  %1290 = vmatprep.subr.mxu0 0.0
  %1291 = vmatpush2.msra.mxu0 0.0
  %1292 = vmatprep.mubr.f32.mxu0 0.0
  %1293 = vmatmul.mubr.f32.gmra.mxu0 %v1226
  %v1294 = vpop.f32.mrf.mxu0
  %v1295 = vadd.f32 0.0, %v1294
  %v1296 = vpop.f32.mrf.mxu0
  %1297 = vdwg.mxu0
  %s1298 = scalar_lea.vmem %s2, 28
  %1299 = vst.msk [vmem:[%s1298] sm:$0x3] %vm94, %v1295
  %s1300 = scalar_lea.vmem %s0, 30
  %v1301 = vld [vmem:[%s1300] sm:$0x3]
  %s1302 = scalar_lea.vmem %s1, 960
  %v1303 = vld [vmem:[%s1302] sm:$0xff]
  %v1304 = vld [vmem:[%s1302 + $0x8] sm:$0xff]
  %v1305 = vld [vmem:[%s1302 + $0x10] sm:$0xff]
  %v1306 = vld [vmem:[%s1302 + $0x18] sm:$0xff]
  %v1307 = vld [vmem:[%s1302 + $0x20] sm:$0xff]
  %v1308 = vld [vmem:[%s1302 + $0x28] sm:$0xff]
  %v1309 = vld [vmem:[%s1302 + $0x30] sm:$0xff]
  %v1310 = vld [vmem:[%s1302 + $0x38] sm:$0xff]
  %v1312 = vsel %vm20, %v1301, 0
  %1314 = vmatprep.subr.mxu0 0.0
  %1315 = vmatpush1.msra.mxu0 0.0
  %1316 = vmatprep.subr.mxu0 0.0
  %1317 = vmatpush1.msra.mxu0 0.0
  %1318 = vmatprep.subr.mxu0 0.0
  %1319 = vmatpush1.msra.mxu0 0.0
  %1320 = vmatprep.subr.mxu0 0.0
  %1321 = vmatpush1.msra.mxu0 0.0
  %1322 = vmatprep.subr.mxu0 0.0
  %1323 = vmatpush1.msra.mxu0 0.0
  %1324 = vmatprep.subr.mxu0 0.0
  %1325 = vmatpush1.msra.mxu0 0.0
  %1326 = vmatprep.subr.mxu0 0.0
  %1327 = vmatpush1.msra.mxu0 0.0
  %1328 = vmatprep.subr.mxu0 0.0
  %1329 = vmatpush1.msra.mxu0 0.0
  %1330 = vmatprep.subr.mxu0 0.0
  %1331 = vmatpush1.msra.mxu0 %v1310
  %1332 = vmatprep.subr.mxu0 0.0
  %1333 = vmatpush1.msra.mxu0 %v1309
  %1334 = vmatprep.subr.mxu0 0.0
  %1335 = vmatpush1.msra.mxu0 %v1308
  %1336 = vmatprep.subr.mxu0 0.0
  %1337 = vmatpush1.msra.mxu0 %v1307
  %1338 = vmatprep.subr.mxu0 0.0
  %1339 = vmatpush1.msra.mxu0 %v1306
  %1340 = vmatprep.subr.mxu0 0.0
  %1341 = vmatpush1.msra.mxu0 %v1305
  %1342 = vmatprep.subr.mxu0 0.0
  %1343 = vmatpush1.msra.mxu0 %v1304
  %1344 = vmatprep.subr.mxu0 0.0
  %1345 = vmatpush1.msra.mxu0 %v1303
  %1346 = vmatprep.subr.mxu0 0.0
  %1347 = vmatpush2.msra.mxu0 0.0
  %1348 = vmatprep.subr.mxu0 0.0
  %1349 = vmatpush2.msra.mxu0 0.0
  %1350 = vmatprep.subr.mxu0 0.0
  %1351 = vmatpush2.msra.mxu0 0.0
  %1352 = vmatprep.subr.mxu0 0.0
  %1353 = vmatpush2.msra.mxu0 0.0
  %1354 = vmatprep.subr.mxu0 0.0
  %1355 = vmatpush2.msra.mxu0 0.0
  %1356 = vmatprep.subr.mxu0 0.0
  %1357 = vmatpush2.msra.mxu0 0.0
  %1358 = vmatprep.subr.mxu0 0.0
  %1359 = vmatpush2.msra.mxu0 0.0
  %1360 = vmatprep.subr.mxu0 0.0
  %1361 = vmatpush2.msra.mxu0 0.0
  %1362 = vmatprep.subr.mxu0 0.0
  %1363 = vmatpush2.msra.mxu0 0.0
  %1364 = vmatprep.subr.mxu0 0.0
  %1365 = vmatpush2.msra.mxu0 0.0
  %1366 = vmatprep.subr.mxu0 0.0
  %1367 = vmatpush2.msra.mxu0 0.0
  %1368 = vmatprep.subr.mxu0 0.0
  %1369 = vmatpush2.msra.mxu0 0.0
  %1370 = vmatprep.subr.mxu0 0.0
  %1371 = vmatpush2.msra.mxu0 0.0
  %1372 = vmatprep.subr.mxu0 0.0
  %1373 = vmatpush2.msra.mxu0 0.0
  %1374 = vmatprep.subr.mxu0 0.0
  %1375 = vmatpush2.msra.mxu0 0.0
  %1376 = vmatprep.subr.mxu0 0.0
  %1377 = vmatpush2.msra.mxu0 0.0
  %1378 = vmatprep.mubr.f32.mxu0 0.0
  %1379 = vmatmul.mubr.f32.gmra.mxu0 %v1312
  %v1380 = vpop.f32.mrf.mxu0
  %v1381 = vadd.f32 0.0, %v1380
  %v1382 = vpop.f32.mrf.mxu0
  %1383 = vdwg.mxu0
  %s1384 = scalar_lea.vmem %s2, 30
  %1385 = vst.msk [vmem:[%s1384] sm:$0x3] %vm94, %v1381
  %s1386 = scalar_lea.vmem %s0, 32
  %v1387 = vld [vmem:[%s1386] sm:$0x3]
  %s1388 = scalar_lea.vmem %s1, 1024
  %v1389 = vld [vmem:[%s1388] sm:$0xff]
  %v1390 = vld [vmem:[%s1388 + $0x8] sm:$0xff]
  %v1391 = vld [vmem:[%s1388 + $0x10] sm:$0xff]
  %v1392 = vld [vmem:[%s1388 + $0x18] sm:$0xff]
  %v1393 = vld [vmem:[%s1388 + $0x20] sm:$0xff]
  %v1394 = vld [vmem:[%s1388 + $0x28] sm:$0xff]
  %v1395 = vld [vmem:[%s1388 + $0x30] sm:$0xff]
  %v1396 = vld [vmem:[%s1388 + $0x38] sm:$0xff]
  %v1398 = vsel %vm20, %v1387, 0
  %1400 = vmatprep.subr.mxu0 0.0
  %1401 = vmatpush1.msra.mxu0 0.0
  %1402 = vmatprep.subr.mxu0 0.0
  %1403 = vmatpush1.msra.mxu0 0.0
  %1404 = vmatprep.subr.mxu0 0.0
  %1405 = vmatpush1.msra.mxu0 0.0
  %1406 = vmatprep.subr.mxu0 0.0
  %1407 = vmatpush1.msra.mxu0 0.0
  %1408 = vmatprep.subr.mxu0 0.0
  %1409 = vmatpush1.msra.mxu0 0.0
  %1410 = vmatprep.subr.mxu0 0.0
  %1411 = vmatpush1.msra.mxu0 0.0
  %1412 = vmatprep.subr.mxu0 0.0
  %1413 = vmatpush1.msra.mxu0 0.0
  %1414 = vmatprep.subr.mxu0 0.0
  %1415 = vmatpush1.msra.mxu0 0.0
  %1416 = vmatprep.subr.mxu0 0.0
  %1417 = vmatpush1.msra.mxu0 %v1396
  %1418 = vmatprep.subr.mxu0 0.0
  %1419 = vmatpush1.msra.mxu0 %v1395
  %1420 = vmatprep.subr.mxu0 0.0
  %1421 = vmatpush1.msra.mxu0 %v1394
  %1422 = vmatprep.subr.mxu0 0.0
  %1423 = vmatpush1.msra.mxu0 %v1393
  %1424 = vmatprep.subr.mxu0 0.0
  %1425 = vmatpush1.msra.mxu0 %v1392
  %1426 = vmatprep.subr.mxu0 0.0
  %1427 = vmatpush1.msra.mxu0 %v1391
  %1428 = vmatprep.subr.mxu0 0.0
  %1429 = vmatpush1.msra.mxu0 %v1390
  %1430 = vmatprep.subr.mxu0 0.0
  %1431 = vmatpush1.msra.mxu0 %v1389
  %1432 = vmatprep.subr.mxu0 0.0
  %1433 = vmatpush2.msra.mxu0 0.0
  %1434 = vmatprep.subr.mxu0 0.0
  %1435 = vmatpush2.msra.mxu0 0.0
  %1436 = vmatprep.subr.mxu0 0.0
  %1437 = vmatpush2.msra.mxu0 0.0
  %1438 = vmatprep.subr.mxu0 0.0
  %1439 = vmatpush2.msra.mxu0 0.0
  %1440 = vmatprep.subr.mxu0 0.0
  %1441 = vmatpush2.msra.mxu0 0.0
  %1442 = vmatprep.subr.mxu0 0.0
  %1443 = vmatpush2.msra.mxu0 0.0
  %1444 = vmatprep.subr.mxu0 0.0
  %1445 = vmatpush2.msra.mxu0 0.0
  %1446 = vmatprep.subr.mxu0 0.0
  %1447 = vmatpush2.msra.mxu0 0.0
  %1448 = vmatprep.subr.mxu0 0.0
  %1449 = vmatpush2.msra.mxu0 0.0
  %1450 = vmatprep.subr.mxu0 0.0
  %1451 = vmatpush2.msra.mxu0 0.0
  %1452 = vmatprep.subr.mxu0 0.0
  %1453 = vmatpush2.msra.mxu0 0.0
  %1454 = vmatprep.subr.mxu0 0.0
  %1455 = vmatpush2.msra.mxu0 0.0
  %1456 = vmatprep.subr.mxu0 0.0
  %1457 = vmatpush2.msra.mxu0 0.0
  %1458 = vmatprep.subr.mxu0 0.0
  %1459 = vmatpush2.msra.mxu0 0.0
  %1460 = vmatprep.subr.mxu0 0.0
  %1461 = vmatpush2.msra.mxu0 0.0
  %1462 = vmatprep.subr.mxu0 0.0
  %1463 = vmatpush2.msra.mxu0 0.0
  %1464 = vmatprep.mubr.f32.mxu0 0.0
  %1465 = vmatmul.mubr.f32.gmra.mxu0 %v1398
  %v1466 = vpop.f32.mrf.mxu0
  %v1467 = vadd.f32 0.0, %v1466
  %v1468 = vpop.f32.mrf.mxu0
  %1469 = vdwg.mxu0
  %s1470 = scalar_lea.vmem %s2, 32
  %1471 = vst.msk [vmem:[%s1470] sm:$0x3] %vm94, %v1467
  %s1472 = scalar_lea.vmem %s0, 34
  %v1473 = vld [vmem:[%s1472] sm:$0x3]
  %s1474 = scalar_lea.vmem %s1, 1088
  %v1475 = vld [vmem:[%s1474] sm:$0xff]
  %v1476 = vld [vmem:[%s1474 + $0x8] sm:$0xff]
  %v1477 = vld [vmem:[%s1474 + $0x10] sm:$0xff]
  %v1478 = vld [vmem:[%s1474 + $0x18] sm:$0xff]
  %v1479 = vld [vmem:[%s1474 + $0x20] sm:$0xff]
  %v1480 = vld [vmem:[%s1474 + $0x28] sm:$0xff]
  %v1481 = vld [vmem:[%s1474 + $0x30] sm:$0xff]
  %v1482 = vld [vmem:[%s1474 + $0x38] sm:$0xff]
  %v1484 = vsel %vm20, %v1473, 0
  %1486 = vmatprep.subr.mxu0 0.0
  %1487 = vmatpush1.msra.mxu0 0.0
  %1488 = vmatprep.subr.mxu0 0.0
  %1489 = vmatpush1.msra.mxu0 0.0
  %1490 = vmatprep.subr.mxu0 0.0
  %1491 = vmatpush1.msra.mxu0 0.0
  %1492 = vmatprep.subr.mxu0 0.0
  %1493 = vmatpush1.msra.mxu0 0.0
  %1494 = vmatprep.subr.mxu0 0.0
  %1495 = vmatpush1.msra.mxu0 0.0
  %1496 = vmatprep.subr.mxu0 0.0
  %1497 = vmatpush1.msra.mxu0 0.0
  %1498 = vmatprep.subr.mxu0 0.0
  %1499 = vmatpush1.msra.mxu0 0.0
  %1500 = vmatprep.subr.mxu0 0.0
  %1501 = vmatpush1.msra.mxu0 0.0
  %1502 = vmatprep.subr.mxu0 0.0
  %1503 = vmatpush1.msra.mxu0 %v1482
  %1504 = vmatprep.subr.mxu0 0.0
  %1505 = vmatpush1.msra.mxu0 %v1481
  %1506 = vmatprep.subr.mxu0 0.0
  %1507 = vmatpush1.msra.mxu0 %v1480
  %1508 = vmatprep.subr.mxu0 0.0
  %1509 = vmatpush1.msra.mxu0 %v1479
  %1510 = vmatprep.subr.mxu0 0.0
  %1511 = vmatpush1.msra.mxu0 %v1478
  %1512 = vmatprep.subr.mxu0 0.0
  %1513 = vmatpush1.msra.mxu0 %v1477
  %1514 = vmatprep.subr.mxu0 0.0
  %1515 = vmatpush1.msra.mxu0 %v1476
  %1516 = vmatprep.subr.mxu0 0.0
  %1517 = vmatpush1.msra.mxu0 %v1475
  %1518 = vmatprep.subr.mxu0 0.0
  %1519 = vmatpush2.msra.mxu0 0.0
  %1520 = vmatprep.subr.mxu0 0.0
  %1521 = vmatpush2.msra.mxu0 0.0
  %1522 = vmatprep.subr.mxu0 0.0
  %1523 = vmatpush2.msra.mxu0 0.0
  %1524 = vmatprep.subr.mxu0 0.0
  %1525 = vmatpush2.msra.mxu0 0.0
  %1526 = vmatprep.subr.mxu0 0.0
  %1527 = vmatpush2.msra.mxu0 0.0
  %1528 = vmatprep.subr.mxu0 0.0
  %1529 = vmatpush2.msra.mxu0 0.0
  %1530 = vmatprep.subr.mxu0 0.0
  %1531 = vmatpush2.msra.mxu0 0.0
  %1532 = vmatprep.subr.mxu0 0.0
  %1533 = vmatpush2.msra.mxu0 0.0
  %1534 = vmatprep.subr.mxu0 0.0
  %1535 = vmatpush2.msra.mxu0 0.0
  %1536 = vmatprep.subr.mxu0 0.0
  %1537 = vmatpush2.msra.mxu0 0.0
  %1538 = vmatprep.subr.mxu0 0.0
  %1539 = vmatpush2.msra.mxu0 0.0
  %1540 = vmatprep.subr.mxu0 0.0
  %1541 = vmatpush2.msra.mxu0 0.0
  %1542 = vmatprep.subr.mxu0 0.0
  %1543 = vmatpush2.msra.mxu0 0.0
  %1544 = vmatprep.subr.mxu0 0.0
  %1545 = vmatpush2.msra.mxu0 0.0
  %1546 = vmatprep.subr.mxu0 0.0
  %1547 = vmatpush2.msra.mxu0 0.0
  %1548 = vmatprep.subr.mxu0 0.0
  %1549 = vmatpush2.msra.mxu0 0.0
  %1550 = vmatprep.mubr.f32.mxu0 0.0
  %1551 = vmatmul.mubr.f32.gmra.mxu0 %v1484
  %v1552 = vpop.f32.mrf.mxu0
  %v1553 = vadd.f32 0.0, %v1552
  %v1554 = vpop.f32.mrf.mxu0
  %1555 = vdwg.mxu0
  %s1556 = scalar_lea.vmem %s2, 34
  %1557 = vst.msk [vmem:[%s1556] sm:$0x3] %vm94, %v1553
  %s1558 = scalar_lea.vmem %s0, 36
  %v1559 = vld [vmem:[%s1558] sm:$0x3]
  %s1560 = scalar_lea.vmem %s1, 1152
  %v1561 = vld [vmem:[%s1560] sm:$0xff]
  %v1562 = vld [vmem:[%s1560 + $0x8] sm:$0xff]
  %v1563 = vld [vmem:[%s1560 + $0x10] sm:$0xff]
  %v1564 = vld [vmem:[%s1560 + $0x18] sm:$0xff]
  %v1565 = vld [vmem:[%s1560 + $0x20] sm:$0xff]
  %v1566 = vld [vmem:[%s1560 + $0x28] sm:$0xff]
  %v1567 = vld [vmem:[%s1560 + $0x30] sm:$0xff]
  %v1568 = vld [vmem:[%s1560 + $0x38] sm:$0xff]
  %v1570 = vsel %vm20, %v1559, 0
  %1572 = vmatprep.subr.mxu0 0.0
  %1573 = vmatpush1.msra.mxu0 0.0
  %1574 = vmatprep.subr.mxu0 0.0
  %1575 = vmatpush1.msra.mxu0 0.0
  %1576 = vmatprep.subr.mxu0 0.0
  %1577 = vmatpush1.msra.mxu0 0.0
  %1578 = vmatprep.subr.mxu0 0.0
  %1579 = vmatpush1.msra.mxu0 0.0
  %1580 = vmatprep.subr.mxu0 0.0
  %1581 = vmatpush1.msra.mxu0 0.0
  %1582 = vmatprep.subr.mxu0 0.0
  %1583 = vmatpush1.msra.mxu0 0.0
  %1584 = vmatprep.subr.mxu0 0.0
  %1585 = vmatpush1.msra.mxu0 0.0
  %1586 = vmatprep.subr.mxu0 0.0
  %1587 = vmatpush1.msra.mxu0 0.0
  %1588 = vmatprep.subr.mxu0 0.0
  %1589 = vmatpush1.msra.mxu0 %v1568
  %1590 = vmatprep.subr.mxu0 0.0
  %1591 = vmatpush1.msra.mxu0 %v1567
  %1592 = vmatprep.subr.mxu0 0.0
  %1593 = vmatpush1.msra.mxu0 %v1566
  %1594 = vmatprep.subr.mxu0 0.0
  %1595 = vmatpush1.msra.mxu0 %v1565
  %1596 = vmatprep.subr.mxu0 0.0
  %1597 = vmatpush1.msra.mxu0 %v1564
  %1598 = vmatprep.subr.mxu0 0.0
  %1599 = vmatpush1.msra.mxu0 %v1563
  %1600 = vmatprep.subr.mxu0 0.0
  %1601 = vmatpush1.msra.mxu0 %v1562
  %1602 = vmatprep.subr.mxu0 0.0
  %1603 = vmatpush1.msra.mxu0 %v1561
  %1604 = vmatprep.subr.mxu0 0.0
  %1605 = vmatpush2.msra.mxu0 0.0
  %1606 = vmatprep.subr.mxu0 0.0
  %1607 = vmatpush2.msra.mxu0 0.0
  %1608 = vmatprep.subr.mxu0 0.0
  %1609 = vmatpush2.msra.mxu0 0.0
  %1610 = vmatprep.subr.mxu0 0.0
  %1611 = vmatpush2.msra.mxu0 0.0
  %1612 = vmatprep.subr.mxu0 0.0
  %1613 = vmatpush2.msra.mxu0 0.0
  %1614 = vmatprep.subr.mxu0 0.0
  %1615 = vmatpush2.msra.mxu0 0.0
  %1616 = vmatprep.subr.mxu0 0.0
  %1617 = vmatpush2.msra.mxu0 0.0
  %1618 = vmatprep.subr.mxu0 0.0
  %1619 = vmatpush2.msra.mxu0 0.0
  %1620 = vmatprep.subr.mxu0 0.0
  %1621 = vmatpush2.msra.mxu0 0.0
  %1622 = vmatprep.subr.mxu0 0.0
  %1623 = vmatpush2.msra.mxu0 0.0
  %1624 = vmatprep.subr.mxu0 0.0
  %1625 = vmatpush2.msra.mxu0 0.0
  %1626 = vmatprep.subr.mxu0 0.0
  %1627 = vmatpush2.msra.mxu0 0.0
  %1628 = vmatprep.subr.mxu0 0.0
  %1629 = vmatpush2.msra.mxu0 0.0
  %1630 = vmatprep.subr.mxu0 0.0
  %1631 = vmatpush2.msra.mxu0 0.0
  %1632 = vmatprep.subr.mxu0 0.0
  %1633 = vmatpush2.msra.mxu0 0.0
  %1634 = vmatprep.subr.mxu0 0.0
  %1635 = vmatpush2.msra.mxu0 0.0
  %1636 = vmatprep.mubr.f32.mxu0 0.0
  %1637 = vmatmul.mubr.f32.gmra.mxu0 %v1570
  %v1638 = vpop.f32.mrf.mxu0
  %v1639 = vadd.f32 0.0, %v1638
  %v1640 = vpop.f32.mrf.mxu0
  %1641 = vdwg.mxu0
  %s1642 = scalar_lea.vmem %s2, 36
  %1643 = vst.msk [vmem:[%s1642] sm:$0x3] %vm94, %v1639
  %s1644 = scalar_lea.vmem %s0, 38
  %v1645 = vld [vmem:[%s1644] sm:$0x3]
  %s1646 = scalar_lea.vmem %s1, 1216
  %v1647 = vld [vmem:[%s1646] sm:$0xff]
  %v1648 = vld [vmem:[%s1646 + $0x8] sm:$0xff]
  %v1649 = vld [vmem:[%s1646 + $0x10] sm:$0xff]
  %v1650 = vld [vmem:[%s1646 + $0x18] sm:$0xff]
  %v1651 = vld [vmem:[%s1646 + $0x20] sm:$0xff]
  %v1652 = vld [vmem:[%s1646 + $0x28] sm:$0xff]
  %v1653 = vld [vmem:[%s1646 + $0x30] sm:$0xff]
  %v1654 = vld [vmem:[%s1646 + $0x38] sm:$0xff]
  %v1656 = vsel %vm20, %v1645, 0
  %1658 = vmatprep.subr.mxu0 0.0
  %1659 = vmatpush1.msra.mxu0 0.0
  %1660 = vmatprep.subr.mxu0 0.0
  %1661 = vmatpush1.msra.mxu0 0.0
  %1662 = vmatprep.subr.mxu0 0.0
  %1663 = vmatpush1.msra.mxu0 0.0
  %1664 = vmatprep.subr.mxu0 0.0
  %1665 = vmatpush1.msra.mxu0 0.0
  %1666 = vmatprep.subr.mxu0 0.0
  %1667 = vmatpush1.msra.mxu0 0.0
  %1668 = vmatprep.subr.mxu0 0.0
  %1669 = vmatpush1.msra.mxu0 0.0
  %1670 = vmatprep.subr.mxu0 0.0
  %1671 = vmatpush1.msra.mxu0 0.0
  %1672 = vmatprep.subr.mxu0 0.0
  %1673 = vmatpush1.msra.mxu0 0.0
  %1674 = vmatprep.subr.mxu0 0.0
  %1675 = vmatpush1.msra.mxu0 %v1654
  %1676 = vmatprep.subr.mxu0 0.0
  %1677 = vmatpush1.msra.mxu0 %v1653
  %1678 = vmatprep.subr.mxu0 0.0
  %1679 = vmatpush1.msra.mxu0 %v1652
  %1680 = vmatprep.subr.mxu0 0.0
  %1681 = vmatpush1.msra.mxu0 %v1651
  %1682 = vmatprep.subr.mxu0 0.0
  %1683 = vmatpush1.msra.mxu0 %v1650
  %1684 = vmatprep.subr.mxu0 0.0
  %1685 = vmatpush1.msra.mxu0 %v1649
  %1686 = vmatprep.subr.mxu0 0.0
  %1687 = vmatpush1.msra.mxu0 %v1648
  %1688 = vmatprep.subr.mxu0 0.0
  %1689 = vmatpush1.msra.mxu0 %v1647
  %1690 = vmatprep.subr.mxu0 0.0
  %1691 = vmatpush2.msra.mxu0 0.0
  %1692 = vmatprep.subr.mxu0 0.0
  %1693 = vmatpush2.msra.mxu0 0.0
  %1694 = vmatprep.subr.mxu0 0.0
  %1695 = vmatpush2.msra.mxu0 0.0
  %1696 = vmatprep.subr.mxu0 0.0
  %1697 = vmatpush2.msra.mxu0 0.0
  %1698 = vmatprep.subr.mxu0 0.0
  %1699 = vmatpush2.msra.mxu0 0.0
  %1700 = vmatprep.subr.mxu0 0.0
  %1701 = vmatpush2.msra.mxu0 0.0
  %1702 = vmatprep.subr.mxu0 0.0
  %1703 = vmatpush2.msra.mxu0 0.0
  %1704 = vmatprep.subr.mxu0 0.0
  %1705 = vmatpush2.msra.mxu0 0.0
  %1706 = vmatprep.subr.mxu0 0.0
  %1707 = vmatpush2.msra.mxu0 0.0
  %1708 = vmatprep.subr.mxu0 0.0
  %1709 = vmatpush2.msra.mxu0 0.0
  %1710 = vmatprep.subr.mxu0 0.0
  %1711 = vmatpush2.msra.mxu0 0.0
  %1712 = vmatprep.subr.mxu0 0.0
  %1713 = vmatpush2.msra.mxu0 0.0
  %1714 = vmatprep.subr.mxu0 0.0
  %1715 = vmatpush2.msra.mxu0 0.0
  %1716 = vmatprep.subr.mxu0 0.0
  %1717 = vmatpush2.msra.mxu0 0.0
  %1718 = vmatprep.subr.mxu0 0.0
  %1719 = vmatpush2.msra.mxu0 0.0
  %1720 = vmatprep.subr.mxu0 0.0
  %1721 = vmatpush2.msra.mxu0 0.0
  %1722 = vmatprep.mubr.f32.mxu0 0.0
  %1723 = vmatmul.mubr.f32.gmra.mxu0 %v1656
  %v1724 = vpop.f32.mrf.mxu0
  %v1725 = vadd.f32 0.0, %v1724
  %v1726 = vpop.f32.mrf.mxu0
  %1727 = vdwg.mxu0
  %s1728 = scalar_lea.vmem %s2, 38
  %1729 = vst.msk [vmem:[%s1728] sm:$0x3] %vm94, %v1725
  %s1730 = scalar_lea.vmem %s0, 40
  %v1731 = vld [vmem:[%s1730] sm:$0x3]
  %s1732 = scalar_lea.vmem %s1, 1280
  %v1733 = vld [vmem:[%s1732] sm:$0xff]
  %v1734 = vld [vmem:[%s1732 + $0x8] sm:$0xff]
  %v1735 = vld [vmem:[%s1732 + $0x10] sm:$0xff]
  %v1736 = vld [vmem:[%s1732 + $0x18] sm:$0xff]
  %v1737 = vld [vmem:[%s1732 + $0x20] sm:$0xff]
  %v1738 = vld [vmem:[%s1732 + $0x28] sm:$0xff]
  %v1739 = vld [vmem:[%s1732 + $0x30] sm:$0xff]
  %v1740 = vld [vmem:[%s1732 + $0x38] sm:$0xff]
  %v1742 = vsel %vm20, %v1731, 0
  %1744 = vmatprep.subr.mxu0 0.0
  %1745 = vmatpush1.msra.mxu0 0.0
  %1746 = vmatprep.subr.mxu0 0.0
  %1747 = vmatpush1.msra.mxu0 0.0
  %1748 = vmatprep.subr.mxu0 0.0
  %1749 = vmatpush1.msra.mxu0 0.0
  %1750 = vmatprep.subr.mxu0 0.0
  %1751 = vmatpush1.msra.mxu0 0.0
  %1752 = vmatprep.subr.mxu0 0.0
  %1753 = vmatpush1.msra.mxu0 0.0
  %1754 = vmatprep.subr.mxu0 0.0
  %1755 = vmatpush1.msra.mxu0 0.0
  %1756 = vmatprep.subr.mxu0 0.0
  %1757 = vmatpush1.msra.mxu0 0.0
  %1758 = vmatprep.subr.mxu0 0.0
  %1759 = vmatpush1.msra.mxu0 0.0
  %1760 = vmatprep.subr.mxu0 0.0
  %1761 = vmatpush1.msra.mxu0 %v1740
  %1762 = vmatprep.subr.mxu0 0.0
  %1763 = vmatpush1.msra.mxu0 %v1739
  %1764 = vmatprep.subr.mxu0 0.0
  %1765 = vmatpush1.msra.mxu0 %v1738
  %1766 = vmatprep.subr.mxu0 0.0
  %1767 = vmatpush1.msra.mxu0 %v1737
  %1768 = vmatprep.subr.mxu0 0.0
  %1769 = vmatpush1.msra.mxu0 %v1736
  %1770 = vmatprep.subr.mxu0 0.0
  %1771 = vmatpush1.msra.mxu0 %v1735
  %1772 = vmatprep.subr.mxu0 0.0
  %1773 = vmatpush1.msra.mxu0 %v1734
  %1774 = vmatprep.subr.mxu0 0.0
  %1775 = vmatpush1.msra.mxu0 %v1733
  %1776 = vmatprep.subr.mxu0 0.0
  %1777 = vmatpush2.msra.mxu0 0.0
  %1778 = vmatprep.subr.mxu0 0.0
  %1779 = vmatpush2.msra.mxu0 0.0
  %1780 = vmatprep.subr.mxu0 0.0
  %1781 = vmatpush2.msra.mxu0 0.0
  %1782 = vmatprep.subr.mxu0 0.0
  %1783 = vmatpush2.msra.mxu0 0.0
  %1784 = vmatprep.subr.mxu0 0.0
  %1785 = vmatpush2.msra.mxu0 0.0
  %1786 = vmatprep.subr.mxu0 0.0
  %1787 = vmatpush2.msra.mxu0 0.0
  %1788 = vmatprep.subr.mxu0 0.0
  %1789 = vmatpush2.msra.mxu0 0.0
  %1790 = vmatprep.subr.mxu0 0.0
  %1791 = vmatpush2.msra.mxu0 0.0
  %1792 = vmatprep.subr.mxu0 0.0
  %1793 = vmatpush2.msra.mxu0 0.0
  %1794 = vmatprep.subr.mxu0 0.0
  %1795 = vmatpush2.msra.mxu0 0.0
  %1796 = vmatprep.subr.mxu0 0.0
  %1797 = vmatpush2.msra.mxu0 0.0
  %1798 = vmatprep.subr.mxu0 0.0
  %1799 = vmatpush2.msra.mxu0 0.0
  %1800 = vmatprep.subr.mxu0 0.0
  %1801 = vmatpush2.msra.mxu0 0.0
  %1802 = vmatprep.subr.mxu0 0.0
  %1803 = vmatpush2.msra.mxu0 0.0
  %1804 = vmatprep.subr.mxu0 0.0
  %1805 = vmatpush2.msra.mxu0 0.0
  %1806 = vmatprep.subr.mxu0 0.0
  %1807 = vmatpush2.msra.mxu0 0.0
  %1808 = vmatprep.mubr.f32.mxu0 0.0
  %1809 = vmatmul.mubr.f32.gmra.mxu0 %v1742
  %v1810 = vpop.f32.mrf.mxu0
  %v1811 = vadd.f32 0.0, %v1810
  %v1812 = vpop.f32.mrf.mxu0
  %1813 = vdwg.mxu0
  %s1814 = scalar_lea.vmem %s2, 40
  %1815 = vst.msk [vmem:[%s1814] sm:$0x3] %vm94, %v1811
  %s1816 = scalar_lea.vmem %s0, 42
  %v1817 = vld [vmem:[%s1816] sm:$0x3]
  %s1818 = scalar_lea.vmem %s1, 1344
  %v1819 = vld [vmem:[%s1818] sm:$0xff]
  %v1820 = vld [vmem:[%s1818 + $0x8] sm:$0xff]
  %v1821 = vld [vmem:[%s1818 + $0x10] sm:$0xff]
  %v1822 = vld [vmem:[%s1818 + $0x18] sm:$0xff]
  %v1823 = vld [vmem:[%s1818 + $0x20] sm:$0xff]
  %v1824 = vld [vmem:[%s1818 + $0x28] sm:$0xff]
  %v1825 = vld [vmem:[%s1818 + $0x30] sm:$0xff]
  %v1826 = vld [vmem:[%s1818 + $0x38] sm:$0xff]
  %v1828 = vsel %vm20, %v1817, 0
  %1830 = vmatprep.subr.mxu0 0.0
  %1831 = vmatpush1.msra.mxu0 0.0
  %1832 = vmatprep.subr.mxu0 0.0
  %1833 = vmatpush1.msra.mxu0 0.0
  %1834 = vmatprep.subr.mxu0 0.0
  %1835 = vmatpush1.msra.mxu0 0.0
  %1836 = vmatprep.subr.mxu0 0.0
  %1837 = vmatpush1.msra.mxu0 0.0
  %1838 = vmatprep.subr.mxu0 0.0
  %1839 = vmatpush1.msra.mxu0 0.0
  %1840 = vmatprep.subr.mxu0 0.0
  %1841 = vmatpush1.msra.mxu0 0.0
  %1842 = vmatprep.subr.mxu0 0.0
  %1843 = vmatpush1.msra.mxu0 0.0
  %1844 = vmatprep.subr.mxu0 0.0
  %1845 = vmatpush1.msra.mxu0 0.0
  %1846 = vmatprep.subr.mxu0 0.0
  %1847 = vmatpush1.msra.mxu0 %v1826
  %1848 = vmatprep.subr.mxu0 0.0
  %1849 = vmatpush1.msra.mxu0 %v1825
  %1850 = vmatprep.subr.mxu0 0.0
  %1851 = vmatpush1.msra.mxu0 %v1824
  %1852 = vmatprep.subr.mxu0 0.0
  %1853 = vmatpush1.msra.mxu0 %v1823
  %1854 = vmatprep.subr.mxu0 0.0
  %1855 = vmatpush1.msra.mxu0 %v1822
  %1856 = vmatprep.subr.mxu0 0.0
  %1857 = vmatpush1.msra.mxu0 %v1821
  %1858 = vmatprep.subr.mxu0 0.0
  %1859 = vmatpush1.msra.mxu0 %v1820
  %1860 = vmatprep.subr.mxu0 0.0
  %1861 = vmatpush1.msra.mxu0 %v1819
  %1862 = vmatprep.subr.mxu0 0.0
  %1863 = vmatpush2.msra.mxu0 0.0
  %1864 = vmatprep.subr.mxu0 0.0
  %1865 = vmatpush2.msra.mxu0 0.0
  %1866 = vmatprep.subr.mxu0 0.0
  %1867 = vmatpush2.msra.mxu0 0.0
  %1868 = vmatprep.subr.mxu0 0.0
  %1869 = vmatpush2.msra.mxu0 0.0
  %1870 = vmatprep.subr.mxu0 0.0
  %1871 = vmatpush2.msra.mxu0 0.0
  %1872 = vmatprep.subr.mxu0 0.0
  %1873 = vmatpush2.msra.mxu0 0.0
  %1874 = vmatprep.subr.mxu0 0.0
  %1875 = vmatpush2.msra.mxu0 0.0
  %1876 = vmatprep.subr.mxu0 0.0
  %1877 = vmatpush2.msra.mxu0 0.0
  %1878 = vmatprep.subr.mxu0 0.0
  %1879 = vmatpush2.msra.mxu0 0.0
  %1880 = vmatprep.subr.mxu0 0.0
  %1881 = vmatpush2.msra.mxu0 0.0
  %1882 = vmatprep.subr.mxu0 0.0
  %1883 = vmatpush2.msra.mxu0 0.0
  %1884 = vmatprep.subr.mxu0 0.0
  %1885 = vmatpush2.msra.mxu0 0.0
  %1886 = vmatprep.subr.mxu0 0.0
  %1887 = vmatpush2.msra.mxu0 0.0
  %1888 = vmatprep.subr.mxu0 0.0
  %1889 = vmatpush2.msra.mxu0 0.0
  %1890 = vmatprep.subr.mxu0 0.0
  %1891 = vmatpush2.msra.mxu0 0.0
  %1892 = vmatprep.subr.mxu0 0.0
  %1893 = vmatpush2.msra.mxu0 0.0
  %1894 = vmatprep.mubr.f32.mxu0 0.0
  %1895 = vmatmul.mubr.f32.gmra.mxu0 %v1828
  %v1896 = vpop.f32.mrf.mxu0
  %v1897 = vadd.f32 0.0, %v1896
  %v1898 = vpop.f32.mrf.mxu0
  %1899 = vdwg.mxu0
  %s1900 = scalar_lea.vmem %s2, 42
  %1901 = vst.msk [vmem:[%s1900] sm:$0x3] %vm94, %v1897
  %s1902 = scalar_lea.vmem %s0, 44
  %v1903 = vld [vmem:[%s1902] sm:$0x3]
  %s1904 = scalar_lea.vmem %s1, 1408
  %v1905 = vld [vmem:[%s1904] sm:$0xff]
  %v1906 = vld [vmem:[%s1904 + $0x8] sm:$0xff]
  %v1907 = vld [vmem:[%s1904 + $0x10] sm:$0xff]
  %v1908 = vld [vmem:[%s1904 + $0x18] sm:$0xff]
  %v1909 = vld [vmem:[%s1904 + $0x20] sm:$0xff]
  %v1910 = vld [vmem:[%s1904 + $0x28] sm:$0xff]
  %v1911 = vld [vmem:[%s1904 + $0x30] sm:$0xff]
  %v1912 = vld [vmem:[%s1904 + $0x38] sm:$0xff]
  %v1914 = vsel %vm20, %v1903, 0
  %1916 = vmatprep.subr.mxu0 0.0
  %1917 = vmatpush1.msra.mxu0 0.0
  %1918 = vmatprep.subr.mxu0 0.0
  %1919 = vmatpush1.msra.mxu0 0.0
  %1920 = vmatprep.subr.mxu0 0.0
  %1921 = vmatpush1.msra.mxu0 0.0
  %1922 = vmatprep.subr.mxu0 0.0
  %1923 = vmatpush1.msra.mxu0 0.0
  %1924 = vmatprep.subr.mxu0 0.0
  %1925 = vmatpush1.msra.mxu0 0.0
  %1926 = vmatprep.subr.mxu0 0.0
  %1927 = vmatpush1.msra.mxu0 0.0
  %1928 = vmatprep.subr.mxu0 0.0
  %1929 = vmatpush1.msra.mxu0 0.0
  %1930 = vmatprep.subr.mxu0 0.0
  %1931 = vmatpush1.msra.mxu0 0.0
  %1932 = vmatprep.subr.mxu0 0.0
  %1933 = vmatpush1.msra.mxu0 %v1912
  %1934 = vmatprep.subr.mxu0 0.0
  %1935 = vmatpush1.msra.mxu0 %v1911
  %1936 = vmatprep.subr.mxu0 0.0
  %1937 = vmatpush1.msra.mxu0 %v1910
  %1938 = vmatprep.subr.mxu0 0.0
  %1939 = vmatpush1.msra.mxu0 %v1909
  %1940 = vmatprep.subr.mxu0 0.0
  %1941 = vmatpush1.msra.mxu0 %v1908
  %1942 = vmatprep.subr.mxu0 0.0
  %1943 = vmatpush1.msra.mxu0 %v1907
  %1944 = vmatprep.subr.mxu0 0.0
  %1945 = vmatpush1.msra.mxu0 %v1906
  %1946 = vmatprep.subr.mxu0 0.0
  %1947 = vmatpush1.msra.mxu0 %v1905
  %1948 = vmatprep.subr.mxu0 0.0
  %1949 = vmatpush2.msra.mxu0 0.0
  %1950 = vmatprep.subr.mxu0 0.0
  %1951 = vmatpush2.msra.mxu0 0.0
  %1952 = vmatprep.subr.mxu0 0.0
  %1953 = vmatpush2.msra.mxu0 0.0
  %1954 = vmatprep.subr.mxu0 0.0
  %1955 = vmatpush2.msra.mxu0 0.0
  %1956 = vmatprep.subr.mxu0 0.0
  %1957 = vmatpush2.msra.mxu0 0.0
  %1958 = vmatprep.subr.mxu0 0.0
  %1959 = vmatpush2.msra.mxu0 0.0
  %1960 = vmatprep.subr.mxu0 0.0
  %1961 = vmatpush2.msra.mxu0 0.0
  %1962 = vmatprep.subr.mxu0 0.0
  %1963 = vmatpush2.msra.mxu0 0.0
  %1964 = vmatprep.subr.mxu0 0.0
  %1965 = vmatpush2.msra.mxu0 0.0
  %1966 = vmatprep.subr.mxu0 0.0
  %1967 = vmatpush2.msra.mxu0 0.0
  %1968 = vmatprep.subr.mxu0 0.0
  %1969 = vmatpush2.msra.mxu0 0.0
  %1970 = vmatprep.subr.mxu0 0.0
  %1971 = vmatpush2.msra.mxu0 0.0
  %1972 = vmatprep.subr.mxu0 0.0
  %1973 = vmatpush2.msra.mxu0 0.0
  %1974 = vmatprep.subr.mxu0 0.0
  %1975 = vmatpush2.msra.mxu0 0.0
  %1976 = vmatprep.subr.mxu0 0.0
  %1977 = vmatpush2.msra.mxu0 0.0
  %1978 = vmatprep.subr.mxu0 0.0
  %1979 = vmatpush2.msra.mxu0 0.0
  %1980 = vmatprep.mubr.f32.mxu0 0.0
  %1981 = vmatmul.mubr.f32.gmra.mxu0 %v1914
  %v1982 = vpop.f32.mrf.mxu0
  %v1983 = vadd.f32 0.0, %v1982
  %v1984 = vpop.f32.mrf.mxu0
  %1985 = vdwg.mxu0
  %s1986 = scalar_lea.vmem %s2, 44
  %1987 = vst.msk [vmem:[%s1986] sm:$0x3] %vm94, %v1983
  %s1988 = scalar_lea.vmem %s0, 46
  %v1989 = vld [vmem:[%s1988] sm:$0x3]
  %s1990 = scalar_lea.vmem %s1, 1472
  %v1991 = vld [vmem:[%s1990] sm:$0xff]
  %v1992 = vld [vmem:[%s1990 + $0x8] sm:$0xff]
  %v1993 = vld [vmem:[%s1990 + $0x10] sm:$0xff]
  %v1994 = vld [vmem:[%s1990 + $0x18] sm:$0xff]
  %v1995 = vld [vmem:[%s1990 + $0x20] sm:$0xff]
  %v1996 = vld [vmem:[%s1990 + $0x28] sm:$0xff]
  %v1997 = vld [vmem:[%s1990 + $0x30] sm:$0xff]
  %v1998 = vld [vmem:[%s1990 + $0x38] sm:$0xff]
  %v2000 = vsel %vm20, %v1989, 0
  %2002 = vmatprep.subr.mxu0 0.0
  %2003 = vmatpush1.msra.mxu0 0.0
  %2004 = vmatprep.subr.mxu0 0.0
  %2005 = vmatpush1.msra.mxu0 0.0
  %2006 = vmatprep.subr.mxu0 0.0
  %2007 = vmatpush1.msra.mxu0 0.0
  %2008 = vmatprep.subr.mxu0 0.0
  %2009 = vmatpush1.msra.mxu0 0.0
  %2010 = vmatprep.subr.mxu0 0.0
  %2011 = vmatpush1.msra.mxu0 0.0
  %2012 = vmatprep.subr.mxu0 0.0
  %2013 = vmatpush1.msra.mxu0 0.0
  %2014 = vmatprep.subr.mxu0 0.0
  %2015 = vmatpush1.msra.mxu0 0.0
  %2016 = vmatprep.subr.mxu0 0.0
  %2017 = vmatpush1.msra.mxu0 0.0
  %2018 = vmatprep.subr.mxu0 0.0
  %2019 = vmatpush1.msra.mxu0 %v1998
  %2020 = vmatprep.subr.mxu0 0.0
  %2021 = vmatpush1.msra.mxu0 %v1997
  %2022 = vmatprep.subr.mxu0 0.0
  %2023 = vmatpush1.msra.mxu0 %v1996
  %2024 = vmatprep.subr.mxu0 0.0
  %2025 = vmatpush1.msra.mxu0 %v1995
  %2026 = vmatprep.subr.mxu0 0.0
  %2027 = vmatpush1.msra.mxu0 %v1994
  %2028 = vmatprep.subr.mxu0 0.0
  %2029 = vmatpush1.msra.mxu0 %v1993
  %2030 = vmatprep.subr.mxu0 0.0
  %2031 = vmatpush1.msra.mxu0 %v1992
  %2032 = vmatprep.subr.mxu0 0.0
  %2033 = vmatpush1.msra.mxu0 %v1991
  %2034 = vmatprep.subr.mxu0 0.0
  %2035 = vmatpush2.msra.mxu0 0.0
  %2036 = vmatprep.subr.mxu0 0.0
  %2037 = vmatpush2.msra.mxu0 0.0
  %2038 = vmatprep.subr.mxu0 0.0
  %2039 = vmatpush2.msra.mxu0 0.0
  %2040 = vmatprep.subr.mxu0 0.0
  %2041 = vmatpush2.msra.mxu0 0.0
  %2042 = vmatprep.subr.mxu0 0.0
  %2043 = vmatpush2.msra.mxu0 0.0
  %2044 = vmatprep.subr.mxu0 0.0
  %2045 = vmatpush2.msra.mxu0 0.0
  %2046 = vmatprep.subr.mxu0 0.0
  %2047 = vmatpush2.msra.mxu0 0.0
  %2048 = vmatprep.subr.mxu0 0.0
  %2049 = vmatpush2.msra.mxu0 0.0
  %2050 = vmatprep.subr.mxu0 0.0
  %2051 = vmatpush2.msra.mxu0 0.0
  %2052 = vmatprep.subr.mxu0 0.0
  %2053 = vmatpush2.msra.mxu0 0.0
  %2054 = vmatprep.subr.mxu0 0.0
  %2055 = vmatpush2.msra.mxu0 0.0
  %2056 = vmatprep.subr.mxu0 0.0
  %2057 = vmatpush2.msra.mxu0 0.0
  %2058 = vmatprep.subr.mxu0 0.0
  %2059 = vmatpush2.msra.mxu0 0.0
  %2060 = vmatprep.subr.mxu0 0.0
  %2061 = vmatpush2.msra.mxu0 0.0
  %2062 = vmatprep.subr.mxu0 0.0
  %2063 = vmatpush2.msra.mxu0 0.0
  %2064 = vmatprep.subr.mxu0 0.0
  %2065 = vmatpush2.msra.mxu0 0.0
  %2066 = vmatprep.mubr.f32.mxu0 0.0
  %2067 = vmatmul.mubr.f32.gmra.mxu0 %v2000
  %v2068 = vpop.f32.mrf.mxu0
  %v2069 = vadd.f32 0.0, %v2068
  %v2070 = vpop.f32.mrf.mxu0
  %2071 = vdwg.mxu0
  %s2072 = scalar_lea.vmem %s2, 46
  %2073 = vst.msk [vmem:[%s2072] sm:$0x3] %vm94, %v2069
  %s2074 = scalar_lea.vmem %s0, 48
  %v2075 = vld [vmem:[%s2074] sm:$0x3]
  %s2076 = scalar_lea.vmem %s1, 1536
  %v2077 = vld [vmem:[%s2076] sm:$0xff]
  %v2078 = vld [vmem:[%s2076 + $0x8] sm:$0xff]
  %v2079 = vld [vmem:[%s2076 + $0x10] sm:$0xff]
  %v2080 = vld [vmem:[%s2076 + $0x18] sm:$0xff]
  %v2081 = vld [vmem:[%s2076 + $0x20] sm:$0xff]
  %v2082 = vld [vmem:[%s2076 + $0x28] sm:$0xff]
  %v2083 = vld [vmem:[%s2076 + $0x30] sm:$0xff]
  %v2084 = vld [vmem:[%s2076 + $0x38] sm:$0xff]
  %v2086 = vsel %vm20, %v2075, 0
  %2088 = vmatprep.subr.mxu0 0.0
  %2089 = vmatpush1.msra.mxu0 0.0
  %2090 = vmatprep.subr.mxu0 0.0
  %2091 = vmatpush1.msra.mxu0 0.0
  %2092 = vmatprep.subr.mxu0 0.0
  %2093 = vmatpush1.msra.mxu0 0.0
  %2094 = vmatprep.subr.mxu0 0.0
  %2095 = vmatpush1.msra.mxu0 0.0
  %2096 = vmatprep.subr.mxu0 0.0
  %2097 = vmatpush1.msra.mxu0 0.0
  %2098 = vmatprep.subr.mxu0 0.0
  %2099 = vmatpush1.msra.mxu0 0.0
  %2100 = vmatprep.subr.mxu0 0.0
  %2101 = vmatpush1.msra.mxu0 0.0
  %2102 = vmatprep.subr.mxu0 0.0
  %2103 = vmatpush1.msra.mxu0 0.0
  %2104 = vmatprep.subr.mxu0 0.0
  %2105 = vmatpush1.msra.mxu0 %v2084
  %2106 = vmatprep.subr.mxu0 0.0
  %2107 = vmatpush1.msra.mxu0 %v2083
  %2108 = vmatprep.subr.mxu0 0.0
  %2109 = vmatpush1.msra.mxu0 %v2082
  %2110 = vmatprep.subr.mxu0 0.0
  %2111 = vmatpush1.msra.mxu0 %v2081
  %2112 = vmatprep.subr.mxu0 0.0
  %2113 = vmatpush1.msra.mxu0 %v2080
  %2114 = vmatprep.subr.mxu0 0.0
  %2115 = vmatpush1.msra.mxu0 %v2079
  %2116 = vmatprep.subr.mxu0 0.0
  %2117 = vmatpush1.msra.mxu0 %v2078
  %2118 = vmatprep.subr.mxu0 0.0
  %2119 = vmatpush1.msra.mxu0 %v2077
  %2120 = vmatprep.subr.mxu0 0.0
  %2121 = vmatpush2.msra.mxu0 0.0
  %2122 = vmatprep.subr.mxu0 0.0
  %2123 = vmatpush2.msra.mxu0 0.0
  %2124 = vmatprep.subr.mxu0 0.0
  %2125 = vmatpush2.msra.mxu0 0.0
  %2126 = vmatprep.subr.mxu0 0.0
  %2127 = vmatpush2.msra.mxu0 0.0
  %2128 = vmatprep.subr.mxu0 0.0
  %2129 = vmatpush2.msra.mxu0 0.0
  %2130 = vmatprep.subr.mxu0 0.0
  %2131 = vmatpush2.msra.mxu0 0.0
  %2132 = vmatprep.subr.mxu0 0.0
  %2133 = vmatpush2.msra.mxu0 0.0
  %2134 = vmatprep.subr.mxu0 0.0
  %2135 = vmatpush2.msra.mxu0 0.0
  %2136 = vmatprep.subr.mxu0 0.0
  %2137 = vmatpush2.msra.mxu0 0.0
  %2138 = vmatprep.subr.mxu0 0.0
  %2139 = vmatpush2.msra.mxu0 0.0
  %2140 = vmatprep.subr.mxu0 0.0
  %2141 = vmatpush2.msra.mxu0 0.0
  %2142 = vmatprep.subr.mxu0 0.0
  %2143 = vmatpush2.msra.mxu0 0.0
  %2144 = vmatprep.subr.mxu0 0.0
  %2145 = vmatpush2.msra.mxu0 0.0
  %2146 = vmatprep.subr.mxu0 0.0
  %2147 = vmatpush2.msra.mxu0 0.0
  %2148 = vmatprep.subr.mxu0 0.0
  %2149 = vmatpush2.msra.mxu0 0.0
  %2150 = vmatprep.subr.mxu0 0.0
  %2151 = vmatpush2.msra.mxu0 0.0
  %2152 = vmatprep.mubr.f32.mxu0 0.0
  %2153 = vmatmul.mubr.f32.gmra.mxu0 %v2086
  %v2154 = vpop.f32.mrf.mxu0
  %v2155 = vadd.f32 0.0, %v2154
  %v2156 = vpop.f32.mrf.mxu0
  %2157 = vdwg.mxu0
  %s2158 = scalar_lea.vmem %s2, 48
  %2159 = vst.msk [vmem:[%s2158] sm:$0x3] %vm94, %v2155
  %s2160 = scalar_lea.vmem %s0, 50
  %v2161 = vld [vmem:[%s2160] sm:$0x3]
  %s2162 = scalar_lea.vmem %s1, 1600
  %v2163 = vld [vmem:[%s2162] sm:$0xff]
  %v2164 = vld [vmem:[%s2162 + $0x8] sm:$0xff]
  %v2165 = vld [vmem:[%s2162 + $0x10] sm:$0xff]
  %v2166 = vld [vmem:[%s2162 + $0x18] sm:$0xff]
  %v2167 = vld [vmem:[%s2162 + $0x20] sm:$0xff]
  %v2168 = vld [vmem:[%s2162 + $0x28] sm:$0xff]
  %v2169 = vld [vmem:[%s2162 + $0x30] sm:$0xff]
  %v2170 = vld [vmem:[%s2162 + $0x38] sm:$0xff]
  %v2172 = vsel %vm20, %v2161, 0
  %2174 = vmatprep.subr.mxu0 0.0
  %2175 = vmatpush1.msra.mxu0 0.0
  %2176 = vmatprep.subr.mxu0 0.0
  %2177 = vmatpush1.msra.mxu0 0.0
  %2178 = vmatprep.subr.mxu0 0.0
  %2179 = vmatpush1.msra.mxu0 0.0
  %2180 = vmatprep.subr.mxu0 0.0
  %2181 = vmatpush1.msra.mxu0 0.0
  %2182 = vmatprep.subr.mxu0 0.0
  %2183 = vmatpush1.msra.mxu0 0.0
  %2184 = vmatprep.subr.mxu0 0.0
  %2185 = vmatpush1.msra.mxu0 0.0
  %2186 = vmatprep.subr.mxu0 0.0
  %2187 = vmatpush1.msra.mxu0 0.0
  %2188 = vmatprep.subr.mxu0 0.0
  %2189 = vmatpush1.msra.mxu0 0.0
  %2190 = vmatprep.subr.mxu0 0.0
  %2191 = vmatpush1.msra.mxu0 %v2170
  %2192 = vmatprep.subr.mxu0 0.0
  %2193 = vmatpush1.msra.mxu0 %v2169
  %2194 = vmatprep.subr.mxu0 0.0
  %2195 = vmatpush1.msra.mxu0 %v2168
  %2196 = vmatprep.subr.mxu0 0.0
  %2197 = vmatpush1.msra.mxu0 %v2167
  %2198 = vmatprep.subr.mxu0 0.0
  %2199 = vmatpush1.msra.mxu0 %v2166
  %2200 = vmatprep.subr.mxu0 0.0
  %2201 = vmatpush1.msra.mxu0 %v2165
  %2202 = vmatprep.subr.mxu0 0.0
  %2203 = vmatpush1.msra.mxu0 %v2164
  %2204 = vmatprep.subr.mxu0 0.0
  %2205 = vmatpush1.msra.mxu0 %v2163
  %2206 = vmatprep.subr.mxu0 0.0
  %2207 = vmatpush2.msra.mxu0 0.0
  %2208 = vmatprep.subr.mxu0 0.0
  %2209 = vmatpush2.msra.mxu0 0.0
  %2210 = vmatprep.subr.mxu0 0.0
  %2211 = vmatpush2.msra.mxu0 0.0
  %2212 = vmatprep.subr.mxu0 0.0
  %2213 = vmatpush2.msra.mxu0 0.0
  %2214 = vmatprep.subr.mxu0 0.0
  %2215 = vmatpush2.msra.mxu0 0.0
  %2216 = vmatprep.subr.mxu0 0.0
  %2217 = vmatpush2.msra.mxu0 0.0
  %2218 = vmatprep.subr.mxu0 0.0
  %2219 = vmatpush2.msra.mxu0 0.0
  %2220 = vmatprep.subr.mxu0 0.0
  %2221 = vmatpush2.msra.mxu0 0.0
  %2222 = vmatprep.subr.mxu0 0.0
  %2223 = vmatpush2.msra.mxu0 0.0
  %2224 = vmatprep.subr.mxu0 0.0
  %2225 = vmatpush2.msra.mxu0 0.0
  %2226 = vmatprep.subr.mxu0 0.0
  %2227 = vmatpush2.msra.mxu0 0.0
  %2228 = vmatprep.subr.mxu0 0.0
  %2229 = vmatpush2.msra.mxu0 0.0
  %2230 = vmatprep.subr.mxu0 0.0
  %2231 = vmatpush2.msra.mxu0 0.0
  %2232 = vmatprep.subr.mxu0 0.0
  %2233 = vmatpush2.msra.mxu0 0.0
  %2234 = vmatprep.subr.mxu0 0.0
  %2235 = vmatpush2.msra.mxu0 0.0
  %2236 = vmatprep.subr.mxu0 0.0
  %2237 = vmatpush2.msra.mxu0 0.0
  %2238 = vmatprep.mubr.f32.mxu0 0.0
  %2239 = vmatmul.mubr.f32.gmra.mxu0 %v2172
  %v2240 = vpop.f32.mrf.mxu0
  %v2241 = vadd.f32 0.0, %v2240
  %v2242 = vpop.f32.mrf.mxu0
  %2243 = vdwg.mxu0
  %s2244 = scalar_lea.vmem %s2, 50
  %2245 = vst.msk [vmem:[%s2244] sm:$0x3] %vm94, %v2241
  %s2246 = scalar_lea.vmem %s0, 52
  %v2247 = vld [vmem:[%s2246] sm:$0x3]
  %s2248 = scalar_lea.vmem %s1, 1664
  %v2249 = vld [vmem:[%s2248] sm:$0xff]
  %v2250 = vld [vmem:[%s2248 + $0x8] sm:$0xff]
  %v2251 = vld [vmem:[%s2248 + $0x10] sm:$0xff]
  %v2252 = vld [vmem:[%s2248 + $0x18] sm:$0xff]
  %v2253 = vld [vmem:[%s2248 + $0x20] sm:$0xff]
  %v2254 = vld [vmem:[%s2248 + $0x28] sm:$0xff]
  %v2255 = vld [vmem:[%s2248 + $0x30] sm:$0xff]
  %v2256 = vld [vmem:[%s2248 + $0x38] sm:$0xff]
  %v2258 = vsel %vm20, %v2247, 0
  %2260 = vmatprep.subr.mxu0 0.0
  %2261 = vmatpush1.msra.mxu0 0.0
  %2262 = vmatprep.subr.mxu0 0.0
  %2263 = vmatpush1.msra.mxu0 0.0
  %2264 = vmatprep.subr.mxu0 0.0
  %2265 = vmatpush1.msra.mxu0 0.0
  %2266 = vmatprep.subr.mxu0 0.0
  %2267 = vmatpush1.msra.mxu0 0.0
  %2268 = vmatprep.subr.mxu0 0.0
  %2269 = vmatpush1.msra.mxu0 0.0
  %2270 = vmatprep.subr.mxu0 0.0
  %2271 = vmatpush1.msra.mxu0 0.0
  %2272 = vmatprep.subr.mxu0 0.0
  %2273 = vmatpush1.msra.mxu0 0.0
  %2274 = vmatprep.subr.mxu0 0.0
  %2275 = vmatpush1.msra.mxu0 0.0
  %2276 = vmatprep.subr.mxu0 0.0
  %2277 = vmatpush1.msra.mxu0 %v2256
  %2278 = vmatprep.subr.mxu0 0.0
  %2279 = vmatpush1.msra.mxu0 %v2255
  %2280 = vmatprep.subr.mxu0 0.0
  %2281 = vmatpush1.msra.mxu0 %v2254
  %2282 = vmatprep.subr.mxu0 0.0
  %2283 = vmatpush1.msra.mxu0 %v2253
  %2284 = vmatprep.subr.mxu0 0.0
  %2285 = vmatpush1.msra.mxu0 %v2252
  %2286 = vmatprep.subr.mxu0 0.0
  %2287 = vmatpush1.msra.mxu0 %v2251
  %2288 = vmatprep.subr.mxu0 0.0
  %2289 = vmatpush1.msra.mxu0 %v2250
  %2290 = vmatprep.subr.mxu0 0.0
  %2291 = vmatpush1.msra.mxu0 %v2249
  %2292 = vmatprep.subr.mxu0 0.0
  %2293 = vmatpush2.msra.mxu0 0.0
  %2294 = vmatprep.subr.mxu0 0.0
  %2295 = vmatpush2.msra.mxu0 0.0
  %2296 = vmatprep.subr.mxu0 0.0
  %2297 = vmatpush2.msra.mxu0 0.0
  %2298 = vmatprep.subr.mxu0 0.0
  %2299 = vmatpush2.msra.mxu0 0.0
  %2300 = vmatprep.subr.mxu0 0.0
  %2301 = vmatpush2.msra.mxu0 0.0
  %2302 = vmatprep.subr.mxu0 0.0
  %2303 = vmatpush2.msra.mxu0 0.0
  %2304 = vmatprep.subr.mxu0 0.0
  %2305 = vmatpush2.msra.mxu0 0.0
  %2306 = vmatprep.subr.mxu0 0.0
  %2307 = vmatpush2.msra.mxu0 0.0
  %2308 = vmatprep.subr.mxu0 0.0
  %2309 = vmatpush2.msra.mxu0 0.0
  %2310 = vmatprep.subr.mxu0 0.0
  %2311 = vmatpush2.msra.mxu0 0.0
  %2312 = vmatprep.subr.mxu0 0.0
  %2313 = vmatpush2.msra.mxu0 0.0
  %2314 = vmatprep.subr.mxu0 0.0
  %2315 = vmatpush2.msra.mxu0 0.0
  %2316 = vmatprep.subr.mxu0 0.0
  %2317 = vmatpush2.msra.mxu0 0.0
  %2318 = vmatprep.subr.mxu0 0.0
  %2319 = vmatpush2.msra.mxu0 0.0
  %2320 = vmatprep.subr.mxu0 0.0
  %2321 = vmatpush2.msra.mxu0 0.0
  %2322 = vmatprep.subr.mxu0 0.0
  %2323 = vmatpush2.msra.mxu0 0.0
  %2324 = vmatprep.mubr.f32.mxu0 0.0
  %2325 = vmatmul.mubr.f32.gmra.mxu0 %v2258
  %v2326 = vpop.f32.mrf.mxu0
  %v2327 = vadd.f32 0.0, %v2326
  %v2328 = vpop.f32.mrf.mxu0
  %2329 = vdwg.mxu0
  %s2330 = scalar_lea.vmem %s2, 52
  %2331 = vst.msk [vmem:[%s2330] sm:$0x3] %vm94, %v2327
  %s2332 = scalar_lea.vmem %s0, 54
  %v2333 = vld [vmem:[%s2332] sm:$0x3]
  %s2334 = scalar_lea.vmem %s1, 1728
  %v2335 = vld [vmem:[%s2334] sm:$0xff]
  %v2336 = vld [vmem:[%s2334 + $0x8] sm:$0xff]
  %v2337 = vld [vmem:[%s2334 + $0x10] sm:$0xff]
  %v2338 = vld [vmem:[%s2334 + $0x18] sm:$0xff]
  %v2339 = vld [vmem:[%s2334 + $0x20] sm:$0xff]
  %v2340 = vld [vmem:[%s2334 + $0x28] sm:$0xff]
  %v2341 = vld [vmem:[%s2334 + $0x30] sm:$0xff]
  %v2342 = vld [vmem:[%s2334 + $0x38] sm:$0xff]
  %v2344 = vsel %vm20, %v2333, 0
  %2346 = vmatprep.subr.mxu0 0.0
  %2347 = vmatpush1.msra.mxu0 0.0
  %2348 = vmatprep.subr.mxu0 0.0
  %2349 = vmatpush1.msra.mxu0 0.0
  %2350 = vmatprep.subr.mxu0 0.0
  %2351 = vmatpush1.msra.mxu0 0.0
  %2352 = vmatprep.subr.mxu0 0.0
  %2353 = vmatpush1.msra.mxu0 0.0
  %2354 = vmatprep.subr.mxu0 0.0
  %2355 = vmatpush1.msra.mxu0 0.0
  %2356 = vmatprep.subr.mxu0 0.0
  %2357 = vmatpush1.msra.mxu0 0.0
  %2358 = vmatprep.subr.mxu0 0.0
  %2359 = vmatpush1.msra.mxu0 0.0
  %2360 = vmatprep.subr.mxu0 0.0
  %2361 = vmatpush1.msra.mxu0 0.0
  %2362 = vmatprep.subr.mxu0 0.0
  %2363 = vmatpush1.msra.mxu0 %v2342
  %2364 = vmatprep.subr.mxu0 0.0
  %2365 = vmatpush1.msra.mxu0 %v2341
  %2366 = vmatprep.subr.mxu0 0.0
  %2367 = vmatpush1.msra.mxu0 %v2340
  %2368 = vmatprep.subr.mxu0 0.0
  %2369 = vmatpush1.msra.mxu0 %v2339
  %2370 = vmatprep.subr.mxu0 0.0
  %2371 = vmatpush1.msra.mxu0 %v2338
  %2372 = vmatprep.subr.mxu0 0.0
  %2373 = vmatpush1.msra.mxu0 %v2337
  %2374 = vmatprep.subr.mxu0 0.0
  %2375 = vmatpush1.msra.mxu0 %v2336
  %2376 = vmatprep.subr.mxu0 0.0
  %2377 = vmatpush1.msra.mxu0 %v2335
  %2378 = vmatprep.subr.mxu0 0.0
  %2379 = vmatpush2.msra.mxu0 0.0
  %2380 = vmatprep.subr.mxu0 0.0
  %2381 = vmatpush2.msra.mxu0 0.0
  %2382 = vmatprep.subr.mxu0 0.0
  %2383 = vmatpush2.msra.mxu0 0.0
  %2384 = vmatprep.subr.mxu0 0.0
  %2385 = vmatpush2.msra.mxu0 0.0
  %2386 = vmatprep.subr.mxu0 0.0
  %2387 = vmatpush2.msra.mxu0 0.0
  %2388 = vmatprep.subr.mxu0 0.0
  %2389 = vmatpush2.msra.mxu0 0.0
  %2390 = vmatprep.subr.mxu0 0.0
  %2391 = vmatpush2.msra.mxu0 0.0
  %2392 = vmatprep.subr.mxu0 0.0
  %2393 = vmatpush2.msra.mxu0 0.0
  %2394 = vmatprep.subr.mxu0 0.0
  %2395 = vmatpush2.msra.mxu0 0.0
  %2396 = vmatprep.subr.mxu0 0.0
  %2397 = vmatpush2.msra.mxu0 0.0
  %2398 = vmatprep.subr.mxu0 0.0
  %2399 = vmatpush2.msra.mxu0 0.0
  %2400 = vmatprep.subr.mxu0 0.0
  %2401 = vmatpush2.msra.mxu0 0.0
  %2402 = vmatprep.subr.mxu0 0.0
  %2403 = vmatpush2.msra.mxu0 0.0
  %2404 = vmatprep.subr.mxu0 0.0
  %2405 = vmatpush2.msra.mxu0 0.0
  %2406 = vmatprep.subr.mxu0 0.0
  %2407 = vmatpush2.msra.mxu0 0.0
  %2408 = vmatprep.subr.mxu0 0.0
  %2409 = vmatpush2.msra.mxu0 0.0
  %2410 = vmatprep.mubr.f32.mxu0 0.0
  %2411 = vmatmul.mubr.f32.gmra.mxu0 %v2344
  %v2412 = vpop.f32.mrf.mxu0
  %v2413 = vadd.f32 0.0, %v2412
  %v2414 = vpop.f32.mrf.mxu0
  %2415 = vdwg.mxu0
  %s2416 = scalar_lea.vmem %s2, 54
  %2417 = vst.msk [vmem:[%s2416] sm:$0x3] %vm94, %v2413
  // Predicated region
  $region10: #{gfno2d_forward.20} parent=0 // pred_check
    _
  $region11: #{gfno2d_forward.20} parent=0 // pred_check_branch
    %2419 = sbr.rel (0) target = $region13
  $region12: #{gfno2d_forward.20} parent=0 // pred_region
    _
  $region13: #{gfno2d_forward.20} parent=0 // pred_fallthru
    _
  // Predicated region
  $region14: #{gfno2d_forward.20} parent=0 // pred_check
    _
  $region15: #{gfno2d_forward.20} parent=0 // pred_check_branch
    %2421 = sbr.rel (0) target = $region17
  $region16: #{gfno2d_forward.20} parent=0 // pred_region
    _
  $region17: #{gfno2d_forward.20} parent=0 // pred_fallthru
    _

// kernel: gfno2d_forward.22
$region0: #{gfno2d_forward.22}
  #allocation0 [shape = 'u32[]', space=smem, size = 0x4, offset = 0x4, fixed_abs, tag = 'smem constant byte address 0x4 - core index']
  #allocation1 [shape = 'u32[144,128]{1,0:T(1,128)}', space=vmem, size = 0x12000, scoped, tag = 'internal scratch']
  %s0 = inlined_call_operand.vmem [shape: f32[32,512], index: 0, kind: input, shape index: {}]
  %s1 = inlined_call_operand.vmem [shape: f32[32,512], index: 1, kind: input, shape index: {}]
  %s2 = inlined_call_operand.vmem [shape: f32[32,32], index: 2, kind: input, shape index: {}]
  %s3 = inlined_call_operand.vmem [shape: f32[32,1], index: 3, kind: input, shape index: {}]
  %s4 = inlined_call_operand.vmem [shape: f32[32,32], index: 4, kind: input, shape index: {}]
  %s5 = inlined_call_operand.vmem [shape: f32[32,1], index: 5, kind: input, shape index: {}]
  %s6 = inlined_call_operand.vmem [shape: f32[32,32], index: 6, kind: input, shape index: {}]
  %s7 = inlined_call_operand.vmem [shape: f32[32,1], index: 7, kind: input, shape index: {}]
  %s8 = inlined_call_operand.vmem [shape: f32[32,512], index: 8, kind: output, shape index: {}]
  %s9 = sld [smem:[#allocation0]]
  $region42: #{gfno2d_forward.22} parent=0
    _
  %s11 = ssub.s32 1, %s9
  %s12 = scalar_select 0, %s11, %s9
  // Predicated region
  $region2: #{gfno2d_forward.22} parent=0 // pred_check
    _
  $region3: #{gfno2d_forward.22} parent=0 // pred_check_branch
    %14 = sbr.rel (0) target = $region5
  $region4: #{gfno2d_forward.22} parent=0 // pred_region
    _
  $region5: #{gfno2d_forward.22} parent=0 // pred_fallthru
    _
  // Predicated region
  $region6: #{gfno2d_forward.22} parent=0 // pred_check
    _
  $region7: #{gfno2d_forward.22} parent=0 // pred_check_branch
    %16 = sbr.rel (0) target = $region9
  $region8: #{gfno2d_forward.22} parent=0 // pred_region
    _
  $region9: #{gfno2d_forward.22} parent=0 // pred_fallthru
    _
  // Predicated region
  $region10: #{gfno2d_forward.22} parent=0 // pred_check
    _
  $region11: #{gfno2d_forward.22} parent=0 // pred_check_branch
    %18 = sbr.rel (0) target = $region13
  $region12: #{gfno2d_forward.22} parent=0 // pred_region
    _
  $region13: #{gfno2d_forward.22} parent=0 // pred_fallthru
    _
  // Predicated region
  $region14: #{gfno2d_forward.22} parent=0 // pred_check
    _
  $region15: #{gfno2d_forward.22} parent=0 // pred_check_branch
    %20 = sbr.rel (0) target = $region17
  $region16: #{gfno2d_forward.22} parent=0 // pred_region
    _
  $region17: #{gfno2d_forward.22} parent=0 // pred_fallthru
    _
  // Predicated region
  $region18: #{gfno2d_forward.22} parent=0 // pred_check
    _
  $region19: #{gfno2d_forward.22} parent=0 // pred_check_branch
    %22 = sbr.rel (0) target = $region21
  $region20: #{gfno2d_forward.22} parent=0 // pred_region
    _
  $region21: #{gfno2d_forward.22} parent=0 // pred_fallthru
    _
  // Predicated region
  $region22: #{gfno2d_forward.22} parent=0 // pred_check
    _
  $region23: #{gfno2d_forward.22} parent=0 // pred_check_branch
    %24 = sbr.rel (0) target = $region25
  $region24: #{gfno2d_forward.22} parent=0 // pred_region
    _
  $region25: #{gfno2d_forward.22} parent=0 // pred_fallthru
    _
  // Predicated region
  $region26: #{gfno2d_forward.22} parent=0 // pred_check
    _
  $region27: #{gfno2d_forward.22} parent=0 // pred_check_branch
    %26 = sbr.rel (0) target = $region29
  $region28: #{gfno2d_forward.22} parent=0 // pred_region
    _
  $region29: #{gfno2d_forward.22} parent=0 // pred_fallthru
    _
  // Predicated region
  $region30: #{gfno2d_forward.22} parent=0 // pred_check
    _
  $region31: #{gfno2d_forward.22} parent=0 // pred_check_branch
    %28 = sbr.rel (0) target = $region33
  $region32: #{gfno2d_forward.22} parent=0 // pred_region
    _
  $region33: #{gfno2d_forward.22} parent=0 // pred_fallthru
    _
  %v29 = vld [vmem:[%s2] sm:$0xff]
  %v30 = vld [vmem:[%s2 + $0x8] sm:$0xff]
  %v31 = vld [vmem:[%s2 + $0x10] sm:$0xff]
  %v32 = vld [vmem:[%s2 + $0x18] sm:$0xff]
  %v33 = vld [vmem:[%s1] sm:$0xff]
  %v34 = vld [vmem:[%s1 + $0x8] sm:$0xff]
  %v35 = vld [vmem:[%s1 + $0x10] sm:$0xff]
  %v36 = vld [vmem:[%s1 + $0x18] sm:$0xff]
  %v37 = vld [vmem:[%s1 + $0x20] sm:$0xff]
  %v38 = vld [vmem:[%s1 + $0x28] sm:$0xff]
  %v39 = vld [vmem:[%s1 + $0x30] sm:$0xff]
  %v40 = vld [vmem:[%s1 + $0x38] sm:$0xff]
  %v41 = vld [vmem:[%s1 + $0x40] sm:$0xff]
  %v42 = vld [vmem:[%s1 + $0x48] sm:$0xff]
  %v43 = vld [vmem:[%s1 + $0x50] sm:$0xff]
  %v44 = vld [vmem:[%s1 + $0x58] sm:$0xff]
  %v45 = vld [vmem:[%s1 + $0x60] sm:$0xff]
  %v46 = vld [vmem:[%s1 + $0x68] sm:$0xff]
  %v47 = vld [vmem:[%s1 + $0x70] sm:$0xff]
  %v48 = vld [vmem:[%s1 + $0x78] sm:$0xff]
  %v49 = vld [vmem:[%s3] sm:$0xff]
  %v50 = vld [vmem:[%s3 + $0x8] sm:$0xff]
  %v51 = vld [vmem:[%s3 + $0x10] sm:$0xff]
  %v52 = vld [vmem:[%s3 + $0x18] sm:$0xff]
  %54 = vset.pattern.permute.xlu0 0
  %55 = vperm.xlu0 %54, %v49
  %v56 = vpop.permute.xlu0 %55
  %59 = vset.pattern.permute.xlu0 0
  %60 = vperm.xlu0 %59, %v50
  %v61 = vpop.permute.xlu0 %60
  %64 = vset.pattern.permute.xlu0 0
  %65 = vperm.xlu0 %64, %v51
  %v66 = vpop.permute.xlu0 %65
  %69 = vset.pattern.permute.xlu0 0
  %70 = vperm.xlu0 %69, %v52
  %v71 = vpop.permute.xlu0 %70
  %vm73 = vcmask 261120
  %v75 = vsel %vm73, %v29, 0
  %v78 = vsel %vm73, %v30, 0
  %v81 = vsel %vm73, %v31, 0
  %v84 = vsel %vm73, %v32, 0
  %86 = vmatprep.subr.mxu0 0.0
  %87 = vmatpush1.msra.mxu0 0.0
  %88 = vmatprep.subr.mxu0 0.0
  %89 = vmatpush1.msra.mxu0 0.0
  %90 = vmatprep.subr.mxu0 0.0
  %91 = vmatpush1.msra.mxu0 0.0
  %92 = vmatprep.subr.mxu0 0.0
  %93 = vmatpush1.msra.mxu0 0.0
  %94 = vmatprep.subr.mxu0 0.0
  %95 = vmatpush1.msra.mxu0 0.0
  %96 = vmatprep.subr.mxu0 0.0
  %97 = vmatpush1.msra.mxu0 0.0
  %98 = vmatprep.subr.mxu0 0.0
  %99 = vmatpush1.msra.mxu0 0.0
  %100 = vmatprep.subr.mxu0 0.0
  %101 = vmatpush1.msra.mxu0 0.0
  %102 = vmatprep.subr.mxu0 0.0
  %103 = vmatpush1.msra.mxu0 0.0
  %104 = vmatprep.subr.mxu0 0.0
  %105 = vmatpush1.msra.mxu0 0.0
  %106 = vmatprep.subr.mxu0 0.0
  %107 = vmatpush1.msra.mxu0 0.0
  %108 = vmatprep.subr.mxu0 0.0
  %109 = vmatpush1.msra.mxu0 0.0
  %110 = vmatprep.subr.mxu0 %v46
  %111 = vmatpush1.msra.mxu0 %v45
  %112 = vmatprep.subr.mxu0 %v42
  %113 = vmatpush1.msra.mxu0 %v41
  %114 = vmatprep.subr.mxu0 %v38
  %115 = vmatpush1.msra.mxu0 %v37
  %116 = vmatprep.subr.mxu0 %v34
  %117 = vmatpush1.msra.mxu0 %v33
  %118 = vmatprep.subr.mxu0 0.0
  %119 = vmatpush2.msra.mxu0 0.0
  %120 = vmatprep.subr.mxu0 0.0
  %121 = vmatpush2.msra.mxu0 0.0
  %122 = vmatprep.subr.mxu0 0.0
  %123 = vmatpush2.msra.mxu0 0.0
  %124 = vmatprep.subr.mxu0 0.0
  %125 = vmatpush2.msra.mxu0 0.0
  %126 = vmatprep.subr.mxu0 0.0
  %127 = vmatpush2.msra.mxu0 0.0
  %128 = vmatprep.subr.mxu0 0.0
  %129 = vmatpush2.msra.mxu0 0.0
  %130 = vmatprep.subr.mxu0 0.0
  %131 = vmatpush2.msra.mxu0 0.0
  %132 = vmatprep.subr.mxu0 0.0
  %133 = vmatpush2.msra.mxu0 0.0
  %134 = vmatprep.subr.mxu0 0.0
  %135 = vmatpush2.msra.mxu0 0.0
  %136 = vmatprep.subr.mxu0 0.0
  %137 = vmatpush2.msra.mxu0 0.0
  %138 = vmatprep.subr.mxu0 0.0
  %139 = vmatpush2.msra.mxu0 0.0
  %140 = vmatprep.subr.mxu0 0.0
  %141 = vmatpush2.msra.mxu0 0.0
  %142 = vmatprep.subr.mxu0 0.0
  %143 = vmatpush2.msra.mxu0 0.0
  %144 = vmatprep.subr.mxu0 0.0
  %145 = vmatpush2.msra.mxu0 0.0
  %146 = vmatprep.subr.mxu0 0.0
  %147 = vmatpush2.msra.mxu0 0.0
  %148 = vmatprep.subr.mxu0 0.0
  %149 = vmatpush2.msra.mxu0 0.0
  %150 = vmatprep.mubr.f32.mxu0 0.0
  %151 = vmatmul.mubr.f32.gmra.mxu0 %v75
  %v152 = vpop.f32.mrf.mxu0
  %v153 = vadd.f32 %v56, %v152
  %v154 = vpop.f32.mrf.mxu0
  %v155 = vadd.f32 %v56, %v154
  %156 = vmatprep.mubr.f32.mxu0 0.0
  %157 = vmatmul.mubr.f32.gmra.mxu0 %v78
  %v158 = vpop.f32.mrf.mxu0
  %v159 = vadd.f32 %v61, %v158
  %v160 = vpop.f32.mrf.mxu0
  %v161 = vadd.f32 %v61, %v160
  %162 = vmatprep.mubr.f32.mxu0 0.0
  %163 = vmatmul.mubr.f32.gmra.mxu0 %v81
  %v164 = vpop.f32.mrf.mxu0
  %v165 = vadd.f32 %v66, %v164
  %v166 = vpop.f32.mrf.mxu0
  %v167 = vadd.f32 %v66, %v166
  %168 = vmatprep.mubr.f32.mxu0 0.0
  %169 = vmatmul.mubr.f32.gmra.mxu0 %v84
  %v170 = vpop.f32.mrf.mxu0
  %v171 = vadd.f32 %v71, %v170
  %v172 = vpop.f32.mrf.mxu0
  %v173 = vadd.f32 %v71, %v172
  %174 = vdwg.mxu0
  %175 = vmatprep.subr.mxu0 0.0
  %176 = vmatpush1.msra.mxu0 0.0
  %177 = vmatprep.subr.mxu0 0.0
  %178 = vmatpush1.msra.mxu0 0.0
  %179 = vmatprep.subr.mxu0 0.0
  %180 = vmatpush1.msra.mxu0 0.0
  %181 = vmatprep.subr.mxu0 0.0
  %182 = vmatpush1.msra.mxu0 0.0
  %183 = vmatprep.subr.mxu0 0.0
  %184 = vmatpush1.msra.mxu0 0.0
  %185 = vmatprep.subr.mxu0 0.0
  %186 = vmatpush1.msra.mxu0 0.0
  %187 = vmatprep.subr.mxu0 0.0
  %188 = vmatpush1.msra.mxu0 0.0
  %189 = vmatprep.subr.mxu0 0.0
  %190 = vmatpush1.msra.mxu0 0.0
  %191 = vmatprep.subr.mxu0 0.0
  %192 = vmatpush1.msra.mxu0 0.0
  %193 = vmatprep.subr.mxu0 0.0
  %194 = vmatpush1.msra.mxu0 0.0
  %195 = vmatprep.subr.mxu0 0.0
  %196 = vmatpush1.msra.mxu0 0.0
  %197 = vmatprep.subr.mxu0 0.0
  %198 = vmatpush1.msra.mxu0 0.0
  %199 = vmatprep.subr.mxu0 %v48
  %200 = vmatpush1.msra.mxu0 %v47
  %201 = vmatprep.subr.mxu0 %v44
  %202 = vmatpush1.msra.mxu0 %v43
  %203 = vmatprep.subr.mxu0 %v40
  %204 = vmatpush1.msra.mxu0 %v39
  %205 = vmatprep.subr.mxu0 %v36
  %206 = vmatpush1.msra.mxu0 %v35
  %207 = vmatprep.subr.mxu0 0.0
  %208 = vmatpush2.msra.mxu0 0.0
  %209 = vmatprep.subr.mxu0 0.0
  %210 = vmatpush2.msra.mxu0 0.0
  %211 = vmatprep.subr.mxu0 0.0
  %212 = vmatpush2.msra.mxu0 0.0
  %213 = vmatprep.subr.mxu0 0.0
  %214 = vmatpush2.msra.mxu0 0.0
  %215 = vmatprep.subr.mxu0 0.0
  %216 = vmatpush2.msra.mxu0 0.0
  %217 = vmatprep.subr.mxu0 0.0
  %218 = vmatpush2.msra.mxu0 0.0
  %219 = vmatprep.subr.mxu0 0.0
  %220 = vmatpush2.msra.mxu0 0.0
  %221 = vmatprep.subr.mxu0 0.0
  %222 = vmatpush2.msra.mxu0 0.0
  %223 = vmatprep.subr.mxu0 0.0
  %224 = vmatpush2.msra.mxu0 0.0
  %225 = vmatprep.subr.mxu0 0.0
  %226 = vmatpush2.msra.mxu0 0.0
  %227 = vmatprep.subr.mxu0 0.0
  %228 = vmatpush2.msra.mxu0 0.0
  %229 = vmatprep.subr.mxu0 0.0
  %230 = vmatpush2.msra.mxu0 0.0
  %231 = vmatprep.subr.mxu0 0.0
  %232 = vmatpush2.msra.mxu0 0.0
  %233 = vmatprep.subr.mxu0 0.0
  %234 = vmatpush2.msra.mxu0 0.0
  %235 = vmatprep.subr.mxu0 0.0
  %236 = vmatpush2.msra.mxu0 0.0
  %237 = vmatprep.subr.mxu0 0.0
  %238 = vmatpush2.msra.mxu0 0.0
  %239 = vmatprep.mubr.f32.mxu0 0.0
  %240 = vmatmul.mubr.f32.gmra.mxu0 %v75
  %v241 = vpop.f32.mrf.mxu0
  %v242 = vadd.f32 %v56, %v241
  %v243 = vpop.f32.mrf.mxu0
  %v244 = vadd.f32 %v56, %v243
  %245 = vmatprep.mubr.f32.mxu0 0.0
  %246 = vmatmul.mubr.f32.gmra.mxu0 %v78
  %v247 = vpop.f32.mrf.mxu0
  %v248 = vadd.f32 %v61, %v247
  %v249 = vpop.f32.mrf.mxu0
  %v250 = vadd.f32 %v61, %v249
  %251 = vmatprep.mubr.f32.mxu0 0.0
  %252 = vmatmul.mubr.f32.gmra.mxu0 %v81
  %v253 = vpop.f32.mrf.mxu0
  %v254 = vadd.f32 %v66, %v253
  %v255 = vpop.f32.mrf.mxu0
  %v256 = vadd.f32 %v66, %v255
  %257 = vmatprep.mubr.f32.mxu0 0.0
  %258 = vmatmul.mubr.f32.gmra.mxu0 %v84
  %v259 = vpop.f32.mrf.mxu0
  %v260 = vadd.f32 %v71, %v259
  %v261 = vpop.f32.mrf.mxu0
  %v262 = vadd.f32 %v71, %v261
  %263 = vdwg.mxu0
  %v264 = vmul.f32 %v153, 0.5
  %v265 = vmul.f32 %v155, 0.5
  %v266 = vmul.f32 %v242, 0.5
  %v267 = vmul.f32 %v244, 0.5
  %v268 = vmul.f32 %v159, 0.5
  %v269 = vmul.f32 %v161, 0.5
  %v270 = vmul.f32 %v248, 0.5
  %v271 = vmul.f32 %v250, 0.5
  %v272 = vmul.f32 %v165, 0.5
  %v273 = vmul.f32 %v167, 0.5
  %v274 = vmul.f32 %v254, 0.5
  %v275 = vmul.f32 %v256, 0.5
  %v276 = vmul.f32 %v171, 0.5
  %v277 = vmul.f32 %v173, 0.5
  %v278 = vmul.f32 %v260, 0.5
  %v279 = vmul.f32 %v262, 0.5
  %v280 = vmul.f32 %v153, 0.70710677
  %v281 = vmul.f32 %v155, 0.70710677
  %v282 = vmul.f32 %v242, 0.70710677
  %v283 = vmul.f32 %v244, 0.70710677
  %v284 = vmul.f32 %v159, 0.70710677
  %v285 = vmul.f32 %v161, 0.70710677
  %v286 = vmul.f32 %v248, 0.70710677
  %v287 = vmul.f32 %v250, 0.70710677
  %v288 = vmul.f32 %v165, 0.70710677
  %v289 = vmul.f32 %v167, 0.70710677
  %v290 = vmul.f32 %v254, 0.70710677
  %v291 = vmul.f32 %v256, 0.70710677
  %v292 = vmul.f32 %v171, 0.70710677
  %v293 = vmul.f32 %v173, 0.70710677
  %v294 = vmul.f32 %v260, 0.70710677
  %v295 = vmul.f32 %v262, 0.70710677
  %v296 = verf.f32.pop %v280
  %v297 = verf.f32.pop %v281
  %v298 = verf.f32.pop %v282
  %v299 = verf.f32.pop %v283
  %v300 = verf.f32.pop %v284
  %v301 = verf.f32.pop %v285
  %v302 = verf.f32.pop %v286
  %v303 = verf.f32.pop %v287
  %v304 = verf.f32.pop %v288
  %v305 = verf.f32.pop %v289
  %v306 = verf.f32.pop %v290
  %v307 = verf.f32.pop %v291
  %v308 = verf.f32.pop %v292
  %v309 = verf.f32.pop %v293
  %v310 = verf.f32.pop %v294
  %v311 = verf.f32.pop %v295
  %v312 = vadd.f32 %v296, 1.0
  %v313 = vadd.f32 %v297, 1.0
  %v314 = vadd.f32 %v298, 1.0
  %v315 = vadd.f32 %v299, 1.0
  %v316 = vadd.f32 %v300, 1.0
  %v317 = vadd.f32 %v301, 1.0
  %v318 = vadd.f32 %v302, 1.0
  %v319 = vadd.f32 %v303, 1.0
  %v320 = vadd.f32 %v304, 1.0
  %v321 = vadd.f32 %v305, 1.0
  %v322 = vadd.f32 %v306, 1.0
  %v323 = vadd.f32 %v307, 1.0
  %v324 = vadd.f32 %v308, 1.0
  %v325 = vadd.f32 %v309, 1.0
  %v326 = vadd.f32 %v310, 1.0
  %v327 = vadd.f32 %v311, 1.0
  %v328 = vmul.f32 %v264, %v312
  %v329 = vmul.f32 %v265, %v313
  %v330 = vmul.f32 %v266, %v314
  %v331 = vmul.f32 %v267, %v315
  %v332 = vmul.f32 %v268, %v316
  %v333 = vmul.f32 %v269, %v317
  %v334 = vmul.f32 %v270, %v318
  %v335 = vmul.f32 %v271, %v319
  %v336 = vmul.f32 %v272, %v320
  %v337 = vmul.f32 %v273, %v321
  %v338 = vmul.f32 %v274, %v322
  %v339 = vmul.f32 %v275, %v323
  %v340 = vmul.f32 %v276, %v324
  %v341 = vmul.f32 %v277, %v325
  %v342 = vmul.f32 %v278, %v326
  %v343 = vmul.f32 %v279, %v327
  %v344 = vld [vmem:[%s4] sm:$0xff]
  %v345 = vld [vmem:[%s4 + $0x8] sm:$0xff]
  %v346 = vld [vmem:[%s4 + $0x10] sm:$0xff]
  %v347 = vld [vmem:[%s4 + $0x18] sm:$0xff]
  %v348 = vld [vmem:[%s5] sm:$0xff]
  %v349 = vld [vmem:[%s5 + $0x8] sm:$0xff]
  %v350 = vld [vmem:[%s5 + $0x10] sm:$0xff]
  %v351 = vld [vmem:[%s5 + $0x18] sm:$0xff]
  %353 = vset.pattern.permute.xlu0 0
  %354 = vperm.xlu0 %353, %v348
  %v355 = vpop.permute.xlu0 %354
  %358 = vset.pattern.permute.xlu0 0
  %359 = vperm.xlu0 %358, %v349
  %v360 = vpop.permute.xlu0 %359
  %363 = vset.pattern.permute.xlu0 0
  %364 = vperm.xlu0 %363, %v350
  %v365 = vpop.permute.xlu0 %364
  %368 = vset.pattern.permute.xlu0 0
  %369 = vperm.xlu0 %368, %v351
  %v370 = vpop.permute.xlu0 %369
  %v373 = vsel %vm73, %v344, 0
  %v376 = vsel %vm73, %v345, 0
  %v379 = vsel %vm73, %v346, 0
  %v382 = vsel %vm73, %v347, 0
  %384 = vmatprep.subr.mxu0 0.0
  %385 = vmatpush1.msra.mxu0 0.0
  %386 = vmatprep.subr.mxu0 0.0
  %387 = vmatpush1.msra.mxu0 0.0
  %388 = vmatprep.subr.mxu0 0.0
  %389 = vmatpush1.msra.mxu0 0.0
  %390 = vmatprep.subr.mxu0 0.0
  %391 = vmatpush1.msra.mxu0 0.0
  %392 = vmatprep.subr.mxu0 0.0
  %393 = vmatpush1.msra.mxu0 0.0
  %394 = vmatprep.subr.mxu0 0.0
  %395 = vmatpush1.msra.mxu0 0.0
  %396 = vmatprep.subr.mxu0 0.0
  %397 = vmatpush1.msra.mxu0 0.0
  %398 = vmatprep.subr.mxu0 0.0
  %399 = vmatpush1.msra.mxu0 0.0
  %400 = vmatprep.subr.mxu0 0.0
  %401 = vmatpush1.msra.mxu0 0.0
  %402 = vmatprep.subr.mxu0 0.0
  %403 = vmatpush1.msra.mxu0 0.0
  %404 = vmatprep.subr.mxu0 0.0
  %405 = vmatpush1.msra.mxu0 0.0
  %406 = vmatprep.subr.mxu0 0.0
  %407 = vmatpush1.msra.mxu0 0.0
  %408 = vmatprep.subr.mxu0 %v341
  %409 = vmatpush1.msra.mxu0 %v340
  %410 = vmatprep.subr.mxu0 %v337
  %411 = vmatpush1.msra.mxu0 %v336
  %412 = vmatprep.subr.mxu0 %v333
  %413 = vmatpush1.msra.mxu0 %v332
  %414 = vmatprep.subr.mxu0 %v329
  %415 = vmatpush1.msra.mxu0 %v328
  %416 = vmatprep.subr.mxu0 0.0
  %417 = vmatpush2.msra.mxu0 0.0
  %418 = vmatprep.subr.mxu0 0.0
  %419 = vmatpush2.msra.mxu0 0.0
  %420 = vmatprep.subr.mxu0 0.0
  %421 = vmatpush2.msra.mxu0 0.0
  %422 = vmatprep.subr.mxu0 0.0
  %423 = vmatpush2.msra.mxu0 0.0
  %424 = vmatprep.subr.mxu0 0.0
  %425 = vmatpush2.msra.mxu0 0.0
  %426 = vmatprep.subr.mxu0 0.0
  %427 = vmatpush2.msra.mxu0 0.0
  %428 = vmatprep.subr.mxu0 0.0
  %429 = vmatpush2.msra.mxu0 0.0
  %430 = vmatprep.subr.mxu0 0.0
  %431 = vmatpush2.msra.mxu0 0.0
  %432 = vmatprep.subr.mxu0 0.0
  %433 = vmatpush2.msra.mxu0 0.0
  %434 = vmatprep.subr.mxu0 0.0
  %435 = vmatpush2.msra.mxu0 0.0
  %436 = vmatprep.subr.mxu0 0.0
  %437 = vmatpush2.msra.mxu0 0.0
  %438 = vmatprep.subr.mxu0 0.0
  %439 = vmatpush2.msra.mxu0 0.0
  %440 = vmatprep.subr.mxu0 0.0
  %441 = vmatpush2.msra.mxu0 0.0
  %442 = vmatprep.subr.mxu0 0.0
  %443 = vmatpush2.msra.mxu0 0.0
  %444 = vmatprep.subr.mxu0 0.0
  %445 = vmatpush2.msra.mxu0 0.0
  %446 = vmatprep.subr.mxu0 0.0
  %447 = vmatpush2.msra.mxu0 0.0
  %448 = vmatprep.mubr.f32.mxu0 0.0
  %449 = vmatmul.mubr.f32.gmra.mxu0 %v373
  %v450 = vpop.f32.mrf.mxu0
  %v451 = vadd.f32 %v355, %v450
  %v452 = vpop.f32.mrf.mxu0
  %v453 = vadd.f32 %v355, %v452
  %454 = vmatprep.mubr.f32.mxu0 0.0
  %455 = vmatmul.mubr.f32.gmra.mxu0 %v376
  %v456 = vpop.f32.mrf.mxu0
  %v457 = vadd.f32 %v360, %v456
  %v458 = vpop.f32.mrf.mxu0
  %v459 = vadd.f32 %v360, %v458
  %460 = vmatprep.mubr.f32.mxu0 0.0
  %461 = vmatmul.mubr.f32.gmra.mxu0 %v379
  %v462 = vpop.f32.mrf.mxu0
  %v463 = vadd.f32 %v365, %v462
  %v464 = vpop.f32.mrf.mxu0
  %v465 = vadd.f32 %v365, %v464
  %466 = vmatprep.mubr.f32.mxu0 0.0
  %467 = vmatmul.mubr.f32.gmra.mxu0 %v382
  %v468 = vpop.f32.mrf.mxu0
  %v469 = vadd.f32 %v370, %v468
  %v470 = vpop.f32.mrf.mxu0
  %v471 = vadd.f32 %v370, %v470
  %472 = vdwg.mxu0
  %473 = vmatprep.subr.mxu0 0.0
  %474 = vmatpush1.msra.mxu0 0.0
  %475 = vmatprep.subr.mxu0 0.0
  %476 = vmatpush1.msra.mxu0 0.0
  %477 = vmatprep.subr.mxu0 0.0
  %478 = vmatpush1.msra.mxu0 0.0
  %479 = vmatprep.subr.mxu0 0.0
  %480 = vmatpush1.msra.mxu0 0.0
  %481 = vmatprep.subr.mxu0 0.0
  %482 = vmatpush1.msra.mxu0 0.0
  %483 = vmatprep.subr.mxu0 0.0
  %484 = vmatpush1.msra.mxu0 0.0
  %485 = vmatprep.subr.mxu0 0.0
  %486 = vmatpush1.msra.mxu0 0.0
  %487 = vmatprep.subr.mxu0 0.0
  %488 = vmatpush1.msra.mxu0 0.0
  %489 = vmatprep.subr.mxu0 0.0
  %490 = vmatpush1.msra.mxu0 0.0
  %491 = vmatprep.subr.mxu0 0.0
  %492 = vmatpush1.msra.mxu0 0.0
  %493 = vmatprep.subr.mxu0 0.0
  %494 = vmatpush1.msra.mxu0 0.0
  %495 = vmatprep.subr.mxu0 0.0
  %496 = vmatpush1.msra.mxu0 0.0
  %497 = vmatprep.subr.mxu0 %v343
  %498 = vmatpush1.msra.mxu0 %v342
  %499 = vmatprep.subr.mxu0 %v339
  %500 = vmatpush1.msra.mxu0 %v338
  %501 = vmatprep.subr.mxu0 %v335
  %502 = vmatpush1.msra.mxu0 %v334
  %503 = vmatprep.subr.mxu0 %v331
  %504 = vmatpush1.msra.mxu0 %v330
  %505 = vmatprep.subr.mxu0 0.0
  %506 = vmatpush2.msra.mxu0 0.0
  %507 = vmatprep.subr.mxu0 0.0
  %508 = vmatpush2.msra.mxu0 0.0
  %509 = vmatprep.subr.mxu0 0.0
  %510 = vmatpush2.msra.mxu0 0.0
  %511 = vmatprep.subr.mxu0 0.0
  %512 = vmatpush2.msra.mxu0 0.0
  %513 = vmatprep.subr.mxu0 0.0
  %514 = vmatpush2.msra.mxu0 0.0
  %515 = vmatprep.subr.mxu0 0.0
  %516 = vmatpush2.msra.mxu0 0.0
  %517 = vmatprep.subr.mxu0 0.0
  %518 = vmatpush2.msra.mxu0 0.0
  %519 = vmatprep.subr.mxu0 0.0
  %520 = vmatpush2.msra.mxu0 0.0
  %521 = vmatprep.subr.mxu0 0.0
  %522 = vmatpush2.msra.mxu0 0.0
  %523 = vmatprep.subr.mxu0 0.0
  %524 = vmatpush2.msra.mxu0 0.0
  %525 = vmatprep.subr.mxu0 0.0
  %526 = vmatpush2.msra.mxu0 0.0
  %527 = vmatprep.subr.mxu0 0.0
  %528 = vmatpush2.msra.mxu0 0.0
  %529 = vmatprep.subr.mxu0 0.0
  %530 = vmatpush2.msra.mxu0 0.0
  %531 = vmatprep.subr.mxu0 0.0
  %532 = vmatpush2.msra.mxu0 0.0
  %533 = vmatprep.subr.mxu0 0.0
  %534 = vmatpush2.msra.mxu0 0.0
  %535 = vmatprep.subr.mxu0 0.0
  %536 = vmatpush2.msra.mxu0 0.0
  %537 = vmatprep.mubr.f32.mxu0 0.0
  %538 = vmatmul.mubr.f32.gmra.mxu0 %v373
  %v539 = vpop.f32.mrf.mxu0
  %v540 = vadd.f32 %v355, %v539
  %v541 = vpop.f32.mrf.mxu0
  %v542 = vadd.f32 %v355, %v541
  %543 = vmatprep.mubr.f32.mxu0 0.0
  %544 = vmatmul.mubr.f32.gmra.mxu0 %v376
  %v545 = vpop.f32.mrf.mxu0
  %v546 = vadd.f32 %v360, %v545
  %v547 = vpop.f32.mrf.mxu0
  %v548 = vadd.f32 %v360, %v547
  %549 = vmatprep.mubr.f32.mxu0 0.0
  %550 = vmatmul.mubr.f32.gmra.mxu0 %v379
  %v551 = vpop.f32.mrf.mxu0
  %v552 = vadd.f32 %v365, %v551
  %v553 = vpop.f32.mrf.mxu0
  %v554 = vadd.f32 %v365, %v553
  %555 = vmatprep.mubr.f32.mxu0 0.0
  %556 = vmatmul.mubr.f32.gmra.mxu0 %v382
  %v557 = vpop.f32.mrf.mxu0
  %v558 = vadd.f32 %v370, %v557
  %v559 = vpop.f32.mrf.mxu0
  %v560 = vadd.f32 %v370, %v559
  %561 = vdwg.mxu0
  %v562 = vld [vmem:[%s6] sm:$0xff]
  %v563 = vld [vmem:[%s6 + $0x8] sm:$0xff]
  %v564 = vld [vmem:[%s6 + $0x10] sm:$0xff]
  %v565 = vld [vmem:[%s6 + $0x18] sm:$0xff]
  %v566 = vld [vmem:[%s0] sm:$0xff]
  %v567 = vld [vmem:[%s0 + $0x8] sm:$0xff]
  %v568 = vld [vmem:[%s0 + $0x10] sm:$0xff]
  %v569 = vld [vmem:[%s0 + $0x18] sm:$0xff]
  %v570 = vld [vmem:[%s0 + $0x20] sm:$0xff]
  %v571 = vld [vmem:[%s0 + $0x28] sm:$0xff]
  %v572 = vld [vmem:[%s0 + $0x30] sm:$0xff]
  %v573 = vld [vmem:[%s0 + $0x38] sm:$0xff]
  %v574 = vld [vmem:[%s0 + $0x40] sm:$0xff]
  %v575 = vld [vmem:[%s0 + $0x48] sm:$0xff]
  %v576 = vld [vmem:[%s0 + $0x50] sm:$0xff]
  %v577 = vld [vmem:[%s0 + $0x58] sm:$0xff]
  %v578 = vld [vmem:[%s0 + $0x60] sm:$0xff]
  %v579 = vld [vmem:[%s0 + $0x68] sm:$0xff]
  %v580 = vld [vmem:[%s0 + $0x70] sm:$0xff]
  %v581 = vld [vmem:[%s0 + $0x78] sm:$0xff]
  %v582 = vld [vmem:[%s7] sm:$0xff]
  %v583 = vld [vmem:[%s7 + $0x8] sm:$0xff]
  %v584 = vld [vmem:[%s7 + $0x10] sm:$0xff]
  %v585 = vld [vmem:[%s7 + $0x18] sm:$0xff]
  %587 = vset.pattern.permute.xlu0 0
  %588 = vperm.xlu0 %587, %v582
  %v589 = vpop.permute.xlu0 %588
  %592 = vset.pattern.permute.xlu0 0
  %593 = vperm.xlu0 %592, %v583
  %v594 = vpop.permute.xlu0 %593
  %597 = vset.pattern.permute.xlu0 0
  %598 = vperm.xlu0 %597, %v584
  %v599 = vpop.permute.xlu0 %598
  %602 = vset.pattern.permute.xlu0 0
  %603 = vperm.xlu0 %602, %v585
  %v604 = vpop.permute.xlu0 %603
  %v607 = vsel %vm73, %v562, 0
  %v610 = vsel %vm73, %v563, 0
  %v613 = vsel %vm73, %v564, 0
  %v616 = vsel %vm73, %v565, 0
  %618 = vmatprep.subr.mxu0 0.0
  %619 = vmatpush1.msra.mxu0 0.0
  %620 = vmatprep.subr.mxu0 0.0
  %621 = vmatpush1.msra.mxu0 0.0
  %622 = vmatprep.subr.mxu0 0.0
  %623 = vmatpush1.msra.mxu0 0.0
  %624 = vmatprep.subr.mxu0 0.0
  %625 = vmatpush1.msra.mxu0 0.0
  %626 = vmatprep.subr.mxu0 0.0
  %627 = vmatpush1.msra.mxu0 0.0
  %628 = vmatprep.subr.mxu0 0.0
  %629 = vmatpush1.msra.mxu0 0.0
  %630 = vmatprep.subr.mxu0 0.0
  %631 = vmatpush1.msra.mxu0 0.0
  %632 = vmatprep.subr.mxu0 0.0
  %633 = vmatpush1.msra.mxu0 0.0
  %634 = vmatprep.subr.mxu0 0.0
  %635 = vmatpush1.msra.mxu0 0.0
  %636 = vmatprep.subr.mxu0 0.0
  %637 = vmatpush1.msra.mxu0 0.0
  %638 = vmatprep.subr.mxu0 0.0
  %639 = vmatpush1.msra.mxu0 0.0
  %640 = vmatprep.subr.mxu0 0.0
  %641 = vmatpush1.msra.mxu0 0.0
  %642 = vmatprep.subr.mxu0 %v579
  %643 = vmatpush1.msra.mxu0 %v578
  %644 = vmatprep.subr.mxu0 %v575
  %645 = vmatpush1.msra.mxu0 %v574
  %646 = vmatprep.subr.mxu0 %v571
  %647 = vmatpush1.msra.mxu0 %v570
  %648 = vmatprep.subr.mxu0 %v567
  %649 = vmatpush1.msra.mxu0 %v566
  %650 = vmatprep.subr.mxu0 0.0
  %651 = vmatpush2.msra.mxu0 0.0
  %652 = vmatprep.subr.mxu0 0.0
  %653 = vmatpush2.msra.mxu0 0.0
  %654 = vmatprep.subr.mxu0 0.0
  %655 = vmatpush2.msra.mxu0 0.0
  %656 = vmatprep.subr.mxu0 0.0
  %657 = vmatpush2.msra.mxu0 0.0
  %658 = vmatprep.subr.mxu0 0.0
  %659 = vmatpush2.msra.mxu0 0.0
  %660 = vmatprep.subr.mxu0 0.0
  %661 = vmatpush2.msra.mxu0 0.0
  %662 = vmatprep.subr.mxu0 0.0
  %663 = vmatpush2.msra.mxu0 0.0
  %664 = vmatprep.subr.mxu0 0.0
  %665 = vmatpush2.msra.mxu0 0.0
  %666 = vmatprep.subr.mxu0 0.0
  %667 = vmatpush2.msra.mxu0 0.0
  %668 = vmatprep.subr.mxu0 0.0
  %669 = vmatpush2.msra.mxu0 0.0
  %670 = vmatprep.subr.mxu0 0.0
  %671 = vmatpush2.msra.mxu0 0.0
  %672 = vmatprep.subr.mxu0 0.0
  %673 = vmatpush2.msra.mxu0 0.0
  %674 = vmatprep.subr.mxu0 0.0
  %675 = vmatpush2.msra.mxu0 0.0
  %676 = vmatprep.subr.mxu0 0.0
  %677 = vmatpush2.msra.mxu0 0.0
  %678 = vmatprep.subr.mxu0 0.0
  %679 = vmatpush2.msra.mxu0 0.0
  %680 = vmatprep.subr.mxu0 0.0
  %681 = vmatpush2.msra.mxu0 0.0
  %682 = vmatprep.mubr.f32.mxu0 0.0
  %683 = vmatmul.mubr.f32.gmra.mxu0 %v607
  %v684 = vpop.f32.mrf.mxu0
  %v685 = vadd.f32 %v589, %v684
  %v686 = vpop.f32.mrf.mxu0
  %v687 = vadd.f32 %v589, %v686
  %688 = vmatprep.mubr.f32.mxu0 0.0
  %689 = vmatmul.mubr.f32.gmra.mxu0 %v610
  %v690 = vpop.f32.mrf.mxu0
  %v691 = vadd.f32 %v594, %v690
  %v692 = vpop.f32.mrf.mxu0
  %v693 = vadd.f32 %v594, %v692
  %694 = vmatprep.mubr.f32.mxu0 0.0
  %695 = vmatmul.mubr.f32.gmra.mxu0 %v613
  %v696 = vpop.f32.mrf.mxu0
  %v697 = vadd.f32 %v599, %v696
  %v698 = vpop.f32.mrf.mxu0
  %v699 = vadd.f32 %v599, %v698
  %700 = vmatprep.mubr.f32.mxu0 0.0
  %701 = vmatmul.mubr.f32.gmra.mxu0 %v616
  %v702 = vpop.f32.mrf.mxu0
  %v703 = vadd.f32 %v604, %v702
  %v704 = vpop.f32.mrf.mxu0
  %v705 = vadd.f32 %v604, %v704
  %706 = vdwg.mxu0
  %707 = vmatprep.subr.mxu0 0.0
  %708 = vmatpush1.msra.mxu0 0.0
  %709 = vmatprep.subr.mxu0 0.0
  %710 = vmatpush1.msra.mxu0 0.0
  %711 = vmatprep.subr.mxu0 0.0
  %712 = vmatpush1.msra.mxu0 0.0
  %713 = vmatprep.subr.mxu0 0.0
  %714 = vmatpush1.msra.mxu0 0.0
  %715 = vmatprep.subr.mxu0 0.0
  %716 = vmatpush1.msra.mxu0 0.0
  %717 = vmatprep.subr.mxu0 0.0
  %718 = vmatpush1.msra.mxu0 0.0
  %719 = vmatprep.subr.mxu0 0.0
  %720 = vmatpush1.msra.mxu0 0.0
  %721 = vmatprep.subr.mxu0 0.0
  %722 = vmatpush1.msra.mxu0 0.0
  %723 = vmatprep.subr.mxu0 0.0
  %724 = vmatpush1.msra.mxu0 0.0
  %725 = vmatprep.subr.mxu0 0.0
  %726 = vmatpush1.msra.mxu0 0.0
  %727 = vmatprep.subr.mxu0 0.0
  %728 = vmatpush1.msra.mxu0 0.0
  %729 = vmatprep.subr.mxu0 0.0
  %730 = vmatpush1.msra.mxu0 0.0
  %731 = vmatprep.subr.mxu0 %v581
  %732 = vmatpush1.msra.mxu0 %v580
  %733 = vmatprep.subr.mxu0 %v577
  %734 = vmatpush1.msra.mxu0 %v576
  %735 = vmatprep.subr.mxu0 %v573
  %736 = vmatpush1.msra.mxu0 %v572
  %737 = vmatprep.subr.mxu0 %v569
  %738 = vmatpush1.msra.mxu0 %v568
  %739 = vmatprep.subr.mxu0 0.0
  %740 = vmatpush2.msra.mxu0 0.0
  %741 = vmatprep.subr.mxu0 0.0
  %742 = vmatpush2.msra.mxu0 0.0
  %743 = vmatprep.subr.mxu0 0.0
  %744 = vmatpush2.msra.mxu0 0.0
  %745 = vmatprep.subr.mxu0 0.0
  %746 = vmatpush2.msra.mxu0 0.0
  %747 = vmatprep.subr.mxu0 0.0
  %748 = vmatpush2.msra.mxu0 0.0
  %749 = vmatprep.subr.mxu0 0.0
  %750 = vmatpush2.msra.mxu0 0.0
  %751 = vmatprep.subr.mxu0 0.0
  %752 = vmatpush2.msra.mxu0 0.0
  %753 = vmatprep.subr.mxu0 0.0
  %754 = vmatpush2.msra.mxu0 0.0
  %755 = vmatprep.subr.mxu0 0.0
  %756 = vmatpush2.msra.mxu0 0.0
  %757 = vmatprep.subr.mxu0 0.0
  %758 = vmatpush2.msra.mxu0 0.0
  %759 = vmatprep.subr.mxu0 0.0
  %760 = vmatpush2.msra.mxu0 0.0
  %761 = vmatprep.subr.mxu0 0.0
  %762 = vmatpush2.msra.mxu0 0.0
  %763 = vmatprep.subr.mxu0 0.0
  %764 = vmatpush2.msra.mxu0 0.0
  %765 = vmatprep.subr.mxu0 0.0
  %766 = vmatpush2.msra.mxu0 0.0
  %767 = vmatprep.subr.mxu0 0.0
  %768 = vmatpush2.msra.mxu0 0.0
  %769 = vmatprep.subr.mxu0 0.0
  %770 = vmatpush2.msra.mxu0 0.0
  %771 = vmatprep.mubr.f32.mxu0 0.0
  %772 = vmatmul.mubr.f32.gmra.mxu0 %v607
  %v773 = vpop.f32.mrf.mxu0
  %v774 = vadd.f32 %v589, %v773
  %v775 = vpop.f32.mrf.mxu0
  %v776 = vadd.f32 %v589, %v775
  %777 = vmatprep.mubr.f32.mxu0 0.0
  %778 = vmatmul.mubr.f32.gmra.mxu0 %v610
  %v779 = vpop.f32.mrf.mxu0
  %v780 = vadd.f32 %v594, %v779
  %v781 = vpop.f32.mrf.mxu0
  %v782 = vadd.f32 %v594, %v781
  %783 = vmatprep.mubr.f32.mxu0 0.0
  %784 = vmatmul.mubr.f32.gmra.mxu0 %v613
  %v785 = vpop.f32.mrf.mxu0
  %v786 = vadd.f32 %v599, %v785
  %v787 = vpop.f32.mrf.mxu0
  %v788 = vadd.f32 %v599, %v787
  %789 = vmatprep.mubr.f32.mxu0 0.0
  %790 = vmatmul.mubr.f32.gmra.mxu0 %v616
  %v791 = vpop.f32.mrf.mxu0
  %v792 = vadd.f32 %v604, %v791
  %v793 = vpop.f32.mrf.mxu0
  %v794 = vadd.f32 %v604, %v793
  %795 = vdwg.mxu0
  %v796 = vadd.f32 %v451, %v685
  %v797 = vadd.f32 %v453, %v687
  %v798 = vadd.f32 %v540, %v774
  %v799 = vadd.f32 %v542, %v776
  %v800 = vadd.f32 %v457, %v691
  %v801 = vadd.f32 %v459, %v693
  %v802 = vadd.f32 %v546, %v780
  %v803 = vadd.f32 %v548, %v782
  %v804 = vadd.f32 %v463, %v697
  %v805 = vadd.f32 %v465, %v699
  %v806 = vadd.f32 %v552, %v786
  %v807 = vadd.f32 %v554, %v788
  %v808 = vadd.f32 %v469, %v703
  %v809 = vadd.f32 %v471, %v705
  %v810 = vadd.f32 %v558, %v792
  %v811 = vadd.f32 %v560, %v794
  %v812 = vmul.f32 %v796, 0.5
  %v813 = vmul.f32 %v797, 0.5
  %v814 = vmul.f32 %v798, 0.5
  %v815 = vmul.f32 %v799, 0.5
  %v816 = vmul.f32 %v800, 0.5
  %v817 = vmul.f32 %v801, 0.5
  %v818 = vmul.f32 %v802, 0.5
  %v819 = vmul.f32 %v803, 0.5
  %v820 = vmul.f32 %v804, 0.5
  %v821 = vmul.f32 %v805, 0.5
  %v822 = vmul.f32 %v806, 0.5
  %v823 = vmul.f32 %v807, 0.5
  %v824 = vmul.f32 %v808, 0.5
  %v825 = vmul.f32 %v809, 0.5
  %v826 = vmul.f32 %v810, 0.5
  %v827 = vmul.f32 %v811, 0.5
  %v828 = vmul.f32 %v796, 0.70710677
  %v829 = vmul.f32 %v797, 0.70710677
  %v830 = vmul.f32 %v798, 0.70710677
  %v831 = vmul.f32 %v799, 0.70710677
  %v832 = vmul.f32 %v800, 0.70710677
  %v833 = vmul.f32 %v801, 0.70710677
  %v834 = vmul.f32 %v802, 0.70710677
  %v835 = vmul.f32 %v803, 0.70710677
  %v836 = vmul.f32 %v804, 0.70710677
  %v837 = vmul.f32 %v805, 0.70710677
  %v838 = vmul.f32 %v806, 0.70710677
  %v839 = vmul.f32 %v807, 0.70710677
  %v840 = vmul.f32 %v808, 0.70710677
  %v841 = vmul.f32 %v809, 0.70710677
  %v842 = vmul.f32 %v810, 0.70710677
  %v843 = vmul.f32 %v811, 0.70710677
  %v844 = verf.f32.pop %v828
  %v845 = verf.f32.pop %v829
  %v846 = verf.f32.pop %v830
  %v847 = verf.f32.pop %v831
  %v848 = verf.f32.pop %v832
  %v849 = verf.f32.pop %v833
  %v850 = verf.f32.pop %v834
  %v851 = verf.f32.pop %v835
  %v852 = verf.f32.pop %v836
  %v853 = verf.f32.pop %v837
  %v854 = verf.f32.pop %v838
  %v855 = verf.f32.pop %v839
  %v856 = verf.f32.pop %v840
  %v857 = verf.f32.pop %v841
  %v858 = verf.f32.pop %v842
  %v859 = verf.f32.pop %v843
  %v860 = vadd.f32 %v844, 1.0
  %v861 = vadd.f32 %v845, 1.0
  %v862 = vadd.f32 %v846, 1.0
  %v863 = vadd.f32 %v847, 1.0
  %v864 = vadd.f32 %v848, 1.0
  %v865 = vadd.f32 %v849, 1.0
  %v866 = vadd.f32 %v850, 1.0
  %v867 = vadd.f32 %v851, 1.0
  %v868 = vadd.f32 %v852, 1.0
  %v869 = vadd.f32 %v853, 1.0
  %v870 = vadd.f32 %v854, 1.0
  %v871 = vadd.f32 %v855, 1.0
  %v872 = vadd.f32 %v856, 1.0
  %v873 = vadd.f32 %v857, 1.0
  %v874 = vadd.f32 %v858, 1.0
  %v875 = vadd.f32 %v859, 1.0
  %v876 = vmul.f32 %v812, %v860
  %v877 = vmul.f32 %v813, %v861
  %v878 = vmul.f32 %v814, %v862
  %v879 = vmul.f32 %v815, %v863
  %v880 = vmul.f32 %v816, %v864
  %v881 = vmul.f32 %v817, %v865
  %v882 = vmul.f32 %v818, %v866
  %v883 = vmul.f32 %v819, %v867
  %v884 = vmul.f32 %v820, %v868
  %v885 = vmul.f32 %v821, %v869
  %v886 = vmul.f32 %v822, %v870
  %v887 = vmul.f32 %v823, %v871
  %v888 = vmul.f32 %v824, %v872
  %v889 = vmul.f32 %v825, %v873
  %v890 = vmul.f32 %v826, %v874
  %v891 = vmul.f32 %v827, %v875
  %892 = vst [vmem:[%s8] sm:$0xff] %v876
  %893 = vst [vmem:[%s8 + $0x8] sm:$0xff] %v877
  %894 = vst [vmem:[%s8 + $0x10] sm:$0xff] %v878
  %895 = vst [vmem:[%s8 + $0x18] sm:$0xff] %v879
  %896 = vst [vmem:[%s8 + $0x20] sm:$0xff] %v880
  %897 = vst [vmem:[%s8 + $0x28] sm:$0xff] %v881
  %898 = vst [vmem:[%s8 + $0x30] sm:$0xff] %v882
  %899 = vst [vmem:[%s8 + $0x38] sm:$0xff] %v883
  %900 = vst [vmem:[%s8 + $0x40] sm:$0xff] %v884
  %901 = vst [vmem:[%s8 + $0x48] sm:$0xff] %v885
  %902 = vst [vmem:[%s8 + $0x50] sm:$0xff] %v886
  %903 = vst [vmem:[%s8 + $0x58] sm:$0xff] %v887
  %904 = vst [vmem:[%s8 + $0x60] sm:$0xff] %v888
  %905 = vst [vmem:[%s8 + $0x68] sm:$0xff] %v889
  %906 = vst [vmem:[%s8 + $0x70] sm:$0xff] %v890
  %907 = vst [vmem:[%s8 + $0x78] sm:$0xff] %v891
  // Predicated region
  $region34: #{gfno2d_forward.22} parent=0 // pred_check
    _
  $region35: #{gfno2d_forward.22} parent=0 // pred_check_branch
    %909 = sbr.rel (0) target = $region37
  $region36: #{gfno2d_forward.22} parent=0 // pred_region
    _
  $region37: #{gfno2d_forward.22} parent=0 // pred_fallthru
    _
  // Predicated region
  $region38: #{gfno2d_forward.22} parent=0 // pred_check
    _
  $region39: #{gfno2d_forward.22} parent=0 // pred_check_branch
    %911 = sbr.rel (0) target = $region41
  $region40: #{gfno2d_forward.22} parent=0 // pred_region
    _
  $region41: #{gfno2d_forward.22} parent=0 // pred_fallthru
    _

// kernel: gfno2d_forward.34
$region0: #{gfno2d_forward.34}
  #allocation0 [shape = 'u32[]', space=smem, size = 0x4, offset = 0x4, fixed_abs, tag = 'smem constant byte address 0x4 - core index']
  #allocation1 [shape = 'u32[144,128]{1,0:T(1,128)}', space=vmem, size = 0x12000, scoped, tag = 'internal scratch']
  %s0 = inlined_call_operand.vmem [shape: f32[32,512], index: 0, kind: input, shape index: {}]
  %s1 = inlined_call_operand.vmem [shape: f32[32,512], index: 1, kind: input, shape index: {}]
  %s2 = inlined_call_operand.vmem [shape: f32[32,32], index: 2, kind: input, shape index: {}]
  %s3 = inlined_call_operand.vmem [shape: f32[32,1], index: 3, kind: input, shape index: {}]
  %s4 = inlined_call_operand.vmem [shape: f32[32,32], index: 4, kind: input, shape index: {}]
  %s5 = inlined_call_operand.vmem [shape: f32[32,1], index: 5, kind: input, shape index: {}]
  %s6 = inlined_call_operand.vmem [shape: f32[32,32], index: 6, kind: input, shape index: {}]
  %s7 = inlined_call_operand.vmem [shape: f32[32,1], index: 7, kind: input, shape index: {}]
  %s8 = inlined_call_operand.vmem [shape: f32[32,512], index: 8, kind: output, shape index: {}]
  %s9 = sld [smem:[#allocation0]]
  $region42: #{gfno2d_forward.34} parent=0
    _
  %s11 = ssub.s32 1, %s9
  %s12 = scalar_select 0, %s11, %s9
  // Predicated region
  $region2: #{gfno2d_forward.34} parent=0 // pred_check
    _
  $region3: #{gfno2d_forward.34} parent=0 // pred_check_branch
    %14 = sbr.rel (0) target = $region5
  $region4: #{gfno2d_forward.34} parent=0 // pred_region
    _
  $region5: #{gfno2d_forward.34} parent=0 // pred_fallthru
    _
  // Predicated region
  $region6: #{gfno2d_forward.34} parent=0 // pred_check
    _
  $region7: #{gfno2d_forward.34} parent=0 // pred_check_branch
    %16 = sbr.rel (0) target = $region9
  $region8: #{gfno2d_forward.34} parent=0 // pred_region
    _
  $region9: #{gfno2d_forward.34} parent=0 // pred_fallthru
    _
  // Predicated region
  $region10: #{gfno2d_forward.34} parent=0 // pred_check
    _
  $region11: #{gfno2d_forward.34} parent=0 // pred_check_branch
    %18 = sbr.rel (0) target = $region13
  $region12: #{gfno2d_forward.34} parent=0 // pred_region
    _
  $region13: #{gfno2d_forward.34} parent=0 // pred_fallthru
    _
  // Predicated region
  $region14: #{gfno2d_forward.34} parent=0 // pred_check
    _
  $region15: #{gfno2d_forward.34} parent=0 // pred_check_branch
    %20 = sbr.rel (0) target = $region17
  $region16: #{gfno2d_forward.34} parent=0 // pred_region
    _
  $region17: #{gfno2d_forward.34} parent=0 // pred_fallthru
    _
  // Predicated region
  $region18: #{gfno2d_forward.34} parent=0 // pred_check
    _
  $region19: #{gfno2d_forward.34} parent=0 // pred_check_branch
    %22 = sbr.rel (0) target = $region21
  $region20: #{gfno2d_forward.34} parent=0 // pred_region
    _
  $region21: #{gfno2d_forward.34} parent=0 // pred_fallthru
    _
  // Predicated region
  $region22: #{gfno2d_forward.34} parent=0 // pred_check
    _
  $region23: #{gfno2d_forward.34} parent=0 // pred_check_branch
    %24 = sbr.rel (0) target = $region25
  $region24: #{gfno2d_forward.34} parent=0 // pred_region
    _
  $region25: #{gfno2d_forward.34} parent=0 // pred_fallthru
    _
  // Predicated region
  $region26: #{gfno2d_forward.34} parent=0 // pred_check
    _
  $region27: #{gfno2d_forward.34} parent=0 // pred_check_branch
    %26 = sbr.rel (0) target = $region29
  $region28: #{gfno2d_forward.34} parent=0 // pred_region
    _
  $region29: #{gfno2d_forward.34} parent=0 // pred_fallthru
    _
  // Predicated region
  $region30: #{gfno2d_forward.34} parent=0 // pred_check
    _
  $region31: #{gfno2d_forward.34} parent=0 // pred_check_branch
    %28 = sbr.rel (0) target = $region33
  $region32: #{gfno2d_forward.34} parent=0 // pred_region
    _
  $region33: #{gfno2d_forward.34} parent=0 // pred_fallthru
    _
  %v29 = vld [vmem:[%s2] sm:$0xff]
  %v30 = vld [vmem:[%s2 + $0x8] sm:$0xff]
  %v31 = vld [vmem:[%s2 + $0x10] sm:$0xff]
  %v32 = vld [vmem:[%s2 + $0x18] sm:$0xff]
  %v33 = vld [vmem:[%s1] sm:$0xff]
  %v34 = vld [vmem:[%s1 + $0x8] sm:$0xff]
  %v35 = vld [vmem:[%s1 + $0x10] sm:$0xff]
  %v36 = vld [vmem:[%s1 + $0x18] sm:$0xff]
  %v37 = vld [vmem:[%s1 + $0x20] sm:$0xff]
  %v38 = vld [vmem:[%s1 + $0x28] sm:$0xff]
  %v39 = vld [vmem:[%s1 + $0x30] sm:$0xff]
  %v40 = vld [vmem:[%s1 + $0x38] sm:$0xff]
  %v41 = vld [vmem:[%s1 + $0x40] sm:$0xff]
  %v42 = vld [vmem:[%s1 + $0x48] sm:$0xff]
  %v43 = vld [vmem:[%s1 + $0x50] sm:$0xff]
  %v44 = vld [vmem:[%s1 + $0x58] sm:$0xff]
  %v45 = vld [vmem:[%s1 + $0x60] sm:$0xff]
  %v46 = vld [vmem:[%s1 + $0x68] sm:$0xff]
  %v47 = vld [vmem:[%s1 + $0x70] sm:$0xff]
  %v48 = vld [vmem:[%s1 + $0x78] sm:$0xff]
  %v49 = vld [vmem:[%s3] sm:$0xff]
  %v50 = vld [vmem:[%s3 + $0x8] sm:$0xff]
  %v51 = vld [vmem:[%s3 + $0x10] sm:$0xff]
  %v52 = vld [vmem:[%s3 + $0x18] sm:$0xff]
  %54 = vset.pattern.permute.xlu0 0
  %55 = vperm.xlu0 %54, %v49
  %v56 = vpop.permute.xlu0 %55
  %59 = vset.pattern.permute.xlu0 0
  %60 = vperm.xlu0 %59, %v50
  %v61 = vpop.permute.xlu0 %60
  %64 = vset.pattern.permute.xlu0 0
  %65 = vperm.xlu0 %64, %v51
  %v66 = vpop.permute.xlu0 %65
  %69 = vset.pattern.permute.xlu0 0
  %70 = vperm.xlu0 %69, %v52
  %v71 = vpop.permute.xlu0 %70
  %vm73 = vcmask 261120
  %v75 = vsel %vm73, %v29, 0
  %v78 = vsel %vm73, %v30, 0
  %v81 = vsel %vm73, %v31, 0
  %v84 = vsel %vm73, %v32, 0
  %86 = vmatprep.subr.mxu0 0.0
  %87 = vmatpush1.msra.mxu0 0.0
  %88 = vmatprep.subr.mxu0 0.0
  %89 = vmatpush1.msra.mxu0 0.0
  %90 = vmatprep.subr.mxu0 0.0
  %91 = vmatpush1.msra.mxu0 0.0
  %92 = vmatprep.subr.mxu0 0.0
  %93 = vmatpush1.msra.mxu0 0.0
  %94 = vmatprep.subr.mxu0 0.0
  %95 = vmatpush1.msra.mxu0 0.0
  %96 = vmatprep.subr.mxu0 0.0
  %97 = vmatpush1.msra.mxu0 0.0
  %98 = vmatprep.subr.mxu0 0.0
  %99 = vmatpush1.msra.mxu0 0.0
  %100 = vmatprep.subr.mxu0 0.0
  %101 = vmatpush1.msra.mxu0 0.0
  %102 = vmatprep.subr.mxu0 0.0
  %103 = vmatpush1.msra.mxu0 0.0
  %104 = vmatprep.subr.mxu0 0.0
  %105 = vmatpush1.msra.mxu0 0.0
  %106 = vmatprep.subr.mxu0 0.0
  %107 = vmatpush1.msra.mxu0 0.0
  %108 = vmatprep.subr.mxu0 0.0
  %109 = vmatpush1.msra.mxu0 0.0
  %110 = vmatprep.subr.mxu0 %v46
  %111 = vmatpush1.msra.mxu0 %v45
  %112 = vmatprep.subr.mxu0 %v42
  %113 = vmatpush1.msra.mxu0 %v41
  %114 = vmatprep.subr.mxu0 %v38
  %115 = vmatpush1.msra.mxu0 %v37
  %116 = vmatprep.subr.mxu0 %v34
  %117 = vmatpush1.msra.mxu0 %v33
  %118 = vmatprep.subr.mxu0 0.0
  %119 = vmatpush2.msra.mxu0 0.0
  %120 = vmatprep.subr.mxu0 0.0
  %121 = vmatpush2.msra.mxu0 0.0
  %122 = vmatprep.subr.mxu0 0.0
  %123 = vmatpush2.msra.mxu0 0.0
  %124 = vmatprep.subr.mxu0 0.0
  %125 = vmatpush2.msra.mxu0 0.0
  %126 = vmatprep.subr.mxu0 0.0
  %127 = vmatpush2.msra.mxu0 0.0
  %128 = vmatprep.subr.mxu0 0.0
  %129 = vmatpush2.msra.mxu0 0.0
  %130 = vmatprep.subr.mxu0 0.0
  %131 = vmatpush2.msra.mxu0 0.0
  %132 = vmatprep.subr.mxu0 0.0
  %133 = vmatpush2.msra.mxu0 0.0
  %134 = vmatprep.subr.mxu0 0.0
  %135 = vmatpush2.msra.mxu0 0.0
  %136 = vmatprep.subr.mxu0 0.0
  %137 = vmatpush2.msra.mxu0 0.0
  %138 = vmatprep.subr.mxu0 0.0
  %139 = vmatpush2.msra.mxu0 0.0
  %140 = vmatprep.subr.mxu0 0.0
  %141 = vmatpush2.msra.mxu0 0.0
  %142 = vmatprep.subr.mxu0 0.0
  %143 = vmatpush2.msra.mxu0 0.0
  %144 = vmatprep.subr.mxu0 0.0
  %145 = vmatpush2.msra.mxu0 0.0
  %146 = vmatprep.subr.mxu0 0.0
  %147 = vmatpush2.msra.mxu0 0.0
  %148 = vmatprep.subr.mxu0 0.0
  %149 = vmatpush2.msra.mxu0 0.0
  %150 = vmatprep.mubr.f32.mxu0 0.0
  %151 = vmatmul.mubr.f32.gmra.mxu0 %v75
  %v152 = vpop.f32.mrf.mxu0
  %v153 = vadd.f32 %v56, %v152
  %v154 = vpop.f32.mrf.mxu0
  %v155 = vadd.f32 %v56, %v154
  %156 = vmatprep.mubr.f32.mxu0 0.0
  %157 = vmatmul.mubr.f32.gmra.mxu0 %v78
  %v158 = vpop.f32.mrf.mxu0
  %v159 = vadd.f32 %v61, %v158
  %v160 = vpop.f32.mrf.mxu0
  %v161 = vadd.f32 %v61, %v160
  %162 = vmatprep.mubr.f32.mxu0 0.0
  %163 = vmatmul.mubr.f32.gmra.mxu0 %v81
  %v164 = vpop.f32.mrf.mxu0
  %v165 = vadd.f32 %v66, %v164
  %v166 = vpop.f32.mrf.mxu0
  %v167 = vadd.f32 %v66, %v166
  %168 = vmatprep.mubr.f32.mxu0 0.0
  %169 = vmatmul.mubr.f32.gmra.mxu0 %v84
  %v170 = vpop.f32.mrf.mxu0
  %v171 = vadd.f32 %v71, %v170
  %v172 = vpop.f32.mrf.mxu0
  %v173 = vadd.f32 %v71, %v172
  %174 = vdwg.mxu0
  %175 = vmatprep.subr.mxu0 0.0
  %176 = vmatpush1.msra.mxu0 0.0
  %177 = vmatprep.subr.mxu0 0.0
  %178 = vmatpush1.msra.mxu0 0.0
  %179 = vmatprep.subr.mxu0 0.0
  %180 = vmatpush1.msra.mxu0 0.0
  %181 = vmatprep.subr.mxu0 0.0
  %182 = vmatpush1.msra.mxu0 0.0
  %183 = vmatprep.subr.mxu0 0.0
  %184 = vmatpush1.msra.mxu0 0.0
  %185 = vmatprep.subr.mxu0 0.0
  %186 = vmatpush1.msra.mxu0 0.0
  %187 = vmatprep.subr.mxu0 0.0
  %188 = vmatpush1.msra.mxu0 0.0
  %189 = vmatprep.subr.mxu0 0.0
  %190 = vmatpush1.msra.mxu0 0.0
  %191 = vmatprep.subr.mxu0 0.0
  %192 = vmatpush1.msra.mxu0 0.0
  %193 = vmatprep.subr.mxu0 0.0
  %194 = vmatpush1.msra.mxu0 0.0
  %195 = vmatprep.subr.mxu0 0.0
  %196 = vmatpush1.msra.mxu0 0.0
  %197 = vmatprep.subr.mxu0 0.0
  %198 = vmatpush1.msra.mxu0 0.0
  %199 = vmatprep.subr.mxu0 %v48
  %200 = vmatpush1.msra.mxu0 %v47
  %201 = vmatprep.subr.mxu0 %v44
  %202 = vmatpush1.msra.mxu0 %v43
  %203 = vmatprep.subr.mxu0 %v40
  %204 = vmatpush1.msra.mxu0 %v39
  %205 = vmatprep.subr.mxu0 %v36
  %206 = vmatpush1.msra.mxu0 %v35
  %207 = vmatprep.subr.mxu0 0.0
  %208 = vmatpush2.msra.mxu0 0.0
  %209 = vmatprep.subr.mxu0 0.0
  %210 = vmatpush2.msra.mxu0 0.0
  %211 = vmatprep.subr.mxu0 0.0
  %212 = vmatpush2.msra.mxu0 0.0
  %213 = vmatprep.subr.mxu0 0.0
  %214 = vmatpush2.msra.mxu0 0.0
  %215 = vmatprep.subr.mxu0 0.0
  %216 = vmatpush2.msra.mxu0 0.0
  %217 = vmatprep.subr.mxu0 0.0
  %218 = vmatpush2.msra.mxu0 0.0
  %219 = vmatprep.subr.mxu0 0.0
  %220 = vmatpush2.msra.mxu0 0.0
  %221 = vmatprep.subr.mxu0 0.0
  %222 = vmatpush2.msra.mxu0 0.0
  %223 = vmatprep.subr.mxu0 0.0
  %224 = vmatpush2.msra.mxu0 0.0
  %225 = vmatprep.subr.mxu0 0.0
  %226 = vmatpush2.msra.mxu0 0.0
  %227 = vmatprep.subr.mxu0 0.0
  %228 = vmatpush2.msra.mxu0 0.0
  %229 = vmatprep.subr.mxu0 0.0
  %230 = vmatpush2.msra.mxu0 0.0
  %231 = vmatprep.subr.mxu0 0.0
  %232 = vmatpush2.msra.mxu0 0.0
  %233 = vmatprep.subr.mxu0 0.0
  %234 = vmatpush2.msra.mxu0 0.0
  %235 = vmatprep.subr.mxu0 0.0
  %236 = vmatpush2.msra.mxu0 0.0
  %237 = vmatprep.subr.mxu0 0.0
  %238 = vmatpush2.msra.mxu0 0.0
  %239 = vmatprep.mubr.f32.mxu0 0.0
  %240 = vmatmul.mubr.f32.gmra.mxu0 %v75
  %v241 = vpop.f32.mrf.mxu0
  %v242 = vadd.f32 %v56, %v241
  %v243 = vpop.f32.mrf.mxu0
  %v244 = vadd.f32 %v56, %v243
  %245 = vmatprep.mubr.f32.mxu0 0.0
  %246 = vmatmul.mubr.f32.gmra.mxu0 %v78
  %v247 = vpop.f32.mrf.mxu0
  %v248 = vadd.f32 %v61, %v247
  %v249 = vpop.f32.mrf.mxu0
  %v250 = vadd.f32 %v61, %v249
  %251 = vmatprep.mubr.f32.mxu0 0.0
  %252 = vmatmul.mubr.f32.gmra.mxu0 %v81
  %v253 = vpop.f32.mrf.mxu0
  %v254 = vadd.f32 %v66, %v253
  %v255 = vpop.f32.mrf.mxu0
  %v256 = vadd.f32 %v66, %v255
  %257 = vmatprep.mubr.f32.mxu0 0.0
  %258 = vmatmul.mubr.f32.gmra.mxu0 %v84
  %v259 = vpop.f32.mrf.mxu0
  %v260 = vadd.f32 %v71, %v259
  %v261 = vpop.f32.mrf.mxu0
  %v262 = vadd.f32 %v71, %v261
  %263 = vdwg.mxu0
  %v264 = vmul.f32 %v153, 0.5
  %v265 = vmul.f32 %v155, 0.5
  %v266 = vmul.f32 %v242, 0.5
  %v267 = vmul.f32 %v244, 0.5
  %v268 = vmul.f32 %v159, 0.5
  %v269 = vmul.f32 %v161, 0.5
  %v270 = vmul.f32 %v248, 0.5
  %v271 = vmul.f32 %v250, 0.5
  %v272 = vmul.f32 %v165, 0.5
  %v273 = vmul.f32 %v167, 0.5
  %v274 = vmul.f32 %v254, 0.5
  %v275 = vmul.f32 %v256, 0.5
  %v276 = vmul.f32 %v171, 0.5
  %v277 = vmul.f32 %v173, 0.5
  %v278 = vmul.f32 %v260, 0.5
  %v279 = vmul.f32 %v262, 0.5
  %v280 = vmul.f32 %v153, 0.70710677
  %v281 = vmul.f32 %v155, 0.70710677
  %v282 = vmul.f32 %v242, 0.70710677
  %v283 = vmul.f32 %v244, 0.70710677
  %v284 = vmul.f32 %v159, 0.70710677
  %v285 = vmul.f32 %v161, 0.70710677
  %v286 = vmul.f32 %v248, 0.70710677
  %v287 = vmul.f32 %v250, 0.70710677
  %v288 = vmul.f32 %v165, 0.70710677
  %v289 = vmul.f32 %v167, 0.70710677
  %v290 = vmul.f32 %v254, 0.70710677
  %v291 = vmul.f32 %v256, 0.70710677
  %v292 = vmul.f32 %v171, 0.70710677
  %v293 = vmul.f32 %v173, 0.70710677
  %v294 = vmul.f32 %v260, 0.70710677
  %v295 = vmul.f32 %v262, 0.70710677
  %v296 = verf.f32.pop %v280
  %v297 = verf.f32.pop %v281
  %v298 = verf.f32.pop %v282
  %v299 = verf.f32.pop %v283
  %v300 = verf.f32.pop %v284
  %v301 = verf.f32.pop %v285
  %v302 = verf.f32.pop %v286
  %v303 = verf.f32.pop %v287
  %v304 = verf.f32.pop %v288
  %v305 = verf.f32.pop %v289
  %v306 = verf.f32.pop %v290
  %v307 = verf.f32.pop %v291
  %v308 = verf.f32.pop %v292
  %v309 = verf.f32.pop %v293
  %v310 = verf.f32.pop %v294
  %v311 = verf.f32.pop %v295
  %v312 = vadd.f32 %v296, 1.0
  %v313 = vadd.f32 %v297, 1.0
  %v314 = vadd.f32 %v298, 1.0
  %v315 = vadd.f32 %v299, 1.0
  %v316 = vadd.f32 %v300, 1.0
  %v317 = vadd.f32 %v301, 1.0
  %v318 = vadd.f32 %v302, 1.0
  %v319 = vadd.f32 %v303, 1.0
  %v320 = vadd.f32 %v304, 1.0
  %v321 = vadd.f32 %v305, 1.0
  %v322 = vadd.f32 %v306, 1.0
  %v323 = vadd.f32 %v307, 1.0
  %v324 = vadd.f32 %v308, 1.0
  %v325 = vadd.f32 %v309, 1.0
  %v326 = vadd.f32 %v310, 1.0
  %v327 = vadd.f32 %v311, 1.0
  %v328 = vmul.f32 %v264, %v312
  %v329 = vmul.f32 %v265, %v313
  %v330 = vmul.f32 %v266, %v314
  %v331 = vmul.f32 %v267, %v315
  %v332 = vmul.f32 %v268, %v316
  %v333 = vmul.f32 %v269, %v317
  %v334 = vmul.f32 %v270, %v318
  %v335 = vmul.f32 %v271, %v319
  %v336 = vmul.f32 %v272, %v320
  %v337 = vmul.f32 %v273, %v321
  %v338 = vmul.f32 %v274, %v322
  %v339 = vmul.f32 %v275, %v323
  %v340 = vmul.f32 %v276, %v324
  %v341 = vmul.f32 %v277, %v325
  %v342 = vmul.f32 %v278, %v326
  %v343 = vmul.f32 %v279, %v327
  %v344 = vld [vmem:[%s4] sm:$0xff]
  %v345 = vld [vmem:[%s4 + $0x8] sm:$0xff]
  %v346 = vld [vmem:[%s4 + $0x10] sm:$0xff]
  %v347 = vld [vmem:[%s4 + $0x18] sm:$0xff]
  %v348 = vld [vmem:[%s5] sm:$0xff]
  %v349 = vld [vmem:[%s5 + $0x8] sm:$0xff]
  %v350 = vld [vmem:[%s5 + $0x10] sm:$0xff]
  %v351 = vld [vmem:[%s5 + $0x18] sm:$0xff]
  %353 = vset.pattern.permute.xlu0 0
  %354 = vperm.xlu0 %353, %v348
  %v355 = vpop.permute.xlu0 %354
  %358 = vset.pattern.permute.xlu0 0
  %359 = vperm.xlu0 %358, %v349
  %v360 = vpop.permute.xlu0 %359
  %363 = vset.pattern.permute.xlu0 0
  %364 = vperm.xlu0 %363, %v350
  %v365 = vpop.permute.xlu0 %364
  %368 = vset.pattern.permute.xlu0 0
  %369 = vperm.xlu0 %368, %v351
  %v370 = vpop.permute.xlu0 %369
  %v373 = vsel %vm73, %v344, 0
  %v376 = vsel %vm73, %v345, 0
  %v379 = vsel %vm73, %v346, 0
  %v382 = vsel %vm73, %v347, 0
  %384 = vmatprep.subr.mxu0 0.0
  %385 = vmatpush1.msra.mxu0 0.0
  %386 = vmatprep.subr.mxu0 0.0
  %387 = vmatpush1.msra.mxu0 0.0
  %388 = vmatprep.subr.mxu0 0.0
  %389 = vmatpush1.msra.mxu0 0.0
  %390 = vmatprep.subr.mxu0 0.0
  %391 = vmatpush1.msra.mxu0 0.0
  %392 = vmatprep.subr.mxu0 0.0
  %393 = vmatpush1.msra.mxu0 0.0
  %394 = vmatprep.subr.mxu0 0.0
  %395 = vmatpush1.msra.mxu0 0.0
  %396 = vmatprep.subr.mxu0 0.0
  %397 = vmatpush1.msra.mxu0 0.0
  %398 = vmatprep.subr.mxu0 0.0
  %399 = vmatpush1.msra.mxu0 0.0
  %400 = vmatprep.subr.mxu0 0.0
  %401 = vmatpush1.msra.mxu0 0.0
  %402 = vmatprep.subr.mxu0 0.0
  %403 = vmatpush1.msra.mxu0 0.0
  %404 = vmatprep.subr.mxu0 0.0
  %405 = vmatpush1.msra.mxu0 0.0
  %406 = vmatprep.subr.mxu0 0.0
  %407 = vmatpush1.msra.mxu0 0.0
  %408 = vmatprep.subr.mxu0 %v341
  %409 = vmatpush1.msra.mxu0 %v340
  %410 = vmatprep.subr.mxu0 %v337
  %411 = vmatpush1.msra.mxu0 %v336
  %412 = vmatprep.subr.mxu0 %v333
  %413 = vmatpush1.msra.mxu0 %v332
  %414 = vmatprep.subr.mxu0 %v329
  %415 = vmatpush1.msra.mxu0 %v328
  %416 = vmatprep.subr.mxu0 0.0
  %417 = vmatpush2.msra.mxu0 0.0
  %418 = vmatprep.subr.mxu0 0.0
  %419 = vmatpush2.msra.mxu0 0.0
  %420 = vmatprep.subr.mxu0 0.0
  %421 = vmatpush2.msra.mxu0 0.0
  %422 = vmatprep.subr.mxu0 0.0
  %423 = vmatpush2.msra.mxu0 0.0
  %424 = vmatprep.subr.mxu0 0.0
  %425 = vmatpush2.msra.mxu0 0.0
  %426 = vmatprep.subr.mxu0 0.0
  %427 = vmatpush2.msra.mxu0 0.0
  %428 = vmatprep.subr.mxu0 0.0
  %429 = vmatpush2.msra.mxu0 0.0
  %430 = vmatprep.subr.mxu0 0.0
  %431 = vmatpush2.msra.mxu0 0.0
  %432 = vmatprep.subr.mxu0 0.0
  %433 = vmatpush2.msra.mxu0 0.0
  %434 = vmatprep.subr.mxu0 0.0
  %435 = vmatpush2.msra.mxu0 0.0
  %436 = vmatprep.subr.mxu0 0.0
  %437 = vmatpush2.msra.mxu0 0.0
  %438 = vmatprep.subr.mxu0 0.0
  %439 = vmatpush2.msra.mxu0 0.0
  %440 = vmatprep.subr.mxu0 0.0
  %441 = vmatpush2.msra.mxu0 0.0
  %442 = vmatprep.subr.mxu0 0.0
  %443 = vmatpush2.msra.mxu0 0.0
  %444 = vmatprep.subr.mxu0 0.0
  %445 = vmatpush2.msra.mxu0 0.0
  %446 = vmatprep.subr.mxu0 0.0
  %447 = vmatpush2.msra.mxu0 0.0
  %448 = vmatprep.mubr.f32.mxu0 0.0
  %449 = vmatmul.mubr.f32.gmra.mxu0 %v373
  %v450 = vpop.f32.mrf.mxu0
  %v451 = vadd.f32 %v355, %v450
  %v452 = vpop.f32.mrf.mxu0
  %v453 = vadd.f32 %v355, %v452
  %454 = vmatprep.mubr.f32.mxu0 0.0
  %455 = vmatmul.mubr.f32.gmra.mxu0 %v376
  %v456 = vpop.f32.mrf.mxu0
  %v457 = vadd.f32 %v360, %v456
  %v458 = vpop.f32.mrf.mxu0
  %v459 = vadd.f32 %v360, %v458
  %460 = vmatprep.mubr.f32.mxu0 0.0
  %461 = vmatmul.mubr.f32.gmra.mxu0 %v379
  %v462 = vpop.f32.mrf.mxu0
  %v463 = vadd.f32 %v365, %v462
  %v464 = vpop.f32.mrf.mxu0
  %v465 = vadd.f32 %v365, %v464
  %466 = vmatprep.mubr.f32.mxu0 0.0
  %467 = vmatmul.mubr.f32.gmra.mxu0 %v382
  %v468 = vpop.f32.mrf.mxu0
  %v469 = vadd.f32 %v370, %v468
  %v470 = vpop.f32.mrf.mxu0
  %v471 = vadd.f32 %v370, %v470
  %472 = vdwg.mxu0
  %473 = vmatprep.subr.mxu0 0.0
  %474 = vmatpush1.msra.mxu0 0.0
  %475 = vmatprep.subr.mxu0 0.0
  %476 = vmatpush1.msra.mxu0 0.0
  %477 = vmatprep.subr.mxu0 0.0
  %478 = vmatpush1.msra.mxu0 0.0
  %479 = vmatprep.subr.mxu0 0.0
  %480 = vmatpush1.msra.mxu0 0.0
  %481 = vmatprep.subr.mxu0 0.0
  %482 = vmatpush1.msra.mxu0 0.0
  %483 = vmatprep.subr.mxu0 0.0
  %484 = vmatpush1.msra.mxu0 0.0
  %485 = vmatprep.subr.mxu0 0.0
  %486 = vmatpush1.msra.mxu0 0.0
  %487 = vmatprep.subr.mxu0 0.0
  %488 = vmatpush1.msra.mxu0 0.0
  %489 = vmatprep.subr.mxu0 0.0
  %490 = vmatpush1.msra.mxu0 0.0
  %491 = vmatprep.subr.mxu0 0.0
  %492 = vmatpush1.msra.mxu0 0.0
  %493 = vmatprep.subr.mxu0 0.0
  %494 = vmatpush1.msra.mxu0 0.0
  %495 = vmatprep.subr.mxu0 0.0
  %496 = vmatpush1.msra.mxu0 0.0
  %497 = vmatprep.subr.mxu0 %v343
  %498 = vmatpush1.msra.mxu0 %v342
  %499 = vmatprep.subr.mxu0 %v339
  %500 = vmatpush1.msra.mxu0 %v338
  %501 = vmatprep.subr.mxu0 %v335
  %502 = vmatpush1.msra.mxu0 %v334
  %503 = vmatprep.subr.mxu0 %v331
  %504 = vmatpush1.msra.mxu0 %v330
  %505 = vmatprep.subr.mxu0 0.0
  %506 = vmatpush2.msra.mxu0 0.0
  %507 = vmatprep.subr.mxu0 0.0
  %508 = vmatpush2.msra.mxu0 0.0
  %509 = vmatprep.subr.mxu0 0.0
  %510 = vmatpush2.msra.mxu0 0.0
  %511 = vmatprep.subr.mxu0 0.0
  %512 = vmatpush2.msra.mxu0 0.0
  %513 = vmatprep.subr.mxu0 0.0
  %514 = vmatpush2.msra.mxu0 0.0
  %515 = vmatprep.subr.mxu0 0.0
  %516 = vmatpush2.msra.mxu0 0.0
  %517 = vmatprep.subr.mxu0 0.0
  %518 = vmatpush2.msra.mxu0 0.0
  %519 = vmatprep.subr.mxu0 0.0
  %520 = vmatpush2.msra.mxu0 0.0
  %521 = vmatprep.subr.mxu0 0.0
  %522 = vmatpush2.msra.mxu0 0.0
  %523 = vmatprep.subr.mxu0 0.0
  %524 = vmatpush2.msra.mxu0 0.0
  %525 = vmatprep.subr.mxu0 0.0
  %526 = vmatpush2.msra.mxu0 0.0
  %527 = vmatprep.subr.mxu0 0.0
  %528 = vmatpush2.msra.mxu0 0.0
  %529 = vmatprep.subr.mxu0 0.0
  %530 = vmatpush2.msra.mxu0 0.0
  %531 = vmatprep.subr.mxu0 0.0
  %532 = vmatpush2.msra.mxu0 0.0
  %533 = vmatprep.subr.mxu0 0.0
  %534 = vmatpush2.msra.mxu0 0.0
  %535 = vmatprep.subr.mxu0 0.0
  %536 = vmatpush2.msra.mxu0 0.0
  %537 = vmatprep.mubr.f32.mxu0 0.0
  %538 = vmatmul.mubr.f32.gmra.mxu0 %v373
  %v539 = vpop.f32.mrf.mxu0
  %v540 = vadd.f32 %v355, %v539
  %v541 = vpop.f32.mrf.mxu0
  %v542 = vadd.f32 %v355, %v541
  %543 = vmatprep.mubr.f32.mxu0 0.0
  %544 = vmatmul.mubr.f32.gmra.mxu0 %v376
  %v545 = vpop.f32.mrf.mxu0
  %v546 = vadd.f32 %v360, %v545
  %v547 = vpop.f32.mrf.mxu0
  %v548 = vadd.f32 %v360, %v547
  %549 = vmatprep.mubr.f32.mxu0 0.0
  %550 = vmatmul.mubr.f32.gmra.mxu0 %v379
  %v551 = vpop.f32.mrf.mxu0
  %v552 = vadd.f32 %v365, %v551
  %v553 = vpop.f32.mrf.mxu0
  %v554 = vadd.f32 %v365, %v553
  %555 = vmatprep.mubr.f32.mxu0 0.0
  %556 = vmatmul.mubr.f32.gmra.mxu0 %v382
  %v557 = vpop.f32.mrf.mxu0
  %v558 = vadd.f32 %v370, %v557
  %v559 = vpop.f32.mrf.mxu0
  %v560 = vadd.f32 %v370, %v559
  %561 = vdwg.mxu0
  %v562 = vld [vmem:[%s6] sm:$0xff]
  %v563 = vld [vmem:[%s6 + $0x8] sm:$0xff]
  %v564 = vld [vmem:[%s6 + $0x10] sm:$0xff]
  %v565 = vld [vmem:[%s6 + $0x18] sm:$0xff]
  %v566 = vld [vmem:[%s0] sm:$0xff]
  %v567 = vld [vmem:[%s0 + $0x8] sm:$0xff]
  %v568 = vld [vmem:[%s0 + $0x10] sm:$0xff]
  %v569 = vld [vmem:[%s0 + $0x18] sm:$0xff]
  %v570 = vld [vmem:[%s0 + $0x20] sm:$0xff]
  %v571 = vld [vmem:[%s0 + $0x28] sm:$0xff]
  %v572 = vld [vmem:[%s0 + $0x30] sm:$0xff]
  %v573 = vld [vmem:[%s0 + $0x38] sm:$0xff]
  %v574 = vld [vmem:[%s0 + $0x40] sm:$0xff]
  %v575 = vld [vmem:[%s0 + $0x48] sm:$0xff]
  %v576 = vld [vmem:[%s0 + $0x50] sm:$0xff]
  %v577 = vld [vmem:[%s0 + $0x58] sm:$0xff]
  %v578 = vld [vmem:[%s0 + $0x60] sm:$0xff]
  %v579 = vld [vmem:[%s0 + $0x68] sm:$0xff]
  %v580 = vld [vmem:[%s0 + $0x70] sm:$0xff]
  %v581 = vld [vmem:[%s0 + $0x78] sm:$0xff]
  %v582 = vld [vmem:[%s7] sm:$0xff]
  %v583 = vld [vmem:[%s7 + $0x8] sm:$0xff]
  %v584 = vld [vmem:[%s7 + $0x10] sm:$0xff]
  %v585 = vld [vmem:[%s7 + $0x18] sm:$0xff]
  %587 = vset.pattern.permute.xlu0 0
  %588 = vperm.xlu0 %587, %v582
  %v589 = vpop.permute.xlu0 %588
  %592 = vset.pattern.permute.xlu0 0
  %593 = vperm.xlu0 %592, %v583
  %v594 = vpop.permute.xlu0 %593
  %597 = vset.pattern.permute.xlu0 0
  %598 = vperm.xlu0 %597, %v584
  %v599 = vpop.permute.xlu0 %598
  %602 = vset.pattern.permute.xlu0 0
  %603 = vperm.xlu0 %602, %v585
  %v604 = vpop.permute.xlu0 %603
  %v607 = vsel %vm73, %v562, 0
  %v610 = vsel %vm73, %v563, 0
  %v613 = vsel %vm73, %v564, 0
  %v616 = vsel %vm73, %v565, 0
  %618 = vmatprep.subr.mxu0 0.0
  %619 = vmatpush1.msra.mxu0 0.0
  %620 = vmatprep.subr.mxu0 0.0
  %621 = vmatpush1.msra.mxu0 0.0
  %622 = vmatprep.subr.mxu0 0.0
  %623 = vmatpush1.msra.mxu0 0.0
  %624 = vmatprep.subr.mxu0 0.0
  %625 = vmatpush1.msra.mxu0 0.0
  %626 = vmatprep.subr.mxu0 0.0
  %627 = vmatpush1.msra.mxu0 0.0
  %628 = vmatprep.subr.mxu0 0.0
  %629 = vmatpush1.msra.mxu0 0.0
  %630 = vmatprep.subr.mxu0 0.0
  %631 = vmatpush1.msra.mxu0 0.0
  %632 = vmatprep.subr.mxu0 0.0
  %633 = vmatpush1.msra.mxu0 0.0
  %634 = vmatprep.subr.mxu0 0.0
  %635 = vmatpush1.msra.mxu0 0.0
  %636 = vmatprep.subr.mxu0 0.0
  %637 = vmatpush1.msra.mxu0 0.0
  %638 = vmatprep.subr.mxu0 0.0
  %639 = vmatpush1.msra.mxu0 0.0
  %640 = vmatprep.subr.mxu0 0.0
  %641 = vmatpush1.msra.mxu0 0.0
  %642 = vmatprep.subr.mxu0 %v579
  %643 = vmatpush1.msra.mxu0 %v578
  %644 = vmatprep.subr.mxu0 %v575
  %645 = vmatpush1.msra.mxu0 %v574
  %646 = vmatprep.subr.mxu0 %v571
  %647 = vmatpush1.msra.mxu0 %v570
  %648 = vmatprep.subr.mxu0 %v567
  %649 = vmatpush1.msra.mxu0 %v566
  %650 = vmatprep.subr.mxu0 0.0
  %651 = vmatpush2.msra.mxu0 0.0
  %652 = vmatprep.subr.mxu0 0.0
  %653 = vmatpush2.msra.mxu0 0.0
  %654 = vmatprep.subr.mxu0 0.0
  %655 = vmatpush2.msra.mxu0 0.0
  %656 = vmatprep.subr.mxu0 0.0
  %657 = vmatpush2.msra.mxu0 0.0
  %658 = vmatprep.subr.mxu0 0.0
  %659 = vmatpush2.msra.mxu0 0.0
  %660 = vmatprep.subr.mxu0 0.0
  %661 = vmatpush2.msra.mxu0 0.0
  %662 = vmatprep.subr.mxu0 0.0
  %663 = vmatpush2.msra.mxu0 0.0
  %664 = vmatprep.subr.mxu0 0.0
  %665 = vmatpush2.msra.mxu0 0.0
  %666 = vmatprep.subr.mxu0 0.0
  %667 = vmatpush2.msra.mxu0 0.0
  %668 = vmatprep.subr.mxu0 0.0
  %669 = vmatpush2.msra.mxu0 0.0
  %670 = vmatprep.subr.mxu0 0.0
  %671 = vmatpush2.msra.mxu0 0.0
  %672 = vmatprep.subr.mxu0 0.0
  %673 = vmatpush2.msra.mxu0 0.0
  %674 = vmatprep.subr.mxu0 0.0
  %675 = vmatpush2.msra.mxu0 0.0
  %676 = vmatprep.subr.mxu0 0.0
  %677 = vmatpush2.msra.mxu0 0.0
  %678 = vmatprep.subr.mxu0 0.0
  %679 = vmatpush2.msra.mxu0 0.0
  %680 = vmatprep.subr.mxu0 0.0
  %681 = vmatpush2.msra.mxu0 0.0
  %682 = vmatprep.mubr.f32.mxu0 0.0
  %683 = vmatmul.mubr.f32.gmra.mxu0 %v607
  %v684 = vpop.f32.mrf.mxu0
  %v685 = vadd.f32 %v589, %v684
  %v686 = vpop.f32.mrf.mxu0
  %v687 = vadd.f32 %v589, %v686
  %688 = vmatprep.mubr.f32.mxu0 0.0
  %689 = vmatmul.mubr.f32.gmra.mxu0 %v610
  %v690 = vpop.f32.mrf.mxu0
  %v691 = vadd.f32 %v594, %v690
  %v692 = vpop.f32.mrf.mxu0
  %v693 = vadd.f32 %v594, %v692
  %694 = vmatprep.mubr.f32.mxu0 0.0
  %695 = vmatmul.mubr.f32.gmra.mxu0 %v613
  %v696 = vpop.f32.mrf.mxu0
  %v697 = vadd.f32 %v599, %v696
  %v698 = vpop.f32.mrf.mxu0
  %v699 = vadd.f32 %v599, %v698
  %700 = vmatprep.mubr.f32.mxu0 0.0
  %701 = vmatmul.mubr.f32.gmra.mxu0 %v616
  %v702 = vpop.f32.mrf.mxu0
  %v703 = vadd.f32 %v604, %v702
  %v704 = vpop.f32.mrf.mxu0
  %v705 = vadd.f32 %v604, %v704
  %706 = vdwg.mxu0
  %707 = vmatprep.subr.mxu0 0.0
  %708 = vmatpush1.msra.mxu0 0.0
  %709 = vmatprep.subr.mxu0 0.0
  %710 = vmatpush1.msra.mxu0 0.0
  %711 = vmatprep.subr.mxu0 0.0
  %712 = vmatpush1.msra.mxu0 0.0
  %713 = vmatprep.subr.mxu0 0.0
  %714 = vmatpush1.msra.mxu0 0.0
  %715 = vmatprep.subr.mxu0 0.0
  %716 = vmatpush1.msra.mxu0 0.0
  %717 = vmatprep.subr.mxu0 0.0
  %718 = vmatpush1.msra.mxu0 0.0
  %719 = vmatprep.subr.mxu0 0.0
  %720 = vmatpush1.msra.mxu0 0.0
  %721 = vmatprep.subr.mxu0 0.0
  %722 = vmatpush1.msra.mxu0 0.0
  %723 = vmatprep.subr.mxu0 0.0
  %724 = vmatpush1.msra.mxu0 0.0
  %725 = vmatprep.subr.mxu0 0.0
  %726 = vmatpush1.msra.mxu0 0.0
  %727 = vmatprep.subr.mxu0 0.0
  %728 = vmatpush1.msra.mxu0 0.0
  %729 = vmatprep.subr.mxu0 0.0
  %730 = vmatpush1.msra.mxu0 0.0
  %731 = vmatprep.subr.mxu0 %v581
  %732 = vmatpush1.msra.mxu0 %v580
  %733 = vmatprep.subr.mxu0 %v577
  %734 = vmatpush1.msra.mxu0 %v576
  %735 = vmatprep.subr.mxu0 %v573
  %736 = vmatpush1.msra.mxu0 %v572
  %737 = vmatprep.subr.mxu0 %v569
  %738 = vmatpush1.msra.mxu0 %v568
  %739 = vmatprep.subr.mxu0 0.0
  %740 = vmatpush2.msra.mxu0 0.0
  %741 = vmatprep.subr.mxu0 0.0
  %742 = vmatpush2.msra.mxu0 0.0
  %743 = vmatprep.subr.mxu0 0.0
  %744 = vmatpush2.msra.mxu0 0.0
  %745 = vmatprep.subr.mxu0 0.0
  %746 = vmatpush2.msra.mxu0 0.0
  %747 = vmatprep.subr.mxu0 0.0
  %748 = vmatpush2.msra.mxu0 0.0
  %749 = vmatprep.subr.mxu0 0.0
  %750 = vmatpush2.msra.mxu0 0.0
  %751 = vmatprep.subr.mxu0 0.0
  %752 = vmatpush2.msra.mxu0 0.0
  %753 = vmatprep.subr.mxu0 0.0
  %754 = vmatpush2.msra.mxu0 0.0
  %755 = vmatprep.subr.mxu0 0.0
  %756 = vmatpush2.msra.mxu0 0.0
  %757 = vmatprep.subr.mxu0 0.0
  %758 = vmatpush2.msra.mxu0 0.0
  %759 = vmatprep.subr.mxu0 0.0
  %760 = vmatpush2.msra.mxu0 0.0
  %761 = vmatprep.subr.mxu0 0.0
  %762 = vmatpush2.msra.mxu0 0.0
  %763 = vmatprep.subr.mxu0 0.0
  %764 = vmatpush2.msra.mxu0 0.0
  %765 = vmatprep.subr.mxu0 0.0
  %766 = vmatpush2.msra.mxu0 0.0
  %767 = vmatprep.subr.mxu0 0.0
  %768 = vmatpush2.msra.mxu0 0.0
  %769 = vmatprep.subr.mxu0 0.0
  %770 = vmatpush2.msra.mxu0 0.0
  %771 = vmatprep.mubr.f32.mxu0 0.0
  %772 = vmatmul.mubr.f32.gmra.mxu0 %v607
  %v773 = vpop.f32.mrf.mxu0
  %v774 = vadd.f32 %v589, %v773
  %v775 = vpop.f32.mrf.mxu0
  %v776 = vadd.f32 %v589, %v775
  %777 = vmatprep.mubr.f32.mxu0 0.0
  %778 = vmatmul.mubr.f32.gmra.mxu0 %v610
  %v779 = vpop.f32.mrf.mxu0
  %v780 = vadd.f32 %v594, %v779
  %v781 = vpop.f32.mrf.mxu0
  %v782 = vadd.f32 %v594, %v781
  %783 = vmatprep.mubr.f32.mxu0 0.0
  %784 = vmatmul.mubr.f32.gmra.mxu0 %v613
  %v785 = vpop.f32.mrf.mxu0
  %v786 = vadd.f32 %v599, %v785
  %v787 = vpop.f32.mrf.mxu0
  %v788 = vadd.f32 %v599, %v787
  %789 = vmatprep.mubr.f32.mxu0 0.0
  %790 = vmatmul.mubr.f32.gmra.mxu0 %v616
  %v791 = vpop.f32.mrf.mxu0
  %v792 = vadd.f32 %v604, %v791
  %v793 = vpop.f32.mrf.mxu0
  %v794 = vadd.f32 %v604, %v793
  %795 = vdwg.mxu0
  %v796 = vadd.f32 %v451, %v685
  %v797 = vadd.f32 %v453, %v687
  %v798 = vadd.f32 %v540, %v774
  %v799 = vadd.f32 %v542, %v776
  %v800 = vadd.f32 %v457, %v691
  %v801 = vadd.f32 %v459, %v693
  %v802 = vadd.f32 %v546, %v780
  %v803 = vadd.f32 %v548, %v782
  %v804 = vadd.f32 %v463, %v697
  %v805 = vadd.f32 %v465, %v699
  %v806 = vadd.f32 %v552, %v786
  %v807 = vadd.f32 %v554, %v788
  %v808 = vadd.f32 %v469, %v703
  %v809 = vadd.f32 %v471, %v705
  %v810 = vadd.f32 %v558, %v792
  %v811 = vadd.f32 %v560, %v794
  %812 = vst [vmem:[%s8] sm:$0xff] %v796
  %813 = vst [vmem:[%s8 + $0x8] sm:$0xff] %v797
  %814 = vst [vmem:[%s8 + $0x10] sm:$0xff] %v798
  %815 = vst [vmem:[%s8 + $0x18] sm:$0xff] %v799
  %816 = vst [vmem:[%s8 + $0x20] sm:$0xff] %v800
  %817 = vst [vmem:[%s8 + $0x28] sm:$0xff] %v801
  %818 = vst [vmem:[%s8 + $0x30] sm:$0xff] %v802
  %819 = vst [vmem:[%s8 + $0x38] sm:$0xff] %v803
  %820 = vst [vmem:[%s8 + $0x40] sm:$0xff] %v804
  %821 = vst [vmem:[%s8 + $0x48] sm:$0xff] %v805
  %822 = vst [vmem:[%s8 + $0x50] sm:$0xff] %v806
  %823 = vst [vmem:[%s8 + $0x58] sm:$0xff] %v807
  %824 = vst [vmem:[%s8 + $0x60] sm:$0xff] %v808
  %825 = vst [vmem:[%s8 + $0x68] sm:$0xff] %v809
  %826 = vst [vmem:[%s8 + $0x70] sm:$0xff] %v810
  %827 = vst [vmem:[%s8 + $0x78] sm:$0xff] %v811
  // Predicated region
  $region34: #{gfno2d_forward.34} parent=0 // pred_check
    _
  $region35: #{gfno2d_forward.34} parent=0 // pred_check_branch
    %829 = sbr.rel (0) target = $region37
  $region36: #{gfno2d_forward.34} parent=0 // pred_region
    _
  $region37: #{gfno2d_forward.34} parent=0 // pred_fallthru
    _
  // Predicated region
  $region38: #{gfno2d_forward.34} parent=0 // pred_check
    _
  $region39: #{gfno2d_forward.34} parent=0 // pred_check_branch
    %831 = sbr.rel (0) target = $region41
  $region40: #{gfno2d_forward.34} parent=0 // pred_region
    _
  $region41: #{gfno2d_forward.34} parent=0 // pred_fallthru
    _

// kernel: gfno2d_forward.35
$region0: #{gfno2d_forward.35}
  #allocation0 [shape = 'u32[]', space=smem, size = 0x4, offset = 0x4, fixed_abs, tag = 'smem constant byte address 0x4 - core index']
  #allocation1 [shape = 'u32[144,128]{1,0:T(1,128)}', space=vmem, size = 0x12000, scoped, tag = 'internal scratch']
  %s0 = inlined_call_operand.vmem [shape: f32[32,512], index: 0, kind: input, shape index: {}]
  %s1 = inlined_call_operand.vmem [shape: f32[128,32], index: 1, kind: input, shape index: {}]
  %s2 = inlined_call_operand.vmem [shape: f32[128,1], index: 2, kind: input, shape index: {}]
  %s3 = inlined_call_operand.vmem [shape: f32[50,128], index: 3, kind: input, shape index: {}]
  %s4 = inlined_call_operand.vmem [shape: f32[50,1], index: 4, kind: input, shape index: {}]
  %s5 = inlined_call_operand.vmem [shape: f32[50,512], index: 5, kind: output, shape index: {}]
  %s6 = sld [smem:[#allocation0]]
  $region30: #{gfno2d_forward.35} parent=0
    _
  %s8 = ssub.s32 1, %s6
  %s9 = scalar_select 0, %s8, %s6
  // Predicated region
  $region2: #{gfno2d_forward.35} parent=0 // pred_check
    _
  $region3: #{gfno2d_forward.35} parent=0 // pred_check_branch
    %11 = sbr.rel (0) target = $region5
  $region4: #{gfno2d_forward.35} parent=0 // pred_region
    _
  $region5: #{gfno2d_forward.35} parent=0 // pred_fallthru
    _
  // Predicated region
  $region6: #{gfno2d_forward.35} parent=0 // pred_check
    _
  $region7: #{gfno2d_forward.35} parent=0 // pred_check_branch
    %13 = sbr.rel (0) target = $region9
  $region8: #{gfno2d_forward.35} parent=0 // pred_region
    _
  $region9: #{gfno2d_forward.35} parent=0 // pred_fallthru
    _
  // Predicated region
  $region10: #{gfno2d_forward.35} parent=0 // pred_check
    _
  $region11: #{gfno2d_forward.35} parent=0 // pred_check_branch
    %15 = sbr.rel (0) target = $region13
  $region12: #{gfno2d_forward.35} parent=0 // pred_region
    _
  $region13: #{gfno2d_forward.35} parent=0 // pred_fallthru
    _
  // Predicated region
  $region14: #{gfno2d_forward.35} parent=0 // pred_check
    _
  $region15: #{gfno2d_forward.35} parent=0 // pred_check_branch
    %17 = sbr.rel (0) target = $region17
  $region16: #{gfno2d_forward.35} parent=0 // pred_region
    _
  $region17: #{gfno2d_forward.35} parent=0 // pred_fallthru
    _
  // Predicated region
  $region18: #{gfno2d_forward.35} parent=0 // pred_check
    _
  $region19: #{gfno2d_forward.35} parent=0 // pred_check_branch
    %19 = sbr.rel (0) target = $region21
  $region20: #{gfno2d_forward.35} parent=0 // pred_region
    _
  $region21: #{gfno2d_forward.35} parent=0 // pred_fallthru
    _
  %v20 = vld [vmem:[%s1] sm:$0xff]
  %v21 = vld [vmem:[%s1 + $0x8] sm:$0xff]
  %v22 = vld [vmem:[%s1 + $0x10] sm:$0xff]
  %v23 = vld [vmem:[%s1 + $0x18] sm:$0xff]
  %v24 = vld [vmem:[%s1 + $0x20] sm:$0xff]
  %v25 = vld [vmem:[%s1 + $0x28] sm:$0xff]
  %v26 = vld [vmem:[%s1 + $0x30] sm:$0xff]
  %v27 = vld [vmem:[%s1 + $0x38] sm:$0xff]
  %v28 = vld [vmem:[%s1 + $0x40] sm:$0xff]
  %v29 = vld [vmem:[%s1 + $0x48] sm:$0xff]
  %v30 = vld [vmem:[%s1 + $0x50] sm:$0xff]
  %v31 = vld [vmem:[%s1 + $0x58] sm:$0xff]
  %v32 = vld [vmem:[%s1 + $0x60] sm:$0xff]
  %v33 = vld [vmem:[%s1 + $0x68] sm:$0xff]
  %v34 = vld [vmem:[%s1 + $0x70] sm:$0xff]
  %v35 = vld [vmem:[%s1 + $0x78] sm:$0xff]
  %v36 = vld [vmem:[%s0] sm:$0xff]
  %v37 = vld [vmem:[%s0 + $0x8] sm:$0xff]
  %v38 = vld [vmem:[%s0 + $0x10] sm:$0xff]
  %v39 = vld [vmem:[%s0 + $0x18] sm:$0xff]
  %v40 = vld [vmem:[%s0 + $0x20] sm:$0xff]
  %v41 = vld [vmem:[%s0 + $0x28] sm:$0xff]
  %v42 = vld [vmem:[%s0 + $0x30] sm:$0xff]
  %v43 = vld [vmem:[%s0 + $0x38] sm:$0xff]
  %v44 = vld [vmem:[%s0 + $0x40] sm:$0xff]
  %v45 = vld [vmem:[%s0 + $0x48] sm:$0xff]
  %v46 = vld [vmem:[%s0 + $0x50] sm:$0xff]
  %v47 = vld [vmem:[%s0 + $0x58] sm:$0xff]
  %v48 = vld [vmem:[%s0 + $0x60] sm:$0xff]
  %v49 = vld [vmem:[%s0 + $0x68] sm:$0xff]
  %v50 = vld [vmem:[%s0 + $0x70] sm:$0xff]
  %v51 = vld [vmem:[%s0 + $0x78] sm:$0xff]
  %v52 = vld [vmem:[%s2] sm:$0xff]
  %v53 = vld [vmem:[%s2 + $0x8] sm:$0xff]
  %v54 = vld [vmem:[%s2 + $0x10] sm:$0xff]
  %v55 = vld [vmem:[%s2 + $0x18] sm:$0xff]
  %v56 = vld [vmem:[%s2 + $0x20] sm:$0xff]
  %v57 = vld [vmem:[%s2 + $0x28] sm:$0xff]
  %v58 = vld [vmem:[%s2 + $0x30] sm:$0xff]
  %v59 = vld [vmem:[%s2 + $0x38] sm:$0xff]
  %v60 = vld [vmem:[%s2 + $0x40] sm:$0xff]
  %v61 = vld [vmem:[%s2 + $0x48] sm:$0xff]
  %v62 = vld [vmem:[%s2 + $0x50] sm:$0xff]
  %v63 = vld [vmem:[%s2 + $0x58] sm:$0xff]
  %v64 = vld [vmem:[%s2 + $0x60] sm:$0xff]
  %v65 = vld [vmem:[%s2 + $0x68] sm:$0xff]
  %v66 = vld [vmem:[%s2 + $0x70] sm:$0xff]
  %v67 = vld [vmem:[%s2 + $0x78] sm:$0xff]
  %69 = vset.pattern.permute.xlu0 0
  %70 = vperm.xlu0 %69, %v52
  %v71 = vpop.permute.xlu0 %70
  %74 = vset.pattern.permute.xlu0 0
  %75 = vperm.xlu0 %74, %v53
  %v76 = vpop.permute.xlu0 %75
  %79 = vset.pattern.permute.xlu0 0
  %80 = vperm.xlu0 %79, %v54
  %v81 = vpop.permute.xlu0 %80
  %84 = vset.pattern.permute.xlu0 0
  %85 = vperm.xlu0 %84, %v55
  %v86 = vpop.permute.xlu0 %85
  %89 = vset.pattern.permute.xlu0 0
  %90 = vperm.xlu0 %89, %v56
  %v91 = vpop.permute.xlu0 %90
  %94 = vset.pattern.permute.xlu0 0
  %95 = vperm.xlu0 %94, %v57
  %v96 = vpop.permute.xlu0 %95
  %99 = vset.pattern.permute.xlu0 0
  %100 = vperm.xlu0 %99, %v58
  %v101 = vpop.permute.xlu0 %100
  %104 = vset.pattern.permute.xlu0 0
  %105 = vperm.xlu0 %104, %v59
  %v106 = vpop.permute.xlu0 %105
  %109 = vset.pattern.permute.xlu0 0
  %110 = vperm.xlu0 %109, %v60
  %v111 = vpop.permute.xlu0 %110
  %114 = vset.pattern.permute.xlu0 0
  %115 = vperm.xlu0 %114, %v61
  %v116 = vpop.permute.xlu0 %115
  %119 = vset.pattern.permute.xlu0 0
  %120 = vperm.xlu0 %119, %v62
  %v121 = vpop.permute.xlu0 %120
  %124 = vset.pattern.permute.xlu0 0
  %125 = vperm.xlu0 %124, %v63
  %v126 = vpop.permute.xlu0 %125
  %129 = vset.pattern.permute.xlu0 0
  %130 = vperm.xlu0 %129, %v64
  %v131 = vpop.permute.xlu0 %130
  %134 = vset.pattern.permute.xlu0 0
  %135 = vperm.xlu0 %134, %v65
  %v136 = vpop.permute.xlu0 %135
  %139 = vset.pattern.permute.xlu0 0
  %140 = vperm.xlu0 %139, %v66
  %v141 = vpop.permute.xlu0 %140
  %144 = vset.pattern.permute.xlu0 0
  %145 = vperm.xlu0 %144, %v67
  %v146 = vpop.permute.xlu0 %145
  %vm148 = vcmask 261120
  %v150 = vsel %vm148, %v20, 0
  %v153 = vsel %vm148, %v21, 0
  %v156 = vsel %vm148, %v22, 0
  %v159 = vsel %vm148, %v23, 0
  %v162 = vsel %vm148, %v24, 0
  %v165 = vsel %vm148, %v25, 0
  %v168 = vsel %vm148, %v26, 0
  %v171 = vsel %vm148, %v27, 0
  %v174 = vsel %vm148, %v28, 0
  %v177 = vsel %vm148, %v29, 0
  %v180 = vsel %vm148, %v30, 0
  %v183 = vsel %vm148, %v31, 0
  %v186 = vsel %vm148, %v32, 0
  %v189 = vsel %vm148, %v33, 0
  %v192 = vsel %vm148, %v34, 0
  %v195 = vsel %vm148, %v35, 0
  %197 = vmatprep.subr.mxu0 0.0
  %198 = vmatpush1.msra.mxu0 0.0
  %199 = vmatprep.subr.mxu0 0.0
  %200 = vmatpush1.msra.mxu0 0.0
  %201 = vmatprep.subr.mxu0 0.0
  %202 = vmatpush1.msra.mxu0 0.0
  %203 = vmatprep.subr.mxu0 0.0
  %204 = vmatpush1.msra.mxu0 0.0
  %205 = vmatprep.subr.mxu0 0.0
  %206 = vmatpush1.msra.mxu0 0.0
  %207 = vmatprep.subr.mxu0 0.0
  %208 = vmatpush1.msra.mxu0 0.0
  %209 = vmatprep.subr.mxu0 0.0
  %210 = vmatpush1.msra.mxu0 0.0
  %211 = vmatprep.subr.mxu0 0.0
  %212 = vmatpush1.msra.mxu0 0.0
  %213 = vmatprep.subr.mxu0 0.0
  %214 = vmatpush1.msra.mxu0 0.0
  %215 = vmatprep.subr.mxu0 0.0
  %216 = vmatpush1.msra.mxu0 0.0
  %217 = vmatprep.subr.mxu0 0.0
  %218 = vmatpush1.msra.mxu0 0.0
  %219 = vmatprep.subr.mxu0 0.0
  %220 = vmatpush1.msra.mxu0 0.0
  %221 = vmatprep.subr.mxu0 %v49
  %222 = vmatpush1.msra.mxu0 %v48
  %223 = vmatprep.subr.mxu0 %v45
  %224 = vmatpush1.msra.mxu0 %v44
  %225 = vmatprep.subr.mxu0 %v41
  %226 = vmatpush1.msra.mxu0 %v40
  %227 = vmatprep.subr.mxu0 %v37
  %228 = vmatpush1.msra.mxu0 %v36
  %229 = vmatprep.subr.mxu0 0.0
  %230 = vmatpush2.msra.mxu0 0.0
  %231 = vmatprep.subr.mxu0 0.0
  %232 = vmatpush2.msra.mxu0 0.0
  %233 = vmatprep.subr.mxu0 0.0
  %234 = vmatpush2.msra.mxu0 0.0
  %235 = vmatprep.subr.mxu0 0.0
  %236 = vmatpush2.msra.mxu0 0.0
  %237 = vmatprep.subr.mxu0 0.0
  %238 = vmatpush2.msra.mxu0 0.0
  %239 = vmatprep.subr.mxu0 0.0
  %240 = vmatpush2.msra.mxu0 0.0
  %241 = vmatprep.subr.mxu0 0.0
  %242 = vmatpush2.msra.mxu0 0.0
  %243 = vmatprep.subr.mxu0 0.0
  %244 = vmatpush2.msra.mxu0 0.0
  %245 = vmatprep.subr.mxu0 0.0
  %246 = vmatpush2.msra.mxu0 0.0
  %247 = vmatprep.subr.mxu0 0.0
  %248 = vmatpush2.msra.mxu0 0.0
  %249 = vmatprep.subr.mxu0 0.0
  %250 = vmatpush2.msra.mxu0 0.0
  %251 = vmatprep.subr.mxu0 0.0
  %252 = vmatpush2.msra.mxu0 0.0
  %253 = vmatprep.subr.mxu0 0.0
  %254 = vmatpush2.msra.mxu0 0.0
  %255 = vmatprep.subr.mxu0 0.0
  %256 = vmatpush2.msra.mxu0 0.0
  %257 = vmatprep.subr.mxu0 0.0
  %258 = vmatpush2.msra.mxu0 0.0
  %259 = vmatprep.subr.mxu0 0.0
  %260 = vmatpush2.msra.mxu0 0.0
  %261 = vmatprep.mubr.f32.mxu0 0.0
  %262 = vmatmul.mubr.f32.gmra.mxu0 %v150
  %v263 = vpop.f32.mrf.mxu0
  %v264 = vadd.f32 %v71, %v263
  %v265 = vpop.f32.mrf.mxu0
  %v266 = vadd.f32 %v71, %v265
  %267 = vmatprep.mubr.f32.mxu0 0.0
  %268 = vmatmul.mubr.f32.gmra.mxu0 %v153
  %v269 = vpop.f32.mrf.mxu0
  %v270 = vadd.f32 %v76, %v269
  %v271 = vpop.f32.mrf.mxu0
  %v272 = vadd.f32 %v76, %v271
  %273 = vmatprep.mubr.f32.mxu0 0.0
  %274 = vmatmul.mubr.f32.gmra.mxu0 %v156
  %v275 = vpop.f32.mrf.mxu0
  %v276 = vadd.f32 %v81, %v275
  %v277 = vpop.f32.mrf.mxu0
  %v278 = vadd.f32 %v81, %v277
  %279 = vmatprep.mubr.f32.mxu0 0.0
  %280 = vmatmul.mubr.f32.gmra.mxu0 %v159
  %v281 = vpop.f32.mrf.mxu0
  %v282 = vadd.f32 %v86, %v281
  %v283 = vpop.f32.mrf.mxu0
  %v284 = vadd.f32 %v86, %v283
  %285 = vmatprep.mubr.f32.mxu0 0.0
  %286 = vmatmul.mubr.f32.gmra.mxu0 %v162
  %v287 = vpop.f32.mrf.mxu0
  %v288 = vadd.f32 %v91, %v287
  %v289 = vpop.f32.mrf.mxu0
  %v290 = vadd.f32 %v91, %v289
  %291 = vmatprep.mubr.f32.mxu0 0.0
  %292 = vmatmul.mubr.f32.gmra.mxu0 %v165
  %v293 = vpop.f32.mrf.mxu0
  %v294 = vadd.f32 %v96, %v293
  %v295 = vpop.f32.mrf.mxu0
  %v296 = vadd.f32 %v96, %v295
  %297 = vmatprep.mubr.f32.mxu0 0.0
  %298 = vmatmul.mubr.f32.gmra.mxu0 %v168
  %v299 = vpop.f32.mrf.mxu0
  %v300 = vadd.f32 %v101, %v299
  %v301 = vpop.f32.mrf.mxu0
  %v302 = vadd.f32 %v101, %v301
  %303 = vmatprep.mubr.f32.mxu0 0.0
  %304 = vmatmul.mubr.f32.gmra.mxu0 %v171
  %v305 = vpop.f32.mrf.mxu0
  %v306 = vadd.f32 %v106, %v305
  %v307 = vpop.f32.mrf.mxu0
  %v308 = vadd.f32 %v106, %v307
  %309 = vmatprep.mubr.f32.mxu0 0.0
  %310 = vmatmul.mubr.f32.gmra.mxu0 %v174
  %v311 = vpop.f32.mrf.mxu0
  %v312 = vadd.f32 %v111, %v311
  %v313 = vpop.f32.mrf.mxu0
  %v314 = vadd.f32 %v111, %v313
  %315 = vmatprep.mubr.f32.mxu0 0.0
  %316 = vmatmul.mubr.f32.gmra.mxu0 %v177
  %v317 = vpop.f32.mrf.mxu0
  %v318 = vadd.f32 %v116, %v317
  %v319 = vpop.f32.mrf.mxu0
  %v320 = vadd.f32 %v116, %v319
  %321 = vmatprep.mubr.f32.mxu0 0.0
  %322 = vmatmul.mubr.f32.gmra.mxu0 %v180
  %v323 = vpop.f32.mrf.mxu0
  %v324 = vadd.f32 %v121, %v323
  %v325 = vpop.f32.mrf.mxu0
  %v326 = vadd.f32 %v121, %v325
  %327 = vmatprep.mubr.f32.mxu0 0.0
  %328 = vmatmul.mubr.f32.gmra.mxu0 %v183
  %v329 = vpop.f32.mrf.mxu0
  %v330 = vadd.f32 %v126, %v329
  %v331 = vpop.f32.mrf.mxu0
  %v332 = vadd.f32 %v126, %v331
  %333 = vmatprep.mubr.f32.mxu0 0.0
  %334 = vmatmul.mubr.f32.gmra.mxu0 %v186
  %v335 = vpop.f32.mrf.mxu0
  %v336 = vadd.f32 %v131, %v335
  %v337 = vpop.f32.mrf.mxu0
  %v338 = vadd.f32 %v131, %v337
  %339 = vmatprep.mubr.f32.mxu0 0.0
  %340 = vmatmul.mubr.f32.gmra.mxu0 %v189
  %v341 = vpop.f32.mrf.mxu0
  %v342 = vadd.f32 %v136, %v341
  %v343 = vpop.f32.mrf.mxu0
  %v344 = vadd.f32 %v136, %v343
  %345 = vmatprep.mubr.f32.mxu0 0.0
  %346 = vmatmul.mubr.f32.gmra.mxu0 %v192
  %v347 = vpop.f32.mrf.mxu0
  %v348 = vadd.f32 %v141, %v347
  %v349 = vpop.f32.mrf.mxu0
  %v350 = vadd.f32 %v141, %v349
  %351 = vmatprep.mubr.f32.mxu0 0.0
  %352 = vmatmul.mubr.f32.gmra.mxu0 %v195
  %v353 = vpop.f32.mrf.mxu0
  %v354 = vadd.f32 %v146, %v353
  %v355 = vpop.f32.mrf.mxu0
  %v356 = vadd.f32 %v146, %v355
  %357 = vdwg.mxu0
  %358 = vmatprep.subr.mxu0 0.0
  %359 = vmatpush1.msra.mxu0 0.0
  %360 = vmatprep.subr.mxu0 0.0
  %361 = vmatpush1.msra.mxu0 0.0
  %362 = vmatprep.subr.mxu0 0.0
  %363 = vmatpush1.msra.mxu0 0.0
  %364 = vmatprep.subr.mxu0 0.0
  %365 = vmatpush1.msra.mxu0 0.0
  %366 = vmatprep.subr.mxu0 0.0
  %367 = vmatpush1.msra.mxu0 0.0
  %368 = vmatprep.subr.mxu0 0.0
  %369 = vmatpush1.msra.mxu0 0.0
  %370 = vmatprep.subr.mxu0 0.0
  %371 = vmatpush1.msra.mxu0 0.0
  %372 = vmatprep.subr.mxu0 0.0
  %373 = vmatpush1.msra.mxu0 0.0
  %374 = vmatprep.subr.mxu0 0.0
  %375 = vmatpush1.msra.mxu0 0.0
  %376 = vmatprep.subr.mxu0 0.0
  %377 = vmatpush1.msra.mxu0 0.0
  %378 = vmatprep.subr.mxu0 0.0
  %379 = vmatpush1.msra.mxu0 0.0
  %380 = vmatprep.subr.mxu0 0.0
  %381 = vmatpush1.msra.mxu0 0.0
  %382 = vmatprep.subr.mxu0 %v51
  %383 = vmatpush1.msra.mxu0 %v50
  %384 = vmatprep.subr.mxu0 %v47
  %385 = vmatpush1.msra.mxu0 %v46
  %386 = vmatprep.subr.mxu0 %v43
  %387 = vmatpush1.msra.mxu0 %v42
  %388 = vmatprep.subr.mxu0 %v39
  %389 = vmatpush1.msra.mxu0 %v38
  %390 = vmatprep.subr.mxu0 0.0
  %391 = vmatpush2.msra.mxu0 0.0
  %392 = vmatprep.subr.mxu0 0.0
  %393 = vmatpush2.msra.mxu0 0.0
  %394 = vmatprep.subr.mxu0 0.0
  %395 = vmatpush2.msra.mxu0 0.0
  %396 = vmatprep.subr.mxu0 0.0
  %397 = vmatpush2.msra.mxu0 0.0
  %398 = vmatprep.subr.mxu0 0.0
  %399 = vmatpush2.msra.mxu0 0.0
  %400 = vmatprep.subr.mxu0 0.0
  %401 = vmatpush2.msra.mxu0 0.0
  %402 = vmatprep.subr.mxu0 0.0
  %403 = vmatpush2.msra.mxu0 0.0
  %404 = vmatprep.subr.mxu0 0.0
  %405 = vmatpush2.msra.mxu0 0.0
  %406 = vmatprep.subr.mxu0 0.0
  %407 = vmatpush2.msra.mxu0 0.0
  %408 = vmatprep.subr.mxu0 0.0
  %409 = vmatpush2.msra.mxu0 0.0
  %410 = vmatprep.subr.mxu0 0.0
  %411 = vmatpush2.msra.mxu0 0.0
  %412 = vmatprep.subr.mxu0 0.0
  %413 = vmatpush2.msra.mxu0 0.0
  %414 = vmatprep.subr.mxu0 0.0
  %415 = vmatpush2.msra.mxu0 0.0
  %416 = vmatprep.subr.mxu0 0.0
  %417 = vmatpush2.msra.mxu0 0.0
  %418 = vmatprep.subr.mxu0 0.0
  %419 = vmatpush2.msra.mxu0 0.0
  %420 = vmatprep.subr.mxu0 0.0
  %421 = vmatpush2.msra.mxu0 0.0
  %422 = vmatprep.mubr.f32.mxu0 0.0
  %423 = vmatmul.mubr.f32.gmra.mxu0 %v150
  %v424 = vpop.f32.mrf.mxu0
  %v425 = vadd.f32 %v71, %v424
  %v426 = vpop.f32.mrf.mxu0
  %v427 = vadd.f32 %v71, %v426
  %428 = vmatprep.mubr.f32.mxu0 0.0
  %429 = vmatmul.mubr.f32.gmra.mxu0 %v153
  %v430 = vpop.f32.mrf.mxu0
  %v431 = vadd.f32 %v76, %v430
  %v432 = vpop.f32.mrf.mxu0
  %v433 = vadd.f32 %v76, %v432
  %434 = vmatprep.mubr.f32.mxu0 0.0
  %435 = vmatmul.mubr.f32.gmra.mxu0 %v156
  %v436 = vpop.f32.mrf.mxu0
  %v437 = vadd.f32 %v81, %v436
  %v438 = vpop.f32.mrf.mxu0
  %v439 = vadd.f32 %v81, %v438
  %440 = vmatprep.mubr.f32.mxu0 0.0
  %441 = vmatmul.mubr.f32.gmra.mxu0 %v159
  %v442 = vpop.f32.mrf.mxu0
  %v443 = vadd.f32 %v86, %v442
  %v444 = vpop.f32.mrf.mxu0
  %v445 = vadd.f32 %v86, %v444
  %446 = vmatprep.mubr.f32.mxu0 0.0
  %447 = vmatmul.mubr.f32.gmra.mxu0 %v162
  %v448 = vpop.f32.mrf.mxu0
  %v449 = vadd.f32 %v91, %v448
  %v450 = vpop.f32.mrf.mxu0
  %v451 = vadd.f32 %v91, %v450
  %452 = vmatprep.mubr.f32.mxu0 0.0
  %453 = vmatmul.mubr.f32.gmra.mxu0 %v165
  %v454 = vpop.f32.mrf.mxu0
  %v455 = vadd.f32 %v96, %v454
  %v456 = vpop.f32.mrf.mxu0
  %v457 = vadd.f32 %v96, %v456
  %458 = vmatprep.mubr.f32.mxu0 0.0
  %459 = vmatmul.mubr.f32.gmra.mxu0 %v168
  %v460 = vpop.f32.mrf.mxu0
  %v461 = vadd.f32 %v101, %v460
  %v462 = vpop.f32.mrf.mxu0
  %v463 = vadd.f32 %v101, %v462
  %464 = vmatprep.mubr.f32.mxu0 0.0
  %465 = vmatmul.mubr.f32.gmra.mxu0 %v171
  %v466 = vpop.f32.mrf.mxu0
  %v467 = vadd.f32 %v106, %v466
  %v468 = vpop.f32.mrf.mxu0
  %v469 = vadd.f32 %v106, %v468
  %470 = vmatprep.mubr.f32.mxu0 0.0
  %471 = vmatmul.mubr.f32.gmra.mxu0 %v174
  %v472 = vpop.f32.mrf.mxu0
  %v473 = vadd.f32 %v111, %v472
  %v474 = vpop.f32.mrf.mxu0
  %v475 = vadd.f32 %v111, %v474
  %476 = vmatprep.mubr.f32.mxu0 0.0
  %477 = vmatmul.mubr.f32.gmra.mxu0 %v177
  %v478 = vpop.f32.mrf.mxu0
  %v479 = vadd.f32 %v116, %v478
  %v480 = vpop.f32.mrf.mxu0
  %v481 = vadd.f32 %v116, %v480
  %482 = vmatprep.mubr.f32.mxu0 0.0
  %483 = vmatmul.mubr.f32.gmra.mxu0 %v180
  %v484 = vpop.f32.mrf.mxu0
  %v485 = vadd.f32 %v121, %v484
  %v486 = vpop.f32.mrf.mxu0
  %v487 = vadd.f32 %v121, %v486
  %488 = vmatprep.mubr.f32.mxu0 0.0
  %489 = vmatmul.mubr.f32.gmra.mxu0 %v183
  %v490 = vpop.f32.mrf.mxu0
  %v491 = vadd.f32 %v126, %v490
  %v492 = vpop.f32.mrf.mxu0
  %v493 = vadd.f32 %v126, %v492
  %494 = vmatprep.mubr.f32.mxu0 0.0
  %495 = vmatmul.mubr.f32.gmra.mxu0 %v186
  %v496 = vpop.f32.mrf.mxu0
  %v497 = vadd.f32 %v131, %v496
  %v498 = vpop.f32.mrf.mxu0
  %v499 = vadd.f32 %v131, %v498
  %500 = vmatprep.mubr.f32.mxu0 0.0
  %501 = vmatmul.mubr.f32.gmra.mxu0 %v189
  %v502 = vpop.f32.mrf.mxu0
  %v503 = vadd.f32 %v136, %v502
  %v504 = vpop.f32.mrf.mxu0
  %v505 = vadd.f32 %v136, %v504
  %506 = vmatprep.mubr.f32.mxu0 0.0
  %507 = vmatmul.mubr.f32.gmra.mxu0 %v192
  %v508 = vpop.f32.mrf.mxu0
  %v509 = vadd.f32 %v141, %v508
  %v510 = vpop.f32.mrf.mxu0
  %v511 = vadd.f32 %v141, %v510
  %512 = vmatprep.mubr.f32.mxu0 0.0
  %513 = vmatmul.mubr.f32.gmra.mxu0 %v195
  %v514 = vpop.f32.mrf.mxu0
  %v515 = vadd.f32 %v146, %v514
  %v516 = vpop.f32.mrf.mxu0
  %v517 = vadd.f32 %v146, %v516
  %518 = vdwg.mxu0
  %v519 = vmul.f32 %v264, 0.5
  %v520 = vmul.f32 %v266, 0.5
  %v521 = vmul.f32 %v425, 0.5
  %v522 = vmul.f32 %v427, 0.5
  %v523 = vmul.f32 %v270, 0.5
  %v524 = vmul.f32 %v272, 0.5
  %v525 = vmul.f32 %v431, 0.5
  %v526 = vmul.f32 %v433, 0.5
  %v527 = vmul.f32 %v276, 0.5
  %v528 = vmul.f32 %v278, 0.5
  %v529 = vmul.f32 %v437, 0.5
  %v530 = vmul.f32 %v439, 0.5
  %v531 = vmul.f32 %v282, 0.5
  %v532 = vmul.f32 %v284, 0.5
  %v533 = vmul.f32 %v443, 0.5
  %v534 = vmul.f32 %v445, 0.5
  %v535 = vmul.f32 %v288, 0.5
  %v536 = vmul.f32 %v290, 0.5
  %v537 = vmul.f32 %v449, 0.5
  %v538 = vmul.f32 %v451, 0.5
  %v539 = vmul.f32 %v294, 0.5
  %v540 = vmul.f32 %v296, 0.5
  %v541 = vmul.f32 %v455, 0.5
  %v542 = vmul.f32 %v457, 0.5
  %v543 = vmul.f32 %v300, 0.5
  %v544 = vmul.f32 %v302, 0.5
  %v545 = vmul.f32 %v461, 0.5
  %v546 = vmul.f32 %v463, 0.5
  %v547 = vmul.f32 %v306, 0.5
  %v548 = vmul.f32 %v308, 0.5
  %v549 = vmul.f32 %v467, 0.5
  %v550 = vmul.f32 %v469, 0.5
  %v551 = vmul.f32 %v312, 0.5
  %v552 = vmul.f32 %v314, 0.5
  %v553 = vmul.f32 %v473, 0.5
  %v554 = vmul.f32 %v475, 0.5
  %v555 = vmul.f32 %v318, 0.5
  %v556 = vmul.f32 %v320, 0.5
  %v557 = vmul.f32 %v479, 0.5
  %v558 = vmul.f32 %v481, 0.5
  %v559 = vmul.f32 %v324, 0.5
  %v560 = vmul.f32 %v326, 0.5
  %v561 = vmul.f32 %v485, 0.5
  %v562 = vmul.f32 %v487, 0.5
  %v563 = vmul.f32 %v330, 0.5
  %v564 = vmul.f32 %v332, 0.5
  %v565 = vmul.f32 %v491, 0.5
  %v566 = vmul.f32 %v493, 0.5
  %v567 = vmul.f32 %v336, 0.5
  %v568 = vmul.f32 %v338, 0.5
  %v569 = vmul.f32 %v497, 0.5
  %v570 = vmul.f32 %v499, 0.5
  %v571 = vmul.f32 %v342, 0.5
  %v572 = vmul.f32 %v344, 0.5
  %v573 = vmul.f32 %v503, 0.5
  %v574 = vmul.f32 %v505, 0.5
  %v575 = vmul.f32 %v348, 0.5
  %v576 = vmul.f32 %v350, 0.5
  %v577 = vmul.f32 %v509, 0.5
  %v578 = vmul.f32 %v511, 0.5
  %v579 = vmul.f32 %v354, 0.5
  %v580 = vmul.f32 %v356, 0.5
  %v581 = vmul.f32 %v515, 0.5
  %v582 = vmul.f32 %v517, 0.5
  %v583 = vmul.f32 %v264, 0.70710677
  %v584 = vmul.f32 %v266, 0.70710677
  %v585 = vmul.f32 %v425, 0.70710677
  %v586 = vmul.f32 %v427, 0.70710677
  %v587 = vmul.f32 %v270, 0.70710677
  %v588 = vmul.f32 %v272, 0.70710677
  %v589 = vmul.f32 %v431, 0.70710677
  %v590 = vmul.f32 %v433, 0.70710677
  %v591 = vmul.f32 %v276, 0.70710677
  %v592 = vmul.f32 %v278, 0.70710677
  %v593 = vmul.f32 %v437, 0.70710677
  %v594 = vmul.f32 %v439, 0.70710677
  %v595 = vmul.f32 %v282, 0.70710677
  %v596 = vmul.f32 %v284, 0.70710677
  %v597 = vmul.f32 %v443, 0.70710677
  %v598 = vmul.f32 %v445, 0.70710677
  %v599 = vmul.f32 %v288, 0.70710677
  %v600 = vmul.f32 %v290, 0.70710677
  %v601 = vmul.f32 %v449, 0.70710677
  %v602 = vmul.f32 %v451, 0.70710677
  %v603 = vmul.f32 %v294, 0.70710677
  %v604 = vmul.f32 %v296, 0.70710677
  %v605 = vmul.f32 %v455, 0.70710677
  %v606 = vmul.f32 %v457, 0.70710677
  %v607 = vmul.f32 %v300, 0.70710677
  %v608 = vmul.f32 %v302, 0.70710677
  %v609 = vmul.f32 %v461, 0.70710677
  %v610 = vmul.f32 %v463, 0.70710677
  %v611 = vmul.f32 %v306, 0.70710677
  %v612 = vmul.f32 %v308, 0.70710677
  %v613 = vmul.f32 %v467, 0.70710677
  %v614 = vmul.f32 %v469, 0.70710677
  %v615 = vmul.f32 %v312, 0.70710677
  %v616 = vmul.f32 %v314, 0.70710677
  %v617 = vmul.f32 %v473, 0.70710677
  %v618 = vmul.f32 %v475, 0.70710677
  %v619 = vmul.f32 %v318, 0.70710677
  %v620 = vmul.f32 %v320, 0.70710677
  %v621 = vmul.f32 %v479, 0.70710677
  %v622 = vmul.f32 %v481, 0.70710677
  %v623 = vmul.f32 %v324, 0.70710677
  %v624 = vmul.f32 %v326, 0.70710677
  %v625 = vmul.f32 %v485, 0.70710677
  %v626 = vmul.f32 %v487, 0.70710677
  %v627 = vmul.f32 %v330, 0.70710677
  %v628 = vmul.f32 %v332, 0.70710677
  %v629 = vmul.f32 %v491, 0.70710677
  %v630 = vmul.f32 %v493, 0.70710677
  %v631 = vmul.f32 %v336, 0.70710677
  %v632 = vmul.f32 %v338, 0.70710677
  %v633 = vmul.f32 %v497, 0.70710677
  %v634 = vmul.f32 %v499, 0.70710677
  %v635 = vmul.f32 %v342, 0.70710677
  %v636 = vmul.f32 %v344, 0.70710677
  %v637 = vmul.f32 %v503, 0.70710677
  %v638 = vmul.f32 %v505, 0.70710677
  %v639 = vmul.f32 %v348, 0.70710677
  %v640 = vmul.f32 %v350, 0.70710677
  %v641 = vmul.f32 %v509, 0.70710677
  %v642 = vmul.f32 %v511, 0.70710677
  %v643 = vmul.f32 %v354, 0.70710677
  %v644 = vmul.f32 %v356, 0.70710677
  %v645 = vmul.f32 %v515, 0.70710677
  %v646 = vmul.f32 %v517, 0.70710677
  %v647 = verf.f32.pop %v583
  %v648 = verf.f32.pop %v584
  %v649 = verf.f32.pop %v585
  %v650 = verf.f32.pop %v586
  %v651 = verf.f32.pop %v587
  %v652 = verf.f32.pop %v588
  %v653 = verf.f32.pop %v589
  %v654 = verf.f32.pop %v590
  %v655 = verf.f32.pop %v591
  %v656 = verf.f32.pop %v592
  %v657 = verf.f32.pop %v593
  %v658 = verf.f32.pop %v594
  %v659 = verf.f32.pop %v595
  %v660 = verf.f32.pop %v596
  %v661 = verf.f32.pop %v597
  %v662 = verf.f32.pop %v598
  %v663 = verf.f32.pop %v599
  %v664 = verf.f32.pop %v600
  %v665 = verf.f32.pop %v601
  %v666 = verf.f32.pop %v602
  %v667 = verf.f32.pop %v603
  %v668 = verf.f32.pop %v604
  %v669 = verf.f32.pop %v605
  %v670 = verf.f32.pop %v606
  %v671 = verf.f32.pop %v607
  %v672 = verf.f32.pop %v608
  %v673 = verf.f32.pop %v609
  %v674 = verf.f32.pop %v610
  %v675 = verf.f32.pop %v611
  %v676 = verf.f32.pop %v612
  %v677 = verf.f32.pop %v613
  %v678 = verf.f32.pop %v614
  %v679 = verf.f32.pop %v615
  %v680 = verf.f32.pop %v616
  %v681 = verf.f32.pop %v617
  %v682 = verf.f32.pop %v618
  %v683 = verf.f32.pop %v619
  %v684 = verf.f32.pop %v620
  %v685 = verf.f32.pop %v621
  %v686 = verf.f32.pop %v622
  %v687 = verf.f32.pop %v623
  %v688 = verf.f32.pop %v624
  %v689 = verf.f32.pop %v625
  %v690 = verf.f32.pop %v626
  %v691 = verf.f32.pop %v627
  %v692 = verf.f32.pop %v628
  %v693 = verf.f32.pop %v629
  %v694 = verf.f32.pop %v630
  %v695 = verf.f32.pop %v631
  %v696 = verf.f32.pop %v632
  %v697 = verf.f32.pop %v633
  %v698 = verf.f32.pop %v634
  %v699 = verf.f32.pop %v635
  %v700 = verf.f32.pop %v636
  %v701 = verf.f32.pop %v637
  %v702 = verf.f32.pop %v638
  %v703 = verf.f32.pop %v639
  %v704 = verf.f32.pop %v640
  %v705 = verf.f32.pop %v641
  %v706 = verf.f32.pop %v642
  %v707 = verf.f32.pop %v643
  %v708 = verf.f32.pop %v644
  %v709 = verf.f32.pop %v645
  %v710 = verf.f32.pop %v646
  %v711 = vadd.f32 %v647, 1.0
  %v712 = vadd.f32 %v648, 1.0
  %v713 = vadd.f32 %v649, 1.0
  %v714 = vadd.f32 %v650, 1.0
  %v715 = vadd.f32 %v651, 1.0
  %v716 = vadd.f32 %v652, 1.0
  %v717 = vadd.f32 %v653, 1.0
  %v718 = vadd.f32 %v654, 1.0
  %v719 = vadd.f32 %v655, 1.0
  %v720 = vadd.f32 %v656, 1.0
  %v721 = vadd.f32 %v657, 1.0
  %v722 = vadd.f32 %v658, 1.0
  %v723 = vadd.f32 %v659, 1.0
  %v724 = vadd.f32 %v660, 1.0
  %v725 = vadd.f32 %v661, 1.0
  %v726 = vadd.f32 %v662, 1.0
  %v727 = vadd.f32 %v663, 1.0
  %v728 = vadd.f32 %v664, 1.0
  %v729 = vadd.f32 %v665, 1.0
  %v730 = vadd.f32 %v666, 1.0
  %v731 = vadd.f32 %v667, 1.0
  %v732 = vadd.f32 %v668, 1.0
  %v733 = vadd.f32 %v669, 1.0
  %v734 = vadd.f32 %v670, 1.0
  %v735 = vadd.f32 %v671, 1.0
  %v736 = vadd.f32 %v672, 1.0
  %v737 = vadd.f32 %v673, 1.0
  %v738 = vadd.f32 %v674, 1.0
  %v739 = vadd.f32 %v675, 1.0
  %v740 = vadd.f32 %v676, 1.0
  %v741 = vadd.f32 %v677, 1.0
  %v742 = vadd.f32 %v678, 1.0
  %v743 = vadd.f32 %v679, 1.0
  %v744 = vadd.f32 %v680, 1.0
  %v745 = vadd.f32 %v681, 1.0
  %v746 = vadd.f32 %v682, 1.0
  %v747 = vadd.f32 %v683, 1.0
  %v748 = vadd.f32 %v684, 1.0
  %v749 = vadd.f32 %v685, 1.0
  %v750 = vadd.f32 %v686, 1.0
  %v751 = vadd.f32 %v687, 1.0
  %v752 = vadd.f32 %v688, 1.0
  %v753 = vadd.f32 %v689, 1.0
  %v754 = vadd.f32 %v690, 1.0
  %v755 = vadd.f32 %v691, 1.0
  %v756 = vadd.f32 %v692, 1.0
  %v757 = vadd.f32 %v693, 1.0
  %v758 = vadd.f32 %v694, 1.0
  %v759 = vadd.f32 %v695, 1.0
  %v760 = vadd.f32 %v696, 1.0
  %v761 = vadd.f32 %v697, 1.0
  %v762 = vadd.f32 %v698, 1.0
  %v763 = vadd.f32 %v699, 1.0
  %v764 = vadd.f32 %v700, 1.0
  %v765 = vadd.f32 %v701, 1.0
  %v766 = vadd.f32 %v702, 1.0
  %v767 = vadd.f32 %v703, 1.0
  %v768 = vadd.f32 %v704, 1.0
  %v769 = vadd.f32 %v705, 1.0
  %v770 = vadd.f32 %v706, 1.0
  %v771 = vadd.f32 %v707, 1.0
  %v772 = vadd.f32 %v708, 1.0
  %v773 = vadd.f32 %v709, 1.0
  %v774 = vadd.f32 %v710, 1.0
  %v775 = vmul.f32 %v519, %v711
  %v776 = vmul.f32 %v520, %v712
  %v777 = vmul.f32 %v521, %v713
  %v778 = vmul.f32 %v522, %v714
  %v779 = vmul.f32 %v523, %v715
  %v780 = vmul.f32 %v524, %v716
  %v781 = vmul.f32 %v525, %v717
  %v782 = vmul.f32 %v526, %v718
  %v783 = vmul.f32 %v527, %v719
  %v784 = vmul.f32 %v528, %v720
  %v785 = vmul.f32 %v529, %v721
  %v786 = vmul.f32 %v530, %v722
  %v787 = vmul.f32 %v531, %v723
  %v788 = vmul.f32 %v532, %v724
  %v789 = vmul.f32 %v533, %v725
  %v790 = vmul.f32 %v534, %v726
  %v791 = vmul.f32 %v535, %v727
  %v792 = vmul.f32 %v536, %v728
  %v793 = vmul.f32 %v537, %v729
  %v794 = vmul.f32 %v538, %v730
  %v795 = vmul.f32 %v539, %v731
  %v796 = vmul.f32 %v540, %v732
  %v797 = vmul.f32 %v541, %v733
  %v798 = vmul.f32 %v542, %v734
  %v799 = vmul.f32 %v543, %v735
  %v800 = vmul.f32 %v544, %v736
  %v801 = vmul.f32 %v545, %v737
  %v802 = vmul.f32 %v546, %v738
  %v803 = vmul.f32 %v547, %v739
  %v804 = vmul.f32 %v548, %v740
  %v805 = vmul.f32 %v549, %v741
  %v806 = vmul.f32 %v550, %v742
  %v807 = vmul.f32 %v551, %v743
  %v808 = vmul.f32 %v552, %v744
  %v809 = vmul.f32 %v553, %v745
  %v810 = vmul.f32 %v554, %v746
  %v811 = vmul.f32 %v555, %v747
  %v812 = vmul.f32 %v556, %v748
  %v813 = vmul.f32 %v557, %v749
  %v814 = vmul.f32 %v558, %v750
  %v815 = vmul.f32 %v559, %v751
  %v816 = vmul.f32 %v560, %v752
  %v817 = vmul.f32 %v561, %v753
  %v818 = vmul.f32 %v562, %v754
  %v819 = vmul.f32 %v563, %v755
  %v820 = vmul.f32 %v564, %v756
  %v821 = vmul.f32 %v565, %v757
  %v822 = vmul.f32 %v566, %v758
  %v823 = vmul.f32 %v567, %v759
  %v824 = vmul.f32 %v568, %v760
  %v825 = vmul.f32 %v569, %v761
  %v826 = vmul.f32 %v570, %v762
  %v827 = vmul.f32 %v571, %v763
  %v828 = vmul.f32 %v572, %v764
  %v829 = vmul.f32 %v573, %v765
  %v830 = vmul.f32 %v574, %v766
  %v831 = vmul.f32 %v575, %v767
  %v832 = vmul.f32 %v576, %v768
  %v833 = vmul.f32 %v577, %v769
  %v834 = vmul.f32 %v578, %v770
  %v835 = vmul.f32 %v579, %v771
  %v836 = vmul.f32 %v580, %v772
  %v837 = vmul.f32 %v581, %v773
  %v838 = vmul.f32 %v582, %v774
  %v839 = vld [vmem:[%s3] sm:$0xff]
  %v840 = vld [vmem:[%s3 + $0x8] sm:$0xff]
  %v841 = vld [vmem:[%s3 + $0x10] sm:$0xff]
  %v842 = vld [vmem:[%s3 + $0x18] sm:$0xff]
  %v843 = vld [vmem:[%s3 + $0x20] sm:$0xff]
  %v844 = vld [vmem:[%s3 + $0x28] sm:$0xff]
  %v845 = vld [vmem:[%s3 + $0x30] sm:$0x3]
  %v846 = vld [vmem:[%s4] sm:$0xff]
  %v847 = vld [vmem:[%s4 + $0x8] sm:$0xff]
  %v848 = vld [vmem:[%s4 + $0x10] sm:$0xff]
  %v849 = vld [vmem:[%s4 + $0x18] sm:$0xff]
  %v850 = vld [vmem:[%s4 + $0x20] sm:$0xff]
  %v851 = vld [vmem:[%s4 + $0x28] sm:$0xff]
  %v852 = vld [vmem:[%s4 + $0x30] sm:$0x3]
  %854 = vset.pattern.permute.xlu0 0
  %855 = vperm.xlu0 %854, %v846
  %v856 = vpop.permute.xlu0 %855
  %859 = vset.pattern.permute.xlu0 0
  %860 = vperm.xlu0 %859, %v847
  %v861 = vpop.permute.xlu0 %860
  %864 = vset.pattern.permute.xlu0 0
  %865 = vperm.xlu0 %864, %v848
  %v866 = vpop.permute.xlu0 %865
  %869 = vset.pattern.permute.xlu0 0
  %870 = vperm.xlu0 %869, %v849
  %v871 = vpop.permute.xlu0 %870
  %874 = vset.pattern.permute.xlu0 0
  %875 = vperm.xlu0 %874, %v850
  %v876 = vpop.permute.xlu0 %875
  %879 = vset.pattern.permute.xlu0 0
  %880 = vperm.xlu0 %879, %v851
  %v881 = vpop.permute.xlu0 %880
  %884 = vset.pattern.permute.xlu0 0
  %885 = vperm.xlu0 %884, %v852
  %v886 = vpop.permute.xlu0 %885
  %888 = vmatprep.subr.mxu0 %v836
  %889 = vmatpush1.msra.mxu0 %v835
  %890 = vmatprep.subr.mxu0 %v832
  %891 = vmatpush1.msra.mxu0 %v831
  %892 = vmatprep.subr.mxu0 %v828
  %893 = vmatpush1.msra.mxu0 %v827
  %894 = vmatprep.subr.mxu0 %v824
  %895 = vmatpush1.msra.mxu0 %v823
  %896 = vmatprep.subr.mxu0 %v820
  %897 = vmatpush1.msra.mxu0 %v819
  %898 = vmatprep.subr.mxu0 %v816
  %899 = vmatpush1.msra.mxu0 %v815
  %900 = vmatprep.subr.mxu0 %v812
  %901 = vmatpush1.msra.mxu0 %v811
  %902 = vmatprep.subr.mxu0 %v808
  %903 = vmatpush1.msra.mxu0 %v807
  %904 = vmatprep.subr.mxu0 %v804
  %905 = vmatpush1.msra.mxu0 %v803
  %906 = vmatprep.subr.mxu0 %v800
  %907 = vmatpush1.msra.mxu0 %v799
  %908 = vmatprep.subr.mxu0 %v796
  %909 = vmatpush1.msra.mxu0 %v795
  %910 = vmatprep.subr.mxu0 %v792
  %911 = vmatpush1.msra.mxu0 %v791
  %912 = vmatprep.subr.mxu0 %v788
  %913 = vmatpush1.msra.mxu0 %v787
  %914 = vmatprep.subr.mxu0 %v784
  %915 = vmatpush1.msra.mxu0 %v783
  %916 = vmatprep.subr.mxu0 %v780
  %917 = vmatpush1.msra.mxu0 %v779
  %918 = vmatprep.subr.mxu0 %v776
  %919 = vmatpush1.msra.mxu0 %v775
  %920 = vmatprep.subr.mxu0 0.0
  %921 = vmatpush2.msra.mxu0 0.0
  %922 = vmatprep.subr.mxu0 0.0
  %923 = vmatpush2.msra.mxu0 0.0
  %924 = vmatprep.subr.mxu0 0.0
  %925 = vmatpush2.msra.mxu0 0.0
  %926 = vmatprep.subr.mxu0 0.0
  %927 = vmatpush2.msra.mxu0 0.0
  %928 = vmatprep.subr.mxu0 0.0
  %929 = vmatpush2.msra.mxu0 0.0
  %930 = vmatprep.subr.mxu0 0.0
  %931 = vmatpush2.msra.mxu0 0.0
  %932 = vmatprep.subr.mxu0 0.0
  %933 = vmatpush2.msra.mxu0 0.0
  %934 = vmatprep.subr.mxu0 0.0
  %935 = vmatpush2.msra.mxu0 0.0
  %936 = vmatprep.subr.mxu0 0.0
  %937 = vmatpush2.msra.mxu0 0.0
  %938 = vmatprep.subr.mxu0 0.0
  %939 = vmatpush2.msra.mxu0 0.0
  %940 = vmatprep.subr.mxu0 0.0
  %941 = vmatpush2.msra.mxu0 0.0
  %942 = vmatprep.subr.mxu0 0.0
  %943 = vmatpush2.msra.mxu0 0.0
  %944 = vmatprep.subr.mxu0 0.0
  %945 = vmatpush2.msra.mxu0 0.0
  %946 = vmatprep.subr.mxu0 0.0
  %947 = vmatpush2.msra.mxu0 0.0
  %948 = vmatprep.subr.mxu0 0.0
  %949 = vmatpush2.msra.mxu0 0.0
  %950 = vmatprep.subr.mxu0 0.0
  %951 = vmatpush2.msra.mxu0 0.0
  %952 = vmatprep.mubr.f32.mxu0 0.0
  %953 = vmatmul.mubr.f32.gmra.mxu0 %v839
  %v954 = vpop.f32.mrf.mxu0
  %v955 = vadd.f32 %v856, %v954
  %v956 = vpop.f32.mrf.mxu0
  %v957 = vadd.f32 %v856, %v956
  %958 = vmatprep.mubr.f32.mxu0 0.0
  %959 = vmatmul.mubr.f32.gmra.mxu0 %v840
  %v960 = vpop.f32.mrf.mxu0
  %v961 = vadd.f32 %v861, %v960
  %v962 = vpop.f32.mrf.mxu0
  %v963 = vadd.f32 %v861, %v962
  %964 = vmatprep.mubr.f32.mxu0 0.0
  %965 = vmatmul.mubr.f32.gmra.mxu0 %v841
  %v966 = vpop.f32.mrf.mxu0
  %v967 = vadd.f32 %v866, %v966
  %v968 = vpop.f32.mrf.mxu0
  %v969 = vadd.f32 %v866, %v968
  %970 = vmatprep.mubr.f32.mxu0 0.0
  %971 = vmatmul.mubr.f32.gmra.mxu0 %v842
  %v972 = vpop.f32.mrf.mxu0
  %v973 = vadd.f32 %v871, %v972
  %v974 = vpop.f32.mrf.mxu0
  %v975 = vadd.f32 %v871, %v974
  %976 = vmatprep.mubr.f32.mxu0 0.0
  %977 = vmatmul.mubr.f32.gmra.mxu0 %v843
  %v978 = vpop.f32.mrf.mxu0
  %v979 = vadd.f32 %v876, %v978
  %v980 = vpop.f32.mrf.mxu0
  %v981 = vadd.f32 %v876, %v980
  %982 = vmatprep.mubr.f32.mxu0 0.0
  %983 = vmatmul.mubr.f32.gmra.mxu0 %v844
  %v984 = vpop.f32.mrf.mxu0
  %v985 = vadd.f32 %v881, %v984
  %v986 = vpop.f32.mrf.mxu0
  %v987 = vadd.f32 %v881, %v986
  %988 = vmatprep.mubr.f32.mxu0 0.0
  %989 = vmatmul.mubr.f32.gmra.mxu0 %v845
  %v990 = vpop.f32.mrf.mxu0
  %v991 = vadd.f32 %v886, %v990
  %v992 = vpop.f32.mrf.mxu0
  %v993 = vadd.f32 %v886, %v992
  %994 = vdwg.mxu0
  %995 = vmatprep.subr.mxu0 %v838
  %996 = vmatpush1.msra.mxu0 %v837
  %997 = vmatprep.subr.mxu0 %v834
  %998 = vmatpush1.msra.mxu0 %v833
  %999 = vmatprep.subr.mxu0 %v830
  %1000 = vmatpush1.msra.mxu0 %v829
  %1001 = vmatprep.subr.mxu0 %v826
  %1002 = vmatpush1.msra.mxu0 %v825
  %1003 = vmatprep.subr.mxu0 %v822
  %1004 = vmatpush1.msra.mxu0 %v821
  %1005 = vmatprep.subr.mxu0 %v818
  %1006 = vmatpush1.msra.mxu0 %v817
  %1007 = vmatprep.subr.mxu0 %v814
  %1008 = vmatpush1.msra.mxu0 %v813
  %1009 = vmatprep.subr.mxu0 %v810
  %1010 = vmatpush1.msra.mxu0 %v809
  %1011 = vmatprep.subr.mxu0 %v806
  %1012 = vmatpush1.msra.mxu0 %v805
  %1013 = vmatprep.subr.mxu0 %v802
  %1014 = vmatpush1.msra.mxu0 %v801
  %1015 = vmatprep.subr.mxu0 %v798
  %1016 = vmatpush1.msra.mxu0 %v797
  %1017 = vmatprep.subr.mxu0 %v794
  %1018 = vmatpush1.msra.mxu0 %v793
  %1019 = vmatprep.subr.mxu0 %v790
  %1020 = vmatpush1.msra.mxu0 %v789
  %1021 = vmatprep.subr.mxu0 %v786
  %1022 = vmatpush1.msra.mxu0 %v785
  %1023 = vmatprep.subr.mxu0 %v782
  %1024 = vmatpush1.msra.mxu0 %v781
  %1025 = vmatprep.subr.mxu0 %v778
  %1026 = vmatpush1.msra.mxu0 %v777
  %1027 = vmatprep.subr.mxu0 0.0
  %1028 = vmatpush2.msra.mxu0 0.0
  %1029 = vmatprep.subr.mxu0 0.0
  %1030 = vmatpush2.msra.mxu0 0.0
  %1031 = vmatprep.subr.mxu0 0.0
  %1032 = vmatpush2.msra.mxu0 0.0
  %1033 = vmatprep.subr.mxu0 0.0
  %1034 = vmatpush2.msra.mxu0 0.0
  %1035 = vmatprep.subr.mxu0 0.0
  %1036 = vmatpush2.msra.mxu0 0.0
  %1037 = vmatprep.subr.mxu0 0.0
  %1038 = vmatpush2.msra.mxu0 0.0
  %1039 = vmatprep.subr.mxu0 0.0
  %1040 = vmatpush2.msra.mxu0 0.0
  %1041 = vmatprep.subr.mxu0 0.0
  %1042 = vmatpush2.msra.mxu0 0.0
  %1043 = vmatprep.subr.mxu0 0.0
  %1044 = vmatpush2.msra.mxu0 0.0
  %1045 = vmatprep.subr.mxu0 0.0
  %1046 = vmatpush2.msra.mxu0 0.0
  %1047 = vmatprep.subr.mxu0 0.0
  %1048 = vmatpush2.msra.mxu0 0.0
  %1049 = vmatprep.subr.mxu0 0.0
  %1050 = vmatpush2.msra.mxu0 0.0
  %1051 = vmatprep.subr.mxu0 0.0
  %1052 = vmatpush2.msra.mxu0 0.0
  %1053 = vmatprep.subr.mxu0 0.0
  %1054 = vmatpush2.msra.mxu0 0.0
  %1055 = vmatprep.subr.mxu0 0.0
  %1056 = vmatpush2.msra.mxu0 0.0
  %1057 = vmatprep.subr.mxu0 0.0
  %1058 = vmatpush2.msra.mxu0 0.0
  %1059 = vmatprep.mubr.f32.mxu0 0.0
  %1060 = vmatmul.mubr.f32.gmra.mxu0 %v839
  %v1061 = vpop.f32.mrf.mxu0
  %v1062 = vadd.f32 %v856, %v1061
  %v1063 = vpop.f32.mrf.mxu0
  %v1064 = vadd.f32 %v856, %v1063
  %1065 = vmatprep.mubr.f32.mxu0 0.0
  %1066 = vmatmul.mubr.f32.gmra.mxu0 %v840
  %v1067 = vpop.f32.mrf.mxu0
  %v1068 = vadd.f32 %v861, %v1067
  %v1069 = vpop.f32.mrf.mxu0
  %v1070 = vadd.f32 %v861, %v1069
  %1071 = vmatprep.mubr.f32.mxu0 0.0
  %1072 = vmatmul.mubr.f32.gmra.mxu0 %v841
  %v1073 = vpop.f32.mrf.mxu0
  %v1074 = vadd.f32 %v866, %v1073
  %v1075 = vpop.f32.mrf.mxu0
  %v1076 = vadd.f32 %v866, %v1075
  %1077 = vmatprep.mubr.f32.mxu0 0.0
  %1078 = vmatmul.mubr.f32.gmra.mxu0 %v842
  %v1079 = vpop.f32.mrf.mxu0
  %v1080 = vadd.f32 %v871, %v1079
  %v1081 = vpop.f32.mrf.mxu0
  %v1082 = vadd.f32 %v871, %v1081
  %1083 = vmatprep.mubr.f32.mxu0 0.0
  %1084 = vmatmul.mubr.f32.gmra.mxu0 %v843
  %v1085 = vpop.f32.mrf.mxu0
  %v1086 = vadd.f32 %v876, %v1085
  %v1087 = vpop.f32.mrf.mxu0
  %v1088 = vadd.f32 %v876, %v1087
  %1089 = vmatprep.mubr.f32.mxu0 0.0
  %1090 = vmatmul.mubr.f32.gmra.mxu0 %v844
  %v1091 = vpop.f32.mrf.mxu0
  %v1092 = vadd.f32 %v881, %v1091
  %v1093 = vpop.f32.mrf.mxu0
  %v1094 = vadd.f32 %v881, %v1093
  %1095 = vmatprep.mubr.f32.mxu0 0.0
  %1096 = vmatmul.mubr.f32.gmra.mxu0 %v845
  %v1097 = vpop.f32.mrf.mxu0
  %v1098 = vadd.f32 %v886, %v1097
  %v1099 = vpop.f32.mrf.mxu0
  %v1100 = vadd.f32 %v886, %v1099
  %1101 = vdwg.mxu0
  %1102 = vst [vmem:[%s5] sm:$0xff] %v955
  %1103 = vst [vmem:[%s5 + $0x8] sm:$0xff] %v957
  %1104 = vst [vmem:[%s5 + $0x10] sm:$0xff] %v1062
  %1105 = vst [vmem:[%s5 + $0x18] sm:$0xff] %v1064
  %1106 = vst [vmem:[%s5 + $0x20] sm:$0xff] %v961
  %1107 = vst [vmem:[%s5 + $0x28] sm:$0xff] %v963
  %1108 = vst [vmem:[%s5 + $0x30] sm:$0xff] %v1068
  %1109 = vst [vmem:[%s5 + $0x38] sm:$0xff] %v1070
  %1110 = vst [vmem:[%s5 + $0x40] sm:$0xff] %v967
  %1111 = vst [vmem:[%s5 + $0x48] sm:$0xff] %v969
  %1112 = vst [vmem:[%s5 + $0x50] sm:$0xff] %v1074
  %1113 = vst [vmem:[%s5 + $0x58] sm:$0xff] %v1076
  %1114 = vst [vmem:[%s5 + $0x60] sm:$0xff] %v973
  %1115 = vst [vmem:[%s5 + $0x68] sm:$0xff] %v975
  %1116 = vst [vmem:[%s5 + $0x70] sm:$0xff] %v1080
  %1117 = vst [vmem:[%s5 + $0x78] sm:$0xff] %v1082
  %1118 = vst [vmem:[%s5 + $0x80] sm:$0xff] %v979
  %1119 = vst [vmem:[%s5 + $0x88] sm:$0xff] %v981
  %1120 = vst [vmem:[%s5 + $0x90] sm:$0xff] %v1086
  %1121 = vst [vmem:[%s5 + $0x98] sm:$0xff] %v1088
  %1122 = vst [vmem:[%s5 + $0xa0] sm:$0xff] %v985
  %1123 = vst [vmem:[%s5 + $0xa8] sm:$0xff] %v987
  %1124 = vst [vmem:[%s5 + $0xb0] sm:$0xff] %v1092
  %1125 = vst [vmem:[%s5 + $0xb8] sm:$0xff] %v1094
  %1126 = vst [vmem:[%s5 + $0xc0] sm:$0x3] %v991
  %1127 = vst [vmem:[%s5 + $0xc8] sm:$0x3] %v993
  %1128 = vst [vmem:[%s5 + $0xd0] sm:$0x3] %v1098
  %1129 = vst [vmem:[%s5 + $0xd8] sm:$0x3] %v1100
  // Predicated region
  $region22: #{gfno2d_forward.35} parent=0 // pred_check
    _
  $region23: #{gfno2d_forward.35} parent=0 // pred_check_branch
    %1131 = sbr.rel (0) target = $region25
  $region24: #{gfno2d_forward.35} parent=0 // pred_region
    _
  $region25: #{gfno2d_forward.35} parent=0 // pred_fallthru
    _
  // Predicated region
  $region26: #{gfno2d_forward.35} parent=0 // pred_check
    _
  $region27: #{gfno2d_forward.35} parent=0 // pred_check_branch
    %1133 = sbr.rel (0) target = $region29
  $region28: #{gfno2d_forward.35} parent=0 // pred_region
    _
  $region29: #{gfno2d_forward.35} parent=0 // pred_fallthru
    _

</llo_original>
